<compile_context>
chip_gen: v5e
topology: v5e:2x2
jax: 0.10.0
libtpu: 0.0.40
codegen_flags: <defaults>
</compile_context>

<pallas_src>
import functools

import jax
import jax.numpy as jnp
from jax.experimental import pallas as pl
from jax.experimental.pallas import tpu as pltpu

EPS = 1e-6  # LayerNorm2d eps


def point_gen_kernel(x_ref, w1_ref, b1_ref, g1_ref, be1_ref,
                     w2_ref, b2_ref, g2_ref, be2_ref,
                     pooled_ref,
                     pad_ref, col_ref,
                     *, bt, h, w, c):
    hw = h * w
    n = bt * hw
    cin = x_ref.shape[-1]
    inv_c = 1.0 / c

    # ---- 1x1 conv (256 -> 128): one bf16 MXU matmul over the whole block ----
    x = x_ref[...].reshape(n, cin)                                   # bf16
    h1 = jnp.dot(x, w1_ref[...],
                 preferred_element_type=jnp.float32) + b1_ref[...]   # f32

    # ---- LayerNorm2d #1 (over channels), two-pass stats in f32 ----
    mu1 = jnp.sum(h1, axis=-1, keepdims=True) * inv_c
    d1 = h1 - mu1
    var1 = jnp.sum(d1 * d1, axis=-1, keepdims=True) * inv_c
    h1 = d1 * jax.lax.rsqrt(var1 + EPS) * g1_ref[...] + be1_ref[...]

    # ---- padded scratch: zero ONLY the 1-wide border every step, then ----
    # ---- overwrite the interior (keeps 'parallel' megacore sharding safe) ----
    zrow = jnp.zeros((bt, 1, w + 2, c), jnp.float32)
    zcol = jnp.zeros((bt, h + 2, 1, c), jnp.float32)
    pad_ref[:, pl.ds(0, 1), :, :] = zrow
    pad_ref[:, pl.ds(h + 1, 1), :, :] = zrow
    pad_ref[:, :, pl.ds(0, 1), :] = zcol
    pad_ref[:, :, pl.ds(w + 1, 1), :] = zcol
    pad_ref[:, pl.ds(1, h), pl.ds(1, w), :] = h1.reshape(bt, h, w, c)

    # ---- im2col: 3 aligned dy-band loads; dx taps derived in-register ----
    for dy in range(3):
        band = pad_ref[:, pl.ds(dy, h), :, :]            # (bt, h, w+2, c) f32
        for dx in range(3):
            k = 3 * dy + dx
            tap = band[:, :, dx:dx + w, :]               # sublane shift (XLU)
            col_ref[:, pl.ds(k * c, c)] = tap.reshape(n, c).astype(jnp.bfloat16)

    # ---- 3x3 conv (128 -> 128) as one fused MXU matmul (K = 9*128) ----
    acc = jnp.dot(col_ref[...], w2_ref[...],
                  preferred_element_type=jnp.float32) + b2_ref[...]

    # ---- LayerNorm2d #2, two-pass stats in f32 ----
    mu2 = jnp.sum(acc, axis=-1, keepdims=True) * inv_c
    d2 = acc - mu2
    var2 = jnp.sum(d2 * d2, axis=-1, keepdims=True) * inv_c
    h2 = d2 * jax.lax.rsqrt(var2 + EPS) * g2_ref[...] + be2_ref[...]

    # ---- AdaptiveAvgPool2d(1): lane-dense (bt, 128) output block ----
    pooled = jnp.sum(h2.reshape(bt, hw, c), axis=1) * (1.0 / hw)     # (bt, C)
    pooled_ref[...] = pooled.reshape(pooled_ref.shape).astype(pooled_ref.dtype)


def _pick_block_b(batch, cap=8):
    """Largest divisor of `batch` keeping >= 2 grid steps, capped at `cap`."""
    if batch < 2:
        return 1
    best = 1
    for cand in range(2, min(batch // 2, cap) + 1):
        if batch % cand == 0:
            best = cand
    return best


def _vmem_limit_bytes(bt, H, W, Cin, C):
    x_tile = 2 * bt * H * W * Cin * 2                  # bf16 x, double-buffered
    pad = bt * (H + 2) * (W + 2) * C * 4               # f32 pad scratch
    col = bt * H * W * 9 * C * 2                       # bf16 im2col scratch
    temps = 6 * bt * H * W * C * 4                     # f32 value temps
    wts = (Cin * C + 9 * C * C) * 2 + 8 * C * 4
    out = 2 * bt * C * 4
    est = x_tile + pad + col + temps + wts + out
    return int(min(56 << 20, max(32 << 20, 2 * est)))  # <= v7x physical VMEM


def point_gen_forward(x_nchw, params, *, image_size=1024, num_points=1,
                      block_b=None):
    B, Cin, H, W = x_nchw.shape
    C = params["w1"].shape[1]

    if block_b is None:
        block_b = _pick_block_b(B)
    assert B % block_b == 0, "batch must be divisible by block_b"
    nb = B // block_b

    # NCHW -> NHWC; bf16 MXU operands (halves HBM DMA bytes for x / weights).
    x = jnp.transpose(x_nchw, (0, 2, 3, 1)).astype(jnp.bfloat16)
    w1 = params["w1"].astype(jnp.bfloat16)                 # (Cin, C)
    w2 = params["w2"].reshape(9 * C, C).astype(jnp.bfloat16)

    kern = functools.partial(point_gen_kernel, bt=block_b, h=H, w=W, c=C)

    pooled = pl.pallas_call(
        kern,
        out_shape=jax.ShapeDtypeStruct((nb, block_b, C), jnp.float32),
        grid_spec=pltpu.PrefetchScalarGridSpec(
            num_scalar_prefetch=0,
            grid=(nb,),
            in_specs=[
                pl.BlockSpec((block_b, H, W, Cin), lambda b: (b, 0, 0, 0)),  # x
                pl.BlockSpec((Cin, C), lambda b: (0, 0)),                    # w1
                pl.BlockSpec((1, C), lambda b: (0, 0)),                      # b1
                pl.BlockSpec((1, C), lambda b: (0, 0)),                      # ln1 gamma
                pl.BlockSpec((1, C), lambda b: (0, 0)),                      # ln1 beta
                pl.BlockSpec((9 * C, C), lambda b: (0, 0)),                  # w2 (im2col)
                pl.BlockSpec((1, C), lambda b: (0, 0)),                      # b2
                pl.BlockSpec((1, C), lambda b: (0, 0)),                      # ln2 gamma
                pl.BlockSpec((1, C), lambda b: (0, 0)),                      # ln2 beta
            ],
            out_specs=pl.BlockSpec((1, block_b, C), lambda b: (b, 0, 0)),
            scratch_shapes=[
                pltpu.VMEM((block_b, H + 2, W + 2, C), jnp.float32),   # padded h1
                pltpu.VMEM((block_b * H * W, 9 * C), jnp.bfloat16),    # im2col
            ],
        ),
        compiler_params=pltpu.CompilerParams(
            dimension_semantics=("parallel",),
            vmem_limit_bytes=_vmem_limit_bytes(block_b, H, W, Cin, C)),
    )(x, w1, params["b1"], params["g1"], params["be1"],
      w2, params["b2"], params["g2"], params["be2"])

    # Tiny FC + sigmoid (2 output lanes) stays in the wrapper in f32.
    pooled = pooled.reshape(B, C)
    logits = jnp.dot(pooled, params["fcw"]) + params["fcb"][0]
    pts = jax.nn.sigmoid(logits) * image_size
    return pts.reshape(B, num_points, 2)


def make_params(key, cin=256, c=128, num_points=1):
    ks = jax.random.split(key, 6)
    return {
        "w1": 0.02 * jax.random.normal(ks[0], (cin, c), jnp.float32),
        "b1": 0.01 * jax.random.normal(ks[1], (1, c), jnp.float32),
        "g1": jnp.ones((1, c), jnp.float32),
        "be1": jnp.zeros((1, c), jnp.float32),
        "w2": 0.02 * jax.random.normal(ks[2], (9, c, c), jnp.float32),
        "b2": 0.01 * jax.random.normal(ks[3], (1, c), jnp.float32),
        "g2": jnp.ones((1, c), jnp.float32),
        "be2": jnp.zeros((1, c), jnp.float32),
        "fcw": 0.05 * jax.random.normal(ks[4], (c, 2 * num_points), jnp.float32),
        "fcb": 0.01 * jax.random.normal(ks[5], (1, 2 * num_points), jnp.float32),
    }


def reference_forward(x_nchw, p, *, image_size=1024, num_points=1,
                      conv_dtype=jnp.float32):
    """Pure-JAX reference mirroring the PyTorch forward.

    conv_dtype=bfloat16 applies the same MXU-operand rounding as the kernel
    (f32 accumulation, f32 LayerNorm, f32 FC) for a tight comparison.
    """
    cast = lambda a: a.astype(conv_dtype)
    x = jnp.transpose(x_nchw, (0, 2, 3, 1))
    B, H, W, _ = x.shape
    C = p["w1"].shape[1]

    h1 = jnp.einsum("bhwc,cd->bhwd", cast(x), cast(p["w1"]),
                    preferred_element_type=jnp.float32) + p["b1"][0]
    mu = h1.mean(-1, keepdims=True)
    var = ((h1 - mu) ** 2).mean(-1, keepdims=True)
    h1 = (h1 - mu) / jnp.sqrt(var + EPS) * p["g1"][0] + p["be1"][0]

    pad = jnp.pad(cast(h1), ((0, 0), (1, 1), (1, 1), (0, 0)))
    acc = jnp.zeros((B, H, W, C), jnp.float32) + p["b2"][0]
    for k in range(9):
        dy, dx = divmod(k, 3)
        acc = acc + jnp.einsum("bhwc,cd->bhwd",
                               pad[:, dy:dy + H, dx:dx + W, :],
                               cast(p["w2"][k]),
                               preferred_element_type=jnp.float32)
    mu = acc.mean(-1, keepdims=True)
    var = ((acc - mu) ** 2).mean(-1, keepdims=True)
    h2 = (acc - mu) / jnp.sqrt(var + EPS) * p["g2"][0] + p["be2"][0]

    pooled = h2.mean(axis=(1, 2)).astype(jnp.float32)
    logits = pooled @ p["fcw"] + p["fcb"][0]
    return (jax.nn.sigmoid(logits) * image_size).reshape(B, num_points, 2)


if __name__ == "__main__":
    # Cin=256 and C=128 are fixed by the module definition; small spatial dims.
    B, Cin, H, W = 4, 256, 16, 16
    image_size, num_points = 1024, 1

    key = jax.random.PRNGKey(0)
    kx, kp = jax.random.split(key)
    x = jax.random.normal(kx, (B, Cin, H, W), jnp.float32)
    params = make_params(kp, cin=Cin, c=128, num_points=num_points)

    # Default heuristic -> block_b=2, grid=(2,): batched steps, both TCs busy.
    out = point_gen_forward(x, params, image_size=image_size,
                            num_points=num_points)
    out = jax.block_until_ready(out)
    assert out.shape == (B, num_points, 2)

    # Tight check vs. a reference with the same bf16 MXU-input rounding.
    ref_bf16 = reference_forward(x, params, image_size=image_size,
                                 num_points=num_points,
                                 conv_dtype=jnp.bfloat16)
    assert jnp.allclose(out, ref_bf16, rtol=5e-3, atol=1.0), (out, ref_bf16)

    # Loose sanity check vs. the pure-f32 reference (outputs span [0, 1024]).
    ref_f32 = reference_forward(x, params, image_size=image_size,
                                num_points=num_points,
                                conv_dtype=jnp.float32)
    assert jnp.allclose(out, ref_f32, rtol=2e-2, atol=8.0), (out, ref_f32)

    print("KERNEL_OK")
</pallas_src>

<mosaic_0001>
module attributes {stable_mosaic.version = 11 : i64} {
  func.func @point_gen_kernel(%arg0: i32, %arg1: memref<2x16x16x256xbf16, #tpu.memory_space<vmem>>, %arg2: memref<256x128xbf16, #tpu.memory_space<vmem>>, %arg3: memref<1x128xf32, #tpu.memory_space<vmem>>, %arg4: memref<1x128xf32, #tpu.memory_space<vmem>>, %arg5: memref<1x128xf32, #tpu.memory_space<vmem>>, %arg6: memref<1152x128xbf16, #tpu.memory_space<vmem>>, %arg7: memref<1x128xf32, #tpu.memory_space<vmem>>, %arg8: memref<1x128xf32, #tpu.memory_space<vmem>>, %arg9: memref<1x128xf32, #tpu.memory_space<vmem>>, %arg10: memref<1x2x128xf32, #tpu.memory_space<vmem>>, %arg11: memref<2x18x18x128xf32, #tpu.memory_space<vmem>>, %arg12: memref<512x1152xbf16, #tpu.memory_space<vmem>>) attributes {dimension_semantics = [#tpu.dimension_semantics<parallel>], iteration_bounds = array<i64: 2>, scalar_prefetch = 0 : i64, scratch_operands = 2 : i64, tpu.core_type = #tpu.core_type<tc>, window_params = [{transform_indices = @transform_0, window_bounds = array<i64: 2, 16, 16, 256>}, {pipeline_mode = #tpu.pipeline_mode<synchronous>, transform_indices = @transform_1, window_bounds = array<i64: 256, 128>}, {pipeline_mode = #tpu.pipeline_mode<synchronous>, transform_indices = @transform_2, window_bounds = array<i64: 1, 128>}, {pipeline_mode = #tpu.pipeline_mode<synchronous>, transform_indices = @transform_3, window_bounds = array<i64: 1, 128>}, {pipeline_mode = #tpu.pipeline_mode<synchronous>, transform_indices = @transform_4, window_bounds = array<i64: 1, 128>}, {pipeline_mode = #tpu.pipeline_mode<synchronous>, transform_indices = @transform_5, window_bounds = array<i64: 1152, 128>}, {pipeline_mode = #tpu.pipeline_mode<synchronous>, transform_indices = @transform_6, window_bounds = array<i64: 1, 128>}, {pipeline_mode = #tpu.pipeline_mode<synchronous>, transform_indices = @transform_7, window_bounds = array<i64: 1, 128>}, {pipeline_mode = #tpu.pipeline_mode<synchronous>, transform_indices = @transform_8, window_bounds = array<i64: 1, 128>}, {transform_indices = @transform_9, window_bounds = array<i64: 1, 2, 128>}]} {
    %c0 = arith.constant 0 : index
    %c0_0 = arith.constant 0 : index
    %c0_1 = arith.constant 0 : index
    %c0_2 = arith.constant 0 : index
    %0 = vector.load %arg1[%c0, %c0_0, %c0_1, %c0_2] : memref<2x16x16x256xbf16, #tpu.memory_space<vmem>>, vector<2x16x16x256xbf16>
    %1 = vector.shape_cast %0 : vector<2x16x16x256xbf16> to vector<512x256xbf16>
    %c0_3 = arith.constant 0 : index
    %c0_4 = arith.constant 0 : index
    %2 = vector.load %arg2[%c0_3, %c0_4] : memref<256x128xbf16, #tpu.memory_space<vmem>>, vector<256x128xbf16>
    %cst = arith.constant dense<0.000000e+00> : vector<512x128xf32>
    %3 = tpu.matmul %1, %2, %cst {dimension_numbers = #tpu.dot_dimension_numbers<[1], [0], [0], [1], [0, 0, 1, 1], [], []>} : vector<512x256xbf16>, vector<256x128xbf16>, vector<512x128xf32> -> vector<512x128xf32>
    %c0_5 = arith.constant 0 : index
    %c0_6 = arith.constant 0 : index
    %4 = vector.load %arg3[%c0_5, %c0_6] : memref<1x128xf32, #tpu.memory_space<vmem>>, vector<1x128xf32>
    %5 = vector.broadcast %4 : vector<1x128xf32> to vector<512x128xf32>
    %6 = arith.addf %3, %5 : vector<512x128xf32>
    %cst_7 = arith.constant dense<0.000000e+00> : vector<512xf32>
    %7 = vector.multi_reduction <add>, %6, %cst_7 [1] : vector<512x128xf32> to vector<512xf32>
    %8 = vector.shape_cast %7 : vector<512xf32> to vector<512x1xf32>
    %cst_8 = arith.constant 7.812500e-03 : f32
    %9 = vector.broadcast %cst_8 : f32 to vector<512x1xf32>
    %10 = arith.mulf %8, %9 : vector<512x1xf32>
    %11 = vector.broadcast %10 : vector<512x1xf32> to vector<512x128xf32>
    %12 = arith.subf %6, %11 : vector<512x128xf32>
    %13 = arith.mulf %12, %12 : vector<512x128xf32>
    %cst_9 = arith.constant dense<0.000000e+00> : vector<512xf32>
    %14 = vector.multi_reduction <add>, %13, %cst_9 [1] : vector<512x128xf32> to vector<512xf32>
    %15 = vector.shape_cast %14 : vector<512xf32> to vector<512x1xf32>
    %cst_10 = arith.constant 7.812500e-03 : f32
    %16 = vector.broadcast %cst_10 : f32 to vector<512x1xf32>
    %17 = arith.mulf %15, %16 : vector<512x1xf32>
    %cst_11 = arith.constant 9.99999997E-7 : f32
    %18 = vector.broadcast %cst_11 : f32 to vector<512x1xf32>
    %19 = arith.addf %17, %18 : vector<512x1xf32>
    %20 = math.rsqrt %19 : vector<512x1xf32>
    %21 = vector.broadcast %20 : vector<512x1xf32> to vector<512x128xf32>
    %22 = arith.mulf %12, %21 : vector<512x128xf32>
    %c0_12 = arith.constant 0 : index
    %c0_13 = arith.constant 0 : index
    %23 = vector.load %arg4[%c0_12, %c0_13] : memref<1x128xf32, #tpu.memory_space<vmem>>, vector<1x128xf32>
    %24 = vector.broadcast %23 : vector<1x128xf32> to vector<512x128xf32>
    %25 = arith.mulf %22, %24 : vector<512x128xf32>
    %c0_14 = arith.constant 0 : index
    %c0_15 = arith.constant 0 : index
    %26 = vector.load %arg5[%c0_14, %c0_15] : memref<1x128xf32, #tpu.memory_space<vmem>>, vector<1x128xf32>
    %27 = vector.broadcast %26 : vector<1x128xf32> to vector<512x128xf32>
    %28 = arith.addf %25, %27 : vector<512x128xf32>
    %cst_16 = arith.constant 0.000000e+00 : f32
    %29 = vector.broadcast %cst_16 : f32 to vector<2x1x18x128xf32>
    %cst_17 = arith.constant 0.000000e+00 : f32
    %30 = vector.broadcast %cst_17 : f32 to vector<2x18x1x128xf32>
    %c0_18 = arith.constant 0 : index
    %c0_19 = arith.constant 0 : index
    %c0_20 = arith.constant 0 : index
    %c0_21 = arith.constant 0 : index
    %31 = vector.load %arg11[%c0_18, %c0_19, %c0_20, %c0_21] : memref<2x18x18x128xf32, #tpu.memory_space<vmem>>, vector<2x1x18x128xf32>
    tpu.vector_store %arg11[%c0_18, %c0_19, %c0_20, %c0_21], %29 {strides = array<i32>} : memref<2x18x18x128xf32, #tpu.memory_space<vmem>>, vector<2x1x18x128xf32>,
    %c0_22 = arith.constant 0 : index
    %c17 = arith.constant 17 : index
    %c0_23 = arith.constant 0 : index
    %c0_24 = arith.constant 0 : index
    %32 = vector.load %arg11[%c0_22, %c17, %c0_23, %c0_24] : memref<2x18x18x128xf32, #tpu.memory_space<vmem>>, vector<2x1x18x128xf32>
    tpu.vector_store %arg11[%c0_22, %c17, %c0_23, %c0_24], %29 {strides = array<i32>} : memref<2x18x18x128xf32, #tpu.memory_space<vmem>>, vector<2x1x18x128xf32>,
    %c0_25 = arith.constant 0 : index
    %c0_26 = arith.constant 0 : index
    %c0_27 = arith.constant 0 : index
    %c0_28 = arith.constant 0 : index
    %33 = vector.load %arg11[%c0_25, %c0_26, %c0_27, %c0_28] : memref<2x18x18x128xf32, #tpu.memory_space<vmem>>, vector<2x18x1x128xf32>
    tpu.vector_store %arg11[%c0_25, %c0_26, %c0_27, %c0_28], %30 {strides = array<i32>} : memref<2x18x18x128xf32, #tpu.memory_space<vmem>>, vector<2x18x1x128xf32>,
    %c0_29 = arith.constant 0 : index
    %c0_30 = arith.constant 0 : index
    %c17_31 = arith.constant 17 : index
    %c0_32 = arith.constant 0 : index
    %34 = vector.load %arg11[%c0_29, %c0_30, %c17_31, %c0_32] : memref<2x18x18x128xf32, #tpu.memory_space<vmem>>, vector<2x18x1x128xf32>
    tpu.vector_store %arg11[%c0_29, %c0_30, %c17_31, %c0_32], %30 {strides = array<i32>} : memref<2x18x18x128xf32, #tpu.memory_space<vmem>>, vector<2x18x1x128xf32>,
    %35 = vector.shape_cast %28 : vector<512x128xf32> to vector<2x16x16x128xf32>
    %c0_33 = arith.constant 0 : index
    %c1 = arith.constant 1 : index
    %c1_34 = arith.constant 1 : index
    %c0_35 = arith.constant 0 : index
    %36 = vector.load %arg11[%c0_33, %c1, %c1_34, %c0_35] : memref<2x18x18x128xf32, #tpu.memory_space<vmem>>, vector<2x16x16x128xf32>
    tpu.vector_store %arg11[%c0_33, %c1, %c1_34, %c0_35], %35 {strides = array<i32>} : memref<2x18x18x128xf32, #tpu.memory_space<vmem>>, vector<2x16x16x128xf32>,
    %c0_36 = arith.constant 0 : index
    %c0_37 = arith.constant 0 : index
    %c0_38 = arith.constant 0 : index
    %c0_39 = arith.constant 0 : index
    %37 = vector.load %arg11[%c0_36, %c0_37, %c0_38, %c0_39] : memref<2x18x18x128xf32, #tpu.memory_space<vmem>>, vector<2x16x18x128xf32>
    %38 = vector.extract_strided_slice %37 {offsets = [0, 0, 0, 0], sizes = [2, 16, 16, 128], strides = [1, 1, 1, 1]} : vector<2x16x18x128xf32> to vector<2x16x16x128xf32>
    %39 = vector.shape_cast %38 : vector<2x16x16x128xf32> to vector<512x128xf32>
    %40 = arith.truncf %39 : vector<512x128xf32> to vector<512x128xbf16>
    %c0_40 = arith.constant 0 : index
    %c0_41 = arith.constant 0 : index
    %41 = vector.load %arg12[%c0_40, %c0_41] : memref<512x1152xbf16, #tpu.memory_space<vmem>>, vector<512x128xbf16>
    tpu.vector_store %arg12[%c0_40, %c0_41], %40 {strides = array<i32>} : memref<512x1152xbf16, #tpu.memory_space<vmem>>, vector<512x128xbf16>,
    %42 = vector.extract_strided_slice %37 {offsets = [0, 0, 1, 0], sizes = [2, 16, 16, 128], strides = [1, 1, 1, 1]} : vector<2x16x18x128xf32> to vector<2x16x16x128xf32>
    %43 = vector.shape_cast %42 : vector<2x16x16x128xf32> to vector<512x128xf32>
    %44 = arith.truncf %43 : vector<512x128xf32> to vector<512x128xbf16>
    %c0_42 = arith.constant 0 : index
    %c128 = arith.constant 128 : index
    %45 = vector.load %arg12[%c0_42, %c128] : memref<512x1152xbf16, #tpu.memory_space<vmem>>, vector<512x128xbf16>
    tpu.vector_store %arg12[%c0_42, %c128], %44 {strides = array<i32>} : memref<512x1152xbf16, #tpu.memory_space<vmem>>, vector<512x128xbf16>,
    %46 = vector.extract_strided_slice %37 {offsets = [0, 0, 2, 0], sizes = [2, 16, 16, 128], strides = [1, 1, 1, 1]} : vector<2x16x18x128xf32> to vector<2x16x16x128xf32>
    %47 = vector.shape_cast %46 : vector<2x16x16x128xf32> to vector<512x128xf32>
    %48 = arith.truncf %47 : vector<512x128xf32> to vector<512x128xbf16>
    %c0_43 = arith.constant 0 : index
    %c256 = arith.constant 256 : index
    %49 = vector.load %arg12[%c0_43, %c256] : memref<512x1152xbf16, #tpu.memory_space<vmem>>, vector<512x128xbf16>
    tpu.vector_store %arg12[%c0_43, %c256], %48 {strides = array<i32>} : memref<512x1152xbf16, #tpu.memory_space<vmem>>, vector<512x128xbf16>,
    %c0_44 = arith.constant 0 : index
    %c1_45 = arith.constant 1 : index
    %c0_46 = arith.constant 0 : index
    %c0_47 = arith.constant 0 : index
    %50 = vector.load %arg11[%c0_44, %c1_45, %c0_46, %c0_47] : memref<2x18x18x128xf32, #tpu.memory_space<vmem>>, vector<2x16x18x128xf32>
    %51 = vector.extract_strided_slice %50 {offsets = [0, 0, 0, 0], sizes = [2, 16, 16, 128], strides = [1, 1, 1, 1]} : vector<2x16x18x128xf32> to vector<2x16x16x128xf32>
    %52 = vector.shape_cast %51 : vector<2x16x16x128xf32> to vector<512x128xf32>
    %53 = arith.truncf %52 : vector<512x128xf32> to vector<512x128xbf16>
    %c0_48 = arith.constant 0 : index
    %c384 = arith.constant 384 : index
    %54 = vector.load %arg12[%c0_48, %c384] : memref<512x1152xbf16, #tpu.memory_space<vmem>>, vector<512x128xbf16>
    tpu.vector_store %arg12[%c0_48, %c384], %53 {strides = array<i32>} : memref<512x1152xbf16, #tpu.memory_space<vmem>>, vector<512x128xbf16>,
    %55 = vector.extract_strided_slice %50 {offsets = [0, 0, 1, 0], sizes = [2, 16, 16, 128], strides = [1, 1, 1, 1]} : vector<2x16x18x128xf32> to vector<2x16x16x128xf32>
    %56 = vector.shape_cast %55 : vector<2x16x16x128xf32> to vector<512x128xf32>
    %57 = arith.truncf %56 : vector<512x128xf32> to vector<512x128xbf16>
    %c0_49 = arith.constant 0 : index
    %c512 = arith.constant 512 : index
    %58 = vector.load %arg12[%c0_49, %c512] : memref<512x1152xbf16, #tpu.memory_space<vmem>>, vector<512x128xbf16>
    tpu.vector_store %arg12[%c0_49, %c512], %57 {strides = array<i32>} : memref<512x1152xbf16, #tpu.memory_space<vmem>>, vector<512x128xbf16>,
    %59 = vector.extract_strided_slice %50 {offsets = [0, 0, 2, 0], sizes = [2, 16, 16, 128], strides = [1, 1, 1, 1]} : vector<2x16x18x128xf32> to vector<2x16x16x128xf32>
    %60 = vector.shape_cast %59 : vector<2x16x16x128xf32> to vector<512x128xf32>
    %61 = arith.truncf %60 : vector<512x128xf32> to vector<512x128xbf16>
    %c0_50 = arith.constant 0 : index
    %c640 = arith.constant 640 : index
    %62 = vector.load %arg12[%c0_50, %c640] : memref<512x1152xbf16, #tpu.memory_space<vmem>>, vector<512x128xbf16>
    tpu.vector_store %arg12[%c0_50, %c640], %61 {strides = array<i32>} : memref<512x1152xbf16, #tpu.memory_space<vmem>>, vector<512x128xbf16>,
    %c0_51 = arith.constant 0 : index
    %c2 = arith.constant 2 : index
    %c0_52 = arith.constant 0 : index
    %c0_53 = arith.constant 0 : index
    %63 = vector.load %arg11[%c0_51, %c2, %c0_52, %c0_53] : memref<2x18x18x128xf32, #tpu.memory_space<vmem>>, vector<2x16x18x128xf32>
    %64 = vector.extract_strided_slice %63 {offsets = [0, 0, 0, 0], sizes = [2, 16, 16, 128], strides = [1, 1, 1, 1]} : vector<2x16x18x128xf32> to vector<2x16x16x128xf32>
    %65 = vector.shape_cast %64 : vector<2x16x16x128xf32> to vector<512x128xf32>
    %66 = arith.truncf %65 : vector<512x128xf32> to vector<512x128xbf16>
    %c0_54 = arith.constant 0 : index
    %c768 = arith.constant 768 : index
    %67 = vector.load %arg12[%c0_54, %c768] : memref<512x1152xbf16, #tpu.memory_space<vmem>>, vector<512x128xbf16>
    tpu.vector_store %arg12[%c0_54, %c768], %66 {strides = array<i32>} : memref<512x1152xbf16, #tpu.memory_space<vmem>>, vector<512x128xbf16>,
    %68 = vector.extract_strided_slice %63 {offsets = [0, 0, 1, 0], sizes = [2, 16, 16, 128], strides = [1, 1, 1, 1]} : vector<2x16x18x128xf32> to vector<2x16x16x128xf32>
    %69 = vector.shape_cast %68 : vector<2x16x16x128xf32> to vector<512x128xf32>
    %70 = arith.truncf %69 : vector<512x128xf32> to vector<512x128xbf16>
    %c0_55 = arith.constant 0 : index
    %c896 = arith.constant 896 : index
    %71 = vector.load %arg12[%c0_55, %c896] : memref<512x1152xbf16, #tpu.memory_space<vmem>>, vector<512x128xbf16>
    tpu.vector_store %arg12[%c0_55, %c896], %70 {strides = array<i32>} : memref<512x1152xbf16, #tpu.memory_space<vmem>>, vector<512x128xbf16>,
    %72 = vector.extract_strided_slice %63 {offsets = [0, 0, 2, 0], sizes = [2, 16, 16, 128], strides = [1, 1, 1, 1]} : vector<2x16x18x128xf32> to vector<2x16x16x128xf32>
    %73 = vector.shape_cast %72 : vector<2x16x16x128xf32> to vector<512x128xf32>
    %74 = arith.truncf %73 : vector<512x128xf32> to vector<512x128xbf16>
    %c0_56 = arith.constant 0 : index
    %c1024 = arith.constant 1024 : index
    %75 = vector.load %arg12[%c0_56, %c1024] : memref<512x1152xbf16, #tpu.memory_space<vmem>>, vector<512x128xbf16>
    tpu.vector_store %arg12[%c0_56, %c1024], %74 {strides = array<i32>} : memref<512x1152xbf16, #tpu.memory_space<vmem>>, vector<512x128xbf16>,
    %c0_57 = arith.constant 0 : index
    %c0_58 = arith.constant 0 : index
    %76 = vector.load %arg12[%c0_57, %c0_58] : memref<512x1152xbf16, #tpu.memory_space<vmem>>, vector<512x1152xbf16>
    %c0_59 = arith.constant 0 : index
    %c0_60 = arith.constant 0 : index
    %77 = vector.load %arg6[%c0_59, %c0_60] : memref<1152x128xbf16, #tpu.memory_space<vmem>>, vector<1152x128xbf16>
    %cst_61 = arith.constant dense<0.000000e+00> : vector<512x128xf32>
    %78 = tpu.matmul %76, %77, %cst_61 {dimension_numbers = #tpu.dot_dimension_numbers<[1], [0], [0], [1], [0, 0, 1, 1], [], []>} : vector<512x1152xbf16>, vector<1152x128xbf16>, vector<512x128xf32> -> vector<512x128xf32>
    %c0_62 = arith.constant 0 : index
    %c0_63 = arith.constant 0 : index
    %79 = vector.load %arg7[%c0_62, %c0_63] : memref<1x128xf32, #tpu.memory_space<vmem>>, vector<1x128xf32>
    %80 = vector.broadcast %79 : vector<1x128xf32> to vector<512x128xf32>
    %81 = arith.addf %78, %80 : vector<512x128xf32>
    %cst_64 = arith.constant dense<0.000000e+00> : vector<512xf32>
    %82 = vector.multi_reduction <add>, %81, %cst_64 [1] : vector<512x128xf32> to vector<512xf32>
    %83 = vector.shape_cast %82 : vector<512xf32> to vector<512x1xf32>
    %cst_65 = arith.constant 7.812500e-03 : f32
    %84 = vector.broadcast %cst_65 : f32 to vector<512x1xf32>
    %85 = arith.mulf %83, %84 : vector<512x1xf32>
    %86 = vector.broadcast %85 : vector<512x1xf32> to vector<512x128xf32>
    %87 = arith.subf %81, %86 : vector<512x128xf32>
    %88 = arith.mulf %87, %87 : vector<512x128xf32>
    %cst_66 = arith.constant dense<0.000000e+00> : vector<512xf32>
    %89 = vector.multi_reduction <add>, %88, %cst_66 [1] : vector<512x128xf32> to vector<512xf32>
    %90 = vector.shape_cast %89 : vector<512xf32> to vector<512x1xf32>
    %cst_67 = arith.constant 7.812500e-03 : f32
    %91 = vector.broadcast %cst_67 : f32 to vector<512x1xf32>
    %92 = arith.mulf %90, %91 : vector<512x1xf32>
    %cst_68 = arith.constant 9.99999997E-7 : f32
    %93 = vector.broadcast %cst_68 : f32 to vector<512x1xf32>
    %94 = arith.addf %92, %93 : vector<512x1xf32>
    %95 = math.rsqrt %94 : vector<512x1xf32>
    %96 = vector.broadcast %95 : vector<512x1xf32> to vector<512x128xf32>
    %97 = arith.mulf %87, %96 : vector<512x128xf32>
    %c0_69 = arith.constant 0 : index
    %c0_70 = arith.constant 0 : index
    %98 = vector.load %arg8[%c0_69, %c0_70] : memref<1x128xf32, #tpu.memory_space<vmem>>, vector<1x128xf32>
    %99 = vector.broadcast %98 : vector<1x128xf32> to vector<512x128xf32>
    %100 = arith.mulf %97, %99 : vector<512x128xf32>
    %c0_71 = arith.constant 0 : index
    %c0_72 = arith.constant 0 : index
    %101 = vector.load %arg9[%c0_71, %c0_72] : memref<1x128xf32, #tpu.memory_space<vmem>>, vector<1x128xf32>
    %102 = vector.broadcast %101 : vector<1x128xf32> to vector<512x128xf32>
    %103 = arith.addf %100, %102 : vector<512x128xf32>
    %104 = vector.shape_cast %103 : vector<512x128xf32> to vector<2x256x128xf32>
    %cst_73 = arith.constant dense<0.000000e+00> : vector<2x128xf32>
    %105 = vector.multi_reduction <add>, %104, %cst_73 [1] : vector<2x256x128xf32> to vector<2x128xf32>
    %cst_74 = arith.constant 3.906250e-03 : f32
    %106 = vector.broadcast %cst_74 : f32 to vector<2x128xf32>
    %107 = arith.mulf %105, %106 : vector<2x128xf32>
    %108 = vector.shape_cast %107 : vector<2x128xf32> to vector<1x2x128xf32>
    %c0_75 = arith.constant 0 : index
    %c0_76 = arith.constant 0 : index
    %c0_77 = arith.constant 0 : index
    %109 = vector.load %arg10[%c0_75, %c0_76, %c0_77] : memref<1x2x128xf32, #tpu.memory_space<vmem>>, vector<1x2x128xf32>
    tpu.vector_store %arg10[%c0_75, %c0_76, %c0_77], %108 {strides = array<i32>} : memref<1x2x128xf32, #tpu.memory_space<vmem>>, vector<1x2x128xf32>,
    return
  }
  func.func @transform_0(%arg0: i32) -> (i32, i32, i32, i32) {
    %c0_i32 = arith.constant 0 : i32
    %c0_i32_0 = arith.constant 0 : i32
    %c0_i32_1 = arith.constant 0 : i32
    %c0_i32_2 = arith.constant 0 : i32
    return %arg0, %c0_i32, %c0_i32_0, %c0_i32_1 : i32, i32, i32, i32
  }
  func.func @transform_1(%arg0: i32) -> (i32, i32) {
    %c0_i32 = arith.constant 0 : i32
    %c0_i32_0 = arith.constant 0 : i32
    %c0_i32_1 = arith.constant 0 : i32
    return %c0_i32, %c0_i32_0 : i32, i32
  }
  func.func @transform_2(%arg0: i32) -> (i32, i32) {
    %c0_i32 = arith.constant 0 : i32
    %c0_i32_0 = arith.constant 0 : i32
    %c0_i32_1 = arith.constant 0 : i32
    return %c0_i32, %c0_i32_0 : i32, i32
  }
  func.func @transform_3(%arg0: i32) -> (i32, i32) {
    %c0_i32 = arith.constant 0 : i32
    %c0_i32_0 = arith.constant 0 : i32
    %c0_i32_1 = arith.constant 0 : i32
    return %c0_i32, %c0_i32_0 : i32, i32
  }
  func.func @transform_4(%arg0: i32) -> (i32, i32) {
    %c0_i32 = arith.constant 0 : i32
    %c0_i32_0 = arith.constant 0 : i32
    %c0_i32_1 = arith.constant 0 : i32
    return %c0_i32, %c0_i32_0 : i32, i32
  }
  func.func @transform_5(%arg0: i32) -> (i32, i32) {
    %c0_i32 = arith.constant 0 : i32
    %c0_i32_0 = arith.constant 0 : i32
    %c0_i32_1 = arith.constant 0 : i32
    return %c0_i32, %c0_i32_0 : i32, i32
  }
  func.func @transform_6(%arg0: i32) -> (i32, i32) {
    %c0_i32 = arith.constant 0 : i32
    %c0_i32_0 = arith.constant 0 : i32
    %c0_i32_1 = arith.constant 0 : i32
    return %c0_i32, %c0_i32_0 : i32, i32
  }
  func.func @transform_7(%arg0: i32) -> (i32, i32) {
    %c0_i32 = arith.constant 0 : i32
    %c0_i32_0 = arith.constant 0 : i32
    %c0_i32_1 = arith.constant 0 : i32
    return %c0_i32, %c0_i32_0 : i32, i32
  }
  func.func @transform_8(%arg0: i32) -> (i32, i32) {
    %c0_i32 = arith.constant 0 : i32
    %c0_i32_0 = arith.constant 0 : i32
    %c0_i32_1 = arith.constant 0 : i32
    return %c0_i32, %c0_i32_0 : i32, i32
  }
  func.func @transform_9(%arg0: i32) -> (i32, i32, i32) {
    %c0_i32 = arith.constant 0 : i32
    %c0_i32_0 = arith.constant 0 : i32
    %c0_i32_1 = arith.constant 0 : i32
    return %arg0, %c0_i32, %c0_i32_0 : i32, i32, i32
  }
}

</mosaic_0001>

<llo_original>
// kernel: tpu_custom_call.1
$region0: #{tpu_custom_call.1}
  #allocation0 [shape = 'u32[]', space=smem, size = 0x4, offset = 0x4, fixed_abs, tag = 'smem constant byte address 0x4 - core index']
  #allocation1 [shape = 'u32[72,128]{1,0:T(1,128)}', space=vmem, size = 0x9000, scoped, tag = 'internal scratch']
  #allocation2 [shape = 'f32[2,18,18,128]{3,2,1,0:T(8,128)}', space=vmem, size = 0x6c000, scoped, tag = 'scratch operand']
  #allocation3 [shape = 'bf16[512,1152]{1,0:T(8,128)(2,1)}', space=vmem, size = 0x120000, scoped, tag = 'scratch operand']
  %s0 = inlined_call_operand.hbm [shape: bf16[4,16,16,256], index: 0, kind: input, shape index: {}]
  %s1 = inlined_call_operand.hbm [shape: bf16[256,128], index: 1, kind: input, shape index: {}]
  %s2 = inlined_call_operand.vmem [shape: f32[1,128], index: 2, kind: input, shape index: {}]
  %s3 = inlined_call_operand.vmem [shape: f32[1,128], index: 3, kind: input, shape index: {}]
  %s4 = inlined_call_operand.vmem [shape: f32[1,128], index: 4, kind: input, shape index: {}]
  %s5 = inlined_call_operand.hbm [shape: bf16[1152,128], index: 5, kind: input, shape index: {}]
  %s6 = inlined_call_operand.vmem [shape: f32[1,128], index: 6, kind: input, shape index: {}]
  %s7 = inlined_call_operand.vmem [shape: f32[1,128], index: 7, kind: input, shape index: {}]
  %s8 = inlined_call_operand.vmem [shape: f32[1,128], index: 8, kind: input, shape index: {}]
  %s9 = inlined_call_operand.hbm [shape: f32[2,2,128], index: 9, kind: output, shape index: {}]
  %s10 = sld [smem:[#allocation0]]
  $region81: #{tpu_custom_call.1} parent=0
    _
  %s12 = ssub.s32 1, %s10
  %s13 = scalar_select 0, %s12, %s10
  $region1: #{tpu_custom_call.1} parent=0
    #allocation4 [shape = 'u8[524288]{0}', space=vmem, size = 0x80000, scoped, tag = 'input window, operand 0']
    #allocation5 [shape = 's32[2]{0}', space=sflag, size = 0x8, scoped, tag = 'scoped memory for tpu_custom_call.1']
    #allocation6 [shape = 's32[2]{0}', space=sflag, size = 0x8, scoped, tag = 'scoped memory for tpu_custom_call.1']
    #allocation7 [shape = 'u8[65536]{0}', space=vmem, size = 0x10000, scoped, tag = 'input window, operand 1, single buffered']
    #allocation8 [shape = 's32[1]{0}', space=sflag, size = 0x4, scoped, tag = 'scoped memory for tpu_custom_call.1']
    #allocation9 [shape = 'u8[294912]{0}', space=vmem, size = 0x48000, scoped, tag = 'input window, operand 5, single buffered']
    #allocation10 [shape = 'u8[2048]{0}', space=vmem, size = 0x800, scoped, tag = 'output window, operand 0']
    %14 = vsyncpa [#allocation5], 0
    %s15 = scalar_lea.sflag [#allocation5], 1
    %16 = vsyncpa %s15, 0
    %17 = vsyncpa [#allocation8], 0
    %18 = vsyncpa [#allocation6], 0
    %s19 = scalar_lea.sflag [#allocation6], 1
    %20 = vsyncpa %s19, 0
    loop: start=0, step=1, limit=4
    $region2: #{tpu_custom_call.1} parent=1 // loop_pre_header
      _
    $region3: #{tpu_custom_call.1} parent=1 // loop_header
      %s22 = sphi 0, %s26
      %p23 = scmp.ge.s32.totalorder %s22, 4
      %s32 = sphi 0, %s34
      %s35 = sphi 0, %s32
      %s36 = sphi 0, %s35
      %s52 = sphi 0, %s36
      %s56 = sphi 0, %s56
      %s58 = sphi 0, %s56
      %s59 = sphi 0, %s58
      %s73 = sphi 0, %s59
      %s77 = sphi 0, %s77
      %s79 = sphi 0, %s77
      %s80 = sphi 0, %s79
      %s94 = sphi 0, %s80
      %s98 = sphi 0, %s98
      %s100 = sphi 0, %s98
      %s101 = sphi 0, %s100
      %s115 = sphi 0, %s101
      %s119 = sphi 0, %s119
      %s121 = sphi 0, %s119
      %s122 = sphi 0, %s121
      %s136 = sphi 0, %s122
      %s140 = sphi 0, %s140
      %s142 = sphi 0, %s140
      %s143 = sphi 0, %s142
      %s157 = sphi 0, %s143
      %s161 = sphi 0, %s161
      %s163 = sphi 0, %s161
      %s164 = sphi 0, %s163
      %s178 = sphi 0, %s164
      %s182 = sphi 0, %s182
      %s184 = sphi 0, %s182
      %s185 = sphi 0, %s184
      %s199 = sphi 0, %s185
      %s203 = sphi 0, %s203
      %s205 = sphi 0, %s203
      %s206 = sphi 0, %s205
      %s220 = sphi 0, %s206
      %s226 = sphi 0, %s228
      %s229 = sphi 0, %s226
      %s230 = sphi 0, %s229
      %s246 = sphi 0, %s230
    $region4: #{tpu_custom_call.1} parent=1 // loop_header_branch
      %25 = sbr.rel (%p23) target = $region8
    $region5: #{tpu_custom_call.1} parent=1 // loop_body
      %s27 = ssub.s32 %s22, 1
      %s28 = ssub.s32 %s22, 2
      %s29 = sadd.s32 %s22, 1
      %s30 = ssub.s32 %s22, %s29
      %p31 = scmp.eq.s32.totalorder %s30, 0
      %s33 = sadd.s32 %s32, 1
      %s34 = scalar_select %p31, %s32, %s33
      %p37 = pneg %p31
      %p38 = scmp.eq.s32.totalorder %s22, 1
      %p39 = por %p37, %p38
      %p40 = scmp.ne.s32.totalorder %s32, %s35
      %p41 = scmp.eq.s32.totalorder %s22, 0
      %p42 = por %p40, %p41
      %p43 = scmp.ne.s32.totalorder %s32, %s35
      %p44 = scmp.eq.s32.totalorder %s27, 1
      %p45 = por %p43, %p44
      %p46 = scmp.ne.s32.totalorder %s35, %s36
      %p47 = scmp.eq.s32.totalorder %s27, 0
      %p48 = por %p46, %p47
      %p49 = scmp.ne.s32.totalorder %s35, %s36
      %p50 = scmp.eq.s32.totalorder %s28, 1
      %p51 = por %p49, %p50
      %p53 = scmp.ne.s32.totalorder %s36, %s52
      %p54 = scmp.eq.s32.totalorder %s28, 0
      %p55 = por %p53, %p54
      %s57 = sadd.s32 %s56, 1
      %p60 = scmp.eq.s32.totalorder %s22, 1
      %p61 = scmp.ne.s32.totalorder %s56, %s58
      %p62 = scmp.eq.s32.totalorder %s22, 0
      %p63 = por %p61, %p62
      %p64 = scmp.ne.s32.totalorder %s56, %s58
      %p65 = scmp.eq.s32.totalorder %s27, 1
      %p66 = por %p64, %p65
      %p67 = scmp.ne.s32.totalorder %s58, %s59
      %p68 = scmp.eq.s32.totalorder %s27, 0
      %p69 = por %p67, %p68
      %p70 = scmp.ne.s32.totalorder %s58, %s59
      %p71 = scmp.eq.s32.totalorder %s28, 1
      %p72 = por %p70, %p71
      %p74 = scmp.ne.s32.totalorder %s59, %s73
      %p75 = scmp.eq.s32.totalorder %s28, 0
      %p76 = por %p74, %p75
      %s78 = sadd.s32 %s77, 1
      %p81 = scmp.eq.s32.totalorder %s22, 1
      %p82 = scmp.ne.s32.totalorder %s77, %s79
      %p83 = scmp.eq.s32.totalorder %s22, 0
      %p84 = por %p82, %p83
      %p85 = scmp.ne.s32.totalorder %s77, %s79
      %p86 = scmp.eq.s32.totalorder %s27, 1
      %p87 = por %p85, %p86
      %p88 = scmp.ne.s32.totalorder %s79, %s80
      %p89 = scmp.eq.s32.totalorder %s27, 0
      %p90 = por %p88, %p89
      %p91 = scmp.ne.s32.totalorder %s79, %s80
      %p92 = scmp.eq.s32.totalorder %s28, 1
      %p93 = por %p91, %p92
      %p95 = scmp.ne.s32.totalorder %s80, %s94
      %p96 = scmp.eq.s32.totalorder %s28, 0
      %p97 = por %p95, %p96
      %s99 = sadd.s32 %s98, 1
      %p102 = scmp.eq.s32.totalorder %s22, 1
      %p103 = scmp.ne.s32.totalorder %s98, %s100
      %p104 = scmp.eq.s32.totalorder %s22, 0
      %p105 = por %p103, %p104
      %p106 = scmp.ne.s32.totalorder %s98, %s100
      %p107 = scmp.eq.s32.totalorder %s27, 1
      %p108 = por %p106, %p107
      %p109 = scmp.ne.s32.totalorder %s100, %s101
      %p110 = scmp.eq.s32.totalorder %s27, 0
      %p111 = por %p109, %p110
      %p112 = scmp.ne.s32.totalorder %s100, %s101
      %p113 = scmp.eq.s32.totalorder %s28, 1
      %p114 = por %p112, %p113
      %p116 = scmp.ne.s32.totalorder %s101, %s115
      %p117 = scmp.eq.s32.totalorder %s28, 0
      %p118 = por %p116, %p117
      %s120 = sadd.s32 %s119, 1
      %p123 = scmp.eq.s32.totalorder %s22, 1
      %p124 = scmp.ne.s32.totalorder %s119, %s121
      %p125 = scmp.eq.s32.totalorder %s22, 0
      %p126 = por %p124, %p125
      %p127 = scmp.ne.s32.totalorder %s119, %s121
      %p128 = scmp.eq.s32.totalorder %s27, 1
      %p129 = por %p127, %p128
      %p130 = scmp.ne.s32.totalorder %s121, %s122
      %p131 = scmp.eq.s32.totalorder %s27, 0
      %p132 = por %p130, %p131
      %p133 = scmp.ne.s32.totalorder %s121, %s122
      %p134 = scmp.eq.s32.totalorder %s28, 1
      %p135 = por %p133, %p134
      %p137 = scmp.ne.s32.totalorder %s122, %s136
      %p138 = scmp.eq.s32.totalorder %s28, 0
      %p139 = por %p137, %p138
      %s141 = sadd.s32 %s140, 1
      %p144 = scmp.eq.s32.totalorder %s22, 1
      %p145 = scmp.ne.s32.totalorder %s140, %s142
      %p146 = scmp.eq.s32.totalorder %s22, 0
      %p147 = por %p145, %p146
      %p148 = scmp.ne.s32.totalorder %s140, %s142
      %p149 = scmp.eq.s32.totalorder %s27, 1
      %p150 = por %p148, %p149
      %p151 = scmp.ne.s32.totalorder %s142, %s143
      %p152 = scmp.eq.s32.totalorder %s27, 0
      %p153 = por %p151, %p152
      %p154 = scmp.ne.s32.totalorder %s142, %s143
      %p155 = scmp.eq.s32.totalorder %s28, 1
      %p156 = por %p154, %p155
      %p158 = scmp.ne.s32.totalorder %s143, %s157
      %p159 = scmp.eq.s32.totalorder %s28, 0
      %p160 = por %p158, %p159
      %s162 = sadd.s32 %s161, 1
      %p165 = scmp.eq.s32.totalorder %s22, 1
      %p166 = scmp.ne.s32.totalorder %s161, %s163
      %p167 = scmp.eq.s32.totalorder %s22, 0
      %p168 = por %p166, %p167
      %p169 = scmp.ne.s32.totalorder %s161, %s163
      %p170 = scmp.eq.s32.totalorder %s27, 1
      %p171 = por %p169, %p170
      %p172 = scmp.ne.s32.totalorder %s163, %s164
      %p173 = scmp.eq.s32.totalorder %s27, 0
      %p174 = por %p172, %p173
      %p175 = scmp.ne.s32.totalorder %s163, %s164
      %p176 = scmp.eq.s32.totalorder %s28, 1
      %p177 = por %p175, %p176
      %p179 = scmp.ne.s32.totalorder %s164, %s178
      %p180 = scmp.eq.s32.totalorder %s28, 0
      %p181 = por %p179, %p180
      %s183 = sadd.s32 %s182, 1
      %p186 = scmp.eq.s32.totalorder %s22, 1
      %p187 = scmp.ne.s32.totalorder %s182, %s184
      %p188 = scmp.eq.s32.totalorder %s22, 0
      %p189 = por %p187, %p188
      %p190 = scmp.ne.s32.totalorder %s182, %s184
      %p191 = scmp.eq.s32.totalorder %s27, 1
      %p192 = por %p190, %p191
      %p193 = scmp.ne.s32.totalorder %s184, %s185
      %p194 = scmp.eq.s32.totalorder %s27, 0
      %p195 = por %p193, %p194
      %p196 = scmp.ne.s32.totalorder %s184, %s185
      %p197 = scmp.eq.s32.totalorder %s28, 1
      %p198 = por %p196, %p197
      %p200 = scmp.ne.s32.totalorder %s185, %s199
      %p201 = scmp.eq.s32.totalorder %s28, 0
      %p202 = por %p200, %p201
      %s204 = sadd.s32 %s203, 1
      %p207 = scmp.eq.s32.totalorder %s22, 1
      %p208 = scmp.ne.s32.totalorder %s203, %s205
      %p209 = scmp.eq.s32.totalorder %s22, 0
      %p210 = por %p208, %p209
      %p211 = scmp.ne.s32.totalorder %s203, %s205
      %p212 = scmp.eq.s32.totalorder %s27, 1
      %p213 = por %p211, %p212
      %p214 = scmp.ne.s32.totalorder %s205, %s206
      %p215 = scmp.eq.s32.totalorder %s27, 0
      %p216 = por %p214, %p215
      %p217 = scmp.ne.s32.totalorder %s205, %s206
      %p218 = scmp.eq.s32.totalorder %s28, 1
      %p219 = por %p217, %p218
      %p221 = scmp.ne.s32.totalorder %s206, %s220
      %p222 = scmp.eq.s32.totalorder %s28, 0
      %p223 = por %p221, %p222
      %s224 = ssub.s32 %s22, %s29
      %p225 = scmp.eq.s32.totalorder %s224, 0
      %s227 = sadd.s32 %s226, 1
      %s228 = scalar_select %p225, %s226, %s227
      %p231 = pneg %p225
      %p232 = scmp.eq.s32.totalorder %s22, 1
      %p233 = por %p231, %p232
      %p234 = scmp.ne.s32.totalorder %s226, %s229
      %p235 = scmp.eq.s32.totalorder %s22, 0
      %p236 = por %p234, %p235
      %p237 = scmp.ne.s32.totalorder %s226, %s229
      %p238 = scmp.eq.s32.totalorder %s27, 1
      %p239 = por %p237, %p238
      %p240 = scmp.ne.s32.totalorder %s229, %s230
      %p241 = scmp.eq.s32.totalorder %s27, 0
      %p242 = por %p240, %p241
      %p243 = scmp.ne.s32.totalorder %s229, %s230
      %p244 = scmp.eq.s32.totalorder %s28, 1
      %p245 = por %p243, %p244
      %p247 = scmp.ne.s32.totalorder %s230, %s246
      %p248 = scmp.eq.s32.totalorder %s28, 0
      %p249 = por %p247, %p248
      %p250 = scmp.le.s32.totalorder 1, %s22
      %p251 = scmp.lt.s32.totalorder %s22, 3
      %p252 = pnand %p250, %p251
      %p253 = pneg %p252
      // Predicated region
      $region9: #{tpu_custom_call.1} parent=5 // pred_check
        _
      $region10: #{tpu_custom_call.1} parent=5 // pred_check_branch
        %255 = sbr.rel (%p252) target = $region12
      $region11: #{tpu_custom_call.1} parent=5 // pred_region
        %s256 = ssub.s32 %s22, 1
        // Predicated region
        $region13: #{tpu_custom_call.1} parent=11 // pred_check
          %p257 = pneg %p69
        $region14: #{tpu_custom_call.1} parent=11 // pred_check_branch
          %259 = sbr.rel (%p257) target = $region16
        $region15: #{tpu_custom_call.1} parent=11 // pred_region
          %261 = vsyncadd [#allocation8], 0
          %s262 = sshll.u32 %s1, 4
          %s263 = int_to_ptr.hbm [resolvable:$true] %s262
          %s264 = sshll.u32 [#allocation7], 4
          %s265 = int_to_ptr.vmem [resolvable:$true] %s264
          %270 = dma.hbm_to_vmem [thread:$0]  %s263, 2048, %s265, [#allocation8], 64, 64, 4
        $region16: #{tpu_custom_call.1} parent=11 // pred_fallthru
          _
        // Predicated region
        $region17: #{tpu_custom_call.1} parent=11 // pred_check
          %p271 = pneg %p90
        $region18: #{tpu_custom_call.1} parent=11 // pred_check_branch
          %273 = sbr.rel (%p271) target = $region20
        $region19: #{tpu_custom_call.1} parent=11 // pred_region
          _
        $region20: #{tpu_custom_call.1} parent=11 // pred_fallthru
          _
        // Predicated region
        $region21: #{tpu_custom_call.1} parent=11 // pred_check
          %p274 = pneg %p111
        $region22: #{tpu_custom_call.1} parent=11 // pred_check_branch
          %276 = sbr.rel (%p274) target = $region24
        $region23: #{tpu_custom_call.1} parent=11 // pred_region
          _
        $region24: #{tpu_custom_call.1} parent=11 // pred_fallthru
          _
        // Predicated region
        $region25: #{tpu_custom_call.1} parent=11 // pred_check
          %p277 = pneg %p132
        $region26: #{tpu_custom_call.1} parent=11 // pred_check_branch
          %279 = sbr.rel (%p277) target = $region28
        $region27: #{tpu_custom_call.1} parent=11 // pred_region
          _
        $region28: #{tpu_custom_call.1} parent=11 // pred_fallthru
          _
        // Predicated region
        $region29: #{tpu_custom_call.1} parent=11 // pred_check
          %p280 = pneg %p153
        $region30: #{tpu_custom_call.1} parent=11 // pred_check_branch
          %282 = sbr.rel (%p280) target = $region32
        $region31: #{tpu_custom_call.1} parent=11 // pred_region
          %284 = vsyncadd [#allocation8], 0
          %s285 = sshll.u32 %s5, 4
          %s286 = int_to_ptr.hbm [resolvable:$true] %s285
          %s287 = sshll.u32 [#allocation9], 4
          %s288 = int_to_ptr.vmem [resolvable:$true] %s287
          %293 = dma.hbm_to_vmem [thread:$0]  %s286, 9216, %s288, [#allocation8], 64, 64, 4
        $region32: #{tpu_custom_call.1} parent=11 // pred_fallthru
          _
        // Predicated region
        $region33: #{tpu_custom_call.1} parent=11 // pred_check
          %p294 = pneg %p174
        $region34: #{tpu_custom_call.1} parent=11 // pred_check_branch
          %296 = sbr.rel (%p294) target = $region36
        $region35: #{tpu_custom_call.1} parent=11 // pred_region
          _
        $region36: #{tpu_custom_call.1} parent=11 // pred_fallthru
          _
        // Predicated region
        $region37: #{tpu_custom_call.1} parent=11 // pred_check
          %p297 = pneg %p195
        $region38: #{tpu_custom_call.1} parent=11 // pred_check_branch
          %299 = sbr.rel (%p297) target = $region40
        $region39: #{tpu_custom_call.1} parent=11 // pred_region
          _
        $region40: #{tpu_custom_call.1} parent=11 // pred_fallthru
          _
        // Predicated region
        $region41: #{tpu_custom_call.1} parent=11 // pred_check
          %p300 = pneg %p216
        $region42: #{tpu_custom_call.1} parent=11 // pred_check_branch
          %302 = sbr.rel (%p300) target = $region44
        $region43: #{tpu_custom_call.1} parent=11 // pred_region
          _
        $region44: #{tpu_custom_call.1} parent=11 // pred_fallthru
          _
      $region12: #{tpu_custom_call.1} parent=5 // pred_fallthru
        _
      %p303 = scmp.lt.s32.totalorder %s22, 2
      // Predicated region
      $region45: #{tpu_custom_call.1} parent=5 // pred_check
        %p304 = pneg %p303
      $region46: #{tpu_custom_call.1} parent=5 // pred_check_branch
        %306 = sbr.rel (%p304) target = $region48
      $region47: #{tpu_custom_call.1} parent=5 // pred_region
        // Predicated region
        $region49: #{tpu_custom_call.1} parent=47 // pred_check
          %p307 = pneg %p42
        $region50: #{tpu_custom_call.1} parent=47 // pred_check_branch
          %309 = sbr.rel (%p307) target = $region52
        $region51: #{tpu_custom_call.1} parent=47 // pred_region
          %s310 = sand.u32 %s32, 1
          %s311 = scalar_lea.sflag [#allocation5], %s310
          %s312 = sand.u32 %s32, 1
          %s313 = smul.addr %s312, 512
          %s314 = scalar_lea.vmem [#allocation4], %s313
          %s315 = smul.u32 2, %s22
          %317 = vsyncadd %s311, 0
          %s318 = smul.addr %s315, 64
          %s319 = smul.addr %s318, 4
          %s320 = scalar_lea.hbm %s0, %s319
          %s321 = sshll.u32 %s320, 4
          %s322 = int_to_ptr.hbm [resolvable:$true] %s321
          %s323 = sshll.u32 %s314, 4
          %s324 = int_to_ptr.vmem [resolvable:$true] %s323
          %329 = dma.hbm_to_vmem [thread:$0]  %s322, 8192, %s324, %s311, 128, 128, 8
        $region52: #{tpu_custom_call.1} parent=47 // pred_fallthru
          _
      $region48: #{tpu_custom_call.1} parent=5 // pred_fallthru
        _
      %p330 = scmp.le.s32.totalorder 1, %s22
      %p331 = scmp.lt.s32.totalorder %s22, 3
      %p332 = pnand %p330, %p331
      %p333 = pneg %p332
      // Predicated region
      $region53: #{tpu_custom_call.1} parent=5 // pred_check
        _
      $region54: #{tpu_custom_call.1} parent=5 // pred_check_branch
        %335 = sbr.rel (%p332) target = $region56
      $region55: #{tpu_custom_call.1} parent=5 // pred_region
        %s336 = ssub.s32 %s22, 1
        %s337 = sand.u32 %s35, 1
        %s338 = scalar_lea.sflag [#allocation5], %s337
        %s339 = sand.u32 %s35, 1
        %s340 = smul.addr %s339, 512
        %s341 = scalar_lea.vmem [#allocation4], %s340
        // Predicated region
        $region57: #{tpu_custom_call.1} parent=55 // pred_check
          %p342 = pneg %p48
        $region58: #{tpu_custom_call.1} parent=55 // pred_check_branch
          %344 = sbr.rel (%p342) target = $region60
        $region59: #{tpu_custom_call.1} parent=55 // pred_region
          %346 = dma.done %s338, 8192
        $region60: #{tpu_custom_call.1} parent=55 // pred_fallthru
          _
        // Predicated region
        $region61: #{tpu_custom_call.1} parent=55 // pred_check
          %p347 = pneg %p69
        $region62: #{tpu_custom_call.1} parent=55 // pred_check_branch
          %349 = sbr.rel (%p347) target = $region64
        $region63: #{tpu_custom_call.1} parent=55 // pred_region
          %351 = dma.done [#allocation8], 2048
        $region64: #{tpu_custom_call.1} parent=55 // pred_fallthru
          _
        // Predicated region
        $region65: #{tpu_custom_call.1} parent=55 // pred_check
          %p352 = pneg %p153
        $region66: #{tpu_custom_call.1} parent=55 // pred_check_branch
          %354 = sbr.rel (%p352) target = $region68
        $region67: #{tpu_custom_call.1} parent=55 // pred_region
          %356 = dma.done [#allocation8], 9216
        $region68: #{tpu_custom_call.1} parent=55 // pred_fallthru
          _
        %s357 = sand.u32 %s35, 1
        %s358 = scalar_lea.sflag [#allocation5], %s357
        %s359 = sand.u32 %s35, 1
        %s360 = smul.addr %s359, 512
        %s361 = scalar_lea.vmem [#allocation4], %s360
        %p362 = pneg %p48
        %p363 = pneg %p45
        %p364 = pneg %p69
        %p365 = pneg %p66
        %p366 = pneg %p90
        %p367 = pneg %p87
        %p368 = pneg %p111
        %p369 = pneg %p108
        %p370 = pneg %p132
        %p371 = pneg %p129
        %p372 = pneg %p153
        %p373 = pneg %p150
        %p374 = pneg %p174
        %p375 = pneg %p171
        %p376 = pneg %p195
        %p377 = pneg %p192
        %p378 = pneg %p216
        %p379 = pneg %p213
        %p380 = pneg %p242
        %p381 = pneg %p239
        %s382 = sand.u32 %s229, 1
        %s383 = scalar_lea.sflag [#allocation6], %s382
        %s384 = sand.u32 %s229, 1
        %s385 = smul.addr %s384, 2
        %s386 = scalar_lea.vmem [#allocation10], %s385
        %s387 = smul.u32 2, %s27
        %v388 = vld [vmem:[%s341] sm:$0xff]
        %v389 = vld [vmem:[%s341 + $0x8] sm:$0xff]
        %v390 = vld [vmem:[%s341 + $0x10] sm:$0xff]
        %v391 = vld [vmem:[%s341 + $0x18] sm:$0xff]
        %v392 = vld [vmem:[%s341 + $0x20] sm:$0xff]
        %v393 = vld [vmem:[%s341 + $0x28] sm:$0xff]
        %v394 = vld [vmem:[%s341 + $0x30] sm:$0xff]
        %v395 = vld [vmem:[%s341 + $0x38] sm:$0xff]
        %v396 = vld [vmem:[%s341 + $0x40] sm:$0xff]
        %v397 = vld [vmem:[%s341 + $0x48] sm:$0xff]
        %v398 = vld [vmem:[%s341 + $0x50] sm:$0xff]
        %v399 = vld [vmem:[%s341 + $0x58] sm:$0xff]
        %v400 = vld [vmem:[%s341 + $0x60] sm:$0xff]
        %v401 = vld [vmem:[%s341 + $0x68] sm:$0xff]
        %v402 = vld [vmem:[%s341 + $0x70] sm:$0xff]
        %v403 = vld [vmem:[%s341 + $0x78] sm:$0xff]
        %v404 = vld [vmem:[%s341 + $0x80] sm:$0xff]
        %v405 = vld [vmem:[%s341 + $0x88] sm:$0xff]
        %v406 = vld [vmem:[%s341 + $0x90] sm:$0xff]
        %v407 = vld [vmem:[%s341 + $0x98] sm:$0xff]
        %v408 = vld [vmem:[%s341 + $0xa0] sm:$0xff]
        %v409 = vld [vmem:[%s341 + $0xa8] sm:$0xff]
        %v410 = vld [vmem:[%s341 + $0xb0] sm:$0xff]
        %v411 = vld [vmem:[%s341 + $0xb8] sm:$0xff]
        %v412 = vld [vmem:[%s341 + $0xc0] sm:$0xff]
        %v413 = vld [vmem:[%s341 + $0xc8] sm:$0xff]
        %v414 = vld [vmem:[%s341 + $0xd0] sm:$0xff]
        %v415 = vld [vmem:[%s341 + $0xd8] sm:$0xff]
        %v416 = vld [vmem:[%s341 + $0xe0] sm:$0xff]
        %v417 = vld [vmem:[%s341 + $0xe8] sm:$0xff]
        %v418 = vld [vmem:[%s341 + $0xf0] sm:$0xff]
        %v419 = vld [vmem:[%s341 + $0xf8] sm:$0xff]
        %v420 = vld [vmem:[%s341 + $0x100] sm:$0xff]
        %v421 = vld [vmem:[%s341 + $0x108] sm:$0xff]
        %v422 = vld [vmem:[%s341 + $0x110] sm:$0xff]
        %v423 = vld [vmem:[%s341 + $0x118] sm:$0xff]
        %v424 = vld [vmem:[%s341 + $0x120] sm:$0xff]
        %v425 = vld [vmem:[%s341 + $0x128] sm:$0xff]
        %v426 = vld [vmem:[%s341 + $0x130] sm:$0xff]
        %v427 = vld [vmem:[%s341 + $0x138] sm:$0xff]
        %v428 = vld [vmem:[%s341 + $0x140] sm:$0xff]
        %v429 = vld [vmem:[%s341 + $0x148] sm:$0xff]
        %v430 = vld [vmem:[%s341 + $0x150] sm:$0xff]
        %v431 = vld [vmem:[%s341 + $0x158] sm:$0xff]
        %v432 = vld [vmem:[%s341 + $0x160] sm:$0xff]
        %v433 = vld [vmem:[%s341 + $0x168] sm:$0xff]
        %v434 = vld [vmem:[%s341 + $0x170] sm:$0xff]
        %v435 = vld [vmem:[%s341 + $0x178] sm:$0xff]
        %v436 = vld [vmem:[%s341 + $0x180] sm:$0xff]
        %v437 = vld [vmem:[%s341 + $0x188] sm:$0xff]
        %v438 = vld [vmem:[%s341 + $0x190] sm:$0xff]
        %v439 = vld [vmem:[%s341 + $0x198] sm:$0xff]
        %v440 = vld [vmem:[%s341 + $0x1a0] sm:$0xff]
        %v441 = vld [vmem:[%s341 + $0x1a8] sm:$0xff]
        %v442 = vld [vmem:[%s341 + $0x1b0] sm:$0xff]
        %v443 = vld [vmem:[%s341 + $0x1b8] sm:$0xff]
        %v444 = vld [vmem:[%s341 + $0x1c0] sm:$0xff]
        %v445 = vld [vmem:[%s341 + $0x1c8] sm:$0xff]
        %v446 = vld [vmem:[%s341 + $0x1d0] sm:$0xff]
        %v447 = vld [vmem:[%s341 + $0x1d8] sm:$0xff]
        %v448 = vld [vmem:[%s341 + $0x1e0] sm:$0xff]
        %v449 = vld [vmem:[%s341 + $0x1e8] sm:$0xff]
        %v450 = vld [vmem:[%s341 + $0x1f0] sm:$0xff]
        %v451 = vld [vmem:[%s341 + $0x1f8] sm:$0xff]
        %v452 = vld [vmem:[#allocation7] sm:$0xf]
        %v453 = vld [vmem:[#allocation7 + $0x4] sm:$0xf]
        %v454 = vld [vmem:[#allocation7 + $0x8] sm:$0xf]
        %v455 = vld [vmem:[#allocation7 + $0xc] sm:$0xf]
        %v456 = vld [vmem:[#allocation7 + $0x10] sm:$0xf]
        %v457 = vld [vmem:[#allocation7 + $0x14] sm:$0xf]
        %v458 = vld [vmem:[#allocation7 + $0x18] sm:$0xf]
        %v459 = vld [vmem:[#allocation7 + $0x1c] sm:$0xf]
        %v460 = vld [vmem:[#allocation7 + $0x20] sm:$0xf]
        %v461 = vld [vmem:[#allocation7 + $0x24] sm:$0xf]
        %v462 = vld [vmem:[#allocation7 + $0x28] sm:$0xf]
        %v463 = vld [vmem:[#allocation7 + $0x2c] sm:$0xf]
        %v464 = vld [vmem:[#allocation7 + $0x30] sm:$0xf]
        %v465 = vld [vmem:[#allocation7 + $0x34] sm:$0xf]
        %v466 = vld [vmem:[#allocation7 + $0x38] sm:$0xf]
        %v467 = vld [vmem:[#allocation7 + $0x3c] sm:$0xf]
        %v468 = vld [vmem:[#allocation7 + $0x40] sm:$0xf]
        %v469 = vld [vmem:[#allocation7 + $0x44] sm:$0xf]
        %v470 = vld [vmem:[#allocation7 + $0x48] sm:$0xf]
        %v471 = vld [vmem:[#allocation7 + $0x4c] sm:$0xf]
        %v472 = vld [vmem:[#allocation7 + $0x50] sm:$0xf]
        %v473 = vld [vmem:[#allocation7 + $0x54] sm:$0xf]
        %v474 = vld [vmem:[#allocation7 + $0x58] sm:$0xf]
        %v475 = vld [vmem:[#allocation7 + $0x5c] sm:$0xf]
        %v476 = vld [vmem:[#allocation7 + $0x60] sm:$0xf]
        %v477 = vld [vmem:[#allocation7 + $0x64] sm:$0xf]
        %v478 = vld [vmem:[#allocation7 + $0x68] sm:$0xf]
        %v479 = vld [vmem:[#allocation7 + $0x6c] sm:$0xf]
        %v480 = vld [vmem:[#allocation7 + $0x70] sm:$0xf]
        %v481 = vld [vmem:[#allocation7 + $0x74] sm:$0xf]
        %v482 = vld [vmem:[#allocation7 + $0x78] sm:$0xf]
        %v483 = vld [vmem:[#allocation7 + $0x7c] sm:$0xf]
        %v484 = vld [vmem:[%s2] sm:$0x1]
        %v486 = vperm.slane %v484, 0
        %v552 = vunpack.c.l.b16 %v388
        %v553 = vunpack.c.h.b16 %v388
        %v554 = vunpack.c.l.b16 %v389
        %v555 = vunpack.c.h.b16 %v389
        %v556 = vunpack.c.l.b16 %v390
        %v557 = vunpack.c.h.b16 %v390
        %v558 = vunpack.c.l.b16 %v391
        %v559 = vunpack.c.h.b16 %v391
        %v560 = vunpack.c.l.b16 %v392
        %v561 = vunpack.c.h.b16 %v392
        %v562 = vunpack.c.l.b16 %v393
        %v563 = vunpack.c.h.b16 %v393
        %v564 = vunpack.c.l.b16 %v394
        %v565 = vunpack.c.h.b16 %v394
        %v566 = vunpack.c.l.b16 %v395
        %v567 = vunpack.c.h.b16 %v395
        %v568 = vunpack.c.l.b16 %v396
        %v569 = vunpack.c.h.b16 %v396
        %v570 = vunpack.c.l.b16 %v397
        %v571 = vunpack.c.h.b16 %v397
        %v572 = vunpack.c.l.b16 %v398
        %v573 = vunpack.c.h.b16 %v398
        %v574 = vunpack.c.l.b16 %v399
        %v575 = vunpack.c.h.b16 %v399
        %v576 = vunpack.c.l.b16 %v400
        %v577 = vunpack.c.h.b16 %v400
        %v578 = vunpack.c.l.b16 %v401
        %v579 = vunpack.c.h.b16 %v401
        %v580 = vunpack.c.l.b16 %v402
        %v581 = vunpack.c.h.b16 %v402
        %v582 = vunpack.c.l.b16 %v403
        %v583 = vunpack.c.h.b16 %v403
        %v584 = vunpack.c.l.b16 %v404
        %v585 = vunpack.c.h.b16 %v404
        %v586 = vunpack.c.l.b16 %v405
        %v587 = vunpack.c.h.b16 %v405
        %v588 = vunpack.c.l.b16 %v406
        %v589 = vunpack.c.h.b16 %v406
        %v590 = vunpack.c.l.b16 %v407
        %v591 = vunpack.c.h.b16 %v407
        %v592 = vunpack.c.l.b16 %v408
        %v593 = vunpack.c.h.b16 %v408
        %v594 = vunpack.c.l.b16 %v409
        %v595 = vunpack.c.h.b16 %v409
        %v596 = vunpack.c.l.b16 %v410
        %v597 = vunpack.c.h.b16 %v410
        %v598 = vunpack.c.l.b16 %v411
        %v599 = vunpack.c.h.b16 %v411
        %v600 = vunpack.c.l.b16 %v412
        %v601 = vunpack.c.h.b16 %v412
        %v602 = vunpack.c.l.b16 %v413
        %v603 = vunpack.c.h.b16 %v413
        %v604 = vunpack.c.l.b16 %v414
        %v605 = vunpack.c.h.b16 %v414
        %v606 = vunpack.c.l.b16 %v415
        %v607 = vunpack.c.h.b16 %v415
        %v608 = vunpack.c.l.b16 %v416
        %v609 = vunpack.c.h.b16 %v416
        %v610 = vunpack.c.l.b16 %v417
        %v611 = vunpack.c.h.b16 %v417
        %v612 = vunpack.c.l.b16 %v418
        %v613 = vunpack.c.h.b16 %v418
        %v614 = vunpack.c.l.b16 %v419
        %v615 = vunpack.c.h.b16 %v419
        %v616 = vunpack.c.l.b16 %v420
        %v617 = vunpack.c.h.b16 %v420
        %v618 = vunpack.c.l.b16 %v421
        %v619 = vunpack.c.h.b16 %v421
        %v620 = vunpack.c.l.b16 %v422
        %v621 = vunpack.c.h.b16 %v422
        %v622 = vunpack.c.l.b16 %v423
        %v623 = vunpack.c.h.b16 %v423
        %v624 = vunpack.c.l.b16 %v424
        %v625 = vunpack.c.h.b16 %v424
        %v626 = vunpack.c.l.b16 %v425
        %v627 = vunpack.c.h.b16 %v425
        %v628 = vunpack.c.l.b16 %v426
        %v629 = vunpack.c.h.b16 %v426
        %v630 = vunpack.c.l.b16 %v427
        %v631 = vunpack.c.h.b16 %v427
        %v632 = vunpack.c.l.b16 %v428
        %v633 = vunpack.c.h.b16 %v428
        %v634 = vunpack.c.l.b16 %v429
        %v635 = vunpack.c.h.b16 %v429
        %v636 = vunpack.c.l.b16 %v430
        %v637 = vunpack.c.h.b16 %v430
        %v638 = vunpack.c.l.b16 %v431
        %v639 = vunpack.c.h.b16 %v431
        %v640 = vunpack.c.l.b16 %v432
        %v641 = vunpack.c.h.b16 %v432
        %v642 = vunpack.c.l.b16 %v433
        %v643 = vunpack.c.h.b16 %v433
        %v644 = vunpack.c.l.b16 %v434
        %v645 = vunpack.c.h.b16 %v434
        %v646 = vunpack.c.l.b16 %v435
        %v647 = vunpack.c.h.b16 %v435
        %v648 = vunpack.c.l.b16 %v436
        %v649 = vunpack.c.h.b16 %v436
        %v650 = vunpack.c.l.b16 %v437
        %v651 = vunpack.c.h.b16 %v437
        %v652 = vunpack.c.l.b16 %v438
        %v653 = vunpack.c.h.b16 %v438
        %v654 = vunpack.c.l.b16 %v439
        %v655 = vunpack.c.h.b16 %v439
        %v656 = vunpack.c.l.b16 %v440
        %v657 = vunpack.c.h.b16 %v440
        %v658 = vunpack.c.l.b16 %v441
        %v659 = vunpack.c.h.b16 %v441
        %v660 = vunpack.c.l.b16 %v442
        %v661 = vunpack.c.h.b16 %v442
        %v662 = vunpack.c.l.b16 %v443
        %v663 = vunpack.c.h.b16 %v443
        %v664 = vunpack.c.l.b16 %v444
        %v665 = vunpack.c.h.b16 %v444
        %v666 = vunpack.c.l.b16 %v445
        %v667 = vunpack.c.h.b16 %v445
        %v668 = vunpack.c.l.b16 %v446
        %v669 = vunpack.c.h.b16 %v446
        %v670 = vunpack.c.l.b16 %v447
        %v671 = vunpack.c.h.b16 %v447
        %v672 = vunpack.c.l.b16 %v448
        %v673 = vunpack.c.h.b16 %v448
        %v674 = vunpack.c.l.b16 %v449
        %v675 = vunpack.c.h.b16 %v449
        %v676 = vunpack.c.l.b16 %v450
        %v677 = vunpack.c.h.b16 %v450
        %v678 = vunpack.c.l.b16 %v451
        %v679 = vunpack.c.h.b16 %v451
        %v680 = vpack.c.b16 %v554, %v552
        %v681 = vpack.c.b16 %v555, %v553
        %v682 = vpack.c.b16 %v558, %v556
        %v683 = vpack.c.b16 %v559, %v557
        %v684 = vpack.c.b16 %v562, %v560
        %v685 = vpack.c.b16 %v563, %v561
        %v686 = vpack.c.b16 %v566, %v564
        %v687 = vpack.c.b16 %v567, %v565
        %v688 = vpack.c.b16 %v570, %v568
        %v689 = vpack.c.b16 %v571, %v569
        %v690 = vpack.c.b16 %v574, %v572
        %v691 = vpack.c.b16 %v575, %v573
        %v692 = vpack.c.b16 %v578, %v576
        %v693 = vpack.c.b16 %v579, %v577
        %v694 = vpack.c.b16 %v582, %v580
        %v695 = vpack.c.b16 %v583, %v581
        %v696 = vpack.c.b16 %v586, %v584
        %v697 = vpack.c.b16 %v587, %v585
        %v698 = vpack.c.b16 %v590, %v588
        %v699 = vpack.c.b16 %v591, %v589
        %v700 = vpack.c.b16 %v594, %v592
        %v701 = vpack.c.b16 %v595, %v593
        %v702 = vpack.c.b16 %v598, %v596
        %v703 = vpack.c.b16 %v599, %v597
        %v704 = vpack.c.b16 %v602, %v600
        %v705 = vpack.c.b16 %v603, %v601
        %v706 = vpack.c.b16 %v606, %v604
        %v707 = vpack.c.b16 %v607, %v605
        %v708 = vpack.c.b16 %v610, %v608
        %v709 = vpack.c.b16 %v611, %v609
        %v710 = vpack.c.b16 %v614, %v612
        %v711 = vpack.c.b16 %v615, %v613
        %v712 = vpack.c.b16 %v618, %v616
        %v713 = vpack.c.b16 %v619, %v617
        %v714 = vpack.c.b16 %v622, %v620
        %v715 = vpack.c.b16 %v623, %v621
        %v716 = vpack.c.b16 %v626, %v624
        %v717 = vpack.c.b16 %v627, %v625
        %v718 = vpack.c.b16 %v630, %v628
        %v719 = vpack.c.b16 %v631, %v629
        %v720 = vpack.c.b16 %v634, %v632
        %v721 = vpack.c.b16 %v635, %v633
        %v722 = vpack.c.b16 %v638, %v636
        %v723 = vpack.c.b16 %v639, %v637
        %v724 = vpack.c.b16 %v642, %v640
        %v725 = vpack.c.b16 %v643, %v641
        %v726 = vpack.c.b16 %v646, %v644
        %v727 = vpack.c.b16 %v647, %v645
        %v728 = vpack.c.b16 %v650, %v648
        %v729 = vpack.c.b16 %v651, %v649
        %v730 = vpack.c.b16 %v654, %v652
        %v731 = vpack.c.b16 %v655, %v653
        %v732 = vpack.c.b16 %v658, %v656
        %v733 = vpack.c.b16 %v659, %v657
        %v734 = vpack.c.b16 %v662, %v660
        %v735 = vpack.c.b16 %v663, %v661
        %v736 = vpack.c.b16 %v666, %v664
        %v737 = vpack.c.b16 %v667, %v665
        %v738 = vpack.c.b16 %v670, %v668
        %v739 = vpack.c.b16 %v671, %v669
        %v740 = vpack.c.b16 %v674, %v672
        %v741 = vpack.c.b16 %v675, %v673
        %v742 = vpack.c.b16 %v678, %v676
        %v743 = vpack.c.b16 %v679, %v677
        %v840 = vunpack.c.l.b16 %v452
        %v841 = vunpack.c.l.b16 %v453
        %v842 = vunpack.c.l.b16 %v454
        %v843 = vunpack.c.l.b16 %v455
        %v844 = vunpack.c.l.b16 %v456
        %v845 = vunpack.c.l.b16 %v457
        %v846 = vunpack.c.l.b16 %v458
        %v847 = vunpack.c.l.b16 %v459
        %v848 = vunpack.c.l.b16 %v460
        %v849 = vunpack.c.l.b16 %v461
        %v850 = vunpack.c.l.b16 %v462
        %v851 = vunpack.c.l.b16 %v463
        %v852 = vunpack.c.l.b16 %v464
        %v853 = vunpack.c.l.b16 %v465
        %v854 = vunpack.c.l.b16 %v466
        %v855 = vunpack.c.l.b16 %v467
        %v856 = vunpack.c.l.b16 %v468
        %v857 = vunpack.c.l.b16 %v469
        %v858 = vunpack.c.l.b16 %v470
        %v859 = vunpack.c.l.b16 %v471
        %v860 = vunpack.c.l.b16 %v472
        %v861 = vunpack.c.l.b16 %v473
        %v862 = vunpack.c.l.b16 %v474
        %v863 = vunpack.c.l.b16 %v475
        %v864 = vunpack.c.l.b16 %v476
        %v865 = vunpack.c.l.b16 %v477
        %v866 = vunpack.c.l.b16 %v478
        %v867 = vunpack.c.l.b16 %v479
        %v868 = vunpack.c.l.b16 %v480
        %v869 = vunpack.c.l.b16 %v481
        %v870 = vunpack.c.l.b16 %v482
        %v871 = vunpack.c.l.b16 %v483
        %v872 = vpack.c.b16 %v841, %v840
        %v873 = vpack.c.b16 %v843, %v842
        %v874 = vpack.c.b16 %v845, %v844
        %v875 = vpack.c.b16 %v847, %v846
        %v876 = vpack.c.b16 %v849, %v848
        %v877 = vpack.c.b16 %v851, %v850
        %v878 = vpack.c.b16 %v853, %v852
        %v879 = vpack.c.b16 %v855, %v854
        %v880 = vpack.c.b16 %v857, %v856
        %v881 = vpack.c.b16 %v859, %v858
        %v882 = vpack.c.b16 %v861, %v860
        %v883 = vpack.c.b16 %v863, %v862
        %v884 = vpack.c.b16 %v865, %v864
        %v885 = vpack.c.b16 %v867, %v866
        %v886 = vpack.c.b16 %v869, %v868
        %v887 = vpack.c.b16 %v871, %v870
        %904 = vmatpush.bf16.msra.mxu0 %v879
        %905 = vmatpush.bf16.msra.mxu0 %v878
        %906 = vmatpush.bf16.msra.mxu0 %v877
        %907 = vmatpush.bf16.msra.mxu0 %v876
        %908 = vmatpush.bf16.msra.mxu0 %v875
        %909 = vmatpush.bf16.msra.mxu0 %v874
        %910 = vmatpush.bf16.msra.mxu0 %v873
        %911 = vmatpush.bf16.msra.mxu0 %v872
        %912 = vmatmul.bf16.gmra.mxu0 %v680
        %v913 = vpop.f32.mrf.mxu0
        %v914 = vadd.f32 %v486, %v913
        %v915 = vpop.f32.mrf.mxu0
        %v916 = vadd.f32 %v486, %v915
        %917 = vmatmul.bf16.gmra.mxu0 %v682
        %v918 = vpop.f32.mrf.mxu0
        %v919 = vadd.f32 %v486, %v918
        %v920 = vpop.f32.mrf.mxu0
        %v921 = vadd.f32 %v486, %v920
        %922 = vmatmul.bf16.gmra.mxu0 %v684
        %v923 = vpop.f32.mrf.mxu0
        %v924 = vadd.f32 %v486, %v923
        %v925 = vpop.f32.mrf.mxu0
        %v926 = vadd.f32 %v486, %v925
        %927 = vmatmul.bf16.gmra.mxu0 %v686
        %v928 = vpop.f32.mrf.mxu0
        %v929 = vadd.f32 %v486, %v928
        %v930 = vpop.f32.mrf.mxu0
        %v931 = vadd.f32 %v486, %v930
        %932 = vmatmul.bf16.gmra.mxu0 %v688
        %v933 = vpop.f32.mrf.mxu0
        %v934 = vadd.f32 %v486, %v933
        %v935 = vpop.f32.mrf.mxu0
        %v936 = vadd.f32 %v486, %v935
        %937 = vmatmul.bf16.gmra.mxu0 %v690
        %v938 = vpop.f32.mrf.mxu0
        %v939 = vadd.f32 %v486, %v938
        %v940 = vpop.f32.mrf.mxu0
        %v941 = vadd.f32 %v486, %v940
        %942 = vmatmul.bf16.gmra.mxu0 %v692
        %v943 = vpop.f32.mrf.mxu0
        %v944 = vadd.f32 %v486, %v943
        %v945 = vpop.f32.mrf.mxu0
        %v946 = vadd.f32 %v486, %v945
        %947 = vmatmul.bf16.gmra.mxu0 %v694
        %v948 = vpop.f32.mrf.mxu0
        %v949 = vadd.f32 %v486, %v948
        %v950 = vpop.f32.mrf.mxu0
        %v951 = vadd.f32 %v486, %v950
        %952 = vmatmul.bf16.gmra.mxu0 %v696
        %v953 = vpop.f32.mrf.mxu0
        %v954 = vadd.f32 %v486, %v953
        %v955 = vpop.f32.mrf.mxu0
        %v956 = vadd.f32 %v486, %v955
        %957 = vmatmul.bf16.gmra.mxu0 %v698
        %v958 = vpop.f32.mrf.mxu0
        %v959 = vadd.f32 %v486, %v958
        %v960 = vpop.f32.mrf.mxu0
        %v961 = vadd.f32 %v486, %v960
        %962 = vmatmul.bf16.gmra.mxu0 %v700
        %v963 = vpop.f32.mrf.mxu0
        %v964 = vadd.f32 %v486, %v963
        %v965 = vpop.f32.mrf.mxu0
        %v966 = vadd.f32 %v486, %v965
        %967 = vmatmul.bf16.gmra.mxu0 %v702
        %v968 = vpop.f32.mrf.mxu0
        %v969 = vadd.f32 %v486, %v968
        %v970 = vpop.f32.mrf.mxu0
        %v971 = vadd.f32 %v486, %v970
        %972 = vmatmul.bf16.gmra.mxu0 %v704
        %v973 = vpop.f32.mrf.mxu0
        %v974 = vadd.f32 %v486, %v973
        %v975 = vpop.f32.mrf.mxu0
        %v976 = vadd.f32 %v486, %v975
        %977 = vmatmul.bf16.gmra.mxu0 %v706
        %v978 = vpop.f32.mrf.mxu0
        %v979 = vadd.f32 %v486, %v978
        %v980 = vpop.f32.mrf.mxu0
        %v981 = vadd.f32 %v486, %v980
        %982 = vmatmul.bf16.gmra.mxu0 %v708
        %v983 = vpop.f32.mrf.mxu0
        %v984 = vadd.f32 %v486, %v983
        %v985 = vpop.f32.mrf.mxu0
        %v986 = vadd.f32 %v486, %v985
        %987 = vmatmul.bf16.gmra.mxu0 %v710
        %v988 = vpop.f32.mrf.mxu0
        %v989 = vadd.f32 %v486, %v988
        %v990 = vpop.f32.mrf.mxu0
        %v991 = vadd.f32 %v486, %v990
        %992 = vmatmul.bf16.gmra.mxu0 %v712
        %v993 = vpop.f32.mrf.mxu0
        %v994 = vadd.f32 %v486, %v993
        %v995 = vpop.f32.mrf.mxu0
        %v996 = vadd.f32 %v486, %v995
        %997 = vmatmul.bf16.gmra.mxu0 %v714
        %v998 = vpop.f32.mrf.mxu0
        %v999 = vadd.f32 %v486, %v998
        %v1000 = vpop.f32.mrf.mxu0
        %v1001 = vadd.f32 %v486, %v1000
        %1002 = vmatmul.bf16.gmra.mxu0 %v716
        %v1003 = vpop.f32.mrf.mxu0
        %v1004 = vadd.f32 %v486, %v1003
        %v1005 = vpop.f32.mrf.mxu0
        %v1006 = vadd.f32 %v486, %v1005
        %1007 = vmatmul.bf16.gmra.mxu0 %v718
        %v1008 = vpop.f32.mrf.mxu0
        %v1009 = vadd.f32 %v486, %v1008
        %v1010 = vpop.f32.mrf.mxu0
        %v1011 = vadd.f32 %v486, %v1010
        %1012 = vmatmul.bf16.gmra.mxu0 %v720
        %v1013 = vpop.f32.mrf.mxu0
        %v1014 = vadd.f32 %v486, %v1013
        %v1015 = vpop.f32.mrf.mxu0
        %v1016 = vadd.f32 %v486, %v1015
        %1017 = vmatmul.bf16.gmra.mxu0 %v722
        %v1018 = vpop.f32.mrf.mxu0
        %v1019 = vadd.f32 %v486, %v1018
        %v1020 = vpop.f32.mrf.mxu0
        %v1021 = vadd.f32 %v486, %v1020
        %1022 = vmatmul.bf16.gmra.mxu0 %v724
        %v1023 = vpop.f32.mrf.mxu0
        %v1024 = vadd.f32 %v486, %v1023
        %v1025 = vpop.f32.mrf.mxu0
        %v1026 = vadd.f32 %v486, %v1025
        %1027 = vmatmul.bf16.gmra.mxu0 %v726
        %v1028 = vpop.f32.mrf.mxu0
        %v1029 = vadd.f32 %v486, %v1028
        %v1030 = vpop.f32.mrf.mxu0
        %v1031 = vadd.f32 %v486, %v1030
        %1032 = vmatmul.bf16.gmra.mxu0 %v728
        %v1033 = vpop.f32.mrf.mxu0
        %v1034 = vadd.f32 %v486, %v1033
        %v1035 = vpop.f32.mrf.mxu0
        %v1036 = vadd.f32 %v486, %v1035
        %1037 = vmatmul.bf16.gmra.mxu0 %v730
        %v1038 = vpop.f32.mrf.mxu0
        %v1039 = vadd.f32 %v486, %v1038
        %v1040 = vpop.f32.mrf.mxu0
        %v1041 = vadd.f32 %v486, %v1040
        %1042 = vmatmul.bf16.gmra.mxu0 %v732
        %v1043 = vpop.f32.mrf.mxu0
        %v1044 = vadd.f32 %v486, %v1043
        %v1045 = vpop.f32.mrf.mxu0
        %v1046 = vadd.f32 %v486, %v1045
        %1047 = vmatmul.bf16.gmra.mxu0 %v734
        %v1048 = vpop.f32.mrf.mxu0
        %v1049 = vadd.f32 %v486, %v1048
        %v1050 = vpop.f32.mrf.mxu0
        %v1051 = vadd.f32 %v486, %v1050
        %1052 = vmatmul.bf16.gmra.mxu0 %v736
        %v1053 = vpop.f32.mrf.mxu0
        %v1054 = vadd.f32 %v486, %v1053
        %v1055 = vpop.f32.mrf.mxu0
        %v1056 = vadd.f32 %v486, %v1055
        %1057 = vmatmul.bf16.gmra.mxu0 %v738
        %v1058 = vpop.f32.mrf.mxu0
        %v1059 = vadd.f32 %v486, %v1058
        %v1060 = vpop.f32.mrf.mxu0
        %v1061 = vadd.f32 %v486, %v1060
        %1062 = vmatmul.bf16.gmra.mxu0 %v740
        %v1063 = vpop.f32.mrf.mxu0
        %v1064 = vadd.f32 %v486, %v1063
        %v1065 = vpop.f32.mrf.mxu0
        %v1066 = vadd.f32 %v486, %v1065
        %1067 = vmatmul.bf16.gmra.mxu0 %v742
        %v1068 = vpop.f32.mrf.mxu0
        %v1069 = vadd.f32 %v486, %v1068
        %v1070 = vpop.f32.mrf.mxu0
        %v1071 = vadd.f32 %v486, %v1070
        %1072 = vdwg.mxu0
        %1073 = vmatpush.bf16.msra.mxu0 %v887
        %1074 = vmatpush.bf16.msra.mxu0 %v886
        %1075 = vmatpush.bf16.msra.mxu0 %v885
        %1076 = vmatpush.bf16.msra.mxu0 %v884
        %1077 = vmatpush.bf16.msra.mxu0 %v883
        %1078 = vmatpush.bf16.msra.mxu0 %v882
        %1079 = vmatpush.bf16.msra.mxu0 %v881
        %1080 = vmatpush.bf16.msra.mxu0 %v880
        %1081 = vmatmul.bf16.gmra.mxu0 %v681
        %v1082 = vpop.f32.mrf.mxu0
        %v1083 = vadd.f32 %v914, %v1082
        %v1084 = vpop.f32.mrf.mxu0
        %v1085 = vadd.f32 %v916, %v1084
        %1086 = vmatmul.bf16.gmra.mxu0 %v683
        %v1087 = vpop.f32.mrf.mxu0
        %v1088 = vadd.f32 %v919, %v1087
        %v1089 = vpop.f32.mrf.mxu0
        %v1090 = vadd.f32 %v921, %v1089
        %1091 = vmatmul.bf16.gmra.mxu0 %v685
        %v1092 = vpop.f32.mrf.mxu0
        %v1093 = vadd.f32 %v924, %v1092
        %v1094 = vpop.f32.mrf.mxu0
        %v1095 = vadd.f32 %v926, %v1094
        %1096 = vmatmul.bf16.gmra.mxu0 %v687
        %v1097 = vpop.f32.mrf.mxu0
        %v1098 = vadd.f32 %v929, %v1097
        %v1099 = vpop.f32.mrf.mxu0
        %v1100 = vadd.f32 %v931, %v1099
        %1101 = vmatmul.bf16.gmra.mxu0 %v689
        %v1102 = vpop.f32.mrf.mxu0
        %v1103 = vadd.f32 %v934, %v1102
        %v1104 = vpop.f32.mrf.mxu0
        %v1105 = vadd.f32 %v936, %v1104
        %1106 = vmatmul.bf16.gmra.mxu0 %v691
        %v1107 = vpop.f32.mrf.mxu0
        %v1108 = vadd.f32 %v939, %v1107
        %v1109 = vpop.f32.mrf.mxu0
        %v1110 = vadd.f32 %v941, %v1109
        %1111 = vmatmul.bf16.gmra.mxu0 %v693
        %v1112 = vpop.f32.mrf.mxu0
        %v1113 = vadd.f32 %v944, %v1112
        %v1114 = vpop.f32.mrf.mxu0
        %v1115 = vadd.f32 %v946, %v1114
        %1116 = vmatmul.bf16.gmra.mxu0 %v695
        %v1117 = vpop.f32.mrf.mxu0
        %v1118 = vadd.f32 %v949, %v1117
        %v1119 = vpop.f32.mrf.mxu0
        %v1120 = vadd.f32 %v951, %v1119
        %1121 = vmatmul.bf16.gmra.mxu0 %v697
        %v1122 = vpop.f32.mrf.mxu0
        %v1123 = vadd.f32 %v954, %v1122
        %v1124 = vpop.f32.mrf.mxu0
        %v1125 = vadd.f32 %v956, %v1124
        %1126 = vmatmul.bf16.gmra.mxu0 %v699
        %v1127 = vpop.f32.mrf.mxu0
        %v1128 = vadd.f32 %v959, %v1127
        %v1129 = vpop.f32.mrf.mxu0
        %v1130 = vadd.f32 %v961, %v1129
        %1131 = vmatmul.bf16.gmra.mxu0 %v701
        %v1132 = vpop.f32.mrf.mxu0
        %v1133 = vadd.f32 %v964, %v1132
        %v1134 = vpop.f32.mrf.mxu0
        %v1135 = vadd.f32 %v966, %v1134
        %1136 = vmatmul.bf16.gmra.mxu0 %v703
        %v1137 = vpop.f32.mrf.mxu0
        %v1138 = vadd.f32 %v969, %v1137
        %v1139 = vpop.f32.mrf.mxu0
        %v1140 = vadd.f32 %v971, %v1139
        %1141 = vmatmul.bf16.gmra.mxu0 %v705
        %v1142 = vpop.f32.mrf.mxu0
        %v1143 = vadd.f32 %v974, %v1142
        %v1144 = vpop.f32.mrf.mxu0
        %v1145 = vadd.f32 %v976, %v1144
        %1146 = vmatmul.bf16.gmra.mxu0 %v707
        %v1147 = vpop.f32.mrf.mxu0
        %v1148 = vadd.f32 %v979, %v1147
        %v1149 = vpop.f32.mrf.mxu0
        %v1150 = vadd.f32 %v981, %v1149
        %1151 = vmatmul.bf16.gmra.mxu0 %v709
        %v1152 = vpop.f32.mrf.mxu0
        %v1153 = vadd.f32 %v984, %v1152
        %v1154 = vpop.f32.mrf.mxu0
        %v1155 = vadd.f32 %v986, %v1154
        %1156 = vmatmul.bf16.gmra.mxu0 %v711
        %v1157 = vpop.f32.mrf.mxu0
        %v1158 = vadd.f32 %v989, %v1157
        %v1159 = vpop.f32.mrf.mxu0
        %v1160 = vadd.f32 %v991, %v1159
        %1161 = vmatmul.bf16.gmra.mxu0 %v713
        %v1162 = vpop.f32.mrf.mxu0
        %v1163 = vadd.f32 %v994, %v1162
        %v1164 = vpop.f32.mrf.mxu0
        %v1165 = vadd.f32 %v996, %v1164
        %1166 = vmatmul.bf16.gmra.mxu0 %v715
        %v1167 = vpop.f32.mrf.mxu0
        %v1168 = vadd.f32 %v999, %v1167
        %v1169 = vpop.f32.mrf.mxu0
        %v1170 = vadd.f32 %v1001, %v1169
        %1171 = vmatmul.bf16.gmra.mxu0 %v717
        %v1172 = vpop.f32.mrf.mxu0
        %v1173 = vadd.f32 %v1004, %v1172
        %v1174 = vpop.f32.mrf.mxu0
        %v1175 = vadd.f32 %v1006, %v1174
        %1176 = vmatmul.bf16.gmra.mxu0 %v719
        %v1177 = vpop.f32.mrf.mxu0
        %v1178 = vadd.f32 %v1009, %v1177
        %v1179 = vpop.f32.mrf.mxu0
        %v1180 = vadd.f32 %v1011, %v1179
        %1181 = vmatmul.bf16.gmra.mxu0 %v721
        %v1182 = vpop.f32.mrf.mxu0
        %v1183 = vadd.f32 %v1014, %v1182
        %v1184 = vpop.f32.mrf.mxu0
        %v1185 = vadd.f32 %v1016, %v1184
        %1186 = vmatmul.bf16.gmra.mxu0 %v723
        %v1187 = vpop.f32.mrf.mxu0
        %v1188 = vadd.f32 %v1019, %v1187
        %v1189 = vpop.f32.mrf.mxu0
        %v1190 = vadd.f32 %v1021, %v1189
        %1191 = vmatmul.bf16.gmra.mxu0 %v725
        %v1192 = vpop.f32.mrf.mxu0
        %v1193 = vadd.f32 %v1024, %v1192
        %v1194 = vpop.f32.mrf.mxu0
        %v1195 = vadd.f32 %v1026, %v1194
        %1196 = vmatmul.bf16.gmra.mxu0 %v727
        %v1197 = vpop.f32.mrf.mxu0
        %v1198 = vadd.f32 %v1029, %v1197
        %v1199 = vpop.f32.mrf.mxu0
        %v1200 = vadd.f32 %v1031, %v1199
        %1201 = vmatmul.bf16.gmra.mxu0 %v729
        %v1202 = vpop.f32.mrf.mxu0
        %v1203 = vadd.f32 %v1034, %v1202
        %v1204 = vpop.f32.mrf.mxu0
        %v1205 = vadd.f32 %v1036, %v1204
        %1206 = vmatmul.bf16.gmra.mxu0 %v731
        %v1207 = vpop.f32.mrf.mxu0
        %v1208 = vadd.f32 %v1039, %v1207
        %v1209 = vpop.f32.mrf.mxu0
        %v1210 = vadd.f32 %v1041, %v1209
        %1211 = vmatmul.bf16.gmra.mxu0 %v733
        %v1212 = vpop.f32.mrf.mxu0
        %v1213 = vadd.f32 %v1044, %v1212
        %v1214 = vpop.f32.mrf.mxu0
        %v1215 = vadd.f32 %v1046, %v1214
        %1216 = vmatmul.bf16.gmra.mxu0 %v735
        %v1217 = vpop.f32.mrf.mxu0
        %v1218 = vadd.f32 %v1049, %v1217
        %v1219 = vpop.f32.mrf.mxu0
        %v1220 = vadd.f32 %v1051, %v1219
        %1221 = vmatmul.bf16.gmra.mxu0 %v737
        %v1222 = vpop.f32.mrf.mxu0
        %v1223 = vadd.f32 %v1054, %v1222
        %v1224 = vpop.f32.mrf.mxu0
        %v1225 = vadd.f32 %v1056, %v1224
        %1226 = vmatmul.bf16.gmra.mxu0 %v739
        %v1227 = vpop.f32.mrf.mxu0
        %v1228 = vadd.f32 %v1059, %v1227
        %v1229 = vpop.f32.mrf.mxu0
        %v1230 = vadd.f32 %v1061, %v1229
        %1231 = vmatmul.bf16.gmra.mxu0 %v741
        %v1232 = vpop.f32.mrf.mxu0
        %v1233 = vadd.f32 %v1064, %v1232
        %v1234 = vpop.f32.mrf.mxu0
        %v1235 = vadd.f32 %v1066, %v1234
        %1236 = vmatmul.bf16.gmra.mxu0 %v743
        %v1237 = vpop.f32.mrf.mxu0
        %v1238 = vadd.f32 %v1069, %v1237
        %v1239 = vpop.f32.mrf.mxu0
        %v1240 = vadd.f32 %v1071, %v1239
        %1241 = vdwg.mxu0
        %1242 = vadd.xlane.f32.xlu0 %v1083
        %v1243 = vpop.xlane.xlu0 %1242
        %1244 = vadd.xlane.f32.xlu0 %v1085
        %v1245 = vpop.xlane.xlu0 %1244
        %1246 = vadd.xlane.f32.xlu0 %v1088
        %v1247 = vpop.xlane.xlu0 %1246
        %1248 = vadd.xlane.f32.xlu0 %v1090
        %v1249 = vpop.xlane.xlu0 %1248
        %1250 = vadd.xlane.f32.xlu0 %v1093
        %v1251 = vpop.xlane.xlu0 %1250
        %1252 = vadd.xlane.f32.xlu0 %v1095
        %v1253 = vpop.xlane.xlu0 %1252
        %1254 = vadd.xlane.f32.xlu0 %v1098
        %v1255 = vpop.xlane.xlu0 %1254
        %1256 = vadd.xlane.f32.xlu0 %v1100
        %v1257 = vpop.xlane.xlu0 %1256
        %1258 = vadd.xlane.f32.xlu0 %v1103
        %v1259 = vpop.xlane.xlu0 %1258
        %1260 = vadd.xlane.f32.xlu0 %v1105
        %v1261 = vpop.xlane.xlu0 %1260
        %1262 = vadd.xlane.f32.xlu0 %v1108
        %v1263 = vpop.xlane.xlu0 %1262
        %1264 = vadd.xlane.f32.xlu0 %v1110
        %v1265 = vpop.xlane.xlu0 %1264
        %1266 = vadd.xlane.f32.xlu0 %v1113
        %v1267 = vpop.xlane.xlu0 %1266
        %1268 = vadd.xlane.f32.xlu0 %v1115
        %v1269 = vpop.xlane.xlu0 %1268
        %1270 = vadd.xlane.f32.xlu0 %v1118
        %v1271 = vpop.xlane.xlu0 %1270
        %1272 = vadd.xlane.f32.xlu0 %v1120
        %v1273 = vpop.xlane.xlu0 %1272
        %1274 = vadd.xlane.f32.xlu0 %v1123
        %v1275 = vpop.xlane.xlu0 %1274
        %1276 = vadd.xlane.f32.xlu0 %v1125
        %v1277 = vpop.xlane.xlu0 %1276
        %1278 = vadd.xlane.f32.xlu0 %v1128
        %v1279 = vpop.xlane.xlu0 %1278
        %1280 = vadd.xlane.f32.xlu0 %v1130
        %v1281 = vpop.xlane.xlu0 %1280
        %1282 = vadd.xlane.f32.xlu0 %v1133
        %v1283 = vpop.xlane.xlu0 %1282
        %1284 = vadd.xlane.f32.xlu0 %v1135
        %v1285 = vpop.xlane.xlu0 %1284
        %1286 = vadd.xlane.f32.xlu0 %v1138
        %v1287 = vpop.xlane.xlu0 %1286
        %1288 = vadd.xlane.f32.xlu0 %v1140
        %v1289 = vpop.xlane.xlu0 %1288
        %1290 = vadd.xlane.f32.xlu0 %v1143
        %v1291 = vpop.xlane.xlu0 %1290
        %1292 = vadd.xlane.f32.xlu0 %v1145
        %v1293 = vpop.xlane.xlu0 %1292
        %1294 = vadd.xlane.f32.xlu0 %v1148
        %v1295 = vpop.xlane.xlu0 %1294
        %1296 = vadd.xlane.f32.xlu0 %v1150
        %v1297 = vpop.xlane.xlu0 %1296
        %1298 = vadd.xlane.f32.xlu0 %v1153
        %v1299 = vpop.xlane.xlu0 %1298
        %1300 = vadd.xlane.f32.xlu0 %v1155
        %v1301 = vpop.xlane.xlu0 %1300
        %1302 = vadd.xlane.f32.xlu0 %v1158
        %v1303 = vpop.xlane.xlu0 %1302
        %1304 = vadd.xlane.f32.xlu0 %v1160
        %v1305 = vpop.xlane.xlu0 %1304
        %1306 = vadd.xlane.f32.xlu0 %v1163
        %v1307 = vpop.xlane.xlu0 %1306
        %1308 = vadd.xlane.f32.xlu0 %v1165
        %v1309 = vpop.xlane.xlu0 %1308
        %1310 = vadd.xlane.f32.xlu0 %v1168
        %v1311 = vpop.xlane.xlu0 %1310
        %1312 = vadd.xlane.f32.xlu0 %v1170
        %v1313 = vpop.xlane.xlu0 %1312
        %1314 = vadd.xlane.f32.xlu0 %v1173
        %v1315 = vpop.xlane.xlu0 %1314
        %1316 = vadd.xlane.f32.xlu0 %v1175
        %v1317 = vpop.xlane.xlu0 %1316
        %1318 = vadd.xlane.f32.xlu0 %v1178
        %v1319 = vpop.xlane.xlu0 %1318
        %1320 = vadd.xlane.f32.xlu0 %v1180
        %v1321 = vpop.xlane.xlu0 %1320
        %1322 = vadd.xlane.f32.xlu0 %v1183
        %v1323 = vpop.xlane.xlu0 %1322
        %1324 = vadd.xlane.f32.xlu0 %v1185
        %v1325 = vpop.xlane.xlu0 %1324
        %1326 = vadd.xlane.f32.xlu0 %v1188
        %v1327 = vpop.xlane.xlu0 %1326
        %1328 = vadd.xlane.f32.xlu0 %v1190
        %v1329 = vpop.xlane.xlu0 %1328
        %1330 = vadd.xlane.f32.xlu0 %v1193
        %v1331 = vpop.xlane.xlu0 %1330
        %1332 = vadd.xlane.f32.xlu0 %v1195
        %v1333 = vpop.xlane.xlu0 %1332
        %1334 = vadd.xlane.f32.xlu0 %v1198
        %v1335 = vpop.xlane.xlu0 %1334
        %1336 = vadd.xlane.f32.xlu0 %v1200
        %v1337 = vpop.xlane.xlu0 %1336
        %1338 = vadd.xlane.f32.xlu0 %v1203
        %v1339 = vpop.xlane.xlu0 %1338
        %1340 = vadd.xlane.f32.xlu0 %v1205
        %v1341 = vpop.xlane.xlu0 %1340
        %1342 = vadd.xlane.f32.xlu0 %v1208
        %v1343 = vpop.xlane.xlu0 %1342
        %1344 = vadd.xlane.f32.xlu0 %v1210
        %v1345 = vpop.xlane.xlu0 %1344
        %1346 = vadd.xlane.f32.xlu0 %v1213
        %v1347 = vpop.xlane.xlu0 %1346
        %1348 = vadd.xlane.f32.xlu0 %v1215
        %v1349 = vpop.xlane.xlu0 %1348
        %1350 = vadd.xlane.f32.xlu0 %v1218
        %v1351 = vpop.xlane.xlu0 %1350
        %1352 = vadd.xlane.f32.xlu0 %v1220
        %v1353 = vpop.xlane.xlu0 %1352
        %1354 = vadd.xlane.f32.xlu0 %v1223
        %v1355 = vpop.xlane.xlu0 %1354
        %1356 = vadd.xlane.f32.xlu0 %v1225
        %v1357 = vpop.xlane.xlu0 %1356
        %1358 = vadd.xlane.f32.xlu0 %v1228
        %v1359 = vpop.xlane.xlu0 %1358
        %1360 = vadd.xlane.f32.xlu0 %v1230
        %v1361 = vpop.xlane.xlu0 %1360
        %1362 = vadd.xlane.f32.xlu0 %v1233
        %v1363 = vpop.xlane.xlu0 %1362
        %1364 = vadd.xlane.f32.xlu0 %v1235
        %v1365 = vpop.xlane.xlu0 %1364
        %1366 = vadd.xlane.f32.xlu0 %v1238
        %v1367 = vpop.xlane.xlu0 %1366
        %1368 = vadd.xlane.f32.xlu0 %v1240
        %v1369 = vpop.xlane.xlu0 %1368
        %v1370 = vmul.f32 %v1243, 0.0078125
        %v1371 = vmul.f32 %v1245, 0.0078125
        %v1372 = vmul.f32 %v1247, 0.0078125
        %v1373 = vmul.f32 %v1249, 0.0078125
        %v1374 = vmul.f32 %v1251, 0.0078125
        %v1375 = vmul.f32 %v1253, 0.0078125
        %v1376 = vmul.f32 %v1255, 0.0078125
        %v1377 = vmul.f32 %v1257, 0.0078125
        %v1378 = vmul.f32 %v1259, 0.0078125
        %v1379 = vmul.f32 %v1261, 0.0078125
        %v1380 = vmul.f32 %v1263, 0.0078125
        %v1381 = vmul.f32 %v1265, 0.0078125
        %v1382 = vmul.f32 %v1267, 0.0078125
        %v1383 = vmul.f32 %v1269, 0.0078125
        %v1384 = vmul.f32 %v1271, 0.0078125
        %v1385 = vmul.f32 %v1273, 0.0078125
        %v1386 = vmul.f32 %v1275, 0.0078125
        %v1387 = vmul.f32 %v1277, 0.0078125
        %v1388 = vmul.f32 %v1279, 0.0078125
        %v1389 = vmul.f32 %v1281, 0.0078125
        %v1390 = vmul.f32 %v1283, 0.0078125
        %v1391 = vmul.f32 %v1285, 0.0078125
        %v1392 = vmul.f32 %v1287, 0.0078125
        %v1393 = vmul.f32 %v1289, 0.0078125
        %v1394 = vmul.f32 %v1291, 0.0078125
        %v1395 = vmul.f32 %v1293, 0.0078125
        %v1396 = vmul.f32 %v1295, 0.0078125
        %v1397 = vmul.f32 %v1297, 0.0078125
        %v1398 = vmul.f32 %v1299, 0.0078125
        %v1399 = vmul.f32 %v1301, 0.0078125
        %v1400 = vmul.f32 %v1303, 0.0078125
        %v1401 = vmul.f32 %v1305, 0.0078125
        %v1402 = vmul.f32 %v1307, 0.0078125
        %v1403 = vmul.f32 %v1309, 0.0078125
        %v1404 = vmul.f32 %v1311, 0.0078125
        %v1405 = vmul.f32 %v1313, 0.0078125
        %v1406 = vmul.f32 %v1315, 0.0078125
        %v1407 = vmul.f32 %v1317, 0.0078125
        %v1408 = vmul.f32 %v1319, 0.0078125
        %v1409 = vmul.f32 %v1321, 0.0078125
        %v1410 = vmul.f32 %v1323, 0.0078125
        %v1411 = vmul.f32 %v1325, 0.0078125
        %v1412 = vmul.f32 %v1327, 0.0078125
        %v1413 = vmul.f32 %v1329, 0.0078125
        %v1414 = vmul.f32 %v1331, 0.0078125
        %v1415 = vmul.f32 %v1333, 0.0078125
        %v1416 = vmul.f32 %v1335, 0.0078125
        %v1417 = vmul.f32 %v1337, 0.0078125
        %v1418 = vmul.f32 %v1339, 0.0078125
        %v1419 = vmul.f32 %v1341, 0.0078125
        %v1420 = vmul.f32 %v1343, 0.0078125
        %v1421 = vmul.f32 %v1345, 0.0078125
        %v1422 = vmul.f32 %v1347, 0.0078125
        %v1423 = vmul.f32 %v1349, 0.0078125
        %v1424 = vmul.f32 %v1351, 0.0078125
        %v1425 = vmul.f32 %v1353, 0.0078125
        %v1426 = vmul.f32 %v1355, 0.0078125
        %v1427 = vmul.f32 %v1357, 0.0078125
        %v1428 = vmul.f32 %v1359, 0.0078125
        %v1429 = vmul.f32 %v1361, 0.0078125
        %v1430 = vmul.f32 %v1363, 0.0078125
        %v1431 = vmul.f32 %v1365, 0.0078125
        %v1432 = vmul.f32 %v1367, 0.0078125
        %v1433 = vmul.f32 %v1369, 0.0078125
        %v1434 = vsub.f32 %v1083, %v1370
        %v1435 = vsub.f32 %v1085, %v1371
        %v1436 = vsub.f32 %v1088, %v1372
        %v1437 = vsub.f32 %v1090, %v1373
        %v1438 = vsub.f32 %v1093, %v1374
        %v1439 = vsub.f32 %v1095, %v1375
        %v1440 = vsub.f32 %v1098, %v1376
        %v1441 = vsub.f32 %v1100, %v1377
        %v1442 = vsub.f32 %v1103, %v1378
        %v1443 = vsub.f32 %v1105, %v1379
        %v1444 = vsub.f32 %v1108, %v1380
        %v1445 = vsub.f32 %v1110, %v1381
        %v1446 = vsub.f32 %v1113, %v1382
        %v1447 = vsub.f32 %v1115, %v1383
        %v1448 = vsub.f32 %v1118, %v1384
        %v1449 = vsub.f32 %v1120, %v1385
        %v1450 = vsub.f32 %v1123, %v1386
        %v1451 = vsub.f32 %v1125, %v1387
        %v1452 = vsub.f32 %v1128, %v1388
        %v1453 = vsub.f32 %v1130, %v1389
        %v1454 = vsub.f32 %v1133, %v1390
        %v1455 = vsub.f32 %v1135, %v1391
        %v1456 = vsub.f32 %v1138, %v1392
        %v1457 = vsub.f32 %v1140, %v1393
        %v1458 = vsub.f32 %v1143, %v1394
        %v1459 = vsub.f32 %v1145, %v1395
        %v1460 = vsub.f32 %v1148, %v1396
        %v1461 = vsub.f32 %v1150, %v1397
        %v1462 = vsub.f32 %v1153, %v1398
        %v1463 = vsub.f32 %v1155, %v1399
        %v1464 = vsub.f32 %v1158, %v1400
        %v1465 = vsub.f32 %v1160, %v1401
        %v1466 = vsub.f32 %v1163, %v1402
        %v1467 = vsub.f32 %v1165, %v1403
        %v1468 = vsub.f32 %v1168, %v1404
        %v1469 = vsub.f32 %v1170, %v1405
        %v1470 = vsub.f32 %v1173, %v1406
        %v1471 = vsub.f32 %v1175, %v1407
        %v1472 = vsub.f32 %v1178, %v1408
        %v1473 = vsub.f32 %v1180, %v1409
        %v1474 = vsub.f32 %v1183, %v1410
        %v1475 = vsub.f32 %v1185, %v1411
        %v1476 = vsub.f32 %v1188, %v1412
        %v1477 = vsub.f32 %v1190, %v1413
        %v1478 = vsub.f32 %v1193, %v1414
        %v1479 = vsub.f32 %v1195, %v1415
        %v1480 = vsub.f32 %v1198, %v1416
        %v1481 = vsub.f32 %v1200, %v1417
        %v1482 = vsub.f32 %v1203, %v1418
        %v1483 = vsub.f32 %v1205, %v1419
        %v1484 = vsub.f32 %v1208, %v1420
        %v1485 = vsub.f32 %v1210, %v1421
        %v1486 = vsub.f32 %v1213, %v1422
        %v1487 = vsub.f32 %v1215, %v1423
        %v1488 = vsub.f32 %v1218, %v1424
        %v1489 = vsub.f32 %v1220, %v1425
        %v1490 = vsub.f32 %v1223, %v1426
        %v1491 = vsub.f32 %v1225, %v1427
        %v1492 = vsub.f32 %v1228, %v1428
        %v1493 = vsub.f32 %v1230, %v1429
        %v1494 = vsub.f32 %v1233, %v1430
        %v1495 = vsub.f32 %v1235, %v1431
        %v1496 = vsub.f32 %v1238, %v1432
        %v1497 = vsub.f32 %v1240, %v1433
        %v1498 = vmul.f32 %v1434, %v1434
        %v1499 = vmul.f32 %v1435, %v1435
        %v1500 = vmul.f32 %v1436, %v1436
        %v1501 = vmul.f32 %v1437, %v1437
        %v1502 = vmul.f32 %v1438, %v1438
        %v1503 = vmul.f32 %v1439, %v1439
        %v1504 = vmul.f32 %v1440, %v1440
        %v1505 = vmul.f32 %v1441, %v1441
        %v1506 = vmul.f32 %v1442, %v1442
        %v1507 = vmul.f32 %v1443, %v1443
        %v1508 = vmul.f32 %v1444, %v1444
        %v1509 = vmul.f32 %v1445, %v1445
        %v1510 = vmul.f32 %v1446, %v1446
        %v1511 = vmul.f32 %v1447, %v1447
        %v1512 = vmul.f32 %v1448, %v1448
        %v1513 = vmul.f32 %v1449, %v1449
        %v1514 = vmul.f32 %v1450, %v1450
        %v1515 = vmul.f32 %v1451, %v1451
        %v1516 = vmul.f32 %v1452, %v1452
        %v1517 = vmul.f32 %v1453, %v1453
        %v1518 = vmul.f32 %v1454, %v1454
        %v1519 = vmul.f32 %v1455, %v1455
        %v1520 = vmul.f32 %v1456, %v1456
        %v1521 = vmul.f32 %v1457, %v1457
        %v1522 = vmul.f32 %v1458, %v1458
        %v1523 = vmul.f32 %v1459, %v1459
        %v1524 = vmul.f32 %v1460, %v1460
        %v1525 = vmul.f32 %v1461, %v1461
        %v1526 = vmul.f32 %v1462, %v1462
        %v1527 = vmul.f32 %v1463, %v1463
        %v1528 = vmul.f32 %v1464, %v1464
        %v1529 = vmul.f32 %v1465, %v1465
        %v1530 = vmul.f32 %v1466, %v1466
        %v1531 = vmul.f32 %v1467, %v1467
        %v1532 = vmul.f32 %v1468, %v1468
        %v1533 = vmul.f32 %v1469, %v1469
        %v1534 = vmul.f32 %v1470, %v1470
        %v1535 = vmul.f32 %v1471, %v1471
        %v1536 = vmul.f32 %v1472, %v1472
        %v1537 = vmul.f32 %v1473, %v1473
        %v1538 = vmul.f32 %v1474, %v1474
        %v1539 = vmul.f32 %v1475, %v1475
        %v1540 = vmul.f32 %v1476, %v1476
        %v1541 = vmul.f32 %v1477, %v1477
        %v1542 = vmul.f32 %v1478, %v1478
        %v1543 = vmul.f32 %v1479, %v1479
        %v1544 = vmul.f32 %v1480, %v1480
        %v1545 = vmul.f32 %v1481, %v1481
        %v1546 = vmul.f32 %v1482, %v1482
        %v1547 = vmul.f32 %v1483, %v1483
        %v1548 = vmul.f32 %v1484, %v1484
        %v1549 = vmul.f32 %v1485, %v1485
        %v1550 = vmul.f32 %v1486, %v1486
        %v1551 = vmul.f32 %v1487, %v1487
        %v1552 = vmul.f32 %v1488, %v1488
        %v1553 = vmul.f32 %v1489, %v1489
        %v1554 = vmul.f32 %v1490, %v1490
        %v1555 = vmul.f32 %v1491, %v1491
        %v1556 = vmul.f32 %v1492, %v1492
        %v1557 = vmul.f32 %v1493, %v1493
        %v1558 = vmul.f32 %v1494, %v1494
        %v1559 = vmul.f32 %v1495, %v1495
        %v1560 = vmul.f32 %v1496, %v1496
        %v1561 = vmul.f32 %v1497, %v1497
        %1562 = vadd.xlane.f32.xlu0 %v1498
        %v1563 = vpop.xlane.xlu0 %1562
        %1564 = vadd.xlane.f32.xlu0 %v1499
        %v1565 = vpop.xlane.xlu0 %1564
        %1566 = vadd.xlane.f32.xlu0 %v1500
        %v1567 = vpop.xlane.xlu0 %1566
        %1568 = vadd.xlane.f32.xlu0 %v1501
        %v1569 = vpop.xlane.xlu0 %1568
        %1570 = vadd.xlane.f32.xlu0 %v1502
        %v1571 = vpop.xlane.xlu0 %1570
        %1572 = vadd.xlane.f32.xlu0 %v1503
        %v1573 = vpop.xlane.xlu0 %1572
        %1574 = vadd.xlane.f32.xlu0 %v1504
        %v1575 = vpop.xlane.xlu0 %1574
        %1576 = vadd.xlane.f32.xlu0 %v1505
        %v1577 = vpop.xlane.xlu0 %1576
        %1578 = vadd.xlane.f32.xlu0 %v1506
        %v1579 = vpop.xlane.xlu0 %1578
        %1580 = vadd.xlane.f32.xlu0 %v1507
        %v1581 = vpop.xlane.xlu0 %1580
        %1582 = vadd.xlane.f32.xlu0 %v1508
        %v1583 = vpop.xlane.xlu0 %1582
        %1584 = vadd.xlane.f32.xlu0 %v1509
        %v1585 = vpop.xlane.xlu0 %1584
        %1586 = vadd.xlane.f32.xlu0 %v1510
        %v1587 = vpop.xlane.xlu0 %1586
        %1588 = vadd.xlane.f32.xlu0 %v1511
        %v1589 = vpop.xlane.xlu0 %1588
        %1590 = vadd.xlane.f32.xlu0 %v1512
        %v1591 = vpop.xlane.xlu0 %1590
        %1592 = vadd.xlane.f32.xlu0 %v1513
        %v1593 = vpop.xlane.xlu0 %1592
        %1594 = vadd.xlane.f32.xlu0 %v1514
        %v1595 = vpop.xlane.xlu0 %1594
        %1596 = vadd.xlane.f32.xlu0 %v1515
        %v1597 = vpop.xlane.xlu0 %1596
        %1598 = vadd.xlane.f32.xlu0 %v1516
        %v1599 = vpop.xlane.xlu0 %1598
        %1600 = vadd.xlane.f32.xlu0 %v1517
        %v1601 = vpop.xlane.xlu0 %1600
        %1602 = vadd.xlane.f32.xlu0 %v1518
        %v1603 = vpop.xlane.xlu0 %1602
        %1604 = vadd.xlane.f32.xlu0 %v1519
        %v1605 = vpop.xlane.xlu0 %1604
        %1606 = vadd.xlane.f32.xlu0 %v1520
        %v1607 = vpop.xlane.xlu0 %1606
        %1608 = vadd.xlane.f32.xlu0 %v1521
        %v1609 = vpop.xlane.xlu0 %1608
        %1610 = vadd.xlane.f32.xlu0 %v1522
        %v1611 = vpop.xlane.xlu0 %1610
        %1612 = vadd.xlane.f32.xlu0 %v1523
        %v1613 = vpop.xlane.xlu0 %1612
        %1614 = vadd.xlane.f32.xlu0 %v1524
        %v1615 = vpop.xlane.xlu0 %1614
        %1616 = vadd.xlane.f32.xlu0 %v1525
        %v1617 = vpop.xlane.xlu0 %1616
        %1618 = vadd.xlane.f32.xlu0 %v1526
        %v1619 = vpop.xlane.xlu0 %1618
        %1620 = vadd.xlane.f32.xlu0 %v1527
        %v1621 = vpop.xlane.xlu0 %1620
        %1622 = vadd.xlane.f32.xlu0 %v1528
        %v1623 = vpop.xlane.xlu0 %1622
        %1624 = vadd.xlane.f32.xlu0 %v1529
        %v1625 = vpop.xlane.xlu0 %1624
        %1626 = vadd.xlane.f32.xlu0 %v1530
        %v1627 = vpop.xlane.xlu0 %1626
        %1628 = vadd.xlane.f32.xlu0 %v1531
        %v1629 = vpop.xlane.xlu0 %1628
        %1630 = vadd.xlane.f32.xlu0 %v1532
        %v1631 = vpop.xlane.xlu0 %1630
        %1632 = vadd.xlane.f32.xlu0 %v1533
        %v1633 = vpop.xlane.xlu0 %1632
        %1634 = vadd.xlane.f32.xlu0 %v1534
        %v1635 = vpop.xlane.xlu0 %1634
        %1636 = vadd.xlane.f32.xlu0 %v1535
        %v1637 = vpop.xlane.xlu0 %1636
        %1638 = vadd.xlane.f32.xlu0 %v1536
        %v1639 = vpop.xlane.xlu0 %1638
        %1640 = vadd.xlane.f32.xlu0 %v1537
        %v1641 = vpop.xlane.xlu0 %1640
        %1642 = vadd.xlane.f32.xlu0 %v1538
        %v1643 = vpop.xlane.xlu0 %1642
        %1644 = vadd.xlane.f32.xlu0 %v1539
        %v1645 = vpop.xlane.xlu0 %1644
        %1646 = vadd.xlane.f32.xlu0 %v1540
        %v1647 = vpop.xlane.xlu0 %1646
        %1648 = vadd.xlane.f32.xlu0 %v1541
        %v1649 = vpop.xlane.xlu0 %1648
        %1650 = vadd.xlane.f32.xlu0 %v1542
        %v1651 = vpop.xlane.xlu0 %1650
        %1652 = vadd.xlane.f32.xlu0 %v1543
        %v1653 = vpop.xlane.xlu0 %1652
        %1654 = vadd.xlane.f32.xlu0 %v1544
        %v1655 = vpop.xlane.xlu0 %1654
        %1656 = vadd.xlane.f32.xlu0 %v1545
        %v1657 = vpop.xlane.xlu0 %1656
        %1658 = vadd.xlane.f32.xlu0 %v1546
        %v1659 = vpop.xlane.xlu0 %1658
        %1660 = vadd.xlane.f32.xlu0 %v1547
        %v1661 = vpop.xlane.xlu0 %1660
        %1662 = vadd.xlane.f32.xlu0 %v1548
        %v1663 = vpop.xlane.xlu0 %1662
        %1664 = vadd.xlane.f32.xlu0 %v1549
        %v1665 = vpop.xlane.xlu0 %1664
        %1666 = vadd.xlane.f32.xlu0 %v1550
        %v1667 = vpop.xlane.xlu0 %1666
        %1668 = vadd.xlane.f32.xlu0 %v1551
        %v1669 = vpop.xlane.xlu0 %1668
        %1670 = vadd.xlane.f32.xlu0 %v1552
        %v1671 = vpop.xlane.xlu0 %1670
        %1672 = vadd.xlane.f32.xlu0 %v1553
        %v1673 = vpop.xlane.xlu0 %1672
        %1674 = vadd.xlane.f32.xlu0 %v1554
        %v1675 = vpop.xlane.xlu0 %1674
        %1676 = vadd.xlane.f32.xlu0 %v1555
        %v1677 = vpop.xlane.xlu0 %1676
        %1678 = vadd.xlane.f32.xlu0 %v1556
        %v1679 = vpop.xlane.xlu0 %1678
        %1680 = vadd.xlane.f32.xlu0 %v1557
        %v1681 = vpop.xlane.xlu0 %1680
        %1682 = vadd.xlane.f32.xlu0 %v1558
        %v1683 = vpop.xlane.xlu0 %1682
        %1684 = vadd.xlane.f32.xlu0 %v1559
        %v1685 = vpop.xlane.xlu0 %1684
        %1686 = vadd.xlane.f32.xlu0 %v1560
        %v1687 = vpop.xlane.xlu0 %1686
        %1688 = vadd.xlane.f32.xlu0 %v1561
        %v1689 = vpop.xlane.xlu0 %1688
        %v1690 = vmul.f32 %v1563, 0.0078125
        %v1691 = vmul.f32 %v1565, 0.0078125
        %v1692 = vmul.f32 %v1567, 0.0078125
        %v1693 = vmul.f32 %v1569, 0.0078125
        %v1694 = vmul.f32 %v1571, 0.0078125
        %v1695 = vmul.f32 %v1573, 0.0078125
        %v1696 = vmul.f32 %v1575, 0.0078125
        %v1697 = vmul.f32 %v1577, 0.0078125
        %v1698 = vmul.f32 %v1579, 0.0078125
        %v1699 = vmul.f32 %v1581, 0.0078125
        %v1700 = vmul.f32 %v1583, 0.0078125
        %v1701 = vmul.f32 %v1585, 0.0078125
        %v1702 = vmul.f32 %v1587, 0.0078125
        %v1703 = vmul.f32 %v1589, 0.0078125
        %v1704 = vmul.f32 %v1591, 0.0078125
        %v1705 = vmul.f32 %v1593, 0.0078125
        %v1706 = vmul.f32 %v1595, 0.0078125
        %v1707 = vmul.f32 %v1597, 0.0078125
        %v1708 = vmul.f32 %v1599, 0.0078125
        %v1709 = vmul.f32 %v1601, 0.0078125
        %v1710 = vmul.f32 %v1603, 0.0078125
        %v1711 = vmul.f32 %v1605, 0.0078125
        %v1712 = vmul.f32 %v1607, 0.0078125
        %v1713 = vmul.f32 %v1609, 0.0078125
        %v1714 = vmul.f32 %v1611, 0.0078125
        %v1715 = vmul.f32 %v1613, 0.0078125
        %v1716 = vmul.f32 %v1615, 0.0078125
        %v1717 = vmul.f32 %v1617, 0.0078125
        %v1718 = vmul.f32 %v1619, 0.0078125
        %v1719 = vmul.f32 %v1621, 0.0078125
        %v1720 = vmul.f32 %v1623, 0.0078125
        %v1721 = vmul.f32 %v1625, 0.0078125
        %v1722 = vmul.f32 %v1627, 0.0078125
        %v1723 = vmul.f32 %v1629, 0.0078125
        %v1724 = vmul.f32 %v1631, 0.0078125
        %v1725 = vmul.f32 %v1633, 0.0078125
        %v1726 = vmul.f32 %v1635, 0.0078125
        %v1727 = vmul.f32 %v1637, 0.0078125
        %v1728 = vmul.f32 %v1639, 0.0078125
        %v1729 = vmul.f32 %v1641, 0.0078125
        %v1730 = vmul.f32 %v1643, 0.0078125
        %v1731 = vmul.f32 %v1645, 0.0078125
        %v1732 = vmul.f32 %v1647, 0.0078125
        %v1733 = vmul.f32 %v1649, 0.0078125
        %v1734 = vmul.f32 %v1651, 0.0078125
        %v1735 = vmul.f32 %v1653, 0.0078125
        %v1736 = vmul.f32 %v1655, 0.0078125
        %v1737 = vmul.f32 %v1657, 0.0078125
        %v1738 = vmul.f32 %v1659, 0.0078125
        %v1739 = vmul.f32 %v1661, 0.0078125
        %v1740 = vmul.f32 %v1663, 0.0078125
        %v1741 = vmul.f32 %v1665, 0.0078125
        %v1742 = vmul.f32 %v1667, 0.0078125
        %v1743 = vmul.f32 %v1669, 0.0078125
        %v1744 = vmul.f32 %v1671, 0.0078125
        %v1745 = vmul.f32 %v1673, 0.0078125
        %v1746 = vmul.f32 %v1675, 0.0078125
        %v1747 = vmul.f32 %v1677, 0.0078125
        %v1748 = vmul.f32 %v1679, 0.0078125
        %v1749 = vmul.f32 %v1681, 0.0078125
        %v1750 = vmul.f32 %v1683, 0.0078125
        %v1751 = vmul.f32 %v1685, 0.0078125
        %v1752 = vmul.f32 %v1687, 0.0078125
        %v1753 = vmul.f32 %v1689, 0.0078125
        %v1754 = vadd.f32 %v1690, 1e-06
        %v1755 = vadd.f32 %v1691, 1e-06
        %v1756 = vadd.f32 %v1692, 1e-06
        %v1757 = vadd.f32 %v1693, 1e-06
        %v1758 = vadd.f32 %v1694, 1e-06
        %v1759 = vadd.f32 %v1695, 1e-06
        %v1760 = vadd.f32 %v1696, 1e-06
        %v1761 = vadd.f32 %v1697, 1e-06
        %v1762 = vadd.f32 %v1698, 1e-06
        %v1763 = vadd.f32 %v1699, 1e-06
        %v1764 = vadd.f32 %v1700, 1e-06
        %v1765 = vadd.f32 %v1701, 1e-06
        %v1766 = vadd.f32 %v1702, 1e-06
        %v1767 = vadd.f32 %v1703, 1e-06
        %v1768 = vadd.f32 %v1704, 1e-06
        %v1769 = vadd.f32 %v1705, 1e-06
        %v1770 = vadd.f32 %v1706, 1e-06
        %v1771 = vadd.f32 %v1707, 1e-06
        %v1772 = vadd.f32 %v1708, 1e-06
        %v1773 = vadd.f32 %v1709, 1e-06
        %v1774 = vadd.f32 %v1710, 1e-06
        %v1775 = vadd.f32 %v1711, 1e-06
        %v1776 = vadd.f32 %v1712, 1e-06
        %v1777 = vadd.f32 %v1713, 1e-06
        %v1778 = vadd.f32 %v1714, 1e-06
        %v1779 = vadd.f32 %v1715, 1e-06
        %v1780 = vadd.f32 %v1716, 1e-06
        %v1781 = vadd.f32 %v1717, 1e-06
        %v1782 = vadd.f32 %v1718, 1e-06
        %v1783 = vadd.f32 %v1719, 1e-06
        %v1784 = vadd.f32 %v1720, 1e-06
        %v1785 = vadd.f32 %v1721, 1e-06
        %v1786 = vadd.f32 %v1722, 1e-06
        %v1787 = vadd.f32 %v1723, 1e-06
        %v1788 = vadd.f32 %v1724, 1e-06
        %v1789 = vadd.f32 %v1725, 1e-06
        %v1790 = vadd.f32 %v1726, 1e-06
        %v1791 = vadd.f32 %v1727, 1e-06
        %v1792 = vadd.f32 %v1728, 1e-06
        %v1793 = vadd.f32 %v1729, 1e-06
        %v1794 = vadd.f32 %v1730, 1e-06
        %v1795 = vadd.f32 %v1731, 1e-06
        %v1796 = vadd.f32 %v1732, 1e-06
        %v1797 = vadd.f32 %v1733, 1e-06
        %v1798 = vadd.f32 %v1734, 1e-06
        %v1799 = vadd.f32 %v1735, 1e-06
        %v1800 = vadd.f32 %v1736, 1e-06
        %v1801 = vadd.f32 %v1737, 1e-06
        %v1802 = vadd.f32 %v1738, 1e-06
        %v1803 = vadd.f32 %v1739, 1e-06
        %v1804 = vadd.f32 %v1740, 1e-06
        %v1805 = vadd.f32 %v1741, 1e-06
        %v1806 = vadd.f32 %v1742, 1e-06
        %v1807 = vadd.f32 %v1743, 1e-06
        %v1808 = vadd.f32 %v1744, 1e-06
        %v1809 = vadd.f32 %v1745, 1e-06
        %v1810 = vadd.f32 %v1746, 1e-06
        %v1811 = vadd.f32 %v1747, 1e-06
        %v1812 = vadd.f32 %v1748, 1e-06
        %v1813 = vadd.f32 %v1749, 1e-06
        %v1814 = vadd.f32 %v1750, 1e-06
        %v1815 = vadd.f32 %v1751, 1e-06
        %v1816 = vadd.f32 %v1752, 1e-06
        %v1817 = vadd.f32 %v1753, 1e-06
        %v1818 = vrsqrt.pop %v1754
        %v1819 = vmul.f32 %v1818, %v1754
        %v1820 = vmul.f32 %v1819, %v1818
        %v1821 = vmul.f32 0.5, %v1820
        %v1822 = vsub.f32 1.5, %v1821
        %v1823 = vmul.f32 %v1818, %v1822
        %vm1824 = vweird.f32 %v1754
        %vm1825 = vweird.f32 %v1818
        %vm1826 = vmor %vm1824, %vm1825
        %v1827 = vsel %vm1826, %v1818, %v1823
        %v1828 = vrsqrt.pop %v1755
        %v1829 = vmul.f32 %v1828, %v1755
        %v1830 = vmul.f32 %v1829, %v1828
        %v1831 = vmul.f32 0.5, %v1830
        %v1832 = vsub.f32 1.5, %v1831
        %v1833 = vmul.f32 %v1828, %v1832
        %vm1834 = vweird.f32 %v1755
        %vm1835 = vweird.f32 %v1828
        %vm1836 = vmor %vm1834, %vm1835
        %v1837 = vsel %vm1836, %v1828, %v1833
        %v1838 = vrsqrt.pop %v1756
        %v1839 = vmul.f32 %v1838, %v1756
        %v1840 = vmul.f32 %v1839, %v1838
        %v1841 = vmul.f32 0.5, %v1840
        %v1842 = vsub.f32 1.5, %v1841
        %v1843 = vmul.f32 %v1838, %v1842
        %vm1844 = vweird.f32 %v1756
        %vm1845 = vweird.f32 %v1838
        %vm1846 = vmor %vm1844, %vm1845
        %v1847 = vsel %vm1846, %v1838, %v1843
        %v1848 = vrsqrt.pop %v1757
        %v1849 = vmul.f32 %v1848, %v1757
        %v1850 = vmul.f32 %v1849, %v1848
        %v1851 = vmul.f32 0.5, %v1850
        %v1852 = vsub.f32 1.5, %v1851
        %v1853 = vmul.f32 %v1848, %v1852
        %vm1854 = vweird.f32 %v1757
        %vm1855 = vweird.f32 %v1848
        %vm1856 = vmor %vm1854, %vm1855
        %v1857 = vsel %vm1856, %v1848, %v1853
        %v1858 = vrsqrt.pop %v1758
        %v1859 = vmul.f32 %v1858, %v1758
        %v1860 = vmul.f32 %v1859, %v1858
        %v1861 = vmul.f32 0.5, %v1860
        %v1862 = vsub.f32 1.5, %v1861
        %v1863 = vmul.f32 %v1858, %v1862
        %vm1864 = vweird.f32 %v1758
        %vm1865 = vweird.f32 %v1858
        %vm1866 = vmor %vm1864, %vm1865
        %v1867 = vsel %vm1866, %v1858, %v1863
        %v1868 = vrsqrt.pop %v1759
        %v1869 = vmul.f32 %v1868, %v1759
        %v1870 = vmul.f32 %v1869, %v1868
        %v1871 = vmul.f32 0.5, %v1870
        %v1872 = vsub.f32 1.5, %v1871
        %v1873 = vmul.f32 %v1868, %v1872
        %vm1874 = vweird.f32 %v1759
        %vm1875 = vweird.f32 %v1868
        %vm1876 = vmor %vm1874, %vm1875
        %v1877 = vsel %vm1876, %v1868, %v1873
        %v1878 = vrsqrt.pop %v1760
        %v1879 = vmul.f32 %v1878, %v1760
        %v1880 = vmul.f32 %v1879, %v1878
        %v1881 = vmul.f32 0.5, %v1880
        %v1882 = vsub.f32 1.5, %v1881
        %v1883 = vmul.f32 %v1878, %v1882
        %vm1884 = vweird.f32 %v1760
        %vm1885 = vweird.f32 %v1878
        %vm1886 = vmor %vm1884, %vm1885
        %v1887 = vsel %vm1886, %v1878, %v1883
        %v1888 = vrsqrt.pop %v1761
        %v1889 = vmul.f32 %v1888, %v1761
        %v1890 = vmul.f32 %v1889, %v1888
        %v1891 = vmul.f32 0.5, %v1890
        %v1892 = vsub.f32 1.5, %v1891
        %v1893 = vmul.f32 %v1888, %v1892
        %vm1894 = vweird.f32 %v1761
        %vm1895 = vweird.f32 %v1888
        %vm1896 = vmor %vm1894, %vm1895
        %v1897 = vsel %vm1896, %v1888, %v1893
        %v1898 = vrsqrt.pop %v1762
        %v1899 = vmul.f32 %v1898, %v1762
        %v1900 = vmul.f32 %v1899, %v1898
        %v1901 = vmul.f32 0.5, %v1900
        %v1902 = vsub.f32 1.5, %v1901
        %v1903 = vmul.f32 %v1898, %v1902
        %vm1904 = vweird.f32 %v1762
        %vm1905 = vweird.f32 %v1898
        %vm1906 = vmor %vm1904, %vm1905
        %v1907 = vsel %vm1906, %v1898, %v1903
        %v1908 = vrsqrt.pop %v1763
        %v1909 = vmul.f32 %v1908, %v1763
        %v1910 = vmul.f32 %v1909, %v1908
        %v1911 = vmul.f32 0.5, %v1910
        %v1912 = vsub.f32 1.5, %v1911
        %v1913 = vmul.f32 %v1908, %v1912
        %vm1914 = vweird.f32 %v1763
        %vm1915 = vweird.f32 %v1908
        %vm1916 = vmor %vm1914, %vm1915
        %v1917 = vsel %vm1916, %v1908, %v1913
        %v1918 = vrsqrt.pop %v1764
        %v1919 = vmul.f32 %v1918, %v1764
        %v1920 = vmul.f32 %v1919, %v1918
        %v1921 = vmul.f32 0.5, %v1920
        %v1922 = vsub.f32 1.5, %v1921
        %v1923 = vmul.f32 %v1918, %v1922
        %vm1924 = vweird.f32 %v1764
        %vm1925 = vweird.f32 %v1918
        %vm1926 = vmor %vm1924, %vm1925
        %v1927 = vsel %vm1926, %v1918, %v1923
        %v1928 = vrsqrt.pop %v1765
        %v1929 = vmul.f32 %v1928, %v1765
        %v1930 = vmul.f32 %v1929, %v1928
        %v1931 = vmul.f32 0.5, %v1930
        %v1932 = vsub.f32 1.5, %v1931
        %v1933 = vmul.f32 %v1928, %v1932
        %vm1934 = vweird.f32 %v1765
        %vm1935 = vweird.f32 %v1928
        %vm1936 = vmor %vm1934, %vm1935
        %v1937 = vsel %vm1936, %v1928, %v1933
        %v1938 = vrsqrt.pop %v1766
        %v1939 = vmul.f32 %v1938, %v1766
        %v1940 = vmul.f32 %v1939, %v1938
        %v1941 = vmul.f32 0.5, %v1940
        %v1942 = vsub.f32 1.5, %v1941
        %v1943 = vmul.f32 %v1938, %v1942
        %vm1944 = vweird.f32 %v1766
        %vm1945 = vweird.f32 %v1938
        %vm1946 = vmor %vm1944, %vm1945
        %v1947 = vsel %vm1946, %v1938, %v1943
        %v1948 = vrsqrt.pop %v1767
        %v1949 = vmul.f32 %v1948, %v1767
        %v1950 = vmul.f32 %v1949, %v1948
        %v1951 = vmul.f32 0.5, %v1950
        %v1952 = vsub.f32 1.5, %v1951
        %v1953 = vmul.f32 %v1948, %v1952
        %vm1954 = vweird.f32 %v1767
        %vm1955 = vweird.f32 %v1948
        %vm1956 = vmor %vm1954, %vm1955
        %v1957 = vsel %vm1956, %v1948, %v1953
        %v1958 = vrsqrt.pop %v1768
        %v1959 = vmul.f32 %v1958, %v1768
        %v1960 = vmul.f32 %v1959, %v1958
        %v1961 = vmul.f32 0.5, %v1960
        %v1962 = vsub.f32 1.5, %v1961
        %v1963 = vmul.f32 %v1958, %v1962
        %vm1964 = vweird.f32 %v1768
        %vm1965 = vweird.f32 %v1958
        %vm1966 = vmor %vm1964, %vm1965
        %v1967 = vsel %vm1966, %v1958, %v1963
        %v1968 = vrsqrt.pop %v1769
        %v1969 = vmul.f32 %v1968, %v1769
        %v1970 = vmul.f32 %v1969, %v1968
        %v1971 = vmul.f32 0.5, %v1970
        %v1972 = vsub.f32 1.5, %v1971
        %v1973 = vmul.f32 %v1968, %v1972
        %vm1974 = vweird.f32 %v1769
        %vm1975 = vweird.f32 %v1968
        %vm1976 = vmor %vm1974, %vm1975
        %v1977 = vsel %vm1976, %v1968, %v1973
        %v1978 = vrsqrt.pop %v1770
        %v1979 = vmul.f32 %v1978, %v1770
        %v1980 = vmul.f32 %v1979, %v1978
        %v1981 = vmul.f32 0.5, %v1980
        %v1982 = vsub.f32 1.5, %v1981
        %v1983 = vmul.f32 %v1978, %v1982
        %vm1984 = vweird.f32 %v1770
        %vm1985 = vweird.f32 %v1978
        %vm1986 = vmor %vm1984, %vm1985
        %v1987 = vsel %vm1986, %v1978, %v1983
        %v1988 = vrsqrt.pop %v1771
        %v1989 = vmul.f32 %v1988, %v1771
        %v1990 = vmul.f32 %v1989, %v1988
        %v1991 = vmul.f32 0.5, %v1990
        %v1992 = vsub.f32 1.5, %v1991
        %v1993 = vmul.f32 %v1988, %v1992
        %vm1994 = vweird.f32 %v1771
        %vm1995 = vweird.f32 %v1988
        %vm1996 = vmor %vm1994, %vm1995
        %v1997 = vsel %vm1996, %v1988, %v1993
        %v1998 = vrsqrt.pop %v1772
        %v1999 = vmul.f32 %v1998, %v1772
        %v2000 = vmul.f32 %v1999, %v1998
        %v2001 = vmul.f32 0.5, %v2000
        %v2002 = vsub.f32 1.5, %v2001
        %v2003 = vmul.f32 %v1998, %v2002
        %vm2004 = vweird.f32 %v1772
        %vm2005 = vweird.f32 %v1998
        %vm2006 = vmor %vm2004, %vm2005
        %v2007 = vsel %vm2006, %v1998, %v2003
        %v2008 = vrsqrt.pop %v1773
        %v2009 = vmul.f32 %v2008, %v1773
        %v2010 = vmul.f32 %v2009, %v2008
        %v2011 = vmul.f32 0.5, %v2010
        %v2012 = vsub.f32 1.5, %v2011
        %v2013 = vmul.f32 %v2008, %v2012
        %vm2014 = vweird.f32 %v1773
        %vm2015 = vweird.f32 %v2008
        %vm2016 = vmor %vm2014, %vm2015
        %v2017 = vsel %vm2016, %v2008, %v2013
        %v2018 = vrsqrt.pop %v1774
        %v2019 = vmul.f32 %v2018, %v1774
        %v2020 = vmul.f32 %v2019, %v2018
        %v2021 = vmul.f32 0.5, %v2020
        %v2022 = vsub.f32 1.5, %v2021
        %v2023 = vmul.f32 %v2018, %v2022
        %vm2024 = vweird.f32 %v1774
        %vm2025 = vweird.f32 %v2018
        %vm2026 = vmor %vm2024, %vm2025
        %v2027 = vsel %vm2026, %v2018, %v2023
        %v2028 = vrsqrt.pop %v1775
        %v2029 = vmul.f32 %v2028, %v1775
        %v2030 = vmul.f32 %v2029, %v2028
        %v2031 = vmul.f32 0.5, %v2030
        %v2032 = vsub.f32 1.5, %v2031
        %v2033 = vmul.f32 %v2028, %v2032
        %vm2034 = vweird.f32 %v1775
        %vm2035 = vweird.f32 %v2028
        %vm2036 = vmor %vm2034, %vm2035
        %v2037 = vsel %vm2036, %v2028, %v2033
        %v2038 = vrsqrt.pop %v1776
        %v2039 = vmul.f32 %v2038, %v1776
        %v2040 = vmul.f32 %v2039, %v2038
        %v2041 = vmul.f32 0.5, %v2040
        %v2042 = vsub.f32 1.5, %v2041
        %v2043 = vmul.f32 %v2038, %v2042
        %vm2044 = vweird.f32 %v1776
        %vm2045 = vweird.f32 %v2038
        %vm2046 = vmor %vm2044, %vm2045
        %v2047 = vsel %vm2046, %v2038, %v2043
        %v2048 = vrsqrt.pop %v1777
        %v2049 = vmul.f32 %v2048, %v1777
        %v2050 = vmul.f32 %v2049, %v2048
        %v2051 = vmul.f32 0.5, %v2050
        %v2052 = vsub.f32 1.5, %v2051
        %v2053 = vmul.f32 %v2048, %v2052
        %vm2054 = vweird.f32 %v1777
        %vm2055 = vweird.f32 %v2048
        %vm2056 = vmor %vm2054, %vm2055
        %v2057 = vsel %vm2056, %v2048, %v2053
        %v2058 = vrsqrt.pop %v1778
        %v2059 = vmul.f32 %v2058, %v1778
        %v2060 = vmul.f32 %v2059, %v2058
        %v2061 = vmul.f32 0.5, %v2060
        %v2062 = vsub.f32 1.5, %v2061
        %v2063 = vmul.f32 %v2058, %v2062
        %vm2064 = vweird.f32 %v1778
        %vm2065 = vweird.f32 %v2058
        %vm2066 = vmor %vm2064, %vm2065
        %v2067 = vsel %vm2066, %v2058, %v2063
        %v2068 = vrsqrt.pop %v1779
        %v2069 = vmul.f32 %v2068, %v1779
        %v2070 = vmul.f32 %v2069, %v2068
        %v2071 = vmul.f32 0.5, %v2070
        %v2072 = vsub.f32 1.5, %v2071
        %v2073 = vmul.f32 %v2068, %v2072
        %vm2074 = vweird.f32 %v1779
        %vm2075 = vweird.f32 %v2068
        %vm2076 = vmor %vm2074, %vm2075
        %v2077 = vsel %vm2076, %v2068, %v2073
        %v2078 = vrsqrt.pop %v1780
        %v2079 = vmul.f32 %v2078, %v1780
        %v2080 = vmul.f32 %v2079, %v2078
        %v2081 = vmul.f32 0.5, %v2080
        %v2082 = vsub.f32 1.5, %v2081
        %v2083 = vmul.f32 %v2078, %v2082
        %vm2084 = vweird.f32 %v1780
        %vm2085 = vweird.f32 %v2078
        %vm2086 = vmor %vm2084, %vm2085
        %v2087 = vsel %vm2086, %v2078, %v2083
        %v2088 = vrsqrt.pop %v1781
        %v2089 = vmul.f32 %v2088, %v1781
        %v2090 = vmul.f32 %v2089, %v2088
        %v2091 = vmul.f32 0.5, %v2090
        %v2092 = vsub.f32 1.5, %v2091
        %v2093 = vmul.f32 %v2088, %v2092
        %vm2094 = vweird.f32 %v1781
        %vm2095 = vweird.f32 %v2088
        %vm2096 = vmor %vm2094, %vm2095
        %v2097 = vsel %vm2096, %v2088, %v2093
        %v2098 = vrsqrt.pop %v1782
        %v2099 = vmul.f32 %v2098, %v1782
        %v2100 = vmul.f32 %v2099, %v2098
        %v2101 = vmul.f32 0.5, %v2100
        %v2102 = vsub.f32 1.5, %v2101
        %v2103 = vmul.f32 %v2098, %v2102
        %vm2104 = vweird.f32 %v1782
        %vm2105 = vweird.f32 %v2098
        %vm2106 = vmor %vm2104, %vm2105
        %v2107 = vsel %vm2106, %v2098, %v2103
        %v2108 = vrsqrt.pop %v1783
        %v2109 = vmul.f32 %v2108, %v1783
        %v2110 = vmul.f32 %v2109, %v2108
        %v2111 = vmul.f32 0.5, %v2110
        %v2112 = vsub.f32 1.5, %v2111
        %v2113 = vmul.f32 %v2108, %v2112
        %vm2114 = vweird.f32 %v1783
        %vm2115 = vweird.f32 %v2108
        %vm2116 = vmor %vm2114, %vm2115
        %v2117 = vsel %vm2116, %v2108, %v2113
        %v2118 = vrsqrt.pop %v1784
        %v2119 = vmul.f32 %v2118, %v1784
        %v2120 = vmul.f32 %v2119, %v2118
        %v2121 = vmul.f32 0.5, %v2120
        %v2122 = vsub.f32 1.5, %v2121
        %v2123 = vmul.f32 %v2118, %v2122
        %vm2124 = vweird.f32 %v1784
        %vm2125 = vweird.f32 %v2118
        %vm2126 = vmor %vm2124, %vm2125
        %v2127 = vsel %vm2126, %v2118, %v2123
        %v2128 = vrsqrt.pop %v1785
        %v2129 = vmul.f32 %v2128, %v1785
        %v2130 = vmul.f32 %v2129, %v2128
        %v2131 = vmul.f32 0.5, %v2130
        %v2132 = vsub.f32 1.5, %v2131
        %v2133 = vmul.f32 %v2128, %v2132
        %vm2134 = vweird.f32 %v1785
        %vm2135 = vweird.f32 %v2128
        %vm2136 = vmor %vm2134, %vm2135
        %v2137 = vsel %vm2136, %v2128, %v2133
        %v2138 = vrsqrt.pop %v1786
        %v2139 = vmul.f32 %v2138, %v1786
        %v2140 = vmul.f32 %v2139, %v2138
        %v2141 = vmul.f32 0.5, %v2140
        %v2142 = vsub.f32 1.5, %v2141
        %v2143 = vmul.f32 %v2138, %v2142
        %vm2144 = vweird.f32 %v1786
        %vm2145 = vweird.f32 %v2138
        %vm2146 = vmor %vm2144, %vm2145
        %v2147 = vsel %vm2146, %v2138, %v2143
        %v2148 = vrsqrt.pop %v1787
        %v2149 = vmul.f32 %v2148, %v1787
        %v2150 = vmul.f32 %v2149, %v2148
        %v2151 = vmul.f32 0.5, %v2150
        %v2152 = vsub.f32 1.5, %v2151
        %v2153 = vmul.f32 %v2148, %v2152
        %vm2154 = vweird.f32 %v1787
        %vm2155 = vweird.f32 %v2148
        %vm2156 = vmor %vm2154, %vm2155
        %v2157 = vsel %vm2156, %v2148, %v2153
        %v2158 = vrsqrt.pop %v1788
        %v2159 = vmul.f32 %v2158, %v1788
        %v2160 = vmul.f32 %v2159, %v2158
        %v2161 = vmul.f32 0.5, %v2160
        %v2162 = vsub.f32 1.5, %v2161
        %v2163 = vmul.f32 %v2158, %v2162
        %vm2164 = vweird.f32 %v1788
        %vm2165 = vweird.f32 %v2158
        %vm2166 = vmor %vm2164, %vm2165
        %v2167 = vsel %vm2166, %v2158, %v2163
        %v2168 = vrsqrt.pop %v1789
        %v2169 = vmul.f32 %v2168, %v1789
        %v2170 = vmul.f32 %v2169, %v2168
        %v2171 = vmul.f32 0.5, %v2170
        %v2172 = vsub.f32 1.5, %v2171
        %v2173 = vmul.f32 %v2168, %v2172
        %vm2174 = vweird.f32 %v1789
        %vm2175 = vweird.f32 %v2168
        %vm2176 = vmor %vm2174, %vm2175
        %v2177 = vsel %vm2176, %v2168, %v2173
        %v2178 = vrsqrt.pop %v1790
        %v2179 = vmul.f32 %v2178, %v1790
        %v2180 = vmul.f32 %v2179, %v2178
        %v2181 = vmul.f32 0.5, %v2180
        %v2182 = vsub.f32 1.5, %v2181
        %v2183 = vmul.f32 %v2178, %v2182
        %vm2184 = vweird.f32 %v1790
        %vm2185 = vweird.f32 %v2178
        %vm2186 = vmor %vm2184, %vm2185
        %v2187 = vsel %vm2186, %v2178, %v2183
        %v2188 = vrsqrt.pop %v1791
        %v2189 = vmul.f32 %v2188, %v1791
        %v2190 = vmul.f32 %v2189, %v2188
        %v2191 = vmul.f32 0.5, %v2190
        %v2192 = vsub.f32 1.5, %v2191
        %v2193 = vmul.f32 %v2188, %v2192
        %vm2194 = vweird.f32 %v1791
        %vm2195 = vweird.f32 %v2188
        %vm2196 = vmor %vm2194, %vm2195
        %v2197 = vsel %vm2196, %v2188, %v2193
        %v2198 = vrsqrt.pop %v1792
        %v2199 = vmul.f32 %v2198, %v1792
        %v2200 = vmul.f32 %v2199, %v2198
        %v2201 = vmul.f32 0.5, %v2200
        %v2202 = vsub.f32 1.5, %v2201
        %v2203 = vmul.f32 %v2198, %v2202
        %vm2204 = vweird.f32 %v1792
        %vm2205 = vweird.f32 %v2198
        %vm2206 = vmor %vm2204, %vm2205
        %v2207 = vsel %vm2206, %v2198, %v2203
        %v2208 = vrsqrt.pop %v1793
        %v2209 = vmul.f32 %v2208, %v1793
        %v2210 = vmul.f32 %v2209, %v2208
        %v2211 = vmul.f32 0.5, %v2210
        %v2212 = vsub.f32 1.5, %v2211
        %v2213 = vmul.f32 %v2208, %v2212
        %vm2214 = vweird.f32 %v1793
        %vm2215 = vweird.f32 %v2208
        %vm2216 = vmor %vm2214, %vm2215
        %v2217 = vsel %vm2216, %v2208, %v2213
        %v2218 = vrsqrt.pop %v1794
        %v2219 = vmul.f32 %v2218, %v1794
        %v2220 = vmul.f32 %v2219, %v2218
        %v2221 = vmul.f32 0.5, %v2220
        %v2222 = vsub.f32 1.5, %v2221
        %v2223 = vmul.f32 %v2218, %v2222
        %vm2224 = vweird.f32 %v1794
        %vm2225 = vweird.f32 %v2218
        %vm2226 = vmor %vm2224, %vm2225
        %v2227 = vsel %vm2226, %v2218, %v2223
        %v2228 = vrsqrt.pop %v1795
        %v2229 = vmul.f32 %v2228, %v1795
        %v2230 = vmul.f32 %v2229, %v2228
        %v2231 = vmul.f32 0.5, %v2230
        %v2232 = vsub.f32 1.5, %v2231
        %v2233 = vmul.f32 %v2228, %v2232
        %vm2234 = vweird.f32 %v1795
        %vm2235 = vweird.f32 %v2228
        %vm2236 = vmor %vm2234, %vm2235
        %v2237 = vsel %vm2236, %v2228, %v2233
        %v2238 = vrsqrt.pop %v1796
        %v2239 = vmul.f32 %v2238, %v1796
        %v2240 = vmul.f32 %v2239, %v2238
        %v2241 = vmul.f32 0.5, %v2240
        %v2242 = vsub.f32 1.5, %v2241
        %v2243 = vmul.f32 %v2238, %v2242
        %vm2244 = vweird.f32 %v1796
        %vm2245 = vweird.f32 %v2238
        %vm2246 = vmor %vm2244, %vm2245
        %v2247 = vsel %vm2246, %v2238, %v2243
        %v2248 = vrsqrt.pop %v1797
        %v2249 = vmul.f32 %v2248, %v1797
        %v2250 = vmul.f32 %v2249, %v2248
        %v2251 = vmul.f32 0.5, %v2250
        %v2252 = vsub.f32 1.5, %v2251
        %v2253 = vmul.f32 %v2248, %v2252
        %vm2254 = vweird.f32 %v1797
        %vm2255 = vweird.f32 %v2248
        %vm2256 = vmor %vm2254, %vm2255
        %v2257 = vsel %vm2256, %v2248, %v2253
        %v2258 = vrsqrt.pop %v1798
        %v2259 = vmul.f32 %v2258, %v1798
        %v2260 = vmul.f32 %v2259, %v2258
        %v2261 = vmul.f32 0.5, %v2260
        %v2262 = vsub.f32 1.5, %v2261
        %v2263 = vmul.f32 %v2258, %v2262
        %vm2264 = vweird.f32 %v1798
        %vm2265 = vweird.f32 %v2258
        %vm2266 = vmor %vm2264, %vm2265
        %v2267 = vsel %vm2266, %v2258, %v2263
        %v2268 = vrsqrt.pop %v1799
        %v2269 = vmul.f32 %v2268, %v1799
        %v2270 = vmul.f32 %v2269, %v2268
        %v2271 = vmul.f32 0.5, %v2270
        %v2272 = vsub.f32 1.5, %v2271
        %v2273 = vmul.f32 %v2268, %v2272
        %vm2274 = vweird.f32 %v1799
        %vm2275 = vweird.f32 %v2268
        %vm2276 = vmor %vm2274, %vm2275
        %v2277 = vsel %vm2276, %v2268, %v2273
        %v2278 = vrsqrt.pop %v1800
        %v2279 = vmul.f32 %v2278, %v1800
        %v2280 = vmul.f32 %v2279, %v2278
        %v2281 = vmul.f32 0.5, %v2280
        %v2282 = vsub.f32 1.5, %v2281
        %v2283 = vmul.f32 %v2278, %v2282
        %vm2284 = vweird.f32 %v1800
        %vm2285 = vweird.f32 %v2278
        %vm2286 = vmor %vm2284, %vm2285
        %v2287 = vsel %vm2286, %v2278, %v2283
        %v2288 = vrsqrt.pop %v1801
        %v2289 = vmul.f32 %v2288, %v1801
        %v2290 = vmul.f32 %v2289, %v2288
        %v2291 = vmul.f32 0.5, %v2290
        %v2292 = vsub.f32 1.5, %v2291
        %v2293 = vmul.f32 %v2288, %v2292
        %vm2294 = vweird.f32 %v1801
        %vm2295 = vweird.f32 %v2288
        %vm2296 = vmor %vm2294, %vm2295
        %v2297 = vsel %vm2296, %v2288, %v2293
        %v2298 = vrsqrt.pop %v1802
        %v2299 = vmul.f32 %v2298, %v1802
        %v2300 = vmul.f32 %v2299, %v2298
        %v2301 = vmul.f32 0.5, %v2300
        %v2302 = vsub.f32 1.5, %v2301
        %v2303 = vmul.f32 %v2298, %v2302
        %vm2304 = vweird.f32 %v1802
        %vm2305 = vweird.f32 %v2298
        %vm2306 = vmor %vm2304, %vm2305
        %v2307 = vsel %vm2306, %v2298, %v2303
        %v2308 = vrsqrt.pop %v1803
        %v2309 = vmul.f32 %v2308, %v1803
        %v2310 = vmul.f32 %v2309, %v2308
        %v2311 = vmul.f32 0.5, %v2310
        %v2312 = vsub.f32 1.5, %v2311
        %v2313 = vmul.f32 %v2308, %v2312
        %vm2314 = vweird.f32 %v1803
        %vm2315 = vweird.f32 %v2308
        %vm2316 = vmor %vm2314, %vm2315
        %v2317 = vsel %vm2316, %v2308, %v2313
        %v2318 = vrsqrt.pop %v1804
        %v2319 = vmul.f32 %v2318, %v1804
        %v2320 = vmul.f32 %v2319, %v2318
        %v2321 = vmul.f32 0.5, %v2320
        %v2322 = vsub.f32 1.5, %v2321
        %v2323 = vmul.f32 %v2318, %v2322
        %vm2324 = vweird.f32 %v1804
        %vm2325 = vweird.f32 %v2318
        %vm2326 = vmor %vm2324, %vm2325
        %v2327 = vsel %vm2326, %v2318, %v2323
        %v2328 = vrsqrt.pop %v1805
        %v2329 = vmul.f32 %v2328, %v1805
        %v2330 = vmul.f32 %v2329, %v2328
        %v2331 = vmul.f32 0.5, %v2330
        %v2332 = vsub.f32 1.5, %v2331
        %v2333 = vmul.f32 %v2328, %v2332
        %vm2334 = vweird.f32 %v1805
        %vm2335 = vweird.f32 %v2328
        %vm2336 = vmor %vm2334, %vm2335
        %v2337 = vsel %vm2336, %v2328, %v2333
        %v2338 = vrsqrt.pop %v1806
        %v2339 = vmul.f32 %v2338, %v1806
        %v2340 = vmul.f32 %v2339, %v2338
        %v2341 = vmul.f32 0.5, %v2340
        %v2342 = vsub.f32 1.5, %v2341
        %v2343 = vmul.f32 %v2338, %v2342
        %vm2344 = vweird.f32 %v1806
        %vm2345 = vweird.f32 %v2338
        %vm2346 = vmor %vm2344, %vm2345
        %v2347 = vsel %vm2346, %v2338, %v2343
        %v2348 = vrsqrt.pop %v1807
        %v2349 = vmul.f32 %v2348, %v1807
        %v2350 = vmul.f32 %v2349, %v2348
        %v2351 = vmul.f32 0.5, %v2350
        %v2352 = vsub.f32 1.5, %v2351
        %v2353 = vmul.f32 %v2348, %v2352
        %vm2354 = vweird.f32 %v1807
        %vm2355 = vweird.f32 %v2348
        %vm2356 = vmor %vm2354, %vm2355
        %v2357 = vsel %vm2356, %v2348, %v2353
        %v2358 = vrsqrt.pop %v1808
        %v2359 = vmul.f32 %v2358, %v1808
        %v2360 = vmul.f32 %v2359, %v2358
        %v2361 = vmul.f32 0.5, %v2360
        %v2362 = vsub.f32 1.5, %v2361
        %v2363 = vmul.f32 %v2358, %v2362
        %vm2364 = vweird.f32 %v1808
        %vm2365 = vweird.f32 %v2358
        %vm2366 = vmor %vm2364, %vm2365
        %v2367 = vsel %vm2366, %v2358, %v2363
        %v2368 = vrsqrt.pop %v1809
        %v2369 = vmul.f32 %v2368, %v1809
        %v2370 = vmul.f32 %v2369, %v2368
        %v2371 = vmul.f32 0.5, %v2370
        %v2372 = vsub.f32 1.5, %v2371
        %v2373 = vmul.f32 %v2368, %v2372
        %vm2374 = vweird.f32 %v1809
        %vm2375 = vweird.f32 %v2368
        %vm2376 = vmor %vm2374, %vm2375
        %v2377 = vsel %vm2376, %v2368, %v2373
        %v2378 = vrsqrt.pop %v1810
        %v2379 = vmul.f32 %v2378, %v1810
        %v2380 = vmul.f32 %v2379, %v2378
        %v2381 = vmul.f32 0.5, %v2380
        %v2382 = vsub.f32 1.5, %v2381
        %v2383 = vmul.f32 %v2378, %v2382
        %vm2384 = vweird.f32 %v1810
        %vm2385 = vweird.f32 %v2378
        %vm2386 = vmor %vm2384, %vm2385
        %v2387 = vsel %vm2386, %v2378, %v2383
        %v2388 = vrsqrt.pop %v1811
        %v2389 = vmul.f32 %v2388, %v1811
        %v2390 = vmul.f32 %v2389, %v2388
        %v2391 = vmul.f32 0.5, %v2390
        %v2392 = vsub.f32 1.5, %v2391
        %v2393 = vmul.f32 %v2388, %v2392
        %vm2394 = vweird.f32 %v1811
        %vm2395 = vweird.f32 %v2388
        %vm2396 = vmor %vm2394, %vm2395
        %v2397 = vsel %vm2396, %v2388, %v2393
        %v2398 = vrsqrt.pop %v1812
        %v2399 = vmul.f32 %v2398, %v1812
        %v2400 = vmul.f32 %v2399, %v2398
        %v2401 = vmul.f32 0.5, %v2400
        %v2402 = vsub.f32 1.5, %v2401
        %v2403 = vmul.f32 %v2398, %v2402
        %vm2404 = vweird.f32 %v1812
        %vm2405 = vweird.f32 %v2398
        %vm2406 = vmor %vm2404, %vm2405
        %v2407 = vsel %vm2406, %v2398, %v2403
        %v2408 = vrsqrt.pop %v1813
        %v2409 = vmul.f32 %v2408, %v1813
        %v2410 = vmul.f32 %v2409, %v2408
        %v2411 = vmul.f32 0.5, %v2410
        %v2412 = vsub.f32 1.5, %v2411
        %v2413 = vmul.f32 %v2408, %v2412
        %vm2414 = vweird.f32 %v1813
        %vm2415 = vweird.f32 %v2408
        %vm2416 = vmor %vm2414, %vm2415
        %v2417 = vsel %vm2416, %v2408, %v2413
        %v2418 = vrsqrt.pop %v1814
        %v2419 = vmul.f32 %v2418, %v1814
        %v2420 = vmul.f32 %v2419, %v2418
        %v2421 = vmul.f32 0.5, %v2420
        %v2422 = vsub.f32 1.5, %v2421
        %v2423 = vmul.f32 %v2418, %v2422
        %vm2424 = vweird.f32 %v1814
        %vm2425 = vweird.f32 %v2418
        %vm2426 = vmor %vm2424, %vm2425
        %v2427 = vsel %vm2426, %v2418, %v2423
        %v2428 = vrsqrt.pop %v1815
        %v2429 = vmul.f32 %v2428, %v1815
        %v2430 = vmul.f32 %v2429, %v2428
        %v2431 = vmul.f32 0.5, %v2430
        %v2432 = vsub.f32 1.5, %v2431
        %v2433 = vmul.f32 %v2428, %v2432
        %vm2434 = vweird.f32 %v1815
        %vm2435 = vweird.f32 %v2428
        %vm2436 = vmor %vm2434, %vm2435
        %v2437 = vsel %vm2436, %v2428, %v2433
        %v2438 = vrsqrt.pop %v1816
        %v2439 = vmul.f32 %v2438, %v1816
        %v2440 = vmul.f32 %v2439, %v2438
        %v2441 = vmul.f32 0.5, %v2440
        %v2442 = vsub.f32 1.5, %v2441
        %v2443 = vmul.f32 %v2438, %v2442
        %vm2444 = vweird.f32 %v1816
        %vm2445 = vweird.f32 %v2438
        %vm2446 = vmor %vm2444, %vm2445
        %v2447 = vsel %vm2446, %v2438, %v2443
        %v2448 = vrsqrt.pop %v1817
        %v2449 = vmul.f32 %v2448, %v1817
        %v2450 = vmul.f32 %v2449, %v2448
        %v2451 = vmul.f32 0.5, %v2450
        %v2452 = vsub.f32 1.5, %v2451
        %v2453 = vmul.f32 %v2448, %v2452
        %vm2454 = vweird.f32 %v1817
        %vm2455 = vweird.f32 %v2448
        %vm2456 = vmor %vm2454, %vm2455
        %v2457 = vsel %vm2456, %v2448, %v2453
        %v2458 = vmul.f32 %v1434, %v1827
        %v2459 = vmul.f32 %v1435, %v1837
        %v2460 = vmul.f32 %v1436, %v1847
        %v2461 = vmul.f32 %v1437, %v1857
        %v2462 = vmul.f32 %v1438, %v1867
        %v2463 = vmul.f32 %v1439, %v1877
        %v2464 = vmul.f32 %v1440, %v1887
        %v2465 = vmul.f32 %v1441, %v1897
        %v2466 = vmul.f32 %v1442, %v1907
        %v2467 = vmul.f32 %v1443, %v1917
        %v2468 = vmul.f32 %v1444, %v1927
        %v2469 = vmul.f32 %v1445, %v1937
        %v2470 = vmul.f32 %v1446, %v1947
        %v2471 = vmul.f32 %v1447, %v1957
        %v2472 = vmul.f32 %v1448, %v1967
        %v2473 = vmul.f32 %v1449, %v1977
        %v2474 = vmul.f32 %v1450, %v1987
        %v2475 = vmul.f32 %v1451, %v1997
        %v2476 = vmul.f32 %v1452, %v2007
        %v2477 = vmul.f32 %v1453, %v2017
        %v2478 = vmul.f32 %v1454, %v2027
        %v2479 = vmul.f32 %v1455, %v2037
        %v2480 = vmul.f32 %v1456, %v2047
        %v2481 = vmul.f32 %v1457, %v2057
        %v2482 = vmul.f32 %v1458, %v2067
        %v2483 = vmul.f32 %v1459, %v2077
        %v2484 = vmul.f32 %v1460, %v2087
        %v2485 = vmul.f32 %v1461, %v2097
        %v2486 = vmul.f32 %v1462, %v2107
        %v2487 = vmul.f32 %v1463, %v2117
        %v2488 = vmul.f32 %v1464, %v2127
        %v2489 = vmul.f32 %v1465, %v2137
        %v2490 = vmul.f32 %v1466, %v2147
        %v2491 = vmul.f32 %v1467, %v2157
        %v2492 = vmul.f32 %v1468, %v2167
        %v2493 = vmul.f32 %v1469, %v2177
        %v2494 = vmul.f32 %v1470, %v2187
        %v2495 = vmul.f32 %v1471, %v2197
        %v2496 = vmul.f32 %v1472, %v2207
        %v2497 = vmul.f32 %v1473, %v2217
        %v2498 = vmul.f32 %v1474, %v2227
        %v2499 = vmul.f32 %v1475, %v2237
        %v2500 = vmul.f32 %v1476, %v2247
        %v2501 = vmul.f32 %v1477, %v2257
        %v2502 = vmul.f32 %v1478, %v2267
        %v2503 = vmul.f32 %v1479, %v2277
        %v2504 = vmul.f32 %v1480, %v2287
        %v2505 = vmul.f32 %v1481, %v2297
        %v2506 = vmul.f32 %v1482, %v2307
        %v2507 = vmul.f32 %v1483, %v2317
        %v2508 = vmul.f32 %v1484, %v2327
        %v2509 = vmul.f32 %v1485, %v2337
        %v2510 = vmul.f32 %v1486, %v2347
        %v2511 = vmul.f32 %v1487, %v2357
        %v2512 = vmul.f32 %v1488, %v2367
        %v2513 = vmul.f32 %v1489, %v2377
        %v2514 = vmul.f32 %v1490, %v2387
        %v2515 = vmul.f32 %v1491, %v2397
        %v2516 = vmul.f32 %v1492, %v2407
        %v2517 = vmul.f32 %v1493, %v2417
        %v2518 = vmul.f32 %v1494, %v2427
        %v2519 = vmul.f32 %v1495, %v2437
        %v2520 = vmul.f32 %v1496, %v2447
        %v2521 = vmul.f32 %v1497, %v2457
        %v2522 = vld [vmem:[%s3] sm:$0x1]
        %v2524 = vperm.slane %v2522, 0
        %v2526 = vmul.f32 %v2458, %v2524
        %v2527 = vmul.f32 %v2459, %v2524
        %v2528 = vmul.f32 %v2460, %v2524
        %v2529 = vmul.f32 %v2461, %v2524
        %v2530 = vmul.f32 %v2462, %v2524
        %v2531 = vmul.f32 %v2463, %v2524
        %v2532 = vmul.f32 %v2464, %v2524
        %v2533 = vmul.f32 %v2465, %v2524
        %v2534 = vmul.f32 %v2466, %v2524
        %v2535 = vmul.f32 %v2467, %v2524
        %v2536 = vmul.f32 %v2468, %v2524
        %v2537 = vmul.f32 %v2469, %v2524
        %v2538 = vmul.f32 %v2470, %v2524
        %v2539 = vmul.f32 %v2471, %v2524
        %v2540 = vmul.f32 %v2472, %v2524
        %v2541 = vmul.f32 %v2473, %v2524
        %v2542 = vmul.f32 %v2474, %v2524
        %v2543 = vmul.f32 %v2475, %v2524
        %v2544 = vmul.f32 %v2476, %v2524
        %v2545 = vmul.f32 %v2477, %v2524
        %v2546 = vmul.f32 %v2478, %v2524
        %v2547 = vmul.f32 %v2479, %v2524
        %v2548 = vmul.f32 %v2480, %v2524
        %v2549 = vmul.f32 %v2481, %v2524
        %v2550 = vmul.f32 %v2482, %v2524
        %v2551 = vmul.f32 %v2483, %v2524
        %v2552 = vmul.f32 %v2484, %v2524
        %v2553 = vmul.f32 %v2485, %v2524
        %v2554 = vmul.f32 %v2486, %v2524
        %v2555 = vmul.f32 %v2487, %v2524
        %v2556 = vmul.f32 %v2488, %v2524
        %v2557 = vmul.f32 %v2489, %v2524
        %v2558 = vmul.f32 %v2490, %v2524
        %v2559 = vmul.f32 %v2491, %v2524
        %v2560 = vmul.f32 %v2492, %v2524
        %v2561 = vmul.f32 %v2493, %v2524
        %v2562 = vmul.f32 %v2494, %v2524
        %v2563 = vmul.f32 %v2495, %v2524
        %v2564 = vmul.f32 %v2496, %v2524
        %v2565 = vmul.f32 %v2497, %v2524
        %v2566 = vmul.f32 %v2498, %v2524
        %v2567 = vmul.f32 %v2499, %v2524
        %v2568 = vmul.f32 %v2500, %v2524
        %v2569 = vmul.f32 %v2501, %v2524
        %v2570 = vmul.f32 %v2502, %v2524
        %v2571 = vmul.f32 %v2503, %v2524
        %v2572 = vmul.f32 %v2504, %v2524
        %v2573 = vmul.f32 %v2505, %v2524
        %v2574 = vmul.f32 %v2506, %v2524
        %v2575 = vmul.f32 %v2507, %v2524
        %v2576 = vmul.f32 %v2508, %v2524
        %v2577 = vmul.f32 %v2509, %v2524
        %v2578 = vmul.f32 %v2510, %v2524
        %v2579 = vmul.f32 %v2511, %v2524
        %v2580 = vmul.f32 %v2512, %v2524
        %v2581 = vmul.f32 %v2513, %v2524
        %v2582 = vmul.f32 %v2514, %v2524
        %v2583 = vmul.f32 %v2515, %v2524
        %v2584 = vmul.f32 %v2516, %v2524
        %v2585 = vmul.f32 %v2517, %v2524
        %v2586 = vmul.f32 %v2518, %v2524
        %v2587 = vmul.f32 %v2519, %v2524
        %v2588 = vmul.f32 %v2520, %v2524
        %v2589 = vmul.f32 %v2521, %v2524
        %v2590 = vld [vmem:[%s4] sm:$0x1]
        %v2592 = vperm.slane %v2590, 0
        %v2594 = vadd.f32 %v2526, %v2592
        %v2595 = vadd.f32 %v2527, %v2592
        %v2596 = vadd.f32 %v2528, %v2592
        %v2597 = vadd.f32 %v2529, %v2592
        %v2598 = vadd.f32 %v2530, %v2592
        %v2599 = vadd.f32 %v2531, %v2592
        %v2600 = vadd.f32 %v2532, %v2592
        %v2601 = vadd.f32 %v2533, %v2592
        %v2602 = vadd.f32 %v2534, %v2592
        %v2603 = vadd.f32 %v2535, %v2592
        %v2604 = vadd.f32 %v2536, %v2592
        %v2605 = vadd.f32 %v2537, %v2592
        %v2606 = vadd.f32 %v2538, %v2592
        %v2607 = vadd.f32 %v2539, %v2592
        %v2608 = vadd.f32 %v2540, %v2592
        %v2609 = vadd.f32 %v2541, %v2592
        %v2610 = vadd.f32 %v2542, %v2592
        %v2611 = vadd.f32 %v2543, %v2592
        %v2612 = vadd.f32 %v2544, %v2592
        %v2613 = vadd.f32 %v2545, %v2592
        %v2614 = vadd.f32 %v2546, %v2592
        %v2615 = vadd.f32 %v2547, %v2592
        %v2616 = vadd.f32 %v2548, %v2592
        %v2617 = vadd.f32 %v2549, %v2592
        %v2618 = vadd.f32 %v2550, %v2592
        %v2619 = vadd.f32 %v2551, %v2592
        %v2620 = vadd.f32 %v2552, %v2592
        %v2621 = vadd.f32 %v2553, %v2592
        %v2622 = vadd.f32 %v2554, %v2592
        %v2623 = vadd.f32 %v2555, %v2592
        %v2624 = vadd.f32 %v2556, %v2592
        %v2625 = vadd.f32 %v2557, %v2592
        %v2626 = vadd.f32 %v2558, %v2592
        %v2627 = vadd.f32 %v2559, %v2592
        %v2628 = vadd.f32 %v2560, %v2592
        %v2629 = vadd.f32 %v2561, %v2592
        %v2630 = vadd.f32 %v2562, %v2592
        %v2631 = vadd.f32 %v2563, %v2592
        %v2632 = vadd.f32 %v2564, %v2592
        %v2633 = vadd.f32 %v2565, %v2592
        %v2634 = vadd.f32 %v2566, %v2592
        %v2635 = vadd.f32 %v2567, %v2592
        %v2636 = vadd.f32 %v2568, %v2592
        %v2637 = vadd.f32 %v2569, %v2592
        %v2638 = vadd.f32 %v2570, %v2592
        %v2639 = vadd.f32 %v2571, %v2592
        %v2640 = vadd.f32 %v2572, %v2592
        %v2641 = vadd.f32 %v2573, %v2592
        %v2642 = vadd.f32 %v2574, %v2592
        %v2643 = vadd.f32 %v2575, %v2592
        %v2644 = vadd.f32 %v2576, %v2592
        %v2645 = vadd.f32 %v2577, %v2592
        %v2646 = vadd.f32 %v2578, %v2592
        %v2647 = vadd.f32 %v2579, %v2592
        %v2648 = vadd.f32 %v2580, %v2592
        %v2649 = vadd.f32 %v2581, %v2592
        %v2650 = vadd.f32 %v2582, %v2592
        %v2651 = vadd.f32 %v2583, %v2592
        %v2652 = vadd.f32 %v2584, %v2592
        %v2653 = vadd.f32 %v2585, %v2592
        %v2654 = vadd.f32 %v2586, %v2592
        %v2655 = vadd.f32 %v2587, %v2592
        %v2656 = vadd.f32 %v2588, %v2592
        %v2657 = vadd.f32 %v2589, %v2592
        %2658 = vst [vmem:[#allocation2] sm:$0xff] 0.0
        %2659 = vst [vmem:[#allocation2 + $0x8] sm:$0xff] 0.0
        %2660 = vst [vmem:[#allocation2 + $0x10] sm:$0x3] 0.0
        %2661 = vst [vmem:[#allocation2 + $0x1b0] sm:$0xff] 0.0
        %2662 = vst [vmem:[#allocation2 + $0x1b8] sm:$0xff] 0.0
        %2663 = vst [vmem:[#allocation2 + $0x1c0] sm:$0x3] 0.0
        %s2664 = scalar_lea.vmem [#allocation2], 408
        %2665 = vst [vmem:[%s2664] sm:$0xff] 0.0
        %2666 = vst [vmem:[%s2664 + $0x8] sm:$0xff] 0.0
        %2667 = vst [vmem:[%s2664 + $0x10] sm:$0x3] 0.0
        %2668 = vst [vmem:[%s2664 + $0x1b0] sm:$0xff] 0.0
        %2669 = vst [vmem:[%s2664 + $0x1b8] sm:$0xff] 0.0
        %2670 = vst [vmem:[%s2664 + $0x1c0] sm:$0x3] 0.0
        %2671 = vst [vmem:[#allocation2] sm:$0x1] 0.0
        %2672 = vst [vmem:[#allocation2 + $0x18] sm:$0x1] 0.0
        %2673 = vst [vmem:[#allocation2 + $0x30] sm:$0x1] 0.0
        %2674 = vst [vmem:[#allocation2 + $0x48] sm:$0x1] 0.0
        %2675 = vst [vmem:[#allocation2 + $0x60] sm:$0x1] 0.0
        %2676 = vst [vmem:[#allocation2 + $0x78] sm:$0x1] 0.0
        %2677 = vst [vmem:[#allocation2 + $0x90] sm:$0x1] 0.0
        %2678 = vst [vmem:[#allocation2 + $0xa8] sm:$0x1] 0.0
        %2679 = vst [vmem:[#allocation2 + $0xc0] sm:$0x1] 0.0
        %2680 = vst [vmem:[#allocation2 + $0xd8] sm:$0x1] 0.0
        %2681 = vst [vmem:[#allocation2 + $0xf0] sm:$0x1] 0.0
        %2682 = vst [vmem:[#allocation2 + $0x108] sm:$0x1] 0.0
        %2683 = vst [vmem:[#allocation2 + $0x120] sm:$0x1] 0.0
        %2684 = vst [vmem:[#allocation2 + $0x138] sm:$0x1] 0.0
        %2685 = vst [vmem:[#allocation2 + $0x150] sm:$0x1] 0.0
        %2686 = vst [vmem:[#allocation2 + $0x168] sm:$0x1] 0.0
        %2687 = vst [vmem:[#allocation2 + $0x180] sm:$0x1] 0.0
        %2688 = vst [vmem:[#allocation2 + $0x198] sm:$0x1] 0.0
        %2689 = vst [vmem:[#allocation2 + $0x1b0] sm:$0x1] 0.0
        %2690 = vst [vmem:[#allocation2 + $0x1c8] sm:$0x1] 0.0
        %2691 = vst [vmem:[#allocation2 + $0x1e0] sm:$0x1] 0.0
        %2692 = vst [vmem:[#allocation2 + $0x1f8] sm:$0x1] 0.0
        %2693 = vst [vmem:[#allocation2 + $0x210] sm:$0x1] 0.0
        %2694 = vst [vmem:[#allocation2 + $0x228] sm:$0x1] 0.0
        %2695 = vst [vmem:[#allocation2 + $0x240] sm:$0x1] 0.0
        %2696 = vst [vmem:[#allocation2 + $0x258] sm:$0x1] 0.0
        %2697 = vst [vmem:[#allocation2 + $0x270] sm:$0x1] 0.0
        %2698 = vst [vmem:[#allocation2 + $0x288] sm:$0x1] 0.0
        %2699 = vst [vmem:[#allocation2 + $0x2a0] sm:$0x1] 0.0
        %2700 = vst [vmem:[#allocation2 + $0x2b8] sm:$0x1] 0.0
        %2701 = vst [vmem:[#allocation2 + $0x2d0] sm:$0x1] 0.0
        %2702 = vst [vmem:[#allocation2 + $0x2e8] sm:$0x1] 0.0
        %2703 = vst [vmem:[#allocation2 + $0x300] sm:$0x1] 0.0
        %2704 = vst [vmem:[#allocation2 + $0x318] sm:$0x1] 0.0
        %2705 = vst [vmem:[#allocation2 + $0x330] sm:$0x1] 0.0
        %2706 = vst [vmem:[#allocation2 + $0x348] sm:$0x1] 0.0
        %2707 = vst [vmem:[#allocation2 + $0x11] sm:$0x1] 0.0
        %2708 = vst [vmem:[#allocation2 + $0x29] sm:$0x1] 0.0
        %2709 = vst [vmem:[#allocation2 + $0x41] sm:$0x1] 0.0
        %2710 = vst [vmem:[#allocation2 + $0x59] sm:$0x1] 0.0
        %2711 = vst [vmem:[#allocation2 + $0x71] sm:$0x1] 0.0
        %2712 = vst [vmem:[#allocation2 + $0x89] sm:$0x1] 0.0
        %2713 = vst [vmem:[#allocation2 + $0xa1] sm:$0x1] 0.0
        %2714 = vst [vmem:[#allocation2 + $0xb9] sm:$0x1] 0.0
        %2715 = vst [vmem:[#allocation2 + $0xd1] sm:$0x1] 0.0
        %2716 = vst [vmem:[#allocation2 + $0xe9] sm:$0x1] 0.0
        %2717 = vst [vmem:[#allocation2 + $0x101] sm:$0x1] 0.0
        %2718 = vst [vmem:[#allocation2 + $0x119] sm:$0x1] 0.0
        %2719 = vst [vmem:[#allocation2 + $0x131] sm:$0x1] 0.0
        %2720 = vst [vmem:[#allocation2 + $0x149] sm:$0x1] 0.0
        %2721 = vst [vmem:[#allocation2 + $0x161] sm:$0x1] 0.0
        %2722 = vst [vmem:[#allocation2 + $0x179] sm:$0x1] 0.0
        %2723 = vst [vmem:[#allocation2 + $0x191] sm:$0x1] 0.0
        %2724 = vst [vmem:[#allocation2 + $0x1a9] sm:$0x1] 0.0
        %2725 = vst [vmem:[#allocation2 + $0x1c1] sm:$0x1] 0.0
        %2726 = vst [vmem:[#allocation2 + $0x1d9] sm:$0x1] 0.0
        %2727 = vst [vmem:[#allocation2 + $0x1f1] sm:$0x1] 0.0
        %2728 = vst [vmem:[#allocation2 + $0x209] sm:$0x1] 0.0
        %2729 = vst [vmem:[#allocation2 + $0x221] sm:$0x1] 0.0
        %2730 = vst [vmem:[#allocation2 + $0x239] sm:$0x1] 0.0
        %2731 = vst [vmem:[#allocation2 + $0x251] sm:$0x1] 0.0
        %2732 = vst [vmem:[#allocation2 + $0x269] sm:$0x1] 0.0
        %2733 = vst [vmem:[#allocation2 + $0x281] sm:$0x1] 0.0
        %2734 = vst [vmem:[#allocation2 + $0x299] sm:$0x1] 0.0
        %2735 = vst [vmem:[#allocation2 + $0x2b1] sm:$0x1] 0.0
        %2736 = vst [vmem:[#allocation2 + $0x2c9] sm:$0x1] 0.0
        %2737 = vst [vmem:[#allocation2 + $0x2e1] sm:$0x1] 0.0
        %2738 = vst [vmem:[#allocation2 + $0x2f9] sm:$0x1] 0.0
        %2739 = vst [vmem:[#allocation2 + $0x311] sm:$0x1] 0.0
        %2740 = vst [vmem:[#allocation2 + $0x329] sm:$0x1] 0.0
        %2741 = vst [vmem:[#allocation2 + $0x341] sm:$0x1] 0.0
        %2742 = vst [vmem:[#allocation2 + $0x359] sm:$0x1] 0.0
        %s2743 = scalar_lea.vmem [#allocation2], 24
        %2744 = vst [vmem:[%s2743 + $0x1] sm:$0xff] %v2594
        %2745 = vst [vmem:[%s2743 + $0x9] sm:$0xff] %v2595
        %2746 = vst [vmem:[%s2743 + $0x19] sm:$0xff] %v2596
        %2747 = vst [vmem:[%s2743 + $0x21] sm:$0xff] %v2597
        %2748 = vst [vmem:[%s2743 + $0x31] sm:$0xff] %v2598
        %2749 = vst [vmem:[%s2743 + $0x39] sm:$0xff] %v2599
        %2750 = vst [vmem:[%s2743 + $0x49] sm:$0xff] %v2600
        %2751 = vst [vmem:[%s2743 + $0x51] sm:$0xff] %v2601
        %2752 = vst [vmem:[%s2743 + $0x61] sm:$0xff] %v2602
        %2753 = vst [vmem:[%s2743 + $0x69] sm:$0xff] %v2603
        %2754 = vst [vmem:[%s2743 + $0x79] sm:$0xff] %v2604
        %2755 = vst [vmem:[%s2743 + $0x81] sm:$0xff] %v2605
        %2756 = vst [vmem:[%s2743 + $0x91] sm:$0xff] %v2606
        %2757 = vst [vmem:[%s2743 + $0x99] sm:$0xff] %v2607
        %2758 = vst [vmem:[%s2743 + $0xa9] sm:$0xff] %v2608
        %2759 = vst [vmem:[%s2743 + $0xb1] sm:$0xff] %v2609
        %2760 = vst [vmem:[%s2743 + $0xc1] sm:$0xff] %v2610
        %2761 = vst [vmem:[%s2743 + $0xc9] sm:$0xff] %v2611
        %2762 = vst [vmem:[%s2743 + $0xd9] sm:$0xff] %v2612
        %2763 = vst [vmem:[%s2743 + $0xe1] sm:$0xff] %v2613
        %2764 = vst [vmem:[%s2743 + $0xf1] sm:$0xff] %v2614
        %2765 = vst [vmem:[%s2743 + $0xf9] sm:$0xff] %v2615
        %2766 = vst [vmem:[%s2743 + $0x109] sm:$0xff] %v2616
        %2767 = vst [vmem:[%s2743 + $0x111] sm:$0xff] %v2617
        %2768 = vst [vmem:[%s2743 + $0x121] sm:$0xff] %v2618
        %2769 = vst [vmem:[%s2743 + $0x129] sm:$0xff] %v2619
        %2770 = vst [vmem:[%s2743 + $0x139] sm:$0xff] %v2620
        %2771 = vst [vmem:[%s2743 + $0x141] sm:$0xff] %v2621
        %2772 = vst [vmem:[%s2743 + $0x151] sm:$0xff] %v2622
        %2773 = vst [vmem:[%s2743 + $0x159] sm:$0xff] %v2623
        %2774 = vst [vmem:[%s2743 + $0x169] sm:$0xff] %v2624
        %2775 = vst [vmem:[%s2743 + $0x171] sm:$0xff] %v2625
        %2776 = vst [vmem:[%s2743 + $0x1b1] sm:$0xff] %v2626
        %2777 = vst [vmem:[%s2743 + $0x1b9] sm:$0xff] %v2627
        %2778 = vst [vmem:[%s2743 + $0x1c9] sm:$0xff] %v2628
        %2779 = vst [vmem:[%s2743 + $0x1d1] sm:$0xff] %v2629
        %2780 = vst [vmem:[%s2743 + $0x1e1] sm:$0xff] %v2630
        %2781 = vst [vmem:[%s2743 + $0x1e9] sm:$0xff] %v2631
        %2782 = vst [vmem:[%s2743 + $0x1f9] sm:$0xff] %v2632
        %2783 = vst [vmem:[%s2743 + $0x201] sm:$0xff] %v2633
        %2784 = vst [vmem:[%s2743 + $0x211] sm:$0xff] %v2634
        %2785 = vst [vmem:[%s2743 + $0x219] sm:$0xff] %v2635
        %2786 = vst [vmem:[%s2743 + $0x229] sm:$0xff] %v2636
        %2787 = vst [vmem:[%s2743 + $0x231] sm:$0xff] %v2637
        %2788 = vst [vmem:[%s2743 + $0x241] sm:$0xff] %v2638
        %2789 = vst [vmem:[%s2743 + $0x249] sm:$0xff] %v2639
        %2790 = vst [vmem:[%s2743 + $0x259] sm:$0xff] %v2640
        %2791 = vst [vmem:[%s2743 + $0x261] sm:$0xff] %v2641
        %2792 = vst [vmem:[%s2743 + $0x271] sm:$0xff] %v2642
        %2793 = vst [vmem:[%s2743 + $0x279] sm:$0xff] %v2643
        %2794 = vst [vmem:[%s2743 + $0x289] sm:$0xff] %v2644
        %2795 = vst [vmem:[%s2743 + $0x291] sm:$0xff] %v2645
        %2796 = vst [vmem:[%s2743 + $0x2a1] sm:$0xff] %v2646
        %2797 = vst [vmem:[%s2743 + $0x2a9] sm:$0xff] %v2647
        %2798 = vst [vmem:[%s2743 + $0x2b9] sm:$0xff] %v2648
        %2799 = vst [vmem:[%s2743 + $0x2c1] sm:$0xff] %v2649
        %2800 = vst [vmem:[%s2743 + $0x2d1] sm:$0xff] %v2650
        %2801 = vst [vmem:[%s2743 + $0x2d9] sm:$0xff] %v2651
        %2802 = vst [vmem:[%s2743 + $0x2e9] sm:$0xff] %v2652
        %2803 = vst [vmem:[%s2743 + $0x2f1] sm:$0xff] %v2653
        %2804 = vst [vmem:[%s2743 + $0x301] sm:$0xff] %v2654
        %2805 = vst [vmem:[%s2743 + $0x309] sm:$0xff] %v2655
        %2806 = vst [vmem:[%s2743 + $0x319] sm:$0xff] %v2656
        %2807 = vst [vmem:[%s2743 + $0x321] sm:$0xff] %v2657
        %v2808 = vld [vmem:[#allocation2] sm:$0xff]
        %v2809 = vld [vmem:[#allocation2 + $0x8] sm:$0xff]
        %v2810 = vld [vmem:[#allocation2 + $0x10] sm:$0x3]
        %v2811 = vld [vmem:[#allocation2 + $0x18] sm:$0xff]
        %v2812 = vld [vmem:[#allocation2 + $0x20] sm:$0xff]
        %v2813 = vld [vmem:[#allocation2 + $0x28] sm:$0x3]
        %v2814 = vld [vmem:[#allocation2 + $0x30] sm:$0xff]
        %v2815 = vld [vmem:[#allocation2 + $0x38] sm:$0xff]
        %v2816 = vld [vmem:[#allocation2 + $0x40] sm:$0x3]
        %v2817 = vld [vmem:[#allocation2 + $0x48] sm:$0xff]
        %v2818 = vld [vmem:[#allocation2 + $0x50] sm:$0xff]
        %v2819 = vld [vmem:[#allocation2 + $0x58] sm:$0x3]
        %v2820 = vld [vmem:[#allocation2 + $0x60] sm:$0xff]
        %v2821 = vld [vmem:[#allocation2 + $0x68] sm:$0xff]
        %v2822 = vld [vmem:[#allocation2 + $0x70] sm:$0x3]
        %v2823 = vld [vmem:[#allocation2 + $0x78] sm:$0xff]
        %v2824 = vld [vmem:[#allocation2 + $0x80] sm:$0xff]
        %v2825 = vld [vmem:[#allocation2 + $0x88] sm:$0x3]
        %v2826 = vld [vmem:[#allocation2 + $0x90] sm:$0xff]
        %v2827 = vld [vmem:[#allocation2 + $0x98] sm:$0xff]
        %v2828 = vld [vmem:[#allocation2 + $0xa0] sm:$0x3]
        %v2829 = vld [vmem:[#allocation2 + $0xa8] sm:$0xff]
        %v2830 = vld [vmem:[#allocation2 + $0xb0] sm:$0xff]
        %v2831 = vld [vmem:[#allocation2 + $0xb8] sm:$0x3]
        %v2832 = vld [vmem:[#allocation2 + $0xc0] sm:$0xff]
        %v2833 = vld [vmem:[#allocation2 + $0xc8] sm:$0xff]
        %v2834 = vld [vmem:[#allocation2 + $0xd0] sm:$0x3]
        %v2835 = vld [vmem:[#allocation2 + $0xd8] sm:$0xff]
        %v2836 = vld [vmem:[#allocation2 + $0xe0] sm:$0xff]
        %v2837 = vld [vmem:[#allocation2 + $0xe8] sm:$0x3]
        %v2838 = vld [vmem:[#allocation2 + $0xf0] sm:$0xff]
        %v2839 = vld [vmem:[#allocation2 + $0xf8] sm:$0xff]
        %v2840 = vld [vmem:[#allocation2 + $0x100] sm:$0x3]
        %v2841 = vld [vmem:[#allocation2 + $0x108] sm:$0xff]
        %v2842 = vld [vmem:[#allocation2 + $0x110] sm:$0xff]
        %v2843 = vld [vmem:[#allocation2 + $0x118] sm:$0x3]
        %v2844 = vld [vmem:[#allocation2 + $0x120] sm:$0xff]
        %v2845 = vld [vmem:[#allocation2 + $0x128] sm:$0xff]
        %v2846 = vld [vmem:[#allocation2 + $0x130] sm:$0x3]
        %v2847 = vld [vmem:[#allocation2 + $0x138] sm:$0xff]
        %v2848 = vld [vmem:[#allocation2 + $0x140] sm:$0xff]
        %v2849 = vld [vmem:[#allocation2 + $0x148] sm:$0x3]
        %v2850 = vld [vmem:[#allocation2 + $0x150] sm:$0xff]
        %v2851 = vld [vmem:[#allocation2 + $0x158] sm:$0xff]
        %v2852 = vld [vmem:[#allocation2 + $0x160] sm:$0x3]
        %v2853 = vld [vmem:[#allocation2 + $0x168] sm:$0xff]
        %v2854 = vld [vmem:[#allocation2 + $0x170] sm:$0xff]
        %v2855 = vld [vmem:[#allocation2 + $0x178] sm:$0x3]
        %v2856 = vld [vmem:[#allocation2 + $0x1b0] sm:$0xff]
        %v2857 = vld [vmem:[#allocation2 + $0x1b8] sm:$0xff]
        %v2858 = vld [vmem:[#allocation2 + $0x1c0] sm:$0x3]
        %v2859 = vld [vmem:[#allocation2 + $0x1c8] sm:$0xff]
        %v2860 = vld [vmem:[#allocation2 + $0x1d0] sm:$0xff]
        %v2861 = vld [vmem:[#allocation2 + $0x1d8] sm:$0x3]
        %v2862 = vld [vmem:[#allocation2 + $0x1e0] sm:$0xff]
        %v2863 = vld [vmem:[#allocation2 + $0x1e8] sm:$0xff]
        %v2864 = vld [vmem:[#allocation2 + $0x1f0] sm:$0x3]
        %v2865 = vld [vmem:[#allocation2 + $0x1f8] sm:$0xff]
        %v2866 = vld [vmem:[#allocation2 + $0x200] sm:$0xff]
        %v2867 = vld [vmem:[#allocation2 + $0x208] sm:$0x3]
        %v2868 = vld [vmem:[#allocation2 + $0x210] sm:$0xff]
        %v2869 = vld [vmem:[#allocation2 + $0x218] sm:$0xff]
        %v2870 = vld [vmem:[#allocation2 + $0x220] sm:$0x3]
        %v2871 = vld [vmem:[#allocation2 + $0x228] sm:$0xff]
        %v2872 = vld [vmem:[#allocation2 + $0x230] sm:$0xff]
        %v2873 = vld [vmem:[#allocation2 + $0x238] sm:$0x3]
        %v2874 = vld [vmem:[#allocation2 + $0x240] sm:$0xff]
        %v2875 = vld [vmem:[#allocation2 + $0x248] sm:$0xff]
        %v2876 = vld [vmem:[#allocation2 + $0x250] sm:$0x3]
        %v2877 = vld [vmem:[#allocation2 + $0x258] sm:$0xff]
        %v2878 = vld [vmem:[#allocation2 + $0x260] sm:$0xff]
        %v2879 = vld [vmem:[#allocation2 + $0x268] sm:$0x3]
        %v2880 = vld [vmem:[#allocation2 + $0x270] sm:$0xff]
        %v2881 = vld [vmem:[#allocation2 + $0x278] sm:$0xff]
        %v2882 = vld [vmem:[#allocation2 + $0x280] sm:$0x3]
        %v2883 = vld [vmem:[#allocation2 + $0x288] sm:$0xff]
        %v2884 = vld [vmem:[#allocation2 + $0x290] sm:$0xff]
        %v2885 = vld [vmem:[#allocation2 + $0x298] sm:$0x3]
        %v2886 = vld [vmem:[#allocation2 + $0x2a0] sm:$0xff]
        %v2887 = vld [vmem:[#allocation2 + $0x2a8] sm:$0xff]
        %v2888 = vld [vmem:[#allocation2 + $0x2b0] sm:$0x3]
        %v2889 = vld [vmem:[#allocation2 + $0x2b8] sm:$0xff]
        %v2890 = vld [vmem:[#allocation2 + $0x2c0] sm:$0xff]
        %v2891 = vld [vmem:[#allocation2 + $0x2c8] sm:$0x3]
        %v2892 = vld [vmem:[#allocation2 + $0x2d0] sm:$0xff]
        %v2893 = vld [vmem:[#allocation2 + $0x2d8] sm:$0xff]
        %v2894 = vld [vmem:[#allocation2 + $0x2e0] sm:$0x3]
        %v2895 = vld [vmem:[#allocation2 + $0x2e8] sm:$0xff]
        %v2896 = vld [vmem:[#allocation2 + $0x2f0] sm:$0xff]
        %v2897 = vld [vmem:[#allocation2 + $0x2f8] sm:$0x3]
        %v2898 = vld [vmem:[#allocation2 + $0x300] sm:$0xff]
        %v2899 = vld [vmem:[#allocation2 + $0x308] sm:$0xff]
        %v2900 = vld [vmem:[#allocation2 + $0x310] sm:$0x3]
        %v2901 = vld [vmem:[#allocation2 + $0x318] sm:$0xff]
        %v2902 = vld [vmem:[#allocation2 + $0x320] sm:$0xff]
        %v2903 = vld [vmem:[#allocation2 + $0x328] sm:$0x3]
        %v2904 = vpack.c.bf16 %v2808, %v2808
        %v2905 = vpack.c.bf16 %v2809, %v2809
        %v2906 = vpack.c.bf16 %v2811, %v2811
        %v2907 = vpack.c.bf16 %v2812, %v2812
        %v2908 = vpack.c.bf16 %v2814, %v2814
        %v2909 = vpack.c.bf16 %v2815, %v2815
        %v2910 = vpack.c.bf16 %v2817, %v2817
        %v2911 = vpack.c.bf16 %v2818, %v2818
        %v2912 = vpack.c.bf16 %v2820, %v2820
        %v2913 = vpack.c.bf16 %v2821, %v2821
        %v2914 = vpack.c.bf16 %v2823, %v2823
        %v2915 = vpack.c.bf16 %v2824, %v2824
        %v2916 = vpack.c.bf16 %v2826, %v2826
        %v2917 = vpack.c.bf16 %v2827, %v2827
        %v2918 = vpack.c.bf16 %v2829, %v2829
        %v2919 = vpack.c.bf16 %v2830, %v2830
        %v2920 = vpack.c.bf16 %v2832, %v2832
        %v2921 = vpack.c.bf16 %v2833, %v2833
        %v2922 = vpack.c.bf16 %v2835, %v2835
        %v2923 = vpack.c.bf16 %v2836, %v2836
        %v2924 = vpack.c.bf16 %v2838, %v2838
        %v2925 = vpack.c.bf16 %v2839, %v2839
        %v2926 = vpack.c.bf16 %v2841, %v2841
        %v2927 = vpack.c.bf16 %v2842, %v2842
        %v2928 = vpack.c.bf16 %v2844, %v2844
        %v2929 = vpack.c.bf16 %v2845, %v2845
        %v2930 = vpack.c.bf16 %v2847, %v2847
        %v2931 = vpack.c.bf16 %v2848, %v2848
        %v2932 = vpack.c.bf16 %v2850, %v2850
        %v2933 = vpack.c.bf16 %v2851, %v2851
        %v2934 = vpack.c.bf16 %v2853, %v2853
        %v2935 = vpack.c.bf16 %v2854, %v2854
        %v2936 = vpack.c.bf16 %v2856, %v2856
        %v2937 = vpack.c.bf16 %v2857, %v2857
        %v2938 = vpack.c.bf16 %v2859, %v2859
        %v2939 = vpack.c.bf16 %v2860, %v2860
        %v2940 = vpack.c.bf16 %v2862, %v2862
        %v2941 = vpack.c.bf16 %v2863, %v2863
        %v2942 = vpack.c.bf16 %v2865, %v2865
        %v2943 = vpack.c.bf16 %v2866, %v2866
        %v2944 = vpack.c.bf16 %v2868, %v2868
        %v2945 = vpack.c.bf16 %v2869, %v2869
        %v2946 = vpack.c.bf16 %v2871, %v2871
        %v2947 = vpack.c.bf16 %v2872, %v2872
        %v2948 = vpack.c.bf16 %v2874, %v2874
        %v2949 = vpack.c.bf16 %v2875, %v2875
        %v2950 = vpack.c.bf16 %v2877, %v2877
        %v2951 = vpack.c.bf16 %v2878, %v2878
        %v2952 = vpack.c.bf16 %v2880, %v2880
        %v2953 = vpack.c.bf16 %v2881, %v2881
        %v2954 = vpack.c.bf16 %v2883, %v2883
        %v2955 = vpack.c.bf16 %v2884, %v2884
        %v2956 = vpack.c.bf16 %v2886, %v2886
        %v2957 = vpack.c.bf16 %v2887, %v2887
        %v2958 = vpack.c.bf16 %v2889, %v2889
        %v2959 = vpack.c.bf16 %v2890, %v2890
        %v2960 = vpack.c.bf16 %v2892, %v2892
        %v2961 = vpack.c.bf16 %v2893, %v2893
        %v2962 = vpack.c.bf16 %v2895, %v2895
        %v2963 = vpack.c.bf16 %v2896, %v2896
        %v2964 = vpack.c.bf16 %v2898, %v2898
        %v2965 = vpack.c.bf16 %v2899, %v2899
        %v2966 = vpack.c.bf16 %v2901, %v2901
        %v2967 = vpack.c.bf16 %v2902, %v2902
        %2968 = vst [vmem:[#allocation3] sm:$0xf] %v2904
        %2969 = vst [vmem:[#allocation3 + $0x24] sm:$0xf] %v2905
        %2970 = vst [vmem:[#allocation3 + $0x48] sm:$0xf] %v2906
        %2971 = vst [vmem:[#allocation3 + $0x6c] sm:$0xf] %v2907
        %2972 = vst [vmem:[#allocation3 + $0x90] sm:$0xf] %v2908
        %2973 = vst [vmem:[#allocation3 + $0xb4] sm:$0xf] %v2909
        %2974 = vst [vmem:[#allocation3 + $0xd8] sm:$0xf] %v2910
        %2975 = vst [vmem:[#allocation3 + $0xfc] sm:$0xf] %v2911
        %2976 = vst [vmem:[#allocation3 + $0x120] sm:$0xf] %v2912
        %2977 = vst [vmem:[#allocation3 + $0x144] sm:$0xf] %v2913
        %2978 = vst [vmem:[#allocation3 + $0x168] sm:$0xf] %v2914
        %2979 = vst [vmem:[#allocation3 + $0x18c] sm:$0xf] %v2915
        %2980 = vst [vmem:[#allocation3 + $0x1b0] sm:$0xf] %v2916
        %2981 = vst [vmem:[#allocation3 + $0x1d4] sm:$0xf] %v2917
        %2982 = vst [vmem:[#allocation3 + $0x1f8] sm:$0xf] %v2918
        %2983 = vst [vmem:[#allocation3 + $0x21c] sm:$0xf] %v2919
        %2984 = vst [vmem:[#allocation3 + $0x240] sm:$0xf] %v2920
        %2985 = vst [vmem:[#allocation3 + $0x264] sm:$0xf] %v2921
        %2986 = vst [vmem:[#allocation3 + $0x288] sm:$0xf] %v2922
        %2987 = vst [vmem:[#allocation3 + $0x2ac] sm:$0xf] %v2923
        %2988 = vst [vmem:[#allocation3 + $0x2d0] sm:$0xf] %v2924
        %2989 = vst [vmem:[#allocation3 + $0x2f4] sm:$0xf] %v2925
        %2990 = vst [vmem:[#allocation3 + $0x318] sm:$0xf] %v2926
        %2991 = vst [vmem:[#allocation3 + $0x33c] sm:$0xf] %v2927
        %2992 = vst [vmem:[#allocation3 + $0x360] sm:$0xf] %v2928
        %2993 = vst [vmem:[#allocation3 + $0x384] sm:$0xf] %v2929
        %2994 = vst [vmem:[#allocation3 + $0x3a8] sm:$0xf] %v2930
        %2995 = vst [vmem:[#allocation3 + $0x3cc] sm:$0xf] %v2931
        %2996 = vst [vmem:[#allocation3 + $0x3f0] sm:$0xf] %v2932
        %2997 = vst [vmem:[#allocation3 + $0x414] sm:$0xf] %v2933
        %2998 = vst [vmem:[#allocation3 + $0x438] sm:$0xf] %v2934
        %2999 = vst [vmem:[#allocation3 + $0x45c] sm:$0xf] %v2935
        %3000 = vst [vmem:[#allocation3 + $0x480] sm:$0xf] %v2936
        %3001 = vst [vmem:[#allocation3 + $0x4a4] sm:$0xf] %v2937
        %3002 = vst [vmem:[#allocation3 + $0x4c8] sm:$0xf] %v2938
        %3003 = vst [vmem:[#allocation3 + $0x4ec] sm:$0xf] %v2939
        %3004 = vst [vmem:[#allocation3 + $0x510] sm:$0xf] %v2940
        %3005 = vst [vmem:[#allocation3 + $0x534] sm:$0xf] %v2941
        %3006 = vst [vmem:[#allocation3 + $0x558] sm:$0xf] %v2942
        %3007 = vst [vmem:[#allocation3 + $0x57c] sm:$0xf] %v2943
        %3008 = vst [vmem:[#allocation3 + $0x5a0] sm:$0xf] %v2944
        %3009 = vst [vmem:[#allocation3 + $0x5c4] sm:$0xf] %v2945
        %3010 = vst [vmem:[#allocation3 + $0x5e8] sm:$0xf] %v2946
        %3011 = vst [vmem:[#allocation3 + $0x60c] sm:$0xf] %v2947
        %3012 = vst [vmem:[#allocation3 + $0x630] sm:$0xf] %v2948
        %3013 = vst [vmem:[#allocation3 + $0x654] sm:$0xf] %v2949
        %3014 = vst [vmem:[#allocation3 + $0x678] sm:$0xf] %v2950
        %3015 = vst [vmem:[#allocation3 + $0x69c] sm:$0xf] %v2951
        %3016 = vst [vmem:[#allocation3 + $0x6c0] sm:$0xf] %v2952
        %3017 = vst [vmem:[#allocation3 + $0x6e4] sm:$0xf] %v2953
        %3018 = vst [vmem:[#allocation3 + $0x708] sm:$0xf] %v2954
        %3019 = vst [vmem:[#allocation3 + $0x72c] sm:$0xf] %v2955
        %3020 = vst [vmem:[#allocation3 + $0x750] sm:$0xf] %v2956
        %3021 = vst [vmem:[#allocation3 + $0x774] sm:$0xf] %v2957
        %3022 = vst [vmem:[#allocation3 + $0x798] sm:$0xf] %v2958
        %3023 = vst [vmem:[#allocation3 + $0x7bc] sm:$0xf] %v2959
        %3024 = vst [vmem:[#allocation3 + $0x7e0] sm:$0xf] %v2960
        %3025 = vst [vmem:[#allocation3 + $0x804] sm:$0xf] %v2961
        %3026 = vst [vmem:[#allocation3 + $0x828] sm:$0xf] %v2962
        %3027 = vst [vmem:[#allocation3 + $0x84c] sm:$0xf] %v2963
        %3028 = vst [vmem:[#allocation3 + $0x870] sm:$0xf] %v2964
        %3029 = vst [vmem:[#allocation3 + $0x894] sm:$0xf] %v2965
        %3030 = vst [vmem:[#allocation3 + $0x8b8] sm:$0xf] %v2966
        %3031 = vst [vmem:[#allocation3 + $0x8dc] sm:$0xf] %v2967
        %vm3128 = vcmask 1046528
        %v3129 = vrot.slane %v2808, 1
        %v3130 = vrot.slane %v2809, 1
        %v3131 = vsel %vm3128, %v3129, %v3130
        %v3132 = vrot.slane %v2810, 1
        %v3133 = vsel %vm3128, %v3130, %v3132
        %v3134 = vrot.slane %v2811, 1
        %v3135 = vrot.slane %v2812, 1
        %v3136 = vsel %vm3128, %v3134, %v3135
        %v3137 = vrot.slane %v2813, 1
        %v3138 = vsel %vm3128, %v3135, %v3137
        %v3139 = vrot.slane %v2814, 1
        %v3140 = vrot.slane %v2815, 1
        %v3141 = vsel %vm3128, %v3139, %v3140
        %v3142 = vrot.slane %v2816, 1
        %v3143 = vsel %vm3128, %v3140, %v3142
        %v3144 = vrot.slane %v2817, 1
        %v3145 = vrot.slane %v2818, 1
        %v3146 = vsel %vm3128, %v3144, %v3145
        %v3147 = vrot.slane %v2819, 1
        %v3148 = vsel %vm3128, %v3145, %v3147
        %v3149 = vrot.slane %v2820, 1
        %v3150 = vrot.slane %v2821, 1
        %v3151 = vsel %vm3128, %v3149, %v3150
        %v3152 = vrot.slane %v2822, 1
        %v3153 = vsel %vm3128, %v3150, %v3152
        %v3154 = vrot.slane %v2823, 1
        %v3155 = vrot.slane %v2824, 1
        %v3156 = vsel %vm3128, %v3154, %v3155
        %v3157 = vrot.slane %v2825, 1
        %v3158 = vsel %vm3128, %v3155, %v3157
        %v3159 = vrot.slane %v2826, 1
        %v3160 = vrot.slane %v2827, 1
        %v3161 = vsel %vm3128, %v3159, %v3160
        %v3162 = vrot.slane %v2828, 1
        %v3163 = vsel %vm3128, %v3160, %v3162
        %v3164 = vrot.slane %v2829, 1
        %v3165 = vrot.slane %v2830, 1
        %v3166 = vsel %vm3128, %v3164, %v3165
        %v3167 = vrot.slane %v2831, 1
        %v3168 = vsel %vm3128, %v3165, %v3167
        %v3169 = vrot.slane %v2832, 1
        %v3170 = vrot.slane %v2833, 1
        %v3171 = vsel %vm3128, %v3169, %v3170
        %v3172 = vrot.slane %v2834, 1
        %v3173 = vsel %vm3128, %v3170, %v3172
        %v3174 = vrot.slane %v2835, 1
        %v3175 = vrot.slane %v2836, 1
        %v3176 = vsel %vm3128, %v3174, %v3175
        %v3177 = vrot.slane %v2837, 1
        %v3178 = vsel %vm3128, %v3175, %v3177
        %v3179 = vrot.slane %v2838, 1
        %v3180 = vrot.slane %v2839, 1
        %v3181 = vsel %vm3128, %v3179, %v3180
        %v3182 = vrot.slane %v2840, 1
        %v3183 = vsel %vm3128, %v3180, %v3182
        %v3184 = vrot.slane %v2841, 1
        %v3185 = vrot.slane %v2842, 1
        %v3186 = vsel %vm3128, %v3184, %v3185
        %v3187 = vrot.slane %v2843, 1
        %v3188 = vsel %vm3128, %v3185, %v3187
        %v3189 = vrot.slane %v2844, 1
        %v3190 = vrot.slane %v2845, 1
        %v3191 = vsel %vm3128, %v3189, %v3190
        %v3192 = vrot.slane %v2846, 1
        %v3193 = vsel %vm3128, %v3190, %v3192
        %v3194 = vrot.slane %v2847, 1
        %v3195 = vrot.slane %v2848, 1
        %v3196 = vsel %vm3128, %v3194, %v3195
        %v3197 = vrot.slane %v2849, 1
        %v3198 = vsel %vm3128, %v3195, %v3197
        %v3199 = vrot.slane %v2850, 1
        %v3200 = vrot.slane %v2851, 1
        %v3201 = vsel %vm3128, %v3199, %v3200
        %v3202 = vrot.slane %v2852, 1
        %v3203 = vsel %vm3128, %v3200, %v3202
        %v3204 = vrot.slane %v2853, 1
        %v3205 = vrot.slane %v2854, 1
        %v3206 = vsel %vm3128, %v3204, %v3205
        %v3207 = vrot.slane %v2855, 1
        %v3208 = vsel %vm3128, %v3205, %v3207
        %v3209 = vrot.slane %v2856, 1
        %v3210 = vrot.slane %v2857, 1
        %v3211 = vsel %vm3128, %v3209, %v3210
        %v3212 = vrot.slane %v2858, 1
        %v3213 = vsel %vm3128, %v3210, %v3212
        %v3214 = vrot.slane %v2859, 1
        %v3215 = vrot.slane %v2860, 1
        %v3216 = vsel %vm3128, %v3214, %v3215
        %v3217 = vrot.slane %v2861, 1
        %v3218 = vsel %vm3128, %v3215, %v3217
        %v3219 = vrot.slane %v2862, 1
        %v3220 = vrot.slane %v2863, 1
        %v3221 = vsel %vm3128, %v3219, %v3220
        %v3222 = vrot.slane %v2864, 1
        %v3223 = vsel %vm3128, %v3220, %v3222
        %v3224 = vrot.slane %v2865, 1
        %v3225 = vrot.slane %v2866, 1
        %v3226 = vsel %vm3128, %v3224, %v3225
        %v3227 = vrot.slane %v2867, 1
        %v3228 = vsel %vm3128, %v3225, %v3227
        %v3229 = vrot.slane %v2868, 1
        %v3230 = vrot.slane %v2869, 1
        %v3231 = vsel %vm3128, %v3229, %v3230
        %v3232 = vrot.slane %v2870, 1
        %v3233 = vsel %vm3128, %v3230, %v3232
        %v3234 = vrot.slane %v2871, 1
        %v3235 = vrot.slane %v2872, 1
        %v3236 = vsel %vm3128, %v3234, %v3235
        %v3237 = vrot.slane %v2873, 1
        %v3238 = vsel %vm3128, %v3235, %v3237
        %v3239 = vrot.slane %v2874, 1
        %v3240 = vrot.slane %v2875, 1
        %v3241 = vsel %vm3128, %v3239, %v3240
        %v3242 = vrot.slane %v2876, 1
        %v3243 = vsel %vm3128, %v3240, %v3242
        %v3244 = vrot.slane %v2877, 1
        %v3245 = vrot.slane %v2878, 1
        %v3246 = vsel %vm3128, %v3244, %v3245
        %v3247 = vrot.slane %v2879, 1
        %v3248 = vsel %vm3128, %v3245, %v3247
        %v3249 = vrot.slane %v2880, 1
        %v3250 = vrot.slane %v2881, 1
        %v3251 = vsel %vm3128, %v3249, %v3250
        %v3252 = vrot.slane %v2882, 1
        %v3253 = vsel %vm3128, %v3250, %v3252
        %v3254 = vrot.slane %v2883, 1
        %v3255 = vrot.slane %v2884, 1
        %v3256 = vsel %vm3128, %v3254, %v3255
        %v3257 = vrot.slane %v2885, 1
        %v3258 = vsel %vm3128, %v3255, %v3257
        %v3259 = vrot.slane %v2886, 1
        %v3260 = vrot.slane %v2887, 1
        %v3261 = vsel %vm3128, %v3259, %v3260
        %v3262 = vrot.slane %v2888, 1
        %v3263 = vsel %vm3128, %v3260, %v3262
        %v3264 = vrot.slane %v2889, 1
        %v3265 = vrot.slane %v2890, 1
        %v3266 = vsel %vm3128, %v3264, %v3265
        %v3267 = vrot.slane %v2891, 1
        %v3268 = vsel %vm3128, %v3265, %v3267
        %v3269 = vrot.slane %v2892, 1
        %v3270 = vrot.slane %v2893, 1
        %v3271 = vsel %vm3128, %v3269, %v3270
        %v3272 = vrot.slane %v2894, 1
        %v3273 = vsel %vm3128, %v3270, %v3272
        %v3274 = vrot.slane %v2895, 1
        %v3275 = vrot.slane %v2896, 1
        %v3276 = vsel %vm3128, %v3274, %v3275
        %v3277 = vrot.slane %v2897, 1
        %v3278 = vsel %vm3128, %v3275, %v3277
        %v3279 = vrot.slane %v2898, 1
        %v3280 = vrot.slane %v2899, 1
        %v3281 = vsel %vm3128, %v3279, %v3280
        %v3282 = vrot.slane %v2900, 1
        %v3283 = vsel %vm3128, %v3280, %v3282
        %v3284 = vrot.slane %v2901, 1
        %v3285 = vrot.slane %v2902, 1
        %v3286 = vsel %vm3128, %v3284, %v3285
        %v3287 = vrot.slane %v2903, 1
        %v3288 = vsel %vm3128, %v3285, %v3287
        %v3353 = vpack.c.bf16 %v3131, %v3131
        %v3354 = vpack.c.bf16 %v3133, %v3133
        %v3355 = vpack.c.bf16 %v3136, %v3136
        %v3356 = vpack.c.bf16 %v3138, %v3138
        %v3357 = vpack.c.bf16 %v3141, %v3141
        %v3358 = vpack.c.bf16 %v3143, %v3143
        %v3359 = vpack.c.bf16 %v3146, %v3146
        %v3360 = vpack.c.bf16 %v3148, %v3148
        %v3361 = vpack.c.bf16 %v3151, %v3151
        %v3362 = vpack.c.bf16 %v3153, %v3153
        %v3363 = vpack.c.bf16 %v3156, %v3156
        %v3364 = vpack.c.bf16 %v3158, %v3158
        %v3365 = vpack.c.bf16 %v3161, %v3161
        %v3366 = vpack.c.bf16 %v3163, %v3163
        %v3367 = vpack.c.bf16 %v3166, %v3166
        %v3368 = vpack.c.bf16 %v3168, %v3168
        %v3369 = vpack.c.bf16 %v3171, %v3171
        %v3370 = vpack.c.bf16 %v3173, %v3173
        %v3371 = vpack.c.bf16 %v3176, %v3176
        %v3372 = vpack.c.bf16 %v3178, %v3178
        %v3373 = vpack.c.bf16 %v3181, %v3181
        %v3374 = vpack.c.bf16 %v3183, %v3183
        %v3375 = vpack.c.bf16 %v3186, %v3186
        %v3376 = vpack.c.bf16 %v3188, %v3188
        %v3377 = vpack.c.bf16 %v3191, %v3191
        %v3378 = vpack.c.bf16 %v3193, %v3193
        %v3379 = vpack.c.bf16 %v3196, %v3196
        %v3380 = vpack.c.bf16 %v3198, %v3198
        %v3381 = vpack.c.bf16 %v3201, %v3201
        %v3382 = vpack.c.bf16 %v3203, %v3203
        %v3383 = vpack.c.bf16 %v3206, %v3206
        %v3384 = vpack.c.bf16 %v3208, %v3208
        %v3385 = vpack.c.bf16 %v3211, %v3211
        %v3386 = vpack.c.bf16 %v3213, %v3213
        %v3387 = vpack.c.bf16 %v3216, %v3216
        %v3388 = vpack.c.bf16 %v3218, %v3218
        %v3389 = vpack.c.bf16 %v3221, %v3221
        %v3390 = vpack.c.bf16 %v3223, %v3223
        %v3391 = vpack.c.bf16 %v3226, %v3226
        %v3392 = vpack.c.bf16 %v3228, %v3228
        %v3393 = vpack.c.bf16 %v3231, %v3231
        %v3394 = vpack.c.bf16 %v3233, %v3233
        %v3395 = vpack.c.bf16 %v3236, %v3236
        %v3396 = vpack.c.bf16 %v3238, %v3238
        %v3397 = vpack.c.bf16 %v3241, %v3241
        %v3398 = vpack.c.bf16 %v3243, %v3243
        %v3399 = vpack.c.bf16 %v3246, %v3246
        %v3400 = vpack.c.bf16 %v3248, %v3248
        %v3401 = vpack.c.bf16 %v3251, %v3251
        %v3402 = vpack.c.bf16 %v3253, %v3253
        %v3403 = vpack.c.bf16 %v3256, %v3256
        %v3404 = vpack.c.bf16 %v3258, %v3258
        %v3405 = vpack.c.bf16 %v3261, %v3261
        %v3406 = vpack.c.bf16 %v3263, %v3263
        %v3407 = vpack.c.bf16 %v3266, %v3266
        %v3408 = vpack.c.bf16 %v3268, %v3268
        %v3409 = vpack.c.bf16 %v3271, %v3271
        %v3410 = vpack.c.bf16 %v3273, %v3273
        %v3411 = vpack.c.bf16 %v3276, %v3276
        %v3412 = vpack.c.bf16 %v3278, %v3278
        %v3413 = vpack.c.bf16 %v3281, %v3281
        %v3414 = vpack.c.bf16 %v3283, %v3283
        %v3415 = vpack.c.bf16 %v3286, %v3286
        %v3416 = vpack.c.bf16 %v3288, %v3288
        %3417 = vst [vmem:[#allocation3 + $0x4] sm:$0xf] %v3353
        %3418 = vst [vmem:[#allocation3 + $0x28] sm:$0xf] %v3354
        %3419 = vst [vmem:[#allocation3 + $0x4c] sm:$0xf] %v3355
        %3420 = vst [vmem:[#allocation3 + $0x70] sm:$0xf] %v3356
        %3421 = vst [vmem:[#allocation3 + $0x94] sm:$0xf] %v3357
        %3422 = vst [vmem:[#allocation3 + $0xb8] sm:$0xf] %v3358
        %3423 = vst [vmem:[#allocation3 + $0xdc] sm:$0xf] %v3359
        %3424 = vst [vmem:[#allocation3 + $0x100] sm:$0xf] %v3360
        %3425 = vst [vmem:[#allocation3 + $0x124] sm:$0xf] %v3361
        %3426 = vst [vmem:[#allocation3 + $0x148] sm:$0xf] %v3362
        %3427 = vst [vmem:[#allocation3 + $0x16c] sm:$0xf] %v3363
        %3428 = vst [vmem:[#allocation3 + $0x190] sm:$0xf] %v3364
        %3429 = vst [vmem:[#allocation3 + $0x1b4] sm:$0xf] %v3365
        %3430 = vst [vmem:[#allocation3 + $0x1d8] sm:$0xf] %v3366
        %3431 = vst [vmem:[#allocation3 + $0x1fc] sm:$0xf] %v3367
        %3432 = vst [vmem:[#allocation3 + $0x220] sm:$0xf] %v3368
        %3433 = vst [vmem:[#allocation3 + $0x244] sm:$0xf] %v3369
        %3434 = vst [vmem:[#allocation3 + $0x268] sm:$0xf] %v3370
        %3435 = vst [vmem:[#allocation3 + $0x28c] sm:$0xf] %v3371
        %3436 = vst [vmem:[#allocation3 + $0x2b0] sm:$0xf] %v3372
        %3437 = vst [vmem:[#allocation3 + $0x2d4] sm:$0xf] %v3373
        %3438 = vst [vmem:[#allocation3 + $0x2f8] sm:$0xf] %v3374
        %3439 = vst [vmem:[#allocation3 + $0x31c] sm:$0xf] %v3375
        %3440 = vst [vmem:[#allocation3 + $0x340] sm:$0xf] %v3376
        %3441 = vst [vmem:[#allocation3 + $0x364] sm:$0xf] %v3377
        %3442 = vst [vmem:[#allocation3 + $0x388] sm:$0xf] %v3378
        %3443 = vst [vmem:[#allocation3 + $0x3ac] sm:$0xf] %v3379
        %3444 = vst [vmem:[#allocation3 + $0x3d0] sm:$0xf] %v3380
        %3445 = vst [vmem:[#allocation3 + $0x3f4] sm:$0xf] %v3381
        %3446 = vst [vmem:[#allocation3 + $0x418] sm:$0xf] %v3382
        %3447 = vst [vmem:[#allocation3 + $0x43c] sm:$0xf] %v3383
        %3448 = vst [vmem:[#allocation3 + $0x460] sm:$0xf] %v3384
        %3449 = vst [vmem:[#allocation3 + $0x484] sm:$0xf] %v3385
        %3450 = vst [vmem:[#allocation3 + $0x4a8] sm:$0xf] %v3386
        %3451 = vst [vmem:[#allocation3 + $0x4cc] sm:$0xf] %v3387
        %3452 = vst [vmem:[#allocation3 + $0x4f0] sm:$0xf] %v3388
        %3453 = vst [vmem:[#allocation3 + $0x514] sm:$0xf] %v3389
        %3454 = vst [vmem:[#allocation3 + $0x538] sm:$0xf] %v3390
        %3455 = vst [vmem:[#allocation3 + $0x55c] sm:$0xf] %v3391
        %3456 = vst [vmem:[#allocation3 + $0x580] sm:$0xf] %v3392
        %3457 = vst [vmem:[#allocation3 + $0x5a4] sm:$0xf] %v3393
        %3458 = vst [vmem:[#allocation3 + $0x5c8] sm:$0xf] %v3394
        %3459 = vst [vmem:[#allocation3 + $0x5ec] sm:$0xf] %v3395
        %3460 = vst [vmem:[#allocation3 + $0x610] sm:$0xf] %v3396
        %3461 = vst [vmem:[#allocation3 + $0x634] sm:$0xf] %v3397
        %3462 = vst [vmem:[#allocation3 + $0x658] sm:$0xf] %v3398
        %3463 = vst [vmem:[#allocation3 + $0x67c] sm:$0xf] %v3399
        %3464 = vst [vmem:[#allocation3 + $0x6a0] sm:$0xf] %v3400
        %3465 = vst [vmem:[#allocation3 + $0x6c4] sm:$0xf] %v3401
        %3466 = vst [vmem:[#allocation3 + $0x6e8] sm:$0xf] %v3402
        %3467 = vst [vmem:[#allocation3 + $0x70c] sm:$0xf] %v3403
        %3468 = vst [vmem:[#allocation3 + $0x730] sm:$0xf] %v3404
        %3469 = vst [vmem:[#allocation3 + $0x754] sm:$0xf] %v3405
        %3470 = vst [vmem:[#allocation3 + $0x778] sm:$0xf] %v3406
        %3471 = vst [vmem:[#allocation3 + $0x79c] sm:$0xf] %v3407
        %3472 = vst [vmem:[#allocation3 + $0x7c0] sm:$0xf] %v3408
        %3473 = vst [vmem:[#allocation3 + $0x7e4] sm:$0xf] %v3409
        %3474 = vst [vmem:[#allocation3 + $0x808] sm:$0xf] %v3410
        %3475 = vst [vmem:[#allocation3 + $0x82c] sm:$0xf] %v3411
        %3476 = vst [vmem:[#allocation3 + $0x850] sm:$0xf] %v3412
        %3477 = vst [vmem:[#allocation3 + $0x874] sm:$0xf] %v3413
        %3478 = vst [vmem:[#allocation3 + $0x898] sm:$0xf] %v3414
        %3479 = vst [vmem:[#allocation3 + $0x8bc] sm:$0xf] %v3415
        %3480 = vst [vmem:[#allocation3 + $0x8e0] sm:$0xf] %v3416
        %vm3481 = vcmask 1045504
        %v3482 = vrot.slane %v2808, 2
        %v3483 = vrot.slane %v2809, 2
        %v3484 = vsel %vm3481, %v3482, %v3483
        %v3485 = vrot.slane %v2810, 2
        %v3486 = vsel %vm3481, %v3483, %v3485
        %v3487 = vrot.slane %v2811, 2
        %v3488 = vrot.slane %v2812, 2
        %v3489 = vsel %vm3481, %v3487, %v3488
        %v3490 = vrot.slane %v2813, 2
        %v3491 = vsel %vm3481, %v3488, %v3490
        %v3492 = vrot.slane %v2814, 2
        %v3493 = vrot.slane %v2815, 2
        %v3494 = vsel %vm3481, %v3492, %v3493
        %v3495 = vrot.slane %v2816, 2
        %v3496 = vsel %vm3481, %v3493, %v3495
        %v3497 = vrot.slane %v2817, 2
        %v3498 = vrot.slane %v2818, 2
        %v3499 = vsel %vm3481, %v3497, %v3498
        %v3500 = vrot.slane %v2819, 2
        %v3501 = vsel %vm3481, %v3498, %v3500
        %v3502 = vrot.slane %v2820, 2
        %v3503 = vrot.slane %v2821, 2
        %v3504 = vsel %vm3481, %v3502, %v3503
        %v3505 = vrot.slane %v2822, 2
        %v3506 = vsel %vm3481, %v3503, %v3505
        %v3507 = vrot.slane %v2823, 2
        %v3508 = vrot.slane %v2824, 2
        %v3509 = vsel %vm3481, %v3507, %v3508
        %v3510 = vrot.slane %v2825, 2
        %v3511 = vsel %vm3481, %v3508, %v3510
        %v3512 = vrot.slane %v2826, 2
        %v3513 = vrot.slane %v2827, 2
        %v3514 = vsel %vm3481, %v3512, %v3513
        %v3515 = vrot.slane %v2828, 2
        %v3516 = vsel %vm3481, %v3513, %v3515
        %v3517 = vrot.slane %v2829, 2
        %v3518 = vrot.slane %v2830, 2
        %v3519 = vsel %vm3481, %v3517, %v3518
        %v3520 = vrot.slane %v2831, 2
        %v3521 = vsel %vm3481, %v3518, %v3520
        %v3522 = vrot.slane %v2832, 2
        %v3523 = vrot.slane %v2833, 2
        %v3524 = vsel %vm3481, %v3522, %v3523
        %v3525 = vrot.slane %v2834, 2
        %v3526 = vsel %vm3481, %v3523, %v3525
        %v3527 = vrot.slane %v2835, 2
        %v3528 = vrot.slane %v2836, 2
        %v3529 = vsel %vm3481, %v3527, %v3528
        %v3530 = vrot.slane %v2837, 2
        %v3531 = vsel %vm3481, %v3528, %v3530
        %v3532 = vrot.slane %v2838, 2
        %v3533 = vrot.slane %v2839, 2
        %v3534 = vsel %vm3481, %v3532, %v3533
        %v3535 = vrot.slane %v2840, 2
        %v3536 = vsel %vm3481, %v3533, %v3535
        %v3537 = vrot.slane %v2841, 2
        %v3538 = vrot.slane %v2842, 2
        %v3539 = vsel %vm3481, %v3537, %v3538
        %v3540 = vrot.slane %v2843, 2
        %v3541 = vsel %vm3481, %v3538, %v3540
        %v3542 = vrot.slane %v2844, 2
        %v3543 = vrot.slane %v2845, 2
        %v3544 = vsel %vm3481, %v3542, %v3543
        %v3545 = vrot.slane %v2846, 2
        %v3546 = vsel %vm3481, %v3543, %v3545
        %v3547 = vrot.slane %v2847, 2
        %v3548 = vrot.slane %v2848, 2
        %v3549 = vsel %vm3481, %v3547, %v3548
        %v3550 = vrot.slane %v2849, 2
        %v3551 = vsel %vm3481, %v3548, %v3550
        %v3552 = vrot.slane %v2850, 2
        %v3553 = vrot.slane %v2851, 2
        %v3554 = vsel %vm3481, %v3552, %v3553
        %v3555 = vrot.slane %v2852, 2
        %v3556 = vsel %vm3481, %v3553, %v3555
        %v3557 = vrot.slane %v2853, 2
        %v3558 = vrot.slane %v2854, 2
        %v3559 = vsel %vm3481, %v3557, %v3558
        %v3560 = vrot.slane %v2855, 2
        %v3561 = vsel %vm3481, %v3558, %v3560
        %v3562 = vrot.slane %v2856, 2
        %v3563 = vrot.slane %v2857, 2
        %v3564 = vsel %vm3481, %v3562, %v3563
        %v3565 = vrot.slane %v2858, 2
        %v3566 = vsel %vm3481, %v3563, %v3565
        %v3567 = vrot.slane %v2859, 2
        %v3568 = vrot.slane %v2860, 2
        %v3569 = vsel %vm3481, %v3567, %v3568
        %v3570 = vrot.slane %v2861, 2
        %v3571 = vsel %vm3481, %v3568, %v3570
        %v3572 = vrot.slane %v2862, 2
        %v3573 = vrot.slane %v2863, 2
        %v3574 = vsel %vm3481, %v3572, %v3573
        %v3575 = vrot.slane %v2864, 2
        %v3576 = vsel %vm3481, %v3573, %v3575
        %v3577 = vrot.slane %v2865, 2
        %v3578 = vrot.slane %v2866, 2
        %v3579 = vsel %vm3481, %v3577, %v3578
        %v3580 = vrot.slane %v2867, 2
        %v3581 = vsel %vm3481, %v3578, %v3580
        %v3582 = vrot.slane %v2868, 2
        %v3583 = vrot.slane %v2869, 2
        %v3584 = vsel %vm3481, %v3582, %v3583
        %v3585 = vrot.slane %v2870, 2
        %v3586 = vsel %vm3481, %v3583, %v3585
        %v3587 = vrot.slane %v2871, 2
        %v3588 = vrot.slane %v2872, 2
        %v3589 = vsel %vm3481, %v3587, %v3588
        %v3590 = vrot.slane %v2873, 2
        %v3591 = vsel %vm3481, %v3588, %v3590
        %v3592 = vrot.slane %v2874, 2
        %v3593 = vrot.slane %v2875, 2
        %v3594 = vsel %vm3481, %v3592, %v3593
        %v3595 = vrot.slane %v2876, 2
        %v3596 = vsel %vm3481, %v3593, %v3595
        %v3597 = vrot.slane %v2877, 2
        %v3598 = vrot.slane %v2878, 2
        %v3599 = vsel %vm3481, %v3597, %v3598
        %v3600 = vrot.slane %v2879, 2
        %v3601 = vsel %vm3481, %v3598, %v3600
        %v3602 = vrot.slane %v2880, 2
        %v3603 = vrot.slane %v2881, 2
        %v3604 = vsel %vm3481, %v3602, %v3603
        %v3605 = vrot.slane %v2882, 2
        %v3606 = vsel %vm3481, %v3603, %v3605
        %v3607 = vrot.slane %v2883, 2
        %v3608 = vrot.slane %v2884, 2
        %v3609 = vsel %vm3481, %v3607, %v3608
        %v3610 = vrot.slane %v2885, 2
        %v3611 = vsel %vm3481, %v3608, %v3610
        %v3612 = vrot.slane %v2886, 2
        %v3613 = vrot.slane %v2887, 2
        %v3614 = vsel %vm3481, %v3612, %v3613
        %v3615 = vrot.slane %v2888, 2
        %v3616 = vsel %vm3481, %v3613, %v3615
        %v3617 = vrot.slane %v2889, 2
        %v3618 = vrot.slane %v2890, 2
        %v3619 = vsel %vm3481, %v3617, %v3618
        %v3620 = vrot.slane %v2891, 2
        %v3621 = vsel %vm3481, %v3618, %v3620
        %v3622 = vrot.slane %v2892, 2
        %v3623 = vrot.slane %v2893, 2
        %v3624 = vsel %vm3481, %v3622, %v3623
        %v3625 = vrot.slane %v2894, 2
        %v3626 = vsel %vm3481, %v3623, %v3625
        %v3627 = vrot.slane %v2895, 2
        %v3628 = vrot.slane %v2896, 2
        %v3629 = vsel %vm3481, %v3627, %v3628
        %v3630 = vrot.slane %v2897, 2
        %v3631 = vsel %vm3481, %v3628, %v3630
        %v3632 = vrot.slane %v2898, 2
        %v3633 = vrot.slane %v2899, 2
        %v3634 = vsel %vm3481, %v3632, %v3633
        %v3635 = vrot.slane %v2900, 2
        %v3636 = vsel %vm3481, %v3633, %v3635
        %v3637 = vrot.slane %v2901, 2
        %v3638 = vrot.slane %v2902, 2
        %v3639 = vsel %vm3481, %v3637, %v3638
        %v3640 = vrot.slane %v2903, 2
        %v3641 = vsel %vm3481, %v3638, %v3640
        %v3706 = vpack.c.bf16 %v3484, %v3484
        %v3707 = vpack.c.bf16 %v3486, %v3486
        %v3708 = vpack.c.bf16 %v3489, %v3489
        %v3709 = vpack.c.bf16 %v3491, %v3491
        %v3710 = vpack.c.bf16 %v3494, %v3494
        %v3711 = vpack.c.bf16 %v3496, %v3496
        %v3712 = vpack.c.bf16 %v3499, %v3499
        %v3713 = vpack.c.bf16 %v3501, %v3501
        %v3714 = vpack.c.bf16 %v3504, %v3504
        %v3715 = vpack.c.bf16 %v3506, %v3506
        %v3716 = vpack.c.bf16 %v3509, %v3509
        %v3717 = vpack.c.bf16 %v3511, %v3511
        %v3718 = vpack.c.bf16 %v3514, %v3514
        %v3719 = vpack.c.bf16 %v3516, %v3516
        %v3720 = vpack.c.bf16 %v3519, %v3519
        %v3721 = vpack.c.bf16 %v3521, %v3521
        %v3722 = vpack.c.bf16 %v3524, %v3524
        %v3723 = vpack.c.bf16 %v3526, %v3526
        %v3724 = vpack.c.bf16 %v3529, %v3529
        %v3725 = vpack.c.bf16 %v3531, %v3531
        %v3726 = vpack.c.bf16 %v3534, %v3534
        %v3727 = vpack.c.bf16 %v3536, %v3536
        %v3728 = vpack.c.bf16 %v3539, %v3539
        %v3729 = vpack.c.bf16 %v3541, %v3541
        %v3730 = vpack.c.bf16 %v3544, %v3544
        %v3731 = vpack.c.bf16 %v3546, %v3546
        %v3732 = vpack.c.bf16 %v3549, %v3549
        %v3733 = vpack.c.bf16 %v3551, %v3551
        %v3734 = vpack.c.bf16 %v3554, %v3554
        %v3735 = vpack.c.bf16 %v3556, %v3556
        %v3736 = vpack.c.bf16 %v3559, %v3559
        %v3737 = vpack.c.bf16 %v3561, %v3561
        %v3738 = vpack.c.bf16 %v3564, %v3564
        %v3739 = vpack.c.bf16 %v3566, %v3566
        %v3740 = vpack.c.bf16 %v3569, %v3569
        %v3741 = vpack.c.bf16 %v3571, %v3571
        %v3742 = vpack.c.bf16 %v3574, %v3574
        %v3743 = vpack.c.bf16 %v3576, %v3576
        %v3744 = vpack.c.bf16 %v3579, %v3579
        %v3745 = vpack.c.bf16 %v3581, %v3581
        %v3746 = vpack.c.bf16 %v3584, %v3584
        %v3747 = vpack.c.bf16 %v3586, %v3586
        %v3748 = vpack.c.bf16 %v3589, %v3589
        %v3749 = vpack.c.bf16 %v3591, %v3591
        %v3750 = vpack.c.bf16 %v3594, %v3594
        %v3751 = vpack.c.bf16 %v3596, %v3596
        %v3752 = vpack.c.bf16 %v3599, %v3599
        %v3753 = vpack.c.bf16 %v3601, %v3601
        %v3754 = vpack.c.bf16 %v3604, %v3604
        %v3755 = vpack.c.bf16 %v3606, %v3606
        %v3756 = vpack.c.bf16 %v3609, %v3609
        %v3757 = vpack.c.bf16 %v3611, %v3611
        %v3758 = vpack.c.bf16 %v3614, %v3614
        %v3759 = vpack.c.bf16 %v3616, %v3616
        %v3760 = vpack.c.bf16 %v3619, %v3619
        %v3761 = vpack.c.bf16 %v3621, %v3621
        %v3762 = vpack.c.bf16 %v3624, %v3624
        %v3763 = vpack.c.bf16 %v3626, %v3626
        %v3764 = vpack.c.bf16 %v3629, %v3629
        %v3765 = vpack.c.bf16 %v3631, %v3631
        %v3766 = vpack.c.bf16 %v3634, %v3634
        %v3767 = vpack.c.bf16 %v3636, %v3636
        %v3768 = vpack.c.bf16 %v3639, %v3639
        %v3769 = vpack.c.bf16 %v3641, %v3641
        %3770 = vst [vmem:[#allocation3 + $0x8] sm:$0xf] %v3706
        %3771 = vst [vmem:[#allocation3 + $0x2c] sm:$0xf] %v3707
        %3772 = vst [vmem:[#allocation3 + $0x50] sm:$0xf] %v3708
        %3773 = vst [vmem:[#allocation3 + $0x74] sm:$0xf] %v3709
        %3774 = vst [vmem:[#allocation3 + $0x98] sm:$0xf] %v3710
        %3775 = vst [vmem:[#allocation3 + $0xbc] sm:$0xf] %v3711
        %3776 = vst [vmem:[#allocation3 + $0xe0] sm:$0xf] %v3712
        %3777 = vst [vmem:[#allocation3 + $0x104] sm:$0xf] %v3713
        %3778 = vst [vmem:[#allocation3 + $0x128] sm:$0xf] %v3714
        %3779 = vst [vmem:[#allocation3 + $0x14c] sm:$0xf] %v3715
        %3780 = vst [vmem:[#allocation3 + $0x170] sm:$0xf] %v3716
        %3781 = vst [vmem:[#allocation3 + $0x194] sm:$0xf] %v3717
        %3782 = vst [vmem:[#allocation3 + $0x1b8] sm:$0xf] %v3718
        %3783 = vst [vmem:[#allocation3 + $0x1dc] sm:$0xf] %v3719
        %3784 = vst [vmem:[#allocation3 + $0x200] sm:$0xf] %v3720
        %3785 = vst [vmem:[#allocation3 + $0x224] sm:$0xf] %v3721
        %3786 = vst [vmem:[#allocation3 + $0x248] sm:$0xf] %v3722
        %3787 = vst [vmem:[#allocation3 + $0x26c] sm:$0xf] %v3723
        %3788 = vst [vmem:[#allocation3 + $0x290] sm:$0xf] %v3724
        %3789 = vst [vmem:[#allocation3 + $0x2b4] sm:$0xf] %v3725
        %3790 = vst [vmem:[#allocation3 + $0x2d8] sm:$0xf] %v3726
        %3791 = vst [vmem:[#allocation3 + $0x2fc] sm:$0xf] %v3727
        %3792 = vst [vmem:[#allocation3 + $0x320] sm:$0xf] %v3728
        %3793 = vst [vmem:[#allocation3 + $0x344] sm:$0xf] %v3729
        %3794 = vst [vmem:[#allocation3 + $0x368] sm:$0xf] %v3730
        %3795 = vst [vmem:[#allocation3 + $0x38c] sm:$0xf] %v3731
        %3796 = vst [vmem:[#allocation3 + $0x3b0] sm:$0xf] %v3732
        %3797 = vst [vmem:[#allocation3 + $0x3d4] sm:$0xf] %v3733
        %3798 = vst [vmem:[#allocation3 + $0x3f8] sm:$0xf] %v3734
        %3799 = vst [vmem:[#allocation3 + $0x41c] sm:$0xf] %v3735
        %3800 = vst [vmem:[#allocation3 + $0x440] sm:$0xf] %v3736
        %3801 = vst [vmem:[#allocation3 + $0x464] sm:$0xf] %v3737
        %3802 = vst [vmem:[#allocation3 + $0x488] sm:$0xf] %v3738
        %3803 = vst [vmem:[#allocation3 + $0x4ac] sm:$0xf] %v3739
        %3804 = vst [vmem:[#allocation3 + $0x4d0] sm:$0xf] %v3740
        %3805 = vst [vmem:[#allocation3 + $0x4f4] sm:$0xf] %v3741
        %3806 = vst [vmem:[#allocation3 + $0x518] sm:$0xf] %v3742
        %3807 = vst [vmem:[#allocation3 + $0x53c] sm:$0xf] %v3743
        %3808 = vst [vmem:[#allocation3 + $0x560] sm:$0xf] %v3744
        %3809 = vst [vmem:[#allocation3 + $0x584] sm:$0xf] %v3745
        %3810 = vst [vmem:[#allocation3 + $0x5a8] sm:$0xf] %v3746
        %3811 = vst [vmem:[#allocation3 + $0x5cc] sm:$0xf] %v3747
        %3812 = vst [vmem:[#allocation3 + $0x5f0] sm:$0xf] %v3748
        %3813 = vst [vmem:[#allocation3 + $0x614] sm:$0xf] %v3749
        %3814 = vst [vmem:[#allocation3 + $0x638] sm:$0xf] %v3750
        %3815 = vst [vmem:[#allocation3 + $0x65c] sm:$0xf] %v3751
        %3816 = vst [vmem:[#allocation3 + $0x680] sm:$0xf] %v3752
        %3817 = vst [vmem:[#allocation3 + $0x6a4] sm:$0xf] %v3753
        %3818 = vst [vmem:[#allocation3 + $0x6c8] sm:$0xf] %v3754
        %3819 = vst [vmem:[#allocation3 + $0x6ec] sm:$0xf] %v3755
        %3820 = vst [vmem:[#allocation3 + $0x710] sm:$0xf] %v3756
        %3821 = vst [vmem:[#allocation3 + $0x734] sm:$0xf] %v3757
        %3822 = vst [vmem:[#allocation3 + $0x758] sm:$0xf] %v3758
        %3823 = vst [vmem:[#allocation3 + $0x77c] sm:$0xf] %v3759
        %3824 = vst [vmem:[#allocation3 + $0x7a0] sm:$0xf] %v3760
        %3825 = vst [vmem:[#allocation3 + $0x7c4] sm:$0xf] %v3761
        %3826 = vst [vmem:[#allocation3 + $0x7e8] sm:$0xf] %v3762
        %3827 = vst [vmem:[#allocation3 + $0x80c] sm:$0xf] %v3763
        %3828 = vst [vmem:[#allocation3 + $0x830] sm:$0xf] %v3764
        %3829 = vst [vmem:[#allocation3 + $0x854] sm:$0xf] %v3765
        %3830 = vst [vmem:[#allocation3 + $0x878] sm:$0xf] %v3766
        %3831 = vst [vmem:[#allocation3 + $0x89c] sm:$0xf] %v3767
        %3832 = vst [vmem:[#allocation3 + $0x8c0] sm:$0xf] %v3768
        %3833 = vst [vmem:[#allocation3 + $0x8e4] sm:$0xf] %v3769
        %v3834 = vld [vmem:[%s2743] sm:$0xff]
        %v3835 = vld [vmem:[%s2743 + $0x8] sm:$0xff]
        %v3836 = vld [vmem:[%s2743 + $0x10] sm:$0x3]
        %v3837 = vld [vmem:[%s2743 + $0x18] sm:$0xff]
        %v3838 = vld [vmem:[%s2743 + $0x20] sm:$0xff]
        %v3839 = vld [vmem:[%s2743 + $0x28] sm:$0x3]
        %v3840 = vld [vmem:[%s2743 + $0x30] sm:$0xff]
        %v3841 = vld [vmem:[%s2743 + $0x38] sm:$0xff]
        %v3842 = vld [vmem:[%s2743 + $0x40] sm:$0x3]
        %v3843 = vld [vmem:[%s2743 + $0x48] sm:$0xff]
        %v3844 = vld [vmem:[%s2743 + $0x50] sm:$0xff]
        %v3845 = vld [vmem:[%s2743 + $0x58] sm:$0x3]
        %v3846 = vld [vmem:[%s2743 + $0x60] sm:$0xff]
        %v3847 = vld [vmem:[%s2743 + $0x68] sm:$0xff]
        %v3848 = vld [vmem:[%s2743 + $0x70] sm:$0x3]
        %v3849 = vld [vmem:[%s2743 + $0x78] sm:$0xff]
        %v3850 = vld [vmem:[%s2743 + $0x80] sm:$0xff]
        %v3851 = vld [vmem:[%s2743 + $0x88] sm:$0x3]
        %v3852 = vld [vmem:[%s2743 + $0x90] sm:$0xff]
        %v3853 = vld [vmem:[%s2743 + $0x98] sm:$0xff]
        %v3854 = vld [vmem:[%s2743 + $0xa0] sm:$0x3]
        %v3855 = vld [vmem:[%s2743 + $0xa8] sm:$0xff]
        %v3856 = vld [vmem:[%s2743 + $0xb0] sm:$0xff]
        %v3857 = vld [vmem:[%s2743 + $0xb8] sm:$0x3]
        %v3858 = vld [vmem:[%s2743 + $0xc0] sm:$0xff]
        %v3859 = vld [vmem:[%s2743 + $0xc8] sm:$0xff]
        %v3860 = vld [vmem:[%s2743 + $0xd0] sm:$0x3]
        %v3861 = vld [vmem:[%s2743 + $0xd8] sm:$0xff]
        %v3862 = vld [vmem:[%s2743 + $0xe0] sm:$0xff]
        %v3863 = vld [vmem:[%s2743 + $0xe8] sm:$0x3]
        %v3864 = vld [vmem:[%s2743 + $0xf0] sm:$0xff]
        %v3865 = vld [vmem:[%s2743 + $0xf8] sm:$0xff]
        %v3866 = vld [vmem:[%s2743 + $0x100] sm:$0x3]
        %v3867 = vld [vmem:[%s2743 + $0x108] sm:$0xff]
        %v3868 = vld [vmem:[%s2743 + $0x110] sm:$0xff]
        %v3869 = vld [vmem:[%s2743 + $0x118] sm:$0x3]
        %v3870 = vld [vmem:[%s2743 + $0x120] sm:$0xff]
        %v3871 = vld [vmem:[%s2743 + $0x128] sm:$0xff]
        %v3872 = vld [vmem:[%s2743 + $0x130] sm:$0x3]
        %v3873 = vld [vmem:[%s2743 + $0x138] sm:$0xff]
        %v3874 = vld [vmem:[%s2743 + $0x140] sm:$0xff]
        %v3875 = vld [vmem:[%s2743 + $0x148] sm:$0x3]
        %v3876 = vld [vmem:[%s2743 + $0x150] sm:$0xff]
        %v3877 = vld [vmem:[%s2743 + $0x158] sm:$0xff]
        %v3878 = vld [vmem:[%s2743 + $0x160] sm:$0x3]
        %v3879 = vld [vmem:[%s2743 + $0x168] sm:$0xff]
        %v3880 = vld [vmem:[%s2743 + $0x170] sm:$0xff]
        %v3881 = vld [vmem:[%s2743 + $0x178] sm:$0x3]
        %v3882 = vld [vmem:[%s2743 + $0x1b0] sm:$0xff]
        %v3883 = vld [vmem:[%s2743 + $0x1b8] sm:$0xff]
        %v3884 = vld [vmem:[%s2743 + $0x1c0] sm:$0x3]
        %v3885 = vld [vmem:[%s2743 + $0x1c8] sm:$0xff]
        %v3886 = vld [vmem:[%s2743 + $0x1d0] sm:$0xff]
        %v3887 = vld [vmem:[%s2743 + $0x1d8] sm:$0x3]
        %v3888 = vld [vmem:[%s2743 + $0x1e0] sm:$0xff]
        %v3889 = vld [vmem:[%s2743 + $0x1e8] sm:$0xff]
        %v3890 = vld [vmem:[%s2743 + $0x1f0] sm:$0x3]
        %v3891 = vld [vmem:[%s2743 + $0x1f8] sm:$0xff]
        %v3892 = vld [vmem:[%s2743 + $0x200] sm:$0xff]
        %v3893 = vld [vmem:[%s2743 + $0x208] sm:$0x3]
        %v3894 = vld [vmem:[%s2743 + $0x210] sm:$0xff]
        %v3895 = vld [vmem:[%s2743 + $0x218] sm:$0xff]
        %v3896 = vld [vmem:[%s2743 + $0x220] sm:$0x3]
        %v3897 = vld [vmem:[%s2743 + $0x228] sm:$0xff]
        %v3898 = vld [vmem:[%s2743 + $0x230] sm:$0xff]
        %v3899 = vld [vmem:[%s2743 + $0x238] sm:$0x3]
        %v3900 = vld [vmem:[%s2743 + $0x240] sm:$0xff]
        %v3901 = vld [vmem:[%s2743 + $0x248] sm:$0xff]
        %v3902 = vld [vmem:[%s2743 + $0x250] sm:$0x3]
        %v3903 = vld [vmem:[%s2743 + $0x258] sm:$0xff]
        %v3904 = vld [vmem:[%s2743 + $0x260] sm:$0xff]
        %v3905 = vld [vmem:[%s2743 + $0x268] sm:$0x3]
        %v3906 = vld [vmem:[%s2743 + $0x270] sm:$0xff]
        %v3907 = vld [vmem:[%s2743 + $0x278] sm:$0xff]
        %v3908 = vld [vmem:[%s2743 + $0x280] sm:$0x3]
        %v3909 = vld [vmem:[%s2743 + $0x288] sm:$0xff]
        %v3910 = vld [vmem:[%s2743 + $0x290] sm:$0xff]
        %v3911 = vld [vmem:[%s2743 + $0x298] sm:$0x3]
        %v3912 = vld [vmem:[%s2743 + $0x2a0] sm:$0xff]
        %v3913 = vld [vmem:[%s2743 + $0x2a8] sm:$0xff]
        %v3914 = vld [vmem:[%s2743 + $0x2b0] sm:$0x3]
        %v3915 = vld [vmem:[%s2743 + $0x2b8] sm:$0xff]
        %v3916 = vld [vmem:[%s2743 + $0x2c0] sm:$0xff]
        %v3917 = vld [vmem:[%s2743 + $0x2c8] sm:$0x3]
        %v3918 = vld [vmem:[%s2743 + $0x2d0] sm:$0xff]
        %v3919 = vld [vmem:[%s2743 + $0x2d8] sm:$0xff]
        %v3920 = vld [vmem:[%s2743 + $0x2e0] sm:$0x3]
        %v3921 = vld [vmem:[%s2743 + $0x2e8] sm:$0xff]
        %v3922 = vld [vmem:[%s2743 + $0x2f0] sm:$0xff]
        %v3923 = vld [vmem:[%s2743 + $0x2f8] sm:$0x3]
        %v3924 = vld [vmem:[%s2743 + $0x300] sm:$0xff]
        %v3925 = vld [vmem:[%s2743 + $0x308] sm:$0xff]
        %v3926 = vld [vmem:[%s2743 + $0x310] sm:$0x3]
        %v3927 = vld [vmem:[%s2743 + $0x318] sm:$0xff]
        %v3928 = vld [vmem:[%s2743 + $0x320] sm:$0xff]
        %v3929 = vld [vmem:[%s2743 + $0x328] sm:$0x3]
        %v3930 = vpack.c.bf16 %v3834, %v3834
        %v3931 = vpack.c.bf16 %v3835, %v3835
        %v3932 = vpack.c.bf16 %v3837, %v3837
        %v3933 = vpack.c.bf16 %v3838, %v3838
        %v3934 = vpack.c.bf16 %v3840, %v3840
        %v3935 = vpack.c.bf16 %v3841, %v3841
        %v3936 = vpack.c.bf16 %v3843, %v3843
        %v3937 = vpack.c.bf16 %v3844, %v3844
        %v3938 = vpack.c.bf16 %v3846, %v3846
        %v3939 = vpack.c.bf16 %v3847, %v3847
        %v3940 = vpack.c.bf16 %v3849, %v3849
        %v3941 = vpack.c.bf16 %v3850, %v3850
        %v3942 = vpack.c.bf16 %v3852, %v3852
        %v3943 = vpack.c.bf16 %v3853, %v3853
        %v3944 = vpack.c.bf16 %v3855, %v3855
        %v3945 = vpack.c.bf16 %v3856, %v3856
        %v3946 = vpack.c.bf16 %v3858, %v3858
        %v3947 = vpack.c.bf16 %v3859, %v3859
        %v3948 = vpack.c.bf16 %v3861, %v3861
        %v3949 = vpack.c.bf16 %v3862, %v3862
        %v3950 = vpack.c.bf16 %v3864, %v3864
        %v3951 = vpack.c.bf16 %v3865, %v3865
        %v3952 = vpack.c.bf16 %v3867, %v3867
        %v3953 = vpack.c.bf16 %v3868, %v3868
        %v3954 = vpack.c.bf16 %v3870, %v3870
        %v3955 = vpack.c.bf16 %v3871, %v3871
        %v3956 = vpack.c.bf16 %v3873, %v3873
        %v3957 = vpack.c.bf16 %v3874, %v3874
        %v3958 = vpack.c.bf16 %v3876, %v3876
        %v3959 = vpack.c.bf16 %v3877, %v3877
        %v3960 = vpack.c.bf16 %v3879, %v3879
        %v3961 = vpack.c.bf16 %v3880, %v3880
        %v3962 = vpack.c.bf16 %v3882, %v3882
        %v3963 = vpack.c.bf16 %v3883, %v3883
        %v3964 = vpack.c.bf16 %v3885, %v3885
        %v3965 = vpack.c.bf16 %v3886, %v3886
        %v3966 = vpack.c.bf16 %v3888, %v3888
        %v3967 = vpack.c.bf16 %v3889, %v3889
        %v3968 = vpack.c.bf16 %v3891, %v3891
        %v3969 = vpack.c.bf16 %v3892, %v3892
        %v3970 = vpack.c.bf16 %v3894, %v3894
        %v3971 = vpack.c.bf16 %v3895, %v3895
        %v3972 = vpack.c.bf16 %v3897, %v3897
        %v3973 = vpack.c.bf16 %v3898, %v3898
        %v3974 = vpack.c.bf16 %v3900, %v3900
        %v3975 = vpack.c.bf16 %v3901, %v3901
        %v3976 = vpack.c.bf16 %v3903, %v3903
        %v3977 = vpack.c.bf16 %v3904, %v3904
        %v3978 = vpack.c.bf16 %v3906, %v3906
        %v3979 = vpack.c.bf16 %v3907, %v3907
        %v3980 = vpack.c.bf16 %v3909, %v3909
        %v3981 = vpack.c.bf16 %v3910, %v3910
        %v3982 = vpack.c.bf16 %v3912, %v3912
        %v3983 = vpack.c.bf16 %v3913, %v3913
        %v3984 = vpack.c.bf16 %v3915, %v3915
        %v3985 = vpack.c.bf16 %v3916, %v3916
        %v3986 = vpack.c.bf16 %v3918, %v3918
        %v3987 = vpack.c.bf16 %v3919, %v3919
        %v3988 = vpack.c.bf16 %v3921, %v3921
        %v3989 = vpack.c.bf16 %v3922, %v3922
        %v3990 = vpack.c.bf16 %v3924, %v3924
        %v3991 = vpack.c.bf16 %v3925, %v3925
        %v3992 = vpack.c.bf16 %v3927, %v3927
        %v3993 = vpack.c.bf16 %v3928, %v3928
        %3994 = vst [vmem:[#allocation3 + $0xc] sm:$0xf] %v3930
        %3995 = vst [vmem:[#allocation3 + $0x30] sm:$0xf] %v3931
        %3996 = vst [vmem:[#allocation3 + $0x54] sm:$0xf] %v3932
        %3997 = vst [vmem:[#allocation3 + $0x78] sm:$0xf] %v3933
        %3998 = vst [vmem:[#allocation3 + $0x9c] sm:$0xf] %v3934
        %3999 = vst [vmem:[#allocation3 + $0xc0] sm:$0xf] %v3935
        %4000 = vst [vmem:[#allocation3 + $0xe4] sm:$0xf] %v3936
        %4001 = vst [vmem:[#allocation3 + $0x108] sm:$0xf] %v3937
        %4002 = vst [vmem:[#allocation3 + $0x12c] sm:$0xf] %v3938
        %4003 = vst [vmem:[#allocation3 + $0x150] sm:$0xf] %v3939
        %4004 = vst [vmem:[#allocation3 + $0x174] sm:$0xf] %v3940
        %4005 = vst [vmem:[#allocation3 + $0x198] sm:$0xf] %v3941
        %4006 = vst [vmem:[#allocation3 + $0x1bc] sm:$0xf] %v3942
        %4007 = vst [vmem:[#allocation3 + $0x1e0] sm:$0xf] %v3943
        %4008 = vst [vmem:[#allocation3 + $0x204] sm:$0xf] %v3944
        %4009 = vst [vmem:[#allocation3 + $0x228] sm:$0xf] %v3945
        %4010 = vst [vmem:[#allocation3 + $0x24c] sm:$0xf] %v3946
        %4011 = vst [vmem:[#allocation3 + $0x270] sm:$0xf] %v3947
        %4012 = vst [vmem:[#allocation3 + $0x294] sm:$0xf] %v3948
        %4013 = vst [vmem:[#allocation3 + $0x2b8] sm:$0xf] %v3949
        %4014 = vst [vmem:[#allocation3 + $0x2dc] sm:$0xf] %v3950
        %4015 = vst [vmem:[#allocation3 + $0x300] sm:$0xf] %v3951
        %4016 = vst [vmem:[#allocation3 + $0x324] sm:$0xf] %v3952
        %4017 = vst [vmem:[#allocation3 + $0x348] sm:$0xf] %v3953
        %4018 = vst [vmem:[#allocation3 + $0x36c] sm:$0xf] %v3954
        %4019 = vst [vmem:[#allocation3 + $0x390] sm:$0xf] %v3955
        %4020 = vst [vmem:[#allocation3 + $0x3b4] sm:$0xf] %v3956
        %4021 = vst [vmem:[#allocation3 + $0x3d8] sm:$0xf] %v3957
        %4022 = vst [vmem:[#allocation3 + $0x3fc] sm:$0xf] %v3958
        %4023 = vst [vmem:[#allocation3 + $0x420] sm:$0xf] %v3959
        %4024 = vst [vmem:[#allocation3 + $0x444] sm:$0xf] %v3960
        %4025 = vst [vmem:[#allocation3 + $0x468] sm:$0xf] %v3961
        %4026 = vst [vmem:[#allocation3 + $0x48c] sm:$0xf] %v3962
        %4027 = vst [vmem:[#allocation3 + $0x4b0] sm:$0xf] %v3963
        %4028 = vst [vmem:[#allocation3 + $0x4d4] sm:$0xf] %v3964
        %4029 = vst [vmem:[#allocation3 + $0x4f8] sm:$0xf] %v3965
        %4030 = vst [vmem:[#allocation3 + $0x51c] sm:$0xf] %v3966
        %4031 = vst [vmem:[#allocation3 + $0x540] sm:$0xf] %v3967
        %4032 = vst [vmem:[#allocation3 + $0x564] sm:$0xf] %v3968
        %4033 = vst [vmem:[#allocation3 + $0x588] sm:$0xf] %v3969
        %4034 = vst [vmem:[#allocation3 + $0x5ac] sm:$0xf] %v3970
        %4035 = vst [vmem:[#allocation3 + $0x5d0] sm:$0xf] %v3971
        %4036 = vst [vmem:[#allocation3 + $0x5f4] sm:$0xf] %v3972
        %4037 = vst [vmem:[#allocation3 + $0x618] sm:$0xf] %v3973
        %4038 = vst [vmem:[#allocation3 + $0x63c] sm:$0xf] %v3974
        %4039 = vst [vmem:[#allocation3 + $0x660] sm:$0xf] %v3975
        %4040 = vst [vmem:[#allocation3 + $0x684] sm:$0xf] %v3976
        %4041 = vst [vmem:[#allocation3 + $0x6a8] sm:$0xf] %v3977
        %4042 = vst [vmem:[#allocation3 + $0x6cc] sm:$0xf] %v3978
        %4043 = vst [vmem:[#allocation3 + $0x6f0] sm:$0xf] %v3979
        %4044 = vst [vmem:[#allocation3 + $0x714] sm:$0xf] %v3980
        %4045 = vst [vmem:[#allocation3 + $0x738] sm:$0xf] %v3981
        %4046 = vst [vmem:[#allocation3 + $0x75c] sm:$0xf] %v3982
        %4047 = vst [vmem:[#allocation3 + $0x780] sm:$0xf] %v3983
        %4048 = vst [vmem:[#allocation3 + $0x7a4] sm:$0xf] %v3984
        %4049 = vst [vmem:[#allocation3 + $0x7c8] sm:$0xf] %v3985
        %4050 = vst [vmem:[#allocation3 + $0x7ec] sm:$0xf] %v3986
        %4051 = vst [vmem:[#allocation3 + $0x810] sm:$0xf] %v3987
        %4052 = vst [vmem:[#allocation3 + $0x834] sm:$0xf] %v3988
        %4053 = vst [vmem:[#allocation3 + $0x858] sm:$0xf] %v3989
        %4054 = vst [vmem:[#allocation3 + $0x87c] sm:$0xf] %v3990
        %4055 = vst [vmem:[#allocation3 + $0x8a0] sm:$0xf] %v3991
        %4056 = vst [vmem:[#allocation3 + $0x8c4] sm:$0xf] %v3992
        %4057 = vst [vmem:[#allocation3 + $0x8e8] sm:$0xf] %v3993
        %v4154 = vrot.slane %v3834, 1
        %v4155 = vrot.slane %v3835, 1
        %v4156 = vsel %vm3128, %v4154, %v4155
        %v4157 = vrot.slane %v3836, 1
        %v4158 = vsel %vm3128, %v4155, %v4157
        %v4159 = vrot.slane %v3837, 1
        %v4160 = vrot.slane %v3838, 1
        %v4161 = vsel %vm3128, %v4159, %v4160
        %v4162 = vrot.slane %v3839, 1
        %v4163 = vsel %vm3128, %v4160, %v4162
        %v4164 = vrot.slane %v3840, 1
        %v4165 = vrot.slane %v3841, 1
        %v4166 = vsel %vm3128, %v4164, %v4165
        %v4167 = vrot.slane %v3842, 1
        %v4168 = vsel %vm3128, %v4165, %v4167
        %v4169 = vrot.slane %v3843, 1
        %v4170 = vrot.slane %v3844, 1
        %v4171 = vsel %vm3128, %v4169, %v4170
        %v4172 = vrot.slane %v3845, 1
        %v4173 = vsel %vm3128, %v4170, %v4172
        %v4174 = vrot.slane %v3846, 1
        %v4175 = vrot.slane %v3847, 1
        %v4176 = vsel %vm3128, %v4174, %v4175
        %v4177 = vrot.slane %v3848, 1
        %v4178 = vsel %vm3128, %v4175, %v4177
        %v4179 = vrot.slane %v3849, 1
        %v4180 = vrot.slane %v3850, 1
        %v4181 = vsel %vm3128, %v4179, %v4180
        %v4182 = vrot.slane %v3851, 1
        %v4183 = vsel %vm3128, %v4180, %v4182
        %v4184 = vrot.slane %v3852, 1
        %v4185 = vrot.slane %v3853, 1
        %v4186 = vsel %vm3128, %v4184, %v4185
        %v4187 = vrot.slane %v3854, 1
        %v4188 = vsel %vm3128, %v4185, %v4187
        %v4189 = vrot.slane %v3855, 1
        %v4190 = vrot.slane %v3856, 1
        %v4191 = vsel %vm3128, %v4189, %v4190
        %v4192 = vrot.slane %v3857, 1
        %v4193 = vsel %vm3128, %v4190, %v4192
        %v4194 = vrot.slane %v3858, 1
        %v4195 = vrot.slane %v3859, 1
        %v4196 = vsel %vm3128, %v4194, %v4195
        %v4197 = vrot.slane %v3860, 1
        %v4198 = vsel %vm3128, %v4195, %v4197
        %v4199 = vrot.slane %v3861, 1
        %v4200 = vrot.slane %v3862, 1
        %v4201 = vsel %vm3128, %v4199, %v4200
        %v4202 = vrot.slane %v3863, 1
        %v4203 = vsel %vm3128, %v4200, %v4202
        %v4204 = vrot.slane %v3864, 1
        %v4205 = vrot.slane %v3865, 1
        %v4206 = vsel %vm3128, %v4204, %v4205
        %v4207 = vrot.slane %v3866, 1
        %v4208 = vsel %vm3128, %v4205, %v4207
        %v4209 = vrot.slane %v3867, 1
        %v4210 = vrot.slane %v3868, 1
        %v4211 = vsel %vm3128, %v4209, %v4210
        %v4212 = vrot.slane %v3869, 1
        %v4213 = vsel %vm3128, %v4210, %v4212
        %v4214 = vrot.slane %v3870, 1
        %v4215 = vrot.slane %v3871, 1
        %v4216 = vsel %vm3128, %v4214, %v4215
        %v4217 = vrot.slane %v3872, 1
        %v4218 = vsel %vm3128, %v4215, %v4217
        %v4219 = vrot.slane %v3873, 1
        %v4220 = vrot.slane %v3874, 1
        %v4221 = vsel %vm3128, %v4219, %v4220
        %v4222 = vrot.slane %v3875, 1
        %v4223 = vsel %vm3128, %v4220, %v4222
        %v4224 = vrot.slane %v3876, 1
        %v4225 = vrot.slane %v3877, 1
        %v4226 = vsel %vm3128, %v4224, %v4225
        %v4227 = vrot.slane %v3878, 1
        %v4228 = vsel %vm3128, %v4225, %v4227
        %v4229 = vrot.slane %v3879, 1
        %v4230 = vrot.slane %v3880, 1
        %v4231 = vsel %vm3128, %v4229, %v4230
        %v4232 = vrot.slane %v3881, 1
        %v4233 = vsel %vm3128, %v4230, %v4232
        %v4234 = vrot.slane %v3882, 1
        %v4235 = vrot.slane %v3883, 1
        %v4236 = vsel %vm3128, %v4234, %v4235
        %v4237 = vrot.slane %v3884, 1
        %v4238 = vsel %vm3128, %v4235, %v4237
        %v4239 = vrot.slane %v3885, 1
        %v4240 = vrot.slane %v3886, 1
        %v4241 = vsel %vm3128, %v4239, %v4240
        %v4242 = vrot.slane %v3887, 1
        %v4243 = vsel %vm3128, %v4240, %v4242
        %v4244 = vrot.slane %v3888, 1
        %v4245 = vrot.slane %v3889, 1
        %v4246 = vsel %vm3128, %v4244, %v4245
        %v4247 = vrot.slane %v3890, 1
        %v4248 = vsel %vm3128, %v4245, %v4247
        %v4249 = vrot.slane %v3891, 1
        %v4250 = vrot.slane %v3892, 1
        %v4251 = vsel %vm3128, %v4249, %v4250
        %v4252 = vrot.slane %v3893, 1
        %v4253 = vsel %vm3128, %v4250, %v4252
        %v4254 = vrot.slane %v3894, 1
        %v4255 = vrot.slane %v3895, 1
        %v4256 = vsel %vm3128, %v4254, %v4255
        %v4257 = vrot.slane %v3896, 1
        %v4258 = vsel %vm3128, %v4255, %v4257
        %v4259 = vrot.slane %v3897, 1
        %v4260 = vrot.slane %v3898, 1
        %v4261 = vsel %vm3128, %v4259, %v4260
        %v4262 = vrot.slane %v3899, 1
        %v4263 = vsel %vm3128, %v4260, %v4262
        %v4264 = vrot.slane %v3900, 1
        %v4265 = vrot.slane %v3901, 1
        %v4266 = vsel %vm3128, %v4264, %v4265
        %v4267 = vrot.slane %v3902, 1
        %v4268 = vsel %vm3128, %v4265, %v4267
        %v4269 = vrot.slane %v3903, 1
        %v4270 = vrot.slane %v3904, 1
        %v4271 = vsel %vm3128, %v4269, %v4270
        %v4272 = vrot.slane %v3905, 1
        %v4273 = vsel %vm3128, %v4270, %v4272
        %v4274 = vrot.slane %v3906, 1
        %v4275 = vrot.slane %v3907, 1
        %v4276 = vsel %vm3128, %v4274, %v4275
        %v4277 = vrot.slane %v3908, 1
        %v4278 = vsel %vm3128, %v4275, %v4277
        %v4279 = vrot.slane %v3909, 1
        %v4280 = vrot.slane %v3910, 1
        %v4281 = vsel %vm3128, %v4279, %v4280
        %v4282 = vrot.slane %v3911, 1
        %v4283 = vsel %vm3128, %v4280, %v4282
        %v4284 = vrot.slane %v3912, 1
        %v4285 = vrot.slane %v3913, 1
        %v4286 = vsel %vm3128, %v4284, %v4285
        %v4287 = vrot.slane %v3914, 1
        %v4288 = vsel %vm3128, %v4285, %v4287
        %v4289 = vrot.slane %v3915, 1
        %v4290 = vrot.slane %v3916, 1
        %v4291 = vsel %vm3128, %v4289, %v4290
        %v4292 = vrot.slane %v3917, 1
        %v4293 = vsel %vm3128, %v4290, %v4292
        %v4294 = vrot.slane %v3918, 1
        %v4295 = vrot.slane %v3919, 1
        %v4296 = vsel %vm3128, %v4294, %v4295
        %v4297 = vrot.slane %v3920, 1
        %v4298 = vsel %vm3128, %v4295, %v4297
        %v4299 = vrot.slane %v3921, 1
        %v4300 = vrot.slane %v3922, 1
        %v4301 = vsel %vm3128, %v4299, %v4300
        %v4302 = vrot.slane %v3923, 1
        %v4303 = vsel %vm3128, %v4300, %v4302
        %v4304 = vrot.slane %v3924, 1
        %v4305 = vrot.slane %v3925, 1
        %v4306 = vsel %vm3128, %v4304, %v4305
        %v4307 = vrot.slane %v3926, 1
        %v4308 = vsel %vm3128, %v4305, %v4307
        %v4309 = vrot.slane %v3927, 1
        %v4310 = vrot.slane %v3928, 1
        %v4311 = vsel %vm3128, %v4309, %v4310
        %v4312 = vrot.slane %v3929, 1
        %v4313 = vsel %vm3128, %v4310, %v4312
        %v4378 = vpack.c.bf16 %v4156, %v4156
        %v4379 = vpack.c.bf16 %v4158, %v4158
        %v4380 = vpack.c.bf16 %v4161, %v4161
        %v4381 = vpack.c.bf16 %v4163, %v4163
        %v4382 = vpack.c.bf16 %v4166, %v4166
        %v4383 = vpack.c.bf16 %v4168, %v4168
        %v4384 = vpack.c.bf16 %v4171, %v4171
        %v4385 = vpack.c.bf16 %v4173, %v4173
        %v4386 = vpack.c.bf16 %v4176, %v4176
        %v4387 = vpack.c.bf16 %v4178, %v4178
        %v4388 = vpack.c.bf16 %v4181, %v4181
        %v4389 = vpack.c.bf16 %v4183, %v4183
        %v4390 = vpack.c.bf16 %v4186, %v4186
        %v4391 = vpack.c.bf16 %v4188, %v4188
        %v4392 = vpack.c.bf16 %v4191, %v4191
        %v4393 = vpack.c.bf16 %v4193, %v4193
        %v4394 = vpack.c.bf16 %v4196, %v4196
        %v4395 = vpack.c.bf16 %v4198, %v4198
        %v4396 = vpack.c.bf16 %v4201, %v4201
        %v4397 = vpack.c.bf16 %v4203, %v4203
        %v4398 = vpack.c.bf16 %v4206, %v4206
        %v4399 = vpack.c.bf16 %v4208, %v4208
        %v4400 = vpack.c.bf16 %v4211, %v4211
        %v4401 = vpack.c.bf16 %v4213, %v4213
        %v4402 = vpack.c.bf16 %v4216, %v4216
        %v4403 = vpack.c.bf16 %v4218, %v4218
        %v4404 = vpack.c.bf16 %v4221, %v4221
        %v4405 = vpack.c.bf16 %v4223, %v4223
        %v4406 = vpack.c.bf16 %v4226, %v4226
        %v4407 = vpack.c.bf16 %v4228, %v4228
        %v4408 = vpack.c.bf16 %v4231, %v4231
        %v4409 = vpack.c.bf16 %v4233, %v4233
        %v4410 = vpack.c.bf16 %v4236, %v4236
        %v4411 = vpack.c.bf16 %v4238, %v4238
        %v4412 = vpack.c.bf16 %v4241, %v4241
        %v4413 = vpack.c.bf16 %v4243, %v4243
        %v4414 = vpack.c.bf16 %v4246, %v4246
        %v4415 = vpack.c.bf16 %v4248, %v4248
        %v4416 = vpack.c.bf16 %v4251, %v4251
        %v4417 = vpack.c.bf16 %v4253, %v4253
        %v4418 = vpack.c.bf16 %v4256, %v4256
        %v4419 = vpack.c.bf16 %v4258, %v4258
        %v4420 = vpack.c.bf16 %v4261, %v4261
        %v4421 = vpack.c.bf16 %v4263, %v4263
        %v4422 = vpack.c.bf16 %v4266, %v4266
        %v4423 = vpack.c.bf16 %v4268, %v4268
        %v4424 = vpack.c.bf16 %v4271, %v4271
        %v4425 = vpack.c.bf16 %v4273, %v4273
        %v4426 = vpack.c.bf16 %v4276, %v4276
        %v4427 = vpack.c.bf16 %v4278, %v4278
        %v4428 = vpack.c.bf16 %v4281, %v4281
        %v4429 = vpack.c.bf16 %v4283, %v4283
        %v4430 = vpack.c.bf16 %v4286, %v4286
        %v4431 = vpack.c.bf16 %v4288, %v4288
        %v4432 = vpack.c.bf16 %v4291, %v4291
        %v4433 = vpack.c.bf16 %v4293, %v4293
        %v4434 = vpack.c.bf16 %v4296, %v4296
        %v4435 = vpack.c.bf16 %v4298, %v4298
        %v4436 = vpack.c.bf16 %v4301, %v4301
        %v4437 = vpack.c.bf16 %v4303, %v4303
        %v4438 = vpack.c.bf16 %v4306, %v4306
        %v4439 = vpack.c.bf16 %v4308, %v4308
        %v4440 = vpack.c.bf16 %v4311, %v4311
        %v4441 = vpack.c.bf16 %v4313, %v4313
        %4442 = vst [vmem:[#allocation3 + $0x10] sm:$0xf] %v4378
        %4443 = vst [vmem:[#allocation3 + $0x34] sm:$0xf] %v4379
        %4444 = vst [vmem:[#allocation3 + $0x58] sm:$0xf] %v4380
        %4445 = vst [vmem:[#allocation3 + $0x7c] sm:$0xf] %v4381
        %4446 = vst [vmem:[#allocation3 + $0xa0] sm:$0xf] %v4382
        %4447 = vst [vmem:[#allocation3 + $0xc4] sm:$0xf] %v4383
        %4448 = vst [vmem:[#allocation3 + $0xe8] sm:$0xf] %v4384
        %4449 = vst [vmem:[#allocation3 + $0x10c] sm:$0xf] %v4385
        %4450 = vst [vmem:[#allocation3 + $0x130] sm:$0xf] %v4386
        %4451 = vst [vmem:[#allocation3 + $0x154] sm:$0xf] %v4387
        %4452 = vst [vmem:[#allocation3 + $0x178] sm:$0xf] %v4388
        %4453 = vst [vmem:[#allocation3 + $0x19c] sm:$0xf] %v4389
        %4454 = vst [vmem:[#allocation3 + $0x1c0] sm:$0xf] %v4390
        %4455 = vst [vmem:[#allocation3 + $0x1e4] sm:$0xf] %v4391
        %4456 = vst [vmem:[#allocation3 + $0x208] sm:$0xf] %v4392
        %4457 = vst [vmem:[#allocation3 + $0x22c] sm:$0xf] %v4393
        %4458 = vst [vmem:[#allocation3 + $0x250] sm:$0xf] %v4394
        %4459 = vst [vmem:[#allocation3 + $0x274] sm:$0xf] %v4395
        %4460 = vst [vmem:[#allocation3 + $0x298] sm:$0xf] %v4396
        %4461 = vst [vmem:[#allocation3 + $0x2bc] sm:$0xf] %v4397
        %4462 = vst [vmem:[#allocation3 + $0x2e0] sm:$0xf] %v4398
        %4463 = vst [vmem:[#allocation3 + $0x304] sm:$0xf] %v4399
        %4464 = vst [vmem:[#allocation3 + $0x328] sm:$0xf] %v4400
        %4465 = vst [vmem:[#allocation3 + $0x34c] sm:$0xf] %v4401
        %4466 = vst [vmem:[#allocation3 + $0x370] sm:$0xf] %v4402
        %4467 = vst [vmem:[#allocation3 + $0x394] sm:$0xf] %v4403
        %4468 = vst [vmem:[#allocation3 + $0x3b8] sm:$0xf] %v4404
        %4469 = vst [vmem:[#allocation3 + $0x3dc] sm:$0xf] %v4405
        %4470 = vst [vmem:[#allocation3 + $0x400] sm:$0xf] %v4406
        %4471 = vst [vmem:[#allocation3 + $0x424] sm:$0xf] %v4407
        %4472 = vst [vmem:[#allocation3 + $0x448] sm:$0xf] %v4408
        %4473 = vst [vmem:[#allocation3 + $0x46c] sm:$0xf] %v4409
        %4474 = vst [vmem:[#allocation3 + $0x490] sm:$0xf] %v4410
        %4475 = vst [vmem:[#allocation3 + $0x4b4] sm:$0xf] %v4411
        %4476 = vst [vmem:[#allocation3 + $0x4d8] sm:$0xf] %v4412
        %4477 = vst [vmem:[#allocation3 + $0x4fc] sm:$0xf] %v4413
        %4478 = vst [vmem:[#allocation3 + $0x520] sm:$0xf] %v4414
        %4479 = vst [vmem:[#allocation3 + $0x544] sm:$0xf] %v4415
        %4480 = vst [vmem:[#allocation3 + $0x568] sm:$0xf] %v4416
        %4481 = vst [vmem:[#allocation3 + $0x58c] sm:$0xf] %v4417
        %4482 = vst [vmem:[#allocation3 + $0x5b0] sm:$0xf] %v4418
        %4483 = vst [vmem:[#allocation3 + $0x5d4] sm:$0xf] %v4419
        %4484 = vst [vmem:[#allocation3 + $0x5f8] sm:$0xf] %v4420
        %4485 = vst [vmem:[#allocation3 + $0x61c] sm:$0xf] %v4421
        %4486 = vst [vmem:[#allocation3 + $0x640] sm:$0xf] %v4422
        %4487 = vst [vmem:[#allocation3 + $0x664] sm:$0xf] %v4423
        %4488 = vst [vmem:[#allocation3 + $0x688] sm:$0xf] %v4424
        %4489 = vst [vmem:[#allocation3 + $0x6ac] sm:$0xf] %v4425
        %4490 = vst [vmem:[#allocation3 + $0x6d0] sm:$0xf] %v4426
        %4491 = vst [vmem:[#allocation3 + $0x6f4] sm:$0xf] %v4427
        %4492 = vst [vmem:[#allocation3 + $0x718] sm:$0xf] %v4428
        %4493 = vst [vmem:[#allocation3 + $0x73c] sm:$0xf] %v4429
        %4494 = vst [vmem:[#allocation3 + $0x760] sm:$0xf] %v4430
        %4495 = vst [vmem:[#allocation3 + $0x784] sm:$0xf] %v4431
        %4496 = vst [vmem:[#allocation3 + $0x7a8] sm:$0xf] %v4432
        %4497 = vst [vmem:[#allocation3 + $0x7cc] sm:$0xf] %v4433
        %4498 = vst [vmem:[#allocation3 + $0x7f0] sm:$0xf] %v4434
        %4499 = vst [vmem:[#allocation3 + $0x814] sm:$0xf] %v4435
        %4500 = vst [vmem:[#allocation3 + $0x838] sm:$0xf] %v4436
        %4501 = vst [vmem:[#allocation3 + $0x85c] sm:$0xf] %v4437
        %4502 = vst [vmem:[#allocation3 + $0x880] sm:$0xf] %v4438
        %4503 = vst [vmem:[#allocation3 + $0x8a4] sm:$0xf] %v4439
        %4504 = vst [vmem:[#allocation3 + $0x8c8] sm:$0xf] %v4440
        %4505 = vst [vmem:[#allocation3 + $0x8ec] sm:$0xf] %v4441
        %v4506 = vrot.slane %v3834, 2
        %v4507 = vrot.slane %v3835, 2
        %v4508 = vsel %vm3481, %v4506, %v4507
        %v4509 = vrot.slane %v3836, 2
        %v4510 = vsel %vm3481, %v4507, %v4509
        %v4511 = vrot.slane %v3837, 2
        %v4512 = vrot.slane %v3838, 2
        %v4513 = vsel %vm3481, %v4511, %v4512
        %v4514 = vrot.slane %v3839, 2
        %v4515 = vsel %vm3481, %v4512, %v4514
        %v4516 = vrot.slane %v3840, 2
        %v4517 = vrot.slane %v3841, 2
        %v4518 = vsel %vm3481, %v4516, %v4517
        %v4519 = vrot.slane %v3842, 2
        %v4520 = vsel %vm3481, %v4517, %v4519
        %v4521 = vrot.slane %v3843, 2
        %v4522 = vrot.slane %v3844, 2
        %v4523 = vsel %vm3481, %v4521, %v4522
        %v4524 = vrot.slane %v3845, 2
        %v4525 = vsel %vm3481, %v4522, %v4524
        %v4526 = vrot.slane %v3846, 2
        %v4527 = vrot.slane %v3847, 2
        %v4528 = vsel %vm3481, %v4526, %v4527
        %v4529 = vrot.slane %v3848, 2
        %v4530 = vsel %vm3481, %v4527, %v4529
        %v4531 = vrot.slane %v3849, 2
        %v4532 = vrot.slane %v3850, 2
        %v4533 = vsel %vm3481, %v4531, %v4532
        %v4534 = vrot.slane %v3851, 2
        %v4535 = vsel %vm3481, %v4532, %v4534
        %v4536 = vrot.slane %v3852, 2
        %v4537 = vrot.slane %v3853, 2
        %v4538 = vsel %vm3481, %v4536, %v4537
        %v4539 = vrot.slane %v3854, 2
        %v4540 = vsel %vm3481, %v4537, %v4539
        %v4541 = vrot.slane %v3855, 2
        %v4542 = vrot.slane %v3856, 2
        %v4543 = vsel %vm3481, %v4541, %v4542
        %v4544 = vrot.slane %v3857, 2
        %v4545 = vsel %vm3481, %v4542, %v4544
        %v4546 = vrot.slane %v3858, 2
        %v4547 = vrot.slane %v3859, 2
        %v4548 = vsel %vm3481, %v4546, %v4547
        %v4549 = vrot.slane %v3860, 2
        %v4550 = vsel %vm3481, %v4547, %v4549
        %v4551 = vrot.slane %v3861, 2
        %v4552 = vrot.slane %v3862, 2
        %v4553 = vsel %vm3481, %v4551, %v4552
        %v4554 = vrot.slane %v3863, 2
        %v4555 = vsel %vm3481, %v4552, %v4554
        %v4556 = vrot.slane %v3864, 2
        %v4557 = vrot.slane %v3865, 2
        %v4558 = vsel %vm3481, %v4556, %v4557
        %v4559 = vrot.slane %v3866, 2
        %v4560 = vsel %vm3481, %v4557, %v4559
        %v4561 = vrot.slane %v3867, 2
        %v4562 = vrot.slane %v3868, 2
        %v4563 = vsel %vm3481, %v4561, %v4562
        %v4564 = vrot.slane %v3869, 2
        %v4565 = vsel %vm3481, %v4562, %v4564
        %v4566 = vrot.slane %v3870, 2
        %v4567 = vrot.slane %v3871, 2
        %v4568 = vsel %vm3481, %v4566, %v4567
        %v4569 = vrot.slane %v3872, 2
        %v4570 = vsel %vm3481, %v4567, %v4569
        %v4571 = vrot.slane %v3873, 2
        %v4572 = vrot.slane %v3874, 2
        %v4573 = vsel %vm3481, %v4571, %v4572
        %v4574 = vrot.slane %v3875, 2
        %v4575 = vsel %vm3481, %v4572, %v4574
        %v4576 = vrot.slane %v3876, 2
        %v4577 = vrot.slane %v3877, 2
        %v4578 = vsel %vm3481, %v4576, %v4577
        %v4579 = vrot.slane %v3878, 2
        %v4580 = vsel %vm3481, %v4577, %v4579
        %v4581 = vrot.slane %v3879, 2
        %v4582 = vrot.slane %v3880, 2
        %v4583 = vsel %vm3481, %v4581, %v4582
        %v4584 = vrot.slane %v3881, 2
        %v4585 = vsel %vm3481, %v4582, %v4584
        %v4586 = vrot.slane %v3882, 2
        %v4587 = vrot.slane %v3883, 2
        %v4588 = vsel %vm3481, %v4586, %v4587
        %v4589 = vrot.slane %v3884, 2
        %v4590 = vsel %vm3481, %v4587, %v4589
        %v4591 = vrot.slane %v3885, 2
        %v4592 = vrot.slane %v3886, 2
        %v4593 = vsel %vm3481, %v4591, %v4592
        %v4594 = vrot.slane %v3887, 2
        %v4595 = vsel %vm3481, %v4592, %v4594
        %v4596 = vrot.slane %v3888, 2
        %v4597 = vrot.slane %v3889, 2
        %v4598 = vsel %vm3481, %v4596, %v4597
        %v4599 = vrot.slane %v3890, 2
        %v4600 = vsel %vm3481, %v4597, %v4599
        %v4601 = vrot.slane %v3891, 2
        %v4602 = vrot.slane %v3892, 2
        %v4603 = vsel %vm3481, %v4601, %v4602
        %v4604 = vrot.slane %v3893, 2
        %v4605 = vsel %vm3481, %v4602, %v4604
        %v4606 = vrot.slane %v3894, 2
        %v4607 = vrot.slane %v3895, 2
        %v4608 = vsel %vm3481, %v4606, %v4607
        %v4609 = vrot.slane %v3896, 2
        %v4610 = vsel %vm3481, %v4607, %v4609
        %v4611 = vrot.slane %v3897, 2
        %v4612 = vrot.slane %v3898, 2
        %v4613 = vsel %vm3481, %v4611, %v4612
        %v4614 = vrot.slane %v3899, 2
        %v4615 = vsel %vm3481, %v4612, %v4614
        %v4616 = vrot.slane %v3900, 2
        %v4617 = vrot.slane %v3901, 2
        %v4618 = vsel %vm3481, %v4616, %v4617
        %v4619 = vrot.slane %v3902, 2
        %v4620 = vsel %vm3481, %v4617, %v4619
        %v4621 = vrot.slane %v3903, 2
        %v4622 = vrot.slane %v3904, 2
        %v4623 = vsel %vm3481, %v4621, %v4622
        %v4624 = vrot.slane %v3905, 2
        %v4625 = vsel %vm3481, %v4622, %v4624
        %v4626 = vrot.slane %v3906, 2
        %v4627 = vrot.slane %v3907, 2
        %v4628 = vsel %vm3481, %v4626, %v4627
        %v4629 = vrot.slane %v3908, 2
        %v4630 = vsel %vm3481, %v4627, %v4629
        %v4631 = vrot.slane %v3909, 2
        %v4632 = vrot.slane %v3910, 2
        %v4633 = vsel %vm3481, %v4631, %v4632
        %v4634 = vrot.slane %v3911, 2
        %v4635 = vsel %vm3481, %v4632, %v4634
        %v4636 = vrot.slane %v3912, 2
        %v4637 = vrot.slane %v3913, 2
        %v4638 = vsel %vm3481, %v4636, %v4637
        %v4639 = vrot.slane %v3914, 2
        %v4640 = vsel %vm3481, %v4637, %v4639
        %v4641 = vrot.slane %v3915, 2
        %v4642 = vrot.slane %v3916, 2
        %v4643 = vsel %vm3481, %v4641, %v4642
        %v4644 = vrot.slane %v3917, 2
        %v4645 = vsel %vm3481, %v4642, %v4644
        %v4646 = vrot.slane %v3918, 2
        %v4647 = vrot.slane %v3919, 2
        %v4648 = vsel %vm3481, %v4646, %v4647
        %v4649 = vrot.slane %v3920, 2
        %v4650 = vsel %vm3481, %v4647, %v4649
        %v4651 = vrot.slane %v3921, 2
        %v4652 = vrot.slane %v3922, 2
        %v4653 = vsel %vm3481, %v4651, %v4652
        %v4654 = vrot.slane %v3923, 2
        %v4655 = vsel %vm3481, %v4652, %v4654
        %v4656 = vrot.slane %v3924, 2
        %v4657 = vrot.slane %v3925, 2
        %v4658 = vsel %vm3481, %v4656, %v4657
        %v4659 = vrot.slane %v3926, 2
        %v4660 = vsel %vm3481, %v4657, %v4659
        %v4661 = vrot.slane %v3927, 2
        %v4662 = vrot.slane %v3928, 2
        %v4663 = vsel %vm3481, %v4661, %v4662
        %v4664 = vrot.slane %v3929, 2
        %v4665 = vsel %vm3481, %v4662, %v4664
        %v4730 = vpack.c.bf16 %v4508, %v4508
        %v4731 = vpack.c.bf16 %v4510, %v4510
        %v4732 = vpack.c.bf16 %v4513, %v4513
        %v4733 = vpack.c.bf16 %v4515, %v4515
        %v4734 = vpack.c.bf16 %v4518, %v4518
        %v4735 = vpack.c.bf16 %v4520, %v4520
        %v4736 = vpack.c.bf16 %v4523, %v4523
        %v4737 = vpack.c.bf16 %v4525, %v4525
        %v4738 = vpack.c.bf16 %v4528, %v4528
        %v4739 = vpack.c.bf16 %v4530, %v4530
        %v4740 = vpack.c.bf16 %v4533, %v4533
        %v4741 = vpack.c.bf16 %v4535, %v4535
        %v4742 = vpack.c.bf16 %v4538, %v4538
        %v4743 = vpack.c.bf16 %v4540, %v4540
        %v4744 = vpack.c.bf16 %v4543, %v4543
        %v4745 = vpack.c.bf16 %v4545, %v4545
        %v4746 = vpack.c.bf16 %v4548, %v4548
        %v4747 = vpack.c.bf16 %v4550, %v4550
        %v4748 = vpack.c.bf16 %v4553, %v4553
        %v4749 = vpack.c.bf16 %v4555, %v4555
        %v4750 = vpack.c.bf16 %v4558, %v4558
        %v4751 = vpack.c.bf16 %v4560, %v4560
        %v4752 = vpack.c.bf16 %v4563, %v4563
        %v4753 = vpack.c.bf16 %v4565, %v4565
        %v4754 = vpack.c.bf16 %v4568, %v4568
        %v4755 = vpack.c.bf16 %v4570, %v4570
        %v4756 = vpack.c.bf16 %v4573, %v4573
        %v4757 = vpack.c.bf16 %v4575, %v4575
        %v4758 = vpack.c.bf16 %v4578, %v4578
        %v4759 = vpack.c.bf16 %v4580, %v4580
        %v4760 = vpack.c.bf16 %v4583, %v4583
        %v4761 = vpack.c.bf16 %v4585, %v4585
        %v4762 = vpack.c.bf16 %v4588, %v4588
        %v4763 = vpack.c.bf16 %v4590, %v4590
        %v4764 = vpack.c.bf16 %v4593, %v4593
        %v4765 = vpack.c.bf16 %v4595, %v4595
        %v4766 = vpack.c.bf16 %v4598, %v4598
        %v4767 = vpack.c.bf16 %v4600, %v4600
        %v4768 = vpack.c.bf16 %v4603, %v4603
        %v4769 = vpack.c.bf16 %v4605, %v4605
        %v4770 = vpack.c.bf16 %v4608, %v4608
        %v4771 = vpack.c.bf16 %v4610, %v4610
        %v4772 = vpack.c.bf16 %v4613, %v4613
        %v4773 = vpack.c.bf16 %v4615, %v4615
        %v4774 = vpack.c.bf16 %v4618, %v4618
        %v4775 = vpack.c.bf16 %v4620, %v4620
        %v4776 = vpack.c.bf16 %v4623, %v4623
        %v4777 = vpack.c.bf16 %v4625, %v4625
        %v4778 = vpack.c.bf16 %v4628, %v4628
        %v4779 = vpack.c.bf16 %v4630, %v4630
        %v4780 = vpack.c.bf16 %v4633, %v4633
        %v4781 = vpack.c.bf16 %v4635, %v4635
        %v4782 = vpack.c.bf16 %v4638, %v4638
        %v4783 = vpack.c.bf16 %v4640, %v4640
        %v4784 = vpack.c.bf16 %v4643, %v4643
        %v4785 = vpack.c.bf16 %v4645, %v4645
        %v4786 = vpack.c.bf16 %v4648, %v4648
        %v4787 = vpack.c.bf16 %v4650, %v4650
        %v4788 = vpack.c.bf16 %v4653, %v4653
        %v4789 = vpack.c.bf16 %v4655, %v4655
        %v4790 = vpack.c.bf16 %v4658, %v4658
        %v4791 = vpack.c.bf16 %v4660, %v4660
        %v4792 = vpack.c.bf16 %v4663, %v4663
        %v4793 = vpack.c.bf16 %v4665, %v4665
        %4794 = vst [vmem:[#allocation3 + $0x14] sm:$0xf] %v4730
        %4795 = vst [vmem:[#allocation3 + $0x38] sm:$0xf] %v4731
        %4796 = vst [vmem:[#allocation3 + $0x5c] sm:$0xf] %v4732
        %4797 = vst [vmem:[#allocation3 + $0x80] sm:$0xf] %v4733
        %4798 = vst [vmem:[#allocation3 + $0xa4] sm:$0xf] %v4734
        %4799 = vst [vmem:[#allocation3 + $0xc8] sm:$0xf] %v4735
        %4800 = vst [vmem:[#allocation3 + $0xec] sm:$0xf] %v4736
        %4801 = vst [vmem:[#allocation3 + $0x110] sm:$0xf] %v4737
        %4802 = vst [vmem:[#allocation3 + $0x134] sm:$0xf] %v4738
        %4803 = vst [vmem:[#allocation3 + $0x158] sm:$0xf] %v4739
        %4804 = vst [vmem:[#allocation3 + $0x17c] sm:$0xf] %v4740
        %4805 = vst [vmem:[#allocation3 + $0x1a0] sm:$0xf] %v4741
        %4806 = vst [vmem:[#allocation3 + $0x1c4] sm:$0xf] %v4742
        %4807 = vst [vmem:[#allocation3 + $0x1e8] sm:$0xf] %v4743
        %4808 = vst [vmem:[#allocation3 + $0x20c] sm:$0xf] %v4744
        %4809 = vst [vmem:[#allocation3 + $0x230] sm:$0xf] %v4745
        %4810 = vst [vmem:[#allocation3 + $0x254] sm:$0xf] %v4746
        %4811 = vst [vmem:[#allocation3 + $0x278] sm:$0xf] %v4747
        %4812 = vst [vmem:[#allocation3 + $0x29c] sm:$0xf] %v4748
        %4813 = vst [vmem:[#allocation3 + $0x2c0] sm:$0xf] %v4749
        %4814 = vst [vmem:[#allocation3 + $0x2e4] sm:$0xf] %v4750
        %4815 = vst [vmem:[#allocation3 + $0x308] sm:$0xf] %v4751
        %4816 = vst [vmem:[#allocation3 + $0x32c] sm:$0xf] %v4752
        %4817 = vst [vmem:[#allocation3 + $0x350] sm:$0xf] %v4753
        %4818 = vst [vmem:[#allocation3 + $0x374] sm:$0xf] %v4754
        %4819 = vst [vmem:[#allocation3 + $0x398] sm:$0xf] %v4755
        %4820 = vst [vmem:[#allocation3 + $0x3bc] sm:$0xf] %v4756
        %4821 = vst [vmem:[#allocation3 + $0x3e0] sm:$0xf] %v4757
        %4822 = vst [vmem:[#allocation3 + $0x404] sm:$0xf] %v4758
        %4823 = vst [vmem:[#allocation3 + $0x428] sm:$0xf] %v4759
        %4824 = vst [vmem:[#allocation3 + $0x44c] sm:$0xf] %v4760
        %4825 = vst [vmem:[#allocation3 + $0x470] sm:$0xf] %v4761
        %4826 = vst [vmem:[#allocation3 + $0x494] sm:$0xf] %v4762
        %4827 = vst [vmem:[#allocation3 + $0x4b8] sm:$0xf] %v4763
        %4828 = vst [vmem:[#allocation3 + $0x4dc] sm:$0xf] %v4764
        %4829 = vst [vmem:[#allocation3 + $0x500] sm:$0xf] %v4765
        %4830 = vst [vmem:[#allocation3 + $0x524] sm:$0xf] %v4766
        %4831 = vst [vmem:[#allocation3 + $0x548] sm:$0xf] %v4767
        %4832 = vst [vmem:[#allocation3 + $0x56c] sm:$0xf] %v4768
        %4833 = vst [vmem:[#allocation3 + $0x590] sm:$0xf] %v4769
        %4834 = vst [vmem:[#allocation3 + $0x5b4] sm:$0xf] %v4770
        %4835 = vst [vmem:[#allocation3 + $0x5d8] sm:$0xf] %v4771
        %4836 = vst [vmem:[#allocation3 + $0x5fc] sm:$0xf] %v4772
        %4837 = vst [vmem:[#allocation3 + $0x620] sm:$0xf] %v4773
        %4838 = vst [vmem:[#allocation3 + $0x644] sm:$0xf] %v4774
        %4839 = vst [vmem:[#allocation3 + $0x668] sm:$0xf] %v4775
        %4840 = vst [vmem:[#allocation3 + $0x68c] sm:$0xf] %v4776
        %4841 = vst [vmem:[#allocation3 + $0x6b0] sm:$0xf] %v4777
        %4842 = vst [vmem:[#allocation3 + $0x6d4] sm:$0xf] %v4778
        %4843 = vst [vmem:[#allocation3 + $0x6f8] sm:$0xf] %v4779
        %4844 = vst [vmem:[#allocation3 + $0x71c] sm:$0xf] %v4780
        %4845 = vst [vmem:[#allocation3 + $0x740] sm:$0xf] %v4781
        %4846 = vst [vmem:[#allocation3 + $0x764] sm:$0xf] %v4782
        %4847 = vst [vmem:[#allocation3 + $0x788] sm:$0xf] %v4783
        %4848 = vst [vmem:[#allocation3 + $0x7ac] sm:$0xf] %v4784
        %4849 = vst [vmem:[#allocation3 + $0x7d0] sm:$0xf] %v4785
        %4850 = vst [vmem:[#allocation3 + $0x7f4] sm:$0xf] %v4786
        %4851 = vst [vmem:[#allocation3 + $0x818] sm:$0xf] %v4787
        %4852 = vst [vmem:[#allocation3 + $0x83c] sm:$0xf] %v4788
        %4853 = vst [vmem:[#allocation3 + $0x860] sm:$0xf] %v4789
        %4854 = vst [vmem:[#allocation3 + $0x884] sm:$0xf] %v4790
        %4855 = vst [vmem:[#allocation3 + $0x8a8] sm:$0xf] %v4791
        %4856 = vst [vmem:[#allocation3 + $0x8cc] sm:$0xf] %v4792
        %4857 = vst [vmem:[#allocation3 + $0x8f0] sm:$0xf] %v4793
        %s4858 = scalar_lea.vmem [#allocation2], 48
        %v4859 = vld [vmem:[%s4858] sm:$0xff]
        %v4860 = vld [vmem:[%s4858 + $0x8] sm:$0xff]
        %v4861 = vld [vmem:[%s4858 + $0x10] sm:$0x3]
        %v4862 = vld [vmem:[%s4858 + $0x18] sm:$0xff]
        %v4863 = vld [vmem:[%s4858 + $0x20] sm:$0xff]
        %v4864 = vld [vmem:[%s4858 + $0x28] sm:$0x3]
        %v4865 = vld [vmem:[%s4858 + $0x30] sm:$0xff]
        %v4866 = vld [vmem:[%s4858 + $0x38] sm:$0xff]
        %v4867 = vld [vmem:[%s4858 + $0x40] sm:$0x3]
        %v4868 = vld [vmem:[%s4858 + $0x48] sm:$0xff]
        %v4869 = vld [vmem:[%s4858 + $0x50] sm:$0xff]
        %v4870 = vld [vmem:[%s4858 + $0x58] sm:$0x3]
        %v4871 = vld [vmem:[%s4858 + $0x60] sm:$0xff]
        %v4872 = vld [vmem:[%s4858 + $0x68] sm:$0xff]
        %v4873 = vld [vmem:[%s4858 + $0x70] sm:$0x3]
        %v4874 = vld [vmem:[%s4858 + $0x78] sm:$0xff]
        %v4875 = vld [vmem:[%s4858 + $0x80] sm:$0xff]
        %v4876 = vld [vmem:[%s4858 + $0x88] sm:$0x3]
        %v4877 = vld [vmem:[%s4858 + $0x90] sm:$0xff]
        %v4878 = vld [vmem:[%s4858 + $0x98] sm:$0xff]
        %v4879 = vld [vmem:[%s4858 + $0xa0] sm:$0x3]
        %v4880 = vld [vmem:[%s4858 + $0xa8] sm:$0xff]
        %v4881 = vld [vmem:[%s4858 + $0xb0] sm:$0xff]
        %v4882 = vld [vmem:[%s4858 + $0xb8] sm:$0x3]
        %v4883 = vld [vmem:[%s4858 + $0xc0] sm:$0xff]
        %v4884 = vld [vmem:[%s4858 + $0xc8] sm:$0xff]
        %v4885 = vld [vmem:[%s4858 + $0xd0] sm:$0x3]
        %v4886 = vld [vmem:[%s4858 + $0xd8] sm:$0xff]
        %v4887 = vld [vmem:[%s4858 + $0xe0] sm:$0xff]
        %v4888 = vld [vmem:[%s4858 + $0xe8] sm:$0x3]
        %v4889 = vld [vmem:[%s4858 + $0xf0] sm:$0xff]
        %v4890 = vld [vmem:[%s4858 + $0xf8] sm:$0xff]
        %v4891 = vld [vmem:[%s4858 + $0x100] sm:$0x3]
        %v4892 = vld [vmem:[%s4858 + $0x108] sm:$0xff]
        %v4893 = vld [vmem:[%s4858 + $0x110] sm:$0xff]
        %v4894 = vld [vmem:[%s4858 + $0x118] sm:$0x3]
        %v4895 = vld [vmem:[%s4858 + $0x120] sm:$0xff]
        %v4896 = vld [vmem:[%s4858 + $0x128] sm:$0xff]
        %v4897 = vld [vmem:[%s4858 + $0x130] sm:$0x3]
        %v4898 = vld [vmem:[%s4858 + $0x138] sm:$0xff]
        %v4899 = vld [vmem:[%s4858 + $0x140] sm:$0xff]
        %v4900 = vld [vmem:[%s4858 + $0x148] sm:$0x3]
        %v4901 = vld [vmem:[%s4858 + $0x150] sm:$0xff]
        %v4902 = vld [vmem:[%s4858 + $0x158] sm:$0xff]
        %v4903 = vld [vmem:[%s4858 + $0x160] sm:$0x3]
        %v4904 = vld [vmem:[%s4858 + $0x168] sm:$0xff]
        %v4905 = vld [vmem:[%s4858 + $0x170] sm:$0xff]
        %v4906 = vld [vmem:[%s4858 + $0x178] sm:$0x3]
        %v4907 = vld [vmem:[%s4858 + $0x1b0] sm:$0xff]
        %v4908 = vld [vmem:[%s4858 + $0x1b8] sm:$0xff]
        %v4909 = vld [vmem:[%s4858 + $0x1c0] sm:$0x3]
        %v4910 = vld [vmem:[%s4858 + $0x1c8] sm:$0xff]
        %v4911 = vld [vmem:[%s4858 + $0x1d0] sm:$0xff]
        %v4912 = vld [vmem:[%s4858 + $0x1d8] sm:$0x3]
        %v4913 = vld [vmem:[%s4858 + $0x1e0] sm:$0xff]
        %v4914 = vld [vmem:[%s4858 + $0x1e8] sm:$0xff]
        %v4915 = vld [vmem:[%s4858 + $0x1f0] sm:$0x3]
        %v4916 = vld [vmem:[%s4858 + $0x1f8] sm:$0xff]
        %v4917 = vld [vmem:[%s4858 + $0x200] sm:$0xff]
        %v4918 = vld [vmem:[%s4858 + $0x208] sm:$0x3]
        %v4919 = vld [vmem:[%s4858 + $0x210] sm:$0xff]
        %v4920 = vld [vmem:[%s4858 + $0x218] sm:$0xff]
        %v4921 = vld [vmem:[%s4858 + $0x220] sm:$0x3]
        %v4922 = vld [vmem:[%s4858 + $0x228] sm:$0xff]
        %v4923 = vld [vmem:[%s4858 + $0x230] sm:$0xff]
        %v4924 = vld [vmem:[%s4858 + $0x238] sm:$0x3]
        %v4925 = vld [vmem:[%s4858 + $0x240] sm:$0xff]
        %v4926 = vld [vmem:[%s4858 + $0x248] sm:$0xff]
        %v4927 = vld [vmem:[%s4858 + $0x250] sm:$0x3]
        %v4928 = vld [vmem:[%s4858 + $0x258] sm:$0xff]
        %v4929 = vld [vmem:[%s4858 + $0x260] sm:$0xff]
        %v4930 = vld [vmem:[%s4858 + $0x268] sm:$0x3]
        %v4931 = vld [vmem:[%s4858 + $0x270] sm:$0xff]
        %v4932 = vld [vmem:[%s4858 + $0x278] sm:$0xff]
        %v4933 = vld [vmem:[%s4858 + $0x280] sm:$0x3]
        %v4934 = vld [vmem:[%s4858 + $0x288] sm:$0xff]
        %v4935 = vld [vmem:[%s4858 + $0x290] sm:$0xff]
        %v4936 = vld [vmem:[%s4858 + $0x298] sm:$0x3]
        %v4937 = vld [vmem:[%s4858 + $0x2a0] sm:$0xff]
        %v4938 = vld [vmem:[%s4858 + $0x2a8] sm:$0xff]
        %v4939 = vld [vmem:[%s4858 + $0x2b0] sm:$0x3]
        %v4940 = vld [vmem:[%s4858 + $0x2b8] sm:$0xff]
        %v4941 = vld [vmem:[%s4858 + $0x2c0] sm:$0xff]
        %v4942 = vld [vmem:[%s4858 + $0x2c8] sm:$0x3]
        %v4943 = vld [vmem:[%s4858 + $0x2d0] sm:$0xff]
        %v4944 = vld [vmem:[%s4858 + $0x2d8] sm:$0xff]
        %v4945 = vld [vmem:[%s4858 + $0x2e0] sm:$0x3]
        %v4946 = vld [vmem:[%s4858 + $0x2e8] sm:$0xff]
        %v4947 = vld [vmem:[%s4858 + $0x2f0] sm:$0xff]
        %v4948 = vld [vmem:[%s4858 + $0x2f8] sm:$0x3]
        %v4949 = vld [vmem:[%s4858 + $0x300] sm:$0xff]
        %v4950 = vld [vmem:[%s4858 + $0x308] sm:$0xff]
        %v4951 = vld [vmem:[%s4858 + $0x310] sm:$0x3]
        %v4952 = vld [vmem:[%s4858 + $0x318] sm:$0xff]
        %v4953 = vld [vmem:[%s4858 + $0x320] sm:$0xff]
        %v4954 = vld [vmem:[%s4858 + $0x328] sm:$0x3]
        %v4955 = vpack.c.bf16 %v4859, %v4859
        %v4956 = vpack.c.bf16 %v4860, %v4860
        %v4957 = vpack.c.bf16 %v4862, %v4862
        %v4958 = vpack.c.bf16 %v4863, %v4863
        %v4959 = vpack.c.bf16 %v4865, %v4865
        %v4960 = vpack.c.bf16 %v4866, %v4866
        %v4961 = vpack.c.bf16 %v4868, %v4868
        %v4962 = vpack.c.bf16 %v4869, %v4869
        %v4963 = vpack.c.bf16 %v4871, %v4871
        %v4964 = vpack.c.bf16 %v4872, %v4872
        %v4965 = vpack.c.bf16 %v4874, %v4874
        %v4966 = vpack.c.bf16 %v4875, %v4875
        %v4967 = vpack.c.bf16 %v4877, %v4877
        %v4968 = vpack.c.bf16 %v4878, %v4878
        %v4969 = vpack.c.bf16 %v4880, %v4880
        %v4970 = vpack.c.bf16 %v4881, %v4881
        %v4971 = vpack.c.bf16 %v4883, %v4883
        %v4972 = vpack.c.bf16 %v4884, %v4884
        %v4973 = vpack.c.bf16 %v4886, %v4886
        %v4974 = vpack.c.bf16 %v4887, %v4887
        %v4975 = vpack.c.bf16 %v4889, %v4889
        %v4976 = vpack.c.bf16 %v4890, %v4890
        %v4977 = vpack.c.bf16 %v4892, %v4892
        %v4978 = vpack.c.bf16 %v4893, %v4893
        %v4979 = vpack.c.bf16 %v4895, %v4895
        %v4980 = vpack.c.bf16 %v4896, %v4896
        %v4981 = vpack.c.bf16 %v4898, %v4898
        %v4982 = vpack.c.bf16 %v4899, %v4899
        %v4983 = vpack.c.bf16 %v4901, %v4901
        %v4984 = vpack.c.bf16 %v4902, %v4902
        %v4985 = vpack.c.bf16 %v4904, %v4904
        %v4986 = vpack.c.bf16 %v4905, %v4905
        %v4987 = vpack.c.bf16 %v4907, %v4907
        %v4988 = vpack.c.bf16 %v4908, %v4908
        %v4989 = vpack.c.bf16 %v4910, %v4910
        %v4990 = vpack.c.bf16 %v4911, %v4911
        %v4991 = vpack.c.bf16 %v4913, %v4913
        %v4992 = vpack.c.bf16 %v4914, %v4914
        %v4993 = vpack.c.bf16 %v4916, %v4916
        %v4994 = vpack.c.bf16 %v4917, %v4917
        %v4995 = vpack.c.bf16 %v4919, %v4919
        %v4996 = vpack.c.bf16 %v4920, %v4920
        %v4997 = vpack.c.bf16 %v4922, %v4922
        %v4998 = vpack.c.bf16 %v4923, %v4923
        %v4999 = vpack.c.bf16 %v4925, %v4925
        %v5000 = vpack.c.bf16 %v4926, %v4926
        %v5001 = vpack.c.bf16 %v4928, %v4928
        %v5002 = vpack.c.bf16 %v4929, %v4929
        %v5003 = vpack.c.bf16 %v4931, %v4931
        %v5004 = vpack.c.bf16 %v4932, %v4932
        %v5005 = vpack.c.bf16 %v4934, %v4934
        %v5006 = vpack.c.bf16 %v4935, %v4935
        %v5007 = vpack.c.bf16 %v4937, %v4937
        %v5008 = vpack.c.bf16 %v4938, %v4938
        %v5009 = vpack.c.bf16 %v4940, %v4940
        %v5010 = vpack.c.bf16 %v4941, %v4941
        %v5011 = vpack.c.bf16 %v4943, %v4943
        %v5012 = vpack.c.bf16 %v4944, %v4944
        %v5013 = vpack.c.bf16 %v4946, %v4946
        %v5014 = vpack.c.bf16 %v4947, %v4947
        %v5015 = vpack.c.bf16 %v4949, %v4949
        %v5016 = vpack.c.bf16 %v4950, %v4950
        %v5017 = vpack.c.bf16 %v4952, %v4952
        %v5018 = vpack.c.bf16 %v4953, %v4953
        %5019 = vst [vmem:[#allocation3 + $0x18] sm:$0xf] %v4955
        %5020 = vst [vmem:[#allocation3 + $0x3c] sm:$0xf] %v4956
        %5021 = vst [vmem:[#allocation3 + $0x60] sm:$0xf] %v4957
        %5022 = vst [vmem:[#allocation3 + $0x84] sm:$0xf] %v4958
        %5023 = vst [vmem:[#allocation3 + $0xa8] sm:$0xf] %v4959
        %5024 = vst [vmem:[#allocation3 + $0xcc] sm:$0xf] %v4960
        %5025 = vst [vmem:[#allocation3 + $0xf0] sm:$0xf] %v4961
        %5026 = vst [vmem:[#allocation3 + $0x114] sm:$0xf] %v4962
        %5027 = vst [vmem:[#allocation3 + $0x138] sm:$0xf] %v4963
        %5028 = vst [vmem:[#allocation3 + $0x15c] sm:$0xf] %v4964
        %5029 = vst [vmem:[#allocation3 + $0x180] sm:$0xf] %v4965
        %5030 = vst [vmem:[#allocation3 + $0x1a4] sm:$0xf] %v4966
        %5031 = vst [vmem:[#allocation3 + $0x1c8] sm:$0xf] %v4967
        %5032 = vst [vmem:[#allocation3 + $0x1ec] sm:$0xf] %v4968
        %5033 = vst [vmem:[#allocation3 + $0x210] sm:$0xf] %v4969
        %5034 = vst [vmem:[#allocation3 + $0x234] sm:$0xf] %v4970
        %5035 = vst [vmem:[#allocation3 + $0x258] sm:$0xf] %v4971
        %5036 = vst [vmem:[#allocation3 + $0x27c] sm:$0xf] %v4972
        %5037 = vst [vmem:[#allocation3 + $0x2a0] sm:$0xf] %v4973
        %5038 = vst [vmem:[#allocation3 + $0x2c4] sm:$0xf] %v4974
        %5039 = vst [vmem:[#allocation3 + $0x2e8] sm:$0xf] %v4975
        %5040 = vst [vmem:[#allocation3 + $0x30c] sm:$0xf] %v4976
        %5041 = vst [vmem:[#allocation3 + $0x330] sm:$0xf] %v4977
        %5042 = vst [vmem:[#allocation3 + $0x354] sm:$0xf] %v4978
        %5043 = vst [vmem:[#allocation3 + $0x378] sm:$0xf] %v4979
        %5044 = vst [vmem:[#allocation3 + $0x39c] sm:$0xf] %v4980
        %5045 = vst [vmem:[#allocation3 + $0x3c0] sm:$0xf] %v4981
        %5046 = vst [vmem:[#allocation3 + $0x3e4] sm:$0xf] %v4982
        %5047 = vst [vmem:[#allocation3 + $0x408] sm:$0xf] %v4983
        %5048 = vst [vmem:[#allocation3 + $0x42c] sm:$0xf] %v4984
        %5049 = vst [vmem:[#allocation3 + $0x450] sm:$0xf] %v4985
        %5050 = vst [vmem:[#allocation3 + $0x474] sm:$0xf] %v4986
        %5051 = vst [vmem:[#allocation3 + $0x498] sm:$0xf] %v4987
        %5052 = vst [vmem:[#allocation3 + $0x4bc] sm:$0xf] %v4988
        %5053 = vst [vmem:[#allocation3 + $0x4e0] sm:$0xf] %v4989
        %5054 = vst [vmem:[#allocation3 + $0x504] sm:$0xf] %v4990
        %5055 = vst [vmem:[#allocation3 + $0x528] sm:$0xf] %v4991
        %5056 = vst [vmem:[#allocation3 + $0x54c] sm:$0xf] %v4992
        %5057 = vst [vmem:[#allocation3 + $0x570] sm:$0xf] %v4993
        %5058 = vst [vmem:[#allocation3 + $0x594] sm:$0xf] %v4994
        %5059 = vst [vmem:[#allocation3 + $0x5b8] sm:$0xf] %v4995
        %5060 = vst [vmem:[#allocation3 + $0x5dc] sm:$0xf] %v4996
        %5061 = vst [vmem:[#allocation3 + $0x600] sm:$0xf] %v4997
        %5062 = vst [vmem:[#allocation3 + $0x624] sm:$0xf] %v4998
        %5063 = vst [vmem:[#allocation3 + $0x648] sm:$0xf] %v4999
        %5064 = vst [vmem:[#allocation3 + $0x66c] sm:$0xf] %v5000
        %5065 = vst [vmem:[#allocation3 + $0x690] sm:$0xf] %v5001
        %5066 = vst [vmem:[#allocation3 + $0x6b4] sm:$0xf] %v5002
        %5067 = vst [vmem:[#allocation3 + $0x6d8] sm:$0xf] %v5003
        %5068 = vst [vmem:[#allocation3 + $0x6fc] sm:$0xf] %v5004
        %5069 = vst [vmem:[#allocation3 + $0x720] sm:$0xf] %v5005
        %5070 = vst [vmem:[#allocation3 + $0x744] sm:$0xf] %v5006
        %5071 = vst [vmem:[#allocation3 + $0x768] sm:$0xf] %v5007
        %5072 = vst [vmem:[#allocation3 + $0x78c] sm:$0xf] %v5008
        %5073 = vst [vmem:[#allocation3 + $0x7b0] sm:$0xf] %v5009
        %5074 = vst [vmem:[#allocation3 + $0x7d4] sm:$0xf] %v5010
        %5075 = vst [vmem:[#allocation3 + $0x7f8] sm:$0xf] %v5011
        %5076 = vst [vmem:[#allocation3 + $0x81c] sm:$0xf] %v5012
        %5077 = vst [vmem:[#allocation3 + $0x840] sm:$0xf] %v5013
        %5078 = vst [vmem:[#allocation3 + $0x864] sm:$0xf] %v5014
        %5079 = vst [vmem:[#allocation3 + $0x888] sm:$0xf] %v5015
        %5080 = vst [vmem:[#allocation3 + $0x8ac] sm:$0xf] %v5016
        %5081 = vst [vmem:[#allocation3 + $0x8d0] sm:$0xf] %v5017
        %5082 = vst [vmem:[#allocation3 + $0x8f4] sm:$0xf] %v5018
        %v5179 = vrot.slane %v4859, 1
        %v5180 = vrot.slane %v4860, 1
        %v5181 = vsel %vm3128, %v5179, %v5180
        %v5182 = vrot.slane %v4861, 1
        %v5183 = vsel %vm3128, %v5180, %v5182
        %v5184 = vrot.slane %v4862, 1
        %v5185 = vrot.slane %v4863, 1
        %v5186 = vsel %vm3128, %v5184, %v5185
        %v5187 = vrot.slane %v4864, 1
        %v5188 = vsel %vm3128, %v5185, %v5187
        %v5189 = vrot.slane %v4865, 1
        %v5190 = vrot.slane %v4866, 1
        %v5191 = vsel %vm3128, %v5189, %v5190
        %v5192 = vrot.slane %v4867, 1
        %v5193 = vsel %vm3128, %v5190, %v5192
        %v5194 = vrot.slane %v4868, 1
        %v5195 = vrot.slane %v4869, 1
        %v5196 = vsel %vm3128, %v5194, %v5195
        %v5197 = vrot.slane %v4870, 1
        %v5198 = vsel %vm3128, %v5195, %v5197
        %v5199 = vrot.slane %v4871, 1
        %v5200 = vrot.slane %v4872, 1
        %v5201 = vsel %vm3128, %v5199, %v5200
        %v5202 = vrot.slane %v4873, 1
        %v5203 = vsel %vm3128, %v5200, %v5202
        %v5204 = vrot.slane %v4874, 1
        %v5205 = vrot.slane %v4875, 1
        %v5206 = vsel %vm3128, %v5204, %v5205
        %v5207 = vrot.slane %v4876, 1
        %v5208 = vsel %vm3128, %v5205, %v5207
        %v5209 = vrot.slane %v4877, 1
        %v5210 = vrot.slane %v4878, 1
        %v5211 = vsel %vm3128, %v5209, %v5210
        %v5212 = vrot.slane %v4879, 1
        %v5213 = vsel %vm3128, %v5210, %v5212
        %v5214 = vrot.slane %v4880, 1
        %v5215 = vrot.slane %v4881, 1
        %v5216 = vsel %vm3128, %v5214, %v5215
        %v5217 = vrot.slane %v4882, 1
        %v5218 = vsel %vm3128, %v5215, %v5217
        %v5219 = vrot.slane %v4883, 1
        %v5220 = vrot.slane %v4884, 1
        %v5221 = vsel %vm3128, %v5219, %v5220
        %v5222 = vrot.slane %v4885, 1
        %v5223 = vsel %vm3128, %v5220, %v5222
        %v5224 = vrot.slane %v4886, 1
        %v5225 = vrot.slane %v4887, 1
        %v5226 = vsel %vm3128, %v5224, %v5225
        %v5227 = vrot.slane %v4888, 1
        %v5228 = vsel %vm3128, %v5225, %v5227
        %v5229 = vrot.slane %v4889, 1
        %v5230 = vrot.slane %v4890, 1
        %v5231 = vsel %vm3128, %v5229, %v5230
        %v5232 = vrot.slane %v4891, 1
        %v5233 = vsel %vm3128, %v5230, %v5232
        %v5234 = vrot.slane %v4892, 1
        %v5235 = vrot.slane %v4893, 1
        %v5236 = vsel %vm3128, %v5234, %v5235
        %v5237 = vrot.slane %v4894, 1
        %v5238 = vsel %vm3128, %v5235, %v5237
        %v5239 = vrot.slane %v4895, 1
        %v5240 = vrot.slane %v4896, 1
        %v5241 = vsel %vm3128, %v5239, %v5240
        %v5242 = vrot.slane %v4897, 1
        %v5243 = vsel %vm3128, %v5240, %v5242
        %v5244 = vrot.slane %v4898, 1
        %v5245 = vrot.slane %v4899, 1
        %v5246 = vsel %vm3128, %v5244, %v5245
        %v5247 = vrot.slane %v4900, 1
        %v5248 = vsel %vm3128, %v5245, %v5247
        %v5249 = vrot.slane %v4901, 1
        %v5250 = vrot.slane %v4902, 1
        %v5251 = vsel %vm3128, %v5249, %v5250
        %v5252 = vrot.slane %v4903, 1
        %v5253 = vsel %vm3128, %v5250, %v5252
        %v5254 = vrot.slane %v4904, 1
        %v5255 = vrot.slane %v4905, 1
        %v5256 = vsel %vm3128, %v5254, %v5255
        %v5257 = vrot.slane %v4906, 1
        %v5258 = vsel %vm3128, %v5255, %v5257
        %v5259 = vrot.slane %v4907, 1
        %v5260 = vrot.slane %v4908, 1
        %v5261 = vsel %vm3128, %v5259, %v5260
        %v5262 = vrot.slane %v4909, 1
        %v5263 = vsel %vm3128, %v5260, %v5262
        %v5264 = vrot.slane %v4910, 1
        %v5265 = vrot.slane %v4911, 1
        %v5266 = vsel %vm3128, %v5264, %v5265
        %v5267 = vrot.slane %v4912, 1
        %v5268 = vsel %vm3128, %v5265, %v5267
        %v5269 = vrot.slane %v4913, 1
        %v5270 = vrot.slane %v4914, 1
        %v5271 = vsel %vm3128, %v5269, %v5270
        %v5272 = vrot.slane %v4915, 1
        %v5273 = vsel %vm3128, %v5270, %v5272
        %v5274 = vrot.slane %v4916, 1
        %v5275 = vrot.slane %v4917, 1
        %v5276 = vsel %vm3128, %v5274, %v5275
        %v5277 = vrot.slane %v4918, 1
        %v5278 = vsel %vm3128, %v5275, %v5277
        %v5279 = vrot.slane %v4919, 1
        %v5280 = vrot.slane %v4920, 1
        %v5281 = vsel %vm3128, %v5279, %v5280
        %v5282 = vrot.slane %v4921, 1
        %v5283 = vsel %vm3128, %v5280, %v5282
        %v5284 = vrot.slane %v4922, 1
        %v5285 = vrot.slane %v4923, 1
        %v5286 = vsel %vm3128, %v5284, %v5285
        %v5287 = vrot.slane %v4924, 1
        %v5288 = vsel %vm3128, %v5285, %v5287
        %v5289 = vrot.slane %v4925, 1
        %v5290 = vrot.slane %v4926, 1
        %v5291 = vsel %vm3128, %v5289, %v5290
        %v5292 = vrot.slane %v4927, 1
        %v5293 = vsel %vm3128, %v5290, %v5292
        %v5294 = vrot.slane %v4928, 1
        %v5295 = vrot.slane %v4929, 1
        %v5296 = vsel %vm3128, %v5294, %v5295
        %v5297 = vrot.slane %v4930, 1
        %v5298 = vsel %vm3128, %v5295, %v5297
        %v5299 = vrot.slane %v4931, 1
        %v5300 = vrot.slane %v4932, 1
        %v5301 = vsel %vm3128, %v5299, %v5300
        %v5302 = vrot.slane %v4933, 1
        %v5303 = vsel %vm3128, %v5300, %v5302
        %v5304 = vrot.slane %v4934, 1
        %v5305 = vrot.slane %v4935, 1
        %v5306 = vsel %vm3128, %v5304, %v5305
        %v5307 = vrot.slane %v4936, 1
        %v5308 = vsel %vm3128, %v5305, %v5307
        %v5309 = vrot.slane %v4937, 1
        %v5310 = vrot.slane %v4938, 1
        %v5311 = vsel %vm3128, %v5309, %v5310
        %v5312 = vrot.slane %v4939, 1
        %v5313 = vsel %vm3128, %v5310, %v5312
        %v5314 = vrot.slane %v4940, 1
        %v5315 = vrot.slane %v4941, 1
        %v5316 = vsel %vm3128, %v5314, %v5315
        %v5317 = vrot.slane %v4942, 1
        %v5318 = vsel %vm3128, %v5315, %v5317
        %v5319 = vrot.slane %v4943, 1
        %v5320 = vrot.slane %v4944, 1
        %v5321 = vsel %vm3128, %v5319, %v5320
        %v5322 = vrot.slane %v4945, 1
        %v5323 = vsel %vm3128, %v5320, %v5322
        %v5324 = vrot.slane %v4946, 1
        %v5325 = vrot.slane %v4947, 1
        %v5326 = vsel %vm3128, %v5324, %v5325
        %v5327 = vrot.slane %v4948, 1
        %v5328 = vsel %vm3128, %v5325, %v5327
        %v5329 = vrot.slane %v4949, 1
        %v5330 = vrot.slane %v4950, 1
        %v5331 = vsel %vm3128, %v5329, %v5330
        %v5332 = vrot.slane %v4951, 1
        %v5333 = vsel %vm3128, %v5330, %v5332
        %v5334 = vrot.slane %v4952, 1
        %v5335 = vrot.slane %v4953, 1
        %v5336 = vsel %vm3128, %v5334, %v5335
        %v5337 = vrot.slane %v4954, 1
        %v5338 = vsel %vm3128, %v5335, %v5337
        %v5403 = vpack.c.bf16 %v5181, %v5181
        %v5404 = vpack.c.bf16 %v5183, %v5183
        %v5405 = vpack.c.bf16 %v5186, %v5186
        %v5406 = vpack.c.bf16 %v5188, %v5188
        %v5407 = vpack.c.bf16 %v5191, %v5191
        %v5408 = vpack.c.bf16 %v5193, %v5193
        %v5409 = vpack.c.bf16 %v5196, %v5196
        %v5410 = vpack.c.bf16 %v5198, %v5198
        %v5411 = vpack.c.bf16 %v5201, %v5201
        %v5412 = vpack.c.bf16 %v5203, %v5203
        %v5413 = vpack.c.bf16 %v5206, %v5206
        %v5414 = vpack.c.bf16 %v5208, %v5208
        %v5415 = vpack.c.bf16 %v5211, %v5211
        %v5416 = vpack.c.bf16 %v5213, %v5213
        %v5417 = vpack.c.bf16 %v5216, %v5216
        %v5418 = vpack.c.bf16 %v5218, %v5218
        %v5419 = vpack.c.bf16 %v5221, %v5221
        %v5420 = vpack.c.bf16 %v5223, %v5223
        %v5421 = vpack.c.bf16 %v5226, %v5226
        %v5422 = vpack.c.bf16 %v5228, %v5228
        %v5423 = vpack.c.bf16 %v5231, %v5231
        %v5424 = vpack.c.bf16 %v5233, %v5233
        %v5425 = vpack.c.bf16 %v5236, %v5236
        %v5426 = vpack.c.bf16 %v5238, %v5238
        %v5427 = vpack.c.bf16 %v5241, %v5241
        %v5428 = vpack.c.bf16 %v5243, %v5243
        %v5429 = vpack.c.bf16 %v5246, %v5246
        %v5430 = vpack.c.bf16 %v5248, %v5248
        %v5431 = vpack.c.bf16 %v5251, %v5251
        %v5432 = vpack.c.bf16 %v5253, %v5253
        %v5433 = vpack.c.bf16 %v5256, %v5256
        %v5434 = vpack.c.bf16 %v5258, %v5258
        %v5435 = vpack.c.bf16 %v5261, %v5261
        %v5436 = vpack.c.bf16 %v5263, %v5263
        %v5437 = vpack.c.bf16 %v5266, %v5266
        %v5438 = vpack.c.bf16 %v5268, %v5268
        %v5439 = vpack.c.bf16 %v5271, %v5271
        %v5440 = vpack.c.bf16 %v5273, %v5273
        %v5441 = vpack.c.bf16 %v5276, %v5276
        %v5442 = vpack.c.bf16 %v5278, %v5278
        %v5443 = vpack.c.bf16 %v5281, %v5281
        %v5444 = vpack.c.bf16 %v5283, %v5283
        %v5445 = vpack.c.bf16 %v5286, %v5286
        %v5446 = vpack.c.bf16 %v5288, %v5288
        %v5447 = vpack.c.bf16 %v5291, %v5291
        %v5448 = vpack.c.bf16 %v5293, %v5293
        %v5449 = vpack.c.bf16 %v5296, %v5296
        %v5450 = vpack.c.bf16 %v5298, %v5298
        %v5451 = vpack.c.bf16 %v5301, %v5301
        %v5452 = vpack.c.bf16 %v5303, %v5303
        %v5453 = vpack.c.bf16 %v5306, %v5306
        %v5454 = vpack.c.bf16 %v5308, %v5308
        %v5455 = vpack.c.bf16 %v5311, %v5311
        %v5456 = vpack.c.bf16 %v5313, %v5313
        %v5457 = vpack.c.bf16 %v5316, %v5316
        %v5458 = vpack.c.bf16 %v5318, %v5318
        %v5459 = vpack.c.bf16 %v5321, %v5321
        %v5460 = vpack.c.bf16 %v5323, %v5323
        %v5461 = vpack.c.bf16 %v5326, %v5326
        %v5462 = vpack.c.bf16 %v5328, %v5328
        %v5463 = vpack.c.bf16 %v5331, %v5331
        %v5464 = vpack.c.bf16 %v5333, %v5333
        %v5465 = vpack.c.bf16 %v5336, %v5336
        %v5466 = vpack.c.bf16 %v5338, %v5338
        %5467 = vst [vmem:[#allocation3 + $0x1c] sm:$0xf] %v5403
        %5468 = vst [vmem:[#allocation3 + $0x40] sm:$0xf] %v5404
        %5469 = vst [vmem:[#allocation3 + $0x64] sm:$0xf] %v5405
        %5470 = vst [vmem:[#allocation3 + $0x88] sm:$0xf] %v5406
        %5471 = vst [vmem:[#allocation3 + $0xac] sm:$0xf] %v5407
        %5472 = vst [vmem:[#allocation3 + $0xd0] sm:$0xf] %v5408
        %5473 = vst [vmem:[#allocation3 + $0xf4] sm:$0xf] %v5409
        %5474 = vst [vmem:[#allocation3 + $0x118] sm:$0xf] %v5410
        %5475 = vst [vmem:[#allocation3 + $0x13c] sm:$0xf] %v5411
        %5476 = vst [vmem:[#allocation3 + $0x160] sm:$0xf] %v5412
        %5477 = vst [vmem:[#allocation3 + $0x184] sm:$0xf] %v5413
        %5478 = vst [vmem:[#allocation3 + $0x1a8] sm:$0xf] %v5414
        %5479 = vst [vmem:[#allocation3 + $0x1cc] sm:$0xf] %v5415
        %5480 = vst [vmem:[#allocation3 + $0x1f0] sm:$0xf] %v5416
        %5481 = vst [vmem:[#allocation3 + $0x214] sm:$0xf] %v5417
        %5482 = vst [vmem:[#allocation3 + $0x238] sm:$0xf] %v5418
        %5483 = vst [vmem:[#allocation3 + $0x25c] sm:$0xf] %v5419
        %5484 = vst [vmem:[#allocation3 + $0x280] sm:$0xf] %v5420
        %5485 = vst [vmem:[#allocation3 + $0x2a4] sm:$0xf] %v5421
        %5486 = vst [vmem:[#allocation3 + $0x2c8] sm:$0xf] %v5422
        %5487 = vst [vmem:[#allocation3 + $0x2ec] sm:$0xf] %v5423
        %5488 = vst [vmem:[#allocation3 + $0x310] sm:$0xf] %v5424
        %5489 = vst [vmem:[#allocation3 + $0x334] sm:$0xf] %v5425
        %5490 = vst [vmem:[#allocation3 + $0x358] sm:$0xf] %v5426
        %5491 = vst [vmem:[#allocation3 + $0x37c] sm:$0xf] %v5427
        %5492 = vst [vmem:[#allocation3 + $0x3a0] sm:$0xf] %v5428
        %5493 = vst [vmem:[#allocation3 + $0x3c4] sm:$0xf] %v5429
        %5494 = vst [vmem:[#allocation3 + $0x3e8] sm:$0xf] %v5430
        %5495 = vst [vmem:[#allocation3 + $0x40c] sm:$0xf] %v5431
        %5496 = vst [vmem:[#allocation3 + $0x430] sm:$0xf] %v5432
        %5497 = vst [vmem:[#allocation3 + $0x454] sm:$0xf] %v5433
        %5498 = vst [vmem:[#allocation3 + $0x478] sm:$0xf] %v5434
        %5499 = vst [vmem:[#allocation3 + $0x49c] sm:$0xf] %v5435
        %5500 = vst [vmem:[#allocation3 + $0x4c0] sm:$0xf] %v5436
        %5501 = vst [vmem:[#allocation3 + $0x4e4] sm:$0xf] %v5437
        %5502 = vst [vmem:[#allocation3 + $0x508] sm:$0xf] %v5438
        %5503 = vst [vmem:[#allocation3 + $0x52c] sm:$0xf] %v5439
        %5504 = vst [vmem:[#allocation3 + $0x550] sm:$0xf] %v5440
        %5505 = vst [vmem:[#allocation3 + $0x574] sm:$0xf] %v5441
        %5506 = vst [vmem:[#allocation3 + $0x598] sm:$0xf] %v5442
        %5507 = vst [vmem:[#allocation3 + $0x5bc] sm:$0xf] %v5443
        %5508 = vst [vmem:[#allocation3 + $0x5e0] sm:$0xf] %v5444
        %5509 = vst [vmem:[#allocation3 + $0x604] sm:$0xf] %v5445
        %5510 = vst [vmem:[#allocation3 + $0x628] sm:$0xf] %v5446
        %5511 = vst [vmem:[#allocation3 + $0x64c] sm:$0xf] %v5447
        %5512 = vst [vmem:[#allocation3 + $0x670] sm:$0xf] %v5448
        %5513 = vst [vmem:[#allocation3 + $0x694] sm:$0xf] %v5449
        %5514 = vst [vmem:[#allocation3 + $0x6b8] sm:$0xf] %v5450
        %5515 = vst [vmem:[#allocation3 + $0x6dc] sm:$0xf] %v5451
        %5516 = vst [vmem:[#allocation3 + $0x700] sm:$0xf] %v5452
        %5517 = vst [vmem:[#allocation3 + $0x724] sm:$0xf] %v5453
        %5518 = vst [vmem:[#allocation3 + $0x748] sm:$0xf] %v5454
        %5519 = vst [vmem:[#allocation3 + $0x76c] sm:$0xf] %v5455
        %5520 = vst [vmem:[#allocation3 + $0x790] sm:$0xf] %v5456
        %5521 = vst [vmem:[#allocation3 + $0x7b4] sm:$0xf] %v5457
        %5522 = vst [vmem:[#allocation3 + $0x7d8] sm:$0xf] %v5458
        %5523 = vst [vmem:[#allocation3 + $0x7fc] sm:$0xf] %v5459
        %5524 = vst [vmem:[#allocation3 + $0x820] sm:$0xf] %v5460
        %5525 = vst [vmem:[#allocation3 + $0x844] sm:$0xf] %v5461
        %5526 = vst [vmem:[#allocation3 + $0x868] sm:$0xf] %v5462
        %5527 = vst [vmem:[#allocation3 + $0x88c] sm:$0xf] %v5463
        %5528 = vst [vmem:[#allocation3 + $0x8b0] sm:$0xf] %v5464
        %5529 = vst [vmem:[#allocation3 + $0x8d4] sm:$0xf] %v5465
        %5530 = vst [vmem:[#allocation3 + $0x8f8] sm:$0xf] %v5466
        %v5531 = vrot.slane %v4859, 2
        %v5532 = vrot.slane %v4860, 2
        %v5533 = vsel %vm3481, %v5531, %v5532
        %v5534 = vrot.slane %v4861, 2
        %v5535 = vsel %vm3481, %v5532, %v5534
        %v5536 = vrot.slane %v4862, 2
        %v5537 = vrot.slane %v4863, 2
        %v5538 = vsel %vm3481, %v5536, %v5537
        %v5539 = vrot.slane %v4864, 2
        %v5540 = vsel %vm3481, %v5537, %v5539
        %v5541 = vrot.slane %v4865, 2
        %v5542 = vrot.slane %v4866, 2
        %v5543 = vsel %vm3481, %v5541, %v5542
        %v5544 = vrot.slane %v4867, 2
        %v5545 = vsel %vm3481, %v5542, %v5544
        %v5546 = vrot.slane %v4868, 2
        %v5547 = vrot.slane %v4869, 2
        %v5548 = vsel %vm3481, %v5546, %v5547
        %v5549 = vrot.slane %v4870, 2
        %v5550 = vsel %vm3481, %v5547, %v5549
        %v5551 = vrot.slane %v4871, 2
        %v5552 = vrot.slane %v4872, 2
        %v5553 = vsel %vm3481, %v5551, %v5552
        %v5554 = vrot.slane %v4873, 2
        %v5555 = vsel %vm3481, %v5552, %v5554
        %v5556 = vrot.slane %v4874, 2
        %v5557 = vrot.slane %v4875, 2
        %v5558 = vsel %vm3481, %v5556, %v5557
        %v5559 = vrot.slane %v4876, 2
        %v5560 = vsel %vm3481, %v5557, %v5559
        %v5561 = vrot.slane %v4877, 2
        %v5562 = vrot.slane %v4878, 2
        %v5563 = vsel %vm3481, %v5561, %v5562
        %v5564 = vrot.slane %v4879, 2
        %v5565 = vsel %vm3481, %v5562, %v5564
        %v5566 = vrot.slane %v4880, 2
        %v5567 = vrot.slane %v4881, 2
        %v5568 = vsel %vm3481, %v5566, %v5567
        %v5569 = vrot.slane %v4882, 2
        %v5570 = vsel %vm3481, %v5567, %v5569
        %v5571 = vrot.slane %v4883, 2
        %v5572 = vrot.slane %v4884, 2
        %v5573 = vsel %vm3481, %v5571, %v5572
        %v5574 = vrot.slane %v4885, 2
        %v5575 = vsel %vm3481, %v5572, %v5574
        %v5576 = vrot.slane %v4886, 2
        %v5577 = vrot.slane %v4887, 2
        %v5578 = vsel %vm3481, %v5576, %v5577
        %v5579 = vrot.slane %v4888, 2
        %v5580 = vsel %vm3481, %v5577, %v5579
        %v5581 = vrot.slane %v4889, 2
        %v5582 = vrot.slane %v4890, 2
        %v5583 = vsel %vm3481, %v5581, %v5582
        %v5584 = vrot.slane %v4891, 2
        %v5585 = vsel %vm3481, %v5582, %v5584
        %v5586 = vrot.slane %v4892, 2
        %v5587 = vrot.slane %v4893, 2
        %v5588 = vsel %vm3481, %v5586, %v5587
        %v5589 = vrot.slane %v4894, 2
        %v5590 = vsel %vm3481, %v5587, %v5589
        %v5591 = vrot.slane %v4895, 2
        %v5592 = vrot.slane %v4896, 2
        %v5593 = vsel %vm3481, %v5591, %v5592
        %v5594 = vrot.slane %v4897, 2
        %v5595 = vsel %vm3481, %v5592, %v5594
        %v5596 = vrot.slane %v4898, 2
        %v5597 = vrot.slane %v4899, 2
        %v5598 = vsel %vm3481, %v5596, %v5597
        %v5599 = vrot.slane %v4900, 2
        %v5600 = vsel %vm3481, %v5597, %v5599
        %v5601 = vrot.slane %v4901, 2
        %v5602 = vrot.slane %v4902, 2
        %v5603 = vsel %vm3481, %v5601, %v5602
        %v5604 = vrot.slane %v4903, 2
        %v5605 = vsel %vm3481, %v5602, %v5604
        %v5606 = vrot.slane %v4904, 2
        %v5607 = vrot.slane %v4905, 2
        %v5608 = vsel %vm3481, %v5606, %v5607
        %v5609 = vrot.slane %v4906, 2
        %v5610 = vsel %vm3481, %v5607, %v5609
        %v5611 = vrot.slane %v4907, 2
        %v5612 = vrot.slane %v4908, 2
        %v5613 = vsel %vm3481, %v5611, %v5612
        %v5614 = vrot.slane %v4909, 2
        %v5615 = vsel %vm3481, %v5612, %v5614
        %v5616 = vrot.slane %v4910, 2
        %v5617 = vrot.slane %v4911, 2
        %v5618 = vsel %vm3481, %v5616, %v5617
        %v5619 = vrot.slane %v4912, 2
        %v5620 = vsel %vm3481, %v5617, %v5619
        %v5621 = vrot.slane %v4913, 2
        %v5622 = vrot.slane %v4914, 2
        %v5623 = vsel %vm3481, %v5621, %v5622
        %v5624 = vrot.slane %v4915, 2
        %v5625 = vsel %vm3481, %v5622, %v5624
        %v5626 = vrot.slane %v4916, 2
        %v5627 = vrot.slane %v4917, 2
        %v5628 = vsel %vm3481, %v5626, %v5627
        %v5629 = vrot.slane %v4918, 2
        %v5630 = vsel %vm3481, %v5627, %v5629
        %v5631 = vrot.slane %v4919, 2
        %v5632 = vrot.slane %v4920, 2
        %v5633 = vsel %vm3481, %v5631, %v5632
        %v5634 = vrot.slane %v4921, 2
        %v5635 = vsel %vm3481, %v5632, %v5634
        %v5636 = vrot.slane %v4922, 2
        %v5637 = vrot.slane %v4923, 2
        %v5638 = vsel %vm3481, %v5636, %v5637
        %v5639 = vrot.slane %v4924, 2
        %v5640 = vsel %vm3481, %v5637, %v5639
        %v5641 = vrot.slane %v4925, 2
        %v5642 = vrot.slane %v4926, 2
        %v5643 = vsel %vm3481, %v5641, %v5642
        %v5644 = vrot.slane %v4927, 2
        %v5645 = vsel %vm3481, %v5642, %v5644
        %v5646 = vrot.slane %v4928, 2
        %v5647 = vrot.slane %v4929, 2
        %v5648 = vsel %vm3481, %v5646, %v5647
        %v5649 = vrot.slane %v4930, 2
        %v5650 = vsel %vm3481, %v5647, %v5649
        %v5651 = vrot.slane %v4931, 2
        %v5652 = vrot.slane %v4932, 2
        %v5653 = vsel %vm3481, %v5651, %v5652
        %v5654 = vrot.slane %v4933, 2
        %v5655 = vsel %vm3481, %v5652, %v5654
        %v5656 = vrot.slane %v4934, 2
        %v5657 = vrot.slane %v4935, 2
        %v5658 = vsel %vm3481, %v5656, %v5657
        %v5659 = vrot.slane %v4936, 2
        %v5660 = vsel %vm3481, %v5657, %v5659
        %v5661 = vrot.slane %v4937, 2
        %v5662 = vrot.slane %v4938, 2
        %v5663 = vsel %vm3481, %v5661, %v5662
        %v5664 = vrot.slane %v4939, 2
        %v5665 = vsel %vm3481, %v5662, %v5664
        %v5666 = vrot.slane %v4940, 2
        %v5667 = vrot.slane %v4941, 2
        %v5668 = vsel %vm3481, %v5666, %v5667
        %v5669 = vrot.slane %v4942, 2
        %v5670 = vsel %vm3481, %v5667, %v5669
        %v5671 = vrot.slane %v4943, 2
        %v5672 = vrot.slane %v4944, 2
        %v5673 = vsel %vm3481, %v5671, %v5672
        %v5674 = vrot.slane %v4945, 2
        %v5675 = vsel %vm3481, %v5672, %v5674
        %v5676 = vrot.slane %v4946, 2
        %v5677 = vrot.slane %v4947, 2
        %v5678 = vsel %vm3481, %v5676, %v5677
        %v5679 = vrot.slane %v4948, 2
        %v5680 = vsel %vm3481, %v5677, %v5679
        %v5681 = vrot.slane %v4949, 2
        %v5682 = vrot.slane %v4950, 2
        %v5683 = vsel %vm3481, %v5681, %v5682
        %v5684 = vrot.slane %v4951, 2
        %v5685 = vsel %vm3481, %v5682, %v5684
        %v5686 = vrot.slane %v4952, 2
        %v5687 = vrot.slane %v4953, 2
        %v5688 = vsel %vm3481, %v5686, %v5687
        %v5689 = vrot.slane %v4954, 2
        %v5690 = vsel %vm3481, %v5687, %v5689
        %v5755 = vpack.c.bf16 %v5533, %v5533
        %v5756 = vpack.c.bf16 %v5535, %v5535
        %v5757 = vpack.c.bf16 %v5538, %v5538
        %v5758 = vpack.c.bf16 %v5540, %v5540
        %v5759 = vpack.c.bf16 %v5543, %v5543
        %v5760 = vpack.c.bf16 %v5545, %v5545
        %v5761 = vpack.c.bf16 %v5548, %v5548
        %v5762 = vpack.c.bf16 %v5550, %v5550
        %v5763 = vpack.c.bf16 %v5553, %v5553
        %v5764 = vpack.c.bf16 %v5555, %v5555
        %v5765 = vpack.c.bf16 %v5558, %v5558
        %v5766 = vpack.c.bf16 %v5560, %v5560
        %v5767 = vpack.c.bf16 %v5563, %v5563
        %v5768 = vpack.c.bf16 %v5565, %v5565
        %v5769 = vpack.c.bf16 %v5568, %v5568
        %v5770 = vpack.c.bf16 %v5570, %v5570
        %v5771 = vpack.c.bf16 %v5573, %v5573
        %v5772 = vpack.c.bf16 %v5575, %v5575
        %v5773 = vpack.c.bf16 %v5578, %v5578
        %v5774 = vpack.c.bf16 %v5580, %v5580
        %v5775 = vpack.c.bf16 %v5583, %v5583
        %v5776 = vpack.c.bf16 %v5585, %v5585
        %v5777 = vpack.c.bf16 %v5588, %v5588
        %v5778 = vpack.c.bf16 %v5590, %v5590
        %v5779 = vpack.c.bf16 %v5593, %v5593
        %v5780 = vpack.c.bf16 %v5595, %v5595
        %v5781 = vpack.c.bf16 %v5598, %v5598
        %v5782 = vpack.c.bf16 %v5600, %v5600
        %v5783 = vpack.c.bf16 %v5603, %v5603
        %v5784 = vpack.c.bf16 %v5605, %v5605
        %v5785 = vpack.c.bf16 %v5608, %v5608
        %v5786 = vpack.c.bf16 %v5610, %v5610
        %v5787 = vpack.c.bf16 %v5613, %v5613
        %v5788 = vpack.c.bf16 %v5615, %v5615
        %v5789 = vpack.c.bf16 %v5618, %v5618
        %v5790 = vpack.c.bf16 %v5620, %v5620
        %v5791 = vpack.c.bf16 %v5623, %v5623
        %v5792 = vpack.c.bf16 %v5625, %v5625
        %v5793 = vpack.c.bf16 %v5628, %v5628
        %v5794 = vpack.c.bf16 %v5630, %v5630
        %v5795 = vpack.c.bf16 %v5633, %v5633
        %v5796 = vpack.c.bf16 %v5635, %v5635
        %v5797 = vpack.c.bf16 %v5638, %v5638
        %v5798 = vpack.c.bf16 %v5640, %v5640
        %v5799 = vpack.c.bf16 %v5643, %v5643
        %v5800 = vpack.c.bf16 %v5645, %v5645
        %v5801 = vpack.c.bf16 %v5648, %v5648
        %v5802 = vpack.c.bf16 %v5650, %v5650
        %v5803 = vpack.c.bf16 %v5653, %v5653
        %v5804 = vpack.c.bf16 %v5655, %v5655
        %v5805 = vpack.c.bf16 %v5658, %v5658
        %v5806 = vpack.c.bf16 %v5660, %v5660
        %v5807 = vpack.c.bf16 %v5663, %v5663
        %v5808 = vpack.c.bf16 %v5665, %v5665
        %v5809 = vpack.c.bf16 %v5668, %v5668
        %v5810 = vpack.c.bf16 %v5670, %v5670
        %v5811 = vpack.c.bf16 %v5673, %v5673
        %v5812 = vpack.c.bf16 %v5675, %v5675
        %v5813 = vpack.c.bf16 %v5678, %v5678
        %v5814 = vpack.c.bf16 %v5680, %v5680
        %v5815 = vpack.c.bf16 %v5683, %v5683
        %v5816 = vpack.c.bf16 %v5685, %v5685
        %v5817 = vpack.c.bf16 %v5688, %v5688
        %v5818 = vpack.c.bf16 %v5690, %v5690
        %5819 = vst [vmem:[#allocation3 + $0x20] sm:$0xf] %v5755
        %5820 = vst [vmem:[#allocation3 + $0x44] sm:$0xf] %v5756
        %5821 = vst [vmem:[#allocation3 + $0x68] sm:$0xf] %v5757
        %5822 = vst [vmem:[#allocation3 + $0x8c] sm:$0xf] %v5758
        %5823 = vst [vmem:[#allocation3 + $0xb0] sm:$0xf] %v5759
        %5824 = vst [vmem:[#allocation3 + $0xd4] sm:$0xf] %v5760
        %5825 = vst [vmem:[#allocation3 + $0xf8] sm:$0xf] %v5761
        %5826 = vst [vmem:[#allocation3 + $0x11c] sm:$0xf] %v5762
        %5827 = vst [vmem:[#allocation3 + $0x140] sm:$0xf] %v5763
        %5828 = vst [vmem:[#allocation3 + $0x164] sm:$0xf] %v5764
        %5829 = vst [vmem:[#allocation3 + $0x188] sm:$0xf] %v5765
        %5830 = vst [vmem:[#allocation3 + $0x1ac] sm:$0xf] %v5766
        %5831 = vst [vmem:[#allocation3 + $0x1d0] sm:$0xf] %v5767
        %5832 = vst [vmem:[#allocation3 + $0x1f4] sm:$0xf] %v5768
        %5833 = vst [vmem:[#allocation3 + $0x218] sm:$0xf] %v5769
        %5834 = vst [vmem:[#allocation3 + $0x23c] sm:$0xf] %v5770
        %5835 = vst [vmem:[#allocation3 + $0x260] sm:$0xf] %v5771
        %5836 = vst [vmem:[#allocation3 + $0x284] sm:$0xf] %v5772
        %5837 = vst [vmem:[#allocation3 + $0x2a8] sm:$0xf] %v5773
        %5838 = vst [vmem:[#allocation3 + $0x2cc] sm:$0xf] %v5774
        %5839 = vst [vmem:[#allocation3 + $0x2f0] sm:$0xf] %v5775
        %5840 = vst [vmem:[#allocation3 + $0x314] sm:$0xf] %v5776
        %5841 = vst [vmem:[#allocation3 + $0x338] sm:$0xf] %v5777
        %5842 = vst [vmem:[#allocation3 + $0x35c] sm:$0xf] %v5778
        %5843 = vst [vmem:[#allocation3 + $0x380] sm:$0xf] %v5779
        %5844 = vst [vmem:[#allocation3 + $0x3a4] sm:$0xf] %v5780
        %5845 = vst [vmem:[#allocation3 + $0x3c8] sm:$0xf] %v5781
        %5846 = vst [vmem:[#allocation3 + $0x3ec] sm:$0xf] %v5782
        %5847 = vst [vmem:[#allocation3 + $0x410] sm:$0xf] %v5783
        %5848 = vst [vmem:[#allocation3 + $0x434] sm:$0xf] %v5784
        %5849 = vst [vmem:[#allocation3 + $0x458] sm:$0xf] %v5785
        %5850 = vst [vmem:[#allocation3 + $0x47c] sm:$0xf] %v5786
        %5851 = vst [vmem:[#allocation3 + $0x4a0] sm:$0xf] %v5787
        %5852 = vst [vmem:[#allocation3 + $0x4c4] sm:$0xf] %v5788
        %5853 = vst [vmem:[#allocation3 + $0x4e8] sm:$0xf] %v5789
        %5854 = vst [vmem:[#allocation3 + $0x50c] sm:$0xf] %v5790
        %5855 = vst [vmem:[#allocation3 + $0x530] sm:$0xf] %v5791
        %5856 = vst [vmem:[#allocation3 + $0x554] sm:$0xf] %v5792
        %5857 = vst [vmem:[#allocation3 + $0x578] sm:$0xf] %v5793
        %5858 = vst [vmem:[#allocation3 + $0x59c] sm:$0xf] %v5794
        %5859 = vst [vmem:[#allocation3 + $0x5c0] sm:$0xf] %v5795
        %5860 = vst [vmem:[#allocation3 + $0x5e4] sm:$0xf] %v5796
        %5861 = vst [vmem:[#allocation3 + $0x608] sm:$0xf] %v5797
        %5862 = vst [vmem:[#allocation3 + $0x62c] sm:$0xf] %v5798
        %5863 = vst [vmem:[#allocation3 + $0x650] sm:$0xf] %v5799
        %5864 = vst [vmem:[#allocation3 + $0x674] sm:$0xf] %v5800
        %5865 = vst [vmem:[#allocation3 + $0x698] sm:$0xf] %v5801
        %5866 = vst [vmem:[#allocation3 + $0x6bc] sm:$0xf] %v5802
        %5867 = vst [vmem:[#allocation3 + $0x6e0] sm:$0xf] %v5803
        %5868 = vst [vmem:[#allocation3 + $0x704] sm:$0xf] %v5804
        %5869 = vst [vmem:[#allocation3 + $0x728] sm:$0xf] %v5805
        %5870 = vst [vmem:[#allocation3 + $0x74c] sm:$0xf] %v5806
        %5871 = vst [vmem:[#allocation3 + $0x770] sm:$0xf] %v5807
        %5872 = vst [vmem:[#allocation3 + $0x794] sm:$0xf] %v5808
        %5873 = vst [vmem:[#allocation3 + $0x7b8] sm:$0xf] %v5809
        %5874 = vst [vmem:[#allocation3 + $0x7dc] sm:$0xf] %v5810
        %5875 = vst [vmem:[#allocation3 + $0x800] sm:$0xf] %v5811
        %5876 = vst [vmem:[#allocation3 + $0x824] sm:$0xf] %v5812
        %5877 = vst [vmem:[#allocation3 + $0x848] sm:$0xf] %v5813
        %5878 = vst [vmem:[#allocation3 + $0x86c] sm:$0xf] %v5814
        %5879 = vst [vmem:[#allocation3 + $0x890] sm:$0xf] %v5815
        %5880 = vst [vmem:[#allocation3 + $0x8b4] sm:$0xf] %v5816
        %5881 = vst [vmem:[#allocation3 + $0x8d8] sm:$0xf] %v5817
        %5882 = vst [vmem:[#allocation3 + $0x8fc] sm:$0xf] %v5818
        %v5883 = vld [vmem:[#allocation3] sm:$0xff]
        %v5884 = vld [vmem:[#allocation3 + $0x8] sm:$0xff]
        %v5885 = vld [vmem:[#allocation3 + $0x10] sm:$0xff]
        %v5886 = vld [vmem:[#allocation3 + $0x18] sm:$0xff]
        %v5887 = vld [vmem:[#allocation3 + $0x20] sm:$0xf]
        %v5888 = vld [vmem:[#allocation3 + $0x24] sm:$0xff]
        %v5889 = vld [vmem:[#allocation3 + $0x2c] sm:$0xff]
        %v5890 = vld [vmem:[#allocation3 + $0x34] sm:$0xff]
        %v5891 = vld [vmem:[#allocation3 + $0x3c] sm:$0xff]
        %v5892 = vld [vmem:[#allocation3 + $0x44] sm:$0xf]
        %v5893 = vld [vmem:[#allocation3 + $0x48] sm:$0xff]
        %v5894 = vld [vmem:[#allocation3 + $0x50] sm:$0xff]
        %v5895 = vld [vmem:[#allocation3 + $0x58] sm:$0xff]
        %v5896 = vld [vmem:[#allocation3 + $0x60] sm:$0xff]
        %v5897 = vld [vmem:[#allocation3 + $0x68] sm:$0xf]
        %v5898 = vld [vmem:[#allocation3 + $0x6c] sm:$0xff]
        %v5899 = vld [vmem:[#allocation3 + $0x74] sm:$0xff]
        %v5900 = vld [vmem:[#allocation3 + $0x7c] sm:$0xff]
        %v5901 = vld [vmem:[#allocation3 + $0x84] sm:$0xff]
        %v5902 = vld [vmem:[#allocation3 + $0x8c] sm:$0xf]
        %v5903 = vld [vmem:[#allocation3 + $0x90] sm:$0xff]
        %v5904 = vld [vmem:[#allocation3 + $0x98] sm:$0xff]
        %v5905 = vld [vmem:[#allocation3 + $0xa0] sm:$0xff]
        %v5906 = vld [vmem:[#allocation3 + $0xa8] sm:$0xff]
        %v5907 = vld [vmem:[#allocation3 + $0xb0] sm:$0xf]
        %v5908 = vld [vmem:[#allocation3 + $0xb4] sm:$0xff]
        %v5909 = vld [vmem:[#allocation3 + $0xbc] sm:$0xff]
        %v5910 = vld [vmem:[#allocation3 + $0xc4] sm:$0xff]
        %v5911 = vld [vmem:[#allocation3 + $0xcc] sm:$0xff]
        %v5912 = vld [vmem:[#allocation3 + $0xd4] sm:$0xf]
        %v5913 = vld [vmem:[#allocation3 + $0xd8] sm:$0xff]
        %v5914 = vld [vmem:[#allocation3 + $0xe0] sm:$0xff]
        %v5915 = vld [vmem:[#allocation3 + $0xe8] sm:$0xff]
        %v5916 = vld [vmem:[#allocation3 + $0xf0] sm:$0xff]
        %v5917 = vld [vmem:[#allocation3 + $0xf8] sm:$0xf]
        %v5918 = vld [vmem:[#allocation3 + $0xfc] sm:$0xff]
        %v5919 = vld [vmem:[#allocation3 + $0x104] sm:$0xff]
        %v5920 = vld [vmem:[#allocation3 + $0x10c] sm:$0xff]
        %v5921 = vld [vmem:[#allocation3 + $0x114] sm:$0xff]
        %v5922 = vld [vmem:[#allocation3 + $0x11c] sm:$0xf]
        %v5923 = vld [vmem:[#allocation3 + $0x120] sm:$0xff]
        %v5924 = vld [vmem:[#allocation3 + $0x128] sm:$0xff]
        %v5925 = vld [vmem:[#allocation3 + $0x130] sm:$0xff]
        %v5926 = vld [vmem:[#allocation3 + $0x138] sm:$0xff]
        %v5927 = vld [vmem:[#allocation3 + $0x140] sm:$0xf]
        %v5928 = vld [vmem:[#allocation3 + $0x144] sm:$0xff]
        %v5929 = vld [vmem:[#allocation3 + $0x14c] sm:$0xff]
        %v5930 = vld [vmem:[#allocation3 + $0x154] sm:$0xff]
        %v5931 = vld [vmem:[#allocation3 + $0x15c] sm:$0xff]
        %v5932 = vld [vmem:[#allocation3 + $0x164] sm:$0xf]
        %v5933 = vld [vmem:[#allocation3 + $0x168] sm:$0xff]
        %v5934 = vld [vmem:[#allocation3 + $0x170] sm:$0xff]
        %v5935 = vld [vmem:[#allocation3 + $0x178] sm:$0xff]
        %v5936 = vld [vmem:[#allocation3 + $0x180] sm:$0xff]
        %v5937 = vld [vmem:[#allocation3 + $0x188] sm:$0xf]
        %v5938 = vld [vmem:[#allocation3 + $0x18c] sm:$0xff]
        %v5939 = vld [vmem:[#allocation3 + $0x194] sm:$0xff]
        %v5940 = vld [vmem:[#allocation3 + $0x19c] sm:$0xff]
        %v5941 = vld [vmem:[#allocation3 + $0x1a4] sm:$0xff]
        %v5942 = vld [vmem:[#allocation3 + $0x1ac] sm:$0xf]
        %v5943 = vld [vmem:[#allocation3 + $0x1b0] sm:$0xff]
        %v5944 = vld [vmem:[#allocation3 + $0x1b8] sm:$0xff]
        %v5945 = vld [vmem:[#allocation3 + $0x1c0] sm:$0xff]
        %v5946 = vld [vmem:[#allocation3 + $0x1c8] sm:$0xff]
        %v5947 = vld [vmem:[#allocation3 + $0x1d0] sm:$0xf]
        %v5948 = vld [vmem:[#allocation3 + $0x1d4] sm:$0xff]
        %v5949 = vld [vmem:[#allocation3 + $0x1dc] sm:$0xff]
        %v5950 = vld [vmem:[#allocation3 + $0x1e4] sm:$0xff]
        %v5951 = vld [vmem:[#allocation3 + $0x1ec] sm:$0xff]
        %v5952 = vld [vmem:[#allocation3 + $0x1f4] sm:$0xf]
        %v5953 = vld [vmem:[#allocation3 + $0x1f8] sm:$0xff]
        %v5954 = vld [vmem:[#allocation3 + $0x200] sm:$0xff]
        %v5955 = vld [vmem:[#allocation3 + $0x208] sm:$0xff]
        %v5956 = vld [vmem:[#allocation3 + $0x210] sm:$0xff]
        %v5957 = vld [vmem:[#allocation3 + $0x218] sm:$0xf]
        %v5958 = vld [vmem:[#allocation3 + $0x21c] sm:$0xff]
        %v5959 = vld [vmem:[#allocation3 + $0x224] sm:$0xff]
        %v5960 = vld [vmem:[#allocation3 + $0x22c] sm:$0xff]
        %v5961 = vld [vmem:[#allocation3 + $0x234] sm:$0xff]
        %v5962 = vld [vmem:[#allocation3 + $0x23c] sm:$0xf]
        %v5963 = vld [vmem:[#allocation3 + $0x240] sm:$0xff]
        %v5964 = vld [vmem:[#allocation3 + $0x248] sm:$0xff]
        %v5965 = vld [vmem:[#allocation3 + $0x250] sm:$0xff]
        %v5966 = vld [vmem:[#allocation3 + $0x258] sm:$0xff]
        %v5967 = vld [vmem:[#allocation3 + $0x260] sm:$0xf]
        %v5968 = vld [vmem:[#allocation3 + $0x264] sm:$0xff]
        %v5969 = vld [vmem:[#allocation3 + $0x26c] sm:$0xff]
        %v5970 = vld [vmem:[#allocation3 + $0x274] sm:$0xff]
        %v5971 = vld [vmem:[#allocation3 + $0x27c] sm:$0xff]
        %v5972 = vld [vmem:[#allocation3 + $0x284] sm:$0xf]
        %v5973 = vld [vmem:[#allocation3 + $0x288] sm:$0xff]
        %v5974 = vld [vmem:[#allocation3 + $0x290] sm:$0xff]
        %v5975 = vld [vmem:[#allocation3 + $0x298] sm:$0xff]
        %v5976 = vld [vmem:[#allocation3 + $0x2a0] sm:$0xff]
        %v5977 = vld [vmem:[#allocation3 + $0x2a8] sm:$0xf]
        %v5978 = vld [vmem:[#allocation3 + $0x2ac] sm:$0xff]
        %v5979 = vld [vmem:[#allocation3 + $0x2b4] sm:$0xff]
        %v5980 = vld [vmem:[#allocation3 + $0x2bc] sm:$0xff]
        %v5981 = vld [vmem:[#allocation3 + $0x2c4] sm:$0xff]
        %v5982 = vld [vmem:[#allocation3 + $0x2cc] sm:$0xf]
        %v5983 = vld [vmem:[#allocation3 + $0x2d0] sm:$0xff]
        %v5984 = vld [vmem:[#allocation3 + $0x2d8] sm:$0xff]
        %v5985 = vld [vmem:[#allocation3 + $0x2e0] sm:$0xff]
        %v5986 = vld [vmem:[#allocation3 + $0x2e8] sm:$0xff]
        %v5987 = vld [vmem:[#allocation3 + $0x2f0] sm:$0xf]
        %v5988 = vld [vmem:[#allocation3 + $0x2f4] sm:$0xff]
        %v5989 = vld [vmem:[#allocation3 + $0x2fc] sm:$0xff]
        %v5990 = vld [vmem:[#allocation3 + $0x304] sm:$0xff]
        %v5991 = vld [vmem:[#allocation3 + $0x30c] sm:$0xff]
        %v5992 = vld [vmem:[#allocation3 + $0x314] sm:$0xf]
        %v5993 = vld [vmem:[#allocation3 + $0x318] sm:$0xff]
        %v5994 = vld [vmem:[#allocation3 + $0x320] sm:$0xff]
        %v5995 = vld [vmem:[#allocation3 + $0x328] sm:$0xff]
        %v5996 = vld [vmem:[#allocation3 + $0x330] sm:$0xff]
        %v5997 = vld [vmem:[#allocation3 + $0x338] sm:$0xf]
        %v5998 = vld [vmem:[#allocation3 + $0x33c] sm:$0xff]
        %v5999 = vld [vmem:[#allocation3 + $0x344] sm:$0xff]
        %v6000 = vld [vmem:[#allocation3 + $0x34c] sm:$0xff]
        %v6001 = vld [vmem:[#allocation3 + $0x354] sm:$0xff]
        %v6002 = vld [vmem:[#allocation3 + $0x35c] sm:$0xf]
        %v6003 = vld [vmem:[#allocation3 + $0x360] sm:$0xff]
        %v6004 = vld [vmem:[#allocation3 + $0x368] sm:$0xff]
        %v6005 = vld [vmem:[#allocation3 + $0x370] sm:$0xff]
        %v6006 = vld [vmem:[#allocation3 + $0x378] sm:$0xff]
        %v6007 = vld [vmem:[#allocation3 + $0x380] sm:$0xf]
        %v6008 = vld [vmem:[#allocation3 + $0x384] sm:$0xff]
        %v6009 = vld [vmem:[#allocation3 + $0x38c] sm:$0xff]
        %v6010 = vld [vmem:[#allocation3 + $0x394] sm:$0xff]
        %v6011 = vld [vmem:[#allocation3 + $0x39c] sm:$0xff]
        %v6012 = vld [vmem:[#allocation3 + $0x3a4] sm:$0xf]
        %v6013 = vld [vmem:[#allocation3 + $0x3a8] sm:$0xff]
        %v6014 = vld [vmem:[#allocation3 + $0x3b0] sm:$0xff]
        %v6015 = vld [vmem:[#allocation3 + $0x3b8] sm:$0xff]
        %v6016 = vld [vmem:[#allocation3 + $0x3c0] sm:$0xff]
        %v6017 = vld [vmem:[#allocation3 + $0x3c8] sm:$0xf]
        %v6018 = vld [vmem:[#allocation3 + $0x3cc] sm:$0xff]
        %v6019 = vld [vmem:[#allocation3 + $0x3d4] sm:$0xff]
        %v6020 = vld [vmem:[#allocation3 + $0x3dc] sm:$0xff]
        %v6021 = vld [vmem:[#allocation3 + $0x3e4] sm:$0xff]
        %v6022 = vld [vmem:[#allocation3 + $0x3ec] sm:$0xf]
        %v6023 = vld [vmem:[#allocation3 + $0x3f0] sm:$0xff]
        %v6024 = vld [vmem:[#allocation3 + $0x3f8] sm:$0xff]
        %v6025 = vld [vmem:[#allocation3 + $0x400] sm:$0xff]
        %v6026 = vld [vmem:[#allocation3 + $0x408] sm:$0xff]
        %v6027 = vld [vmem:[#allocation3 + $0x410] sm:$0xf]
        %v6028 = vld [vmem:[#allocation3 + $0x414] sm:$0xff]
        %v6029 = vld [vmem:[#allocation3 + $0x41c] sm:$0xff]
        %v6030 = vld [vmem:[#allocation3 + $0x424] sm:$0xff]
        %v6031 = vld [vmem:[#allocation3 + $0x42c] sm:$0xff]
        %v6032 = vld [vmem:[#allocation3 + $0x434] sm:$0xf]
        %v6033 = vld [vmem:[#allocation3 + $0x438] sm:$0xff]
        %v6034 = vld [vmem:[#allocation3 + $0x440] sm:$0xff]
        %v6035 = vld [vmem:[#allocation3 + $0x448] sm:$0xff]
        %v6036 = vld [vmem:[#allocation3 + $0x450] sm:$0xff]
        %v6037 = vld [vmem:[#allocation3 + $0x458] sm:$0xf]
        %v6038 = vld [vmem:[#allocation3 + $0x45c] sm:$0xff]
        %v6039 = vld [vmem:[#allocation3 + $0x464] sm:$0xff]
        %v6040 = vld [vmem:[#allocation3 + $0x46c] sm:$0xff]
        %v6041 = vld [vmem:[#allocation3 + $0x474] sm:$0xff]
        %v6042 = vld [vmem:[#allocation3 + $0x47c] sm:$0xf]
        %v6043 = vld [vmem:[#allocation3 + $0x480] sm:$0xff]
        %v6044 = vld [vmem:[#allocation3 + $0x488] sm:$0xff]
        %v6045 = vld [vmem:[#allocation3 + $0x490] sm:$0xff]
        %v6046 = vld [vmem:[#allocation3 + $0x498] sm:$0xff]
        %v6047 = vld [vmem:[#allocation3 + $0x4a0] sm:$0xf]
        %v6048 = vld [vmem:[#allocation3 + $0x4a4] sm:$0xff]
        %v6049 = vld [vmem:[#allocation3 + $0x4ac] sm:$0xff]
        %v6050 = vld [vmem:[#allocation3 + $0x4b4] sm:$0xff]
        %v6051 = vld [vmem:[#allocation3 + $0x4bc] sm:$0xff]
        %v6052 = vld [vmem:[#allocation3 + $0x4c4] sm:$0xf]
        %v6053 = vld [vmem:[#allocation3 + $0x4c8] sm:$0xff]
        %v6054 = vld [vmem:[#allocation3 + $0x4d0] sm:$0xff]
        %v6055 = vld [vmem:[#allocation3 + $0x4d8] sm:$0xff]
        %v6056 = vld [vmem:[#allocation3 + $0x4e0] sm:$0xff]
        %v6057 = vld [vmem:[#allocation3 + $0x4e8] sm:$0xf]
        %v6058 = vld [vmem:[#allocation3 + $0x4ec] sm:$0xff]
        %v6059 = vld [vmem:[#allocation3 + $0x4f4] sm:$0xff]
        %v6060 = vld [vmem:[#allocation3 + $0x4fc] sm:$0xff]
        %v6061 = vld [vmem:[#allocation3 + $0x504] sm:$0xff]
        %v6062 = vld [vmem:[#allocation3 + $0x50c] sm:$0xf]
        %v6063 = vld [vmem:[#allocation3 + $0x510] sm:$0xff]
        %v6064 = vld [vmem:[#allocation3 + $0x518] sm:$0xff]
        %v6065 = vld [vmem:[#allocation3 + $0x520] sm:$0xff]
        %v6066 = vld [vmem:[#allocation3 + $0x528] sm:$0xff]
        %v6067 = vld [vmem:[#allocation3 + $0x530] sm:$0xf]
        %v6068 = vld [vmem:[#allocation3 + $0x534] sm:$0xff]
        %v6069 = vld [vmem:[#allocation3 + $0x53c] sm:$0xff]
        %v6070 = vld [vmem:[#allocation3 + $0x544] sm:$0xff]
        %v6071 = vld [vmem:[#allocation3 + $0x54c] sm:$0xff]
        %v6072 = vld [vmem:[#allocation3 + $0x554] sm:$0xf]
        %v6073 = vld [vmem:[#allocation3 + $0x558] sm:$0xff]
        %v6074 = vld [vmem:[#allocation3 + $0x560] sm:$0xff]
        %v6075 = vld [vmem:[#allocation3 + $0x568] sm:$0xff]
        %v6076 = vld [vmem:[#allocation3 + $0x570] sm:$0xff]
        %v6077 = vld [vmem:[#allocation3 + $0x578] sm:$0xf]
        %v6078 = vld [vmem:[#allocation3 + $0x57c] sm:$0xff]
        %v6079 = vld [vmem:[#allocation3 + $0x584] sm:$0xff]
        %v6080 = vld [vmem:[#allocation3 + $0x58c] sm:$0xff]
        %v6081 = vld [vmem:[#allocation3 + $0x594] sm:$0xff]
        %v6082 = vld [vmem:[#allocation3 + $0x59c] sm:$0xf]
        %v6083 = vld [vmem:[#allocation3 + $0x5a0] sm:$0xff]
        %v6084 = vld [vmem:[#allocation3 + $0x5a8] sm:$0xff]
        %v6085 = vld [vmem:[#allocation3 + $0x5b0] sm:$0xff]
        %v6086 = vld [vmem:[#allocation3 + $0x5b8] sm:$0xff]
        %v6087 = vld [vmem:[#allocation3 + $0x5c0] sm:$0xf]
        %v6088 = vld [vmem:[#allocation3 + $0x5c4] sm:$0xff]
        %v6089 = vld [vmem:[#allocation3 + $0x5cc] sm:$0xff]
        %v6090 = vld [vmem:[#allocation3 + $0x5d4] sm:$0xff]
        %v6091 = vld [vmem:[#allocation3 + $0x5dc] sm:$0xff]
        %v6092 = vld [vmem:[#allocation3 + $0x5e4] sm:$0xf]
        %v6093 = vld [vmem:[#allocation3 + $0x5e8] sm:$0xff]
        %v6094 = vld [vmem:[#allocation3 + $0x5f0] sm:$0xff]
        %v6095 = vld [vmem:[#allocation3 + $0x5f8] sm:$0xff]
        %v6096 = vld [vmem:[#allocation3 + $0x600] sm:$0xff]
        %v6097 = vld [vmem:[#allocation3 + $0x608] sm:$0xf]
        %v6098 = vld [vmem:[#allocation3 + $0x60c] sm:$0xff]
        %v6099 = vld [vmem:[#allocation3 + $0x614] sm:$0xff]
        %v6100 = vld [vmem:[#allocation3 + $0x61c] sm:$0xff]
        %v6101 = vld [vmem:[#allocation3 + $0x624] sm:$0xff]
        %v6102 = vld [vmem:[#allocation3 + $0x62c] sm:$0xf]
        %v6103 = vld [vmem:[#allocation3 + $0x630] sm:$0xff]
        %v6104 = vld [vmem:[#allocation3 + $0x638] sm:$0xff]
        %v6105 = vld [vmem:[#allocation3 + $0x640] sm:$0xff]
        %v6106 = vld [vmem:[#allocation3 + $0x648] sm:$0xff]
        %v6107 = vld [vmem:[#allocation3 + $0x650] sm:$0xf]
        %v6108 = vld [vmem:[#allocation3 + $0x654] sm:$0xff]
        %v6109 = vld [vmem:[#allocation3 + $0x65c] sm:$0xff]
        %v6110 = vld [vmem:[#allocation3 + $0x664] sm:$0xff]
        %v6111 = vld [vmem:[#allocation3 + $0x66c] sm:$0xff]
        %v6112 = vld [vmem:[#allocation3 + $0x674] sm:$0xf]
        %v6113 = vld [vmem:[#allocation3 + $0x678] sm:$0xff]
        %v6114 = vld [vmem:[#allocation3 + $0x680] sm:$0xff]
        %v6115 = vld [vmem:[#allocation3 + $0x688] sm:$0xff]
        %v6116 = vld [vmem:[#allocation3 + $0x690] sm:$0xff]
        %v6117 = vld [vmem:[#allocation3 + $0x698] sm:$0xf]
        %v6118 = vld [vmem:[#allocation3 + $0x69c] sm:$0xff]
        %v6119 = vld [vmem:[#allocation3 + $0x6a4] sm:$0xff]
        %v6120 = vld [vmem:[#allocation3 + $0x6ac] sm:$0xff]
        %v6121 = vld [vmem:[#allocation3 + $0x6b4] sm:$0xff]
        %v6122 = vld [vmem:[#allocation3 + $0x6bc] sm:$0xf]
        %v6123 = vld [vmem:[#allocation3 + $0x6c0] sm:$0xff]
        %v6124 = vld [vmem:[#allocation3 + $0x6c8] sm:$0xff]
        %v6125 = vld [vmem:[#allocation3 + $0x6d0] sm:$0xff]
        %v6126 = vld [vmem:[#allocation3 + $0x6d8] sm:$0xff]
        %v6127 = vld [vmem:[#allocation3 + $0x6e0] sm:$0xf]
        %v6128 = vld [vmem:[#allocation3 + $0x6e4] sm:$0xff]
        %v6129 = vld [vmem:[#allocation3 + $0x6ec] sm:$0xff]
        %v6130 = vld [vmem:[#allocation3 + $0x6f4] sm:$0xff]
        %v6131 = vld [vmem:[#allocation3 + $0x6fc] sm:$0xff]
        %v6132 = vld [vmem:[#allocation3 + $0x704] sm:$0xf]
        %v6133 = vld [vmem:[#allocation3 + $0x708] sm:$0xff]
        %v6134 = vld [vmem:[#allocation3 + $0x710] sm:$0xff]
        %v6135 = vld [vmem:[#allocation3 + $0x718] sm:$0xff]
        %v6136 = vld [vmem:[#allocation3 + $0x720] sm:$0xff]
        %v6137 = vld [vmem:[#allocation3 + $0x728] sm:$0xf]
        %v6138 = vld [vmem:[#allocation3 + $0x72c] sm:$0xff]
        %v6139 = vld [vmem:[#allocation3 + $0x734] sm:$0xff]
        %v6140 = vld [vmem:[#allocation3 + $0x73c] sm:$0xff]
        %v6141 = vld [vmem:[#allocation3 + $0x744] sm:$0xff]
        %v6142 = vld [vmem:[#allocation3 + $0x74c] sm:$0xf]
        %v6143 = vld [vmem:[#allocation3 + $0x750] sm:$0xff]
        %v6144 = vld [vmem:[#allocation3 + $0x758] sm:$0xff]
        %v6145 = vld [vmem:[#allocation3 + $0x760] sm:$0xff]
        %v6146 = vld [vmem:[#allocation3 + $0x768] sm:$0xff]
        %v6147 = vld [vmem:[#allocation3 + $0x770] sm:$0xf]
        %v6148 = vld [vmem:[#allocation3 + $0x774] sm:$0xff]
        %v6149 = vld [vmem:[#allocation3 + $0x77c] sm:$0xff]
        %v6150 = vld [vmem:[#allocation3 + $0x784] sm:$0xff]
        %v6151 = vld [vmem:[#allocation3 + $0x78c] sm:$0xff]
        %v6152 = vld [vmem:[#allocation3 + $0x794] sm:$0xf]
        %v6153 = vld [vmem:[#allocation3 + $0x798] sm:$0xff]
        %v6154 = vld [vmem:[#allocation3 + $0x7a0] sm:$0xff]
        %v6155 = vld [vmem:[#allocation3 + $0x7a8] sm:$0xff]
        %v6156 = vld [vmem:[#allocation3 + $0x7b0] sm:$0xff]
        %v6157 = vld [vmem:[#allocation3 + $0x7b8] sm:$0xf]
        %v6158 = vld [vmem:[#allocation3 + $0x7bc] sm:$0xff]
        %v6159 = vld [vmem:[#allocation3 + $0x7c4] sm:$0xff]
        %v6160 = vld [vmem:[#allocation3 + $0x7cc] sm:$0xff]
        %v6161 = vld [vmem:[#allocation3 + $0x7d4] sm:$0xff]
        %v6162 = vld [vmem:[#allocation3 + $0x7dc] sm:$0xf]
        %v6163 = vld [vmem:[#allocation3 + $0x7e0] sm:$0xff]
        %v6164 = vld [vmem:[#allocation3 + $0x7e8] sm:$0xff]
        %v6165 = vld [vmem:[#allocation3 + $0x7f0] sm:$0xff]
        %v6166 = vld [vmem:[#allocation3 + $0x7f8] sm:$0xff]
        %v6167 = vld [vmem:[#allocation3 + $0x800] sm:$0xf]
        %v6168 = vld [vmem:[#allocation3 + $0x804] sm:$0xff]
        %v6169 = vld [vmem:[#allocation3 + $0x80c] sm:$0xff]
        %v6170 = vld [vmem:[#allocation3 + $0x814] sm:$0xff]
        %v6171 = vld [vmem:[#allocation3 + $0x81c] sm:$0xff]
        %v6172 = vld [vmem:[#allocation3 + $0x824] sm:$0xf]
        %v6173 = vld [vmem:[#allocation3 + $0x828] sm:$0xff]
        %v6174 = vld [vmem:[#allocation3 + $0x830] sm:$0xff]
        %v6175 = vld [vmem:[#allocation3 + $0x838] sm:$0xff]
        %v6176 = vld [vmem:[#allocation3 + $0x840] sm:$0xff]
        %v6177 = vld [vmem:[#allocation3 + $0x848] sm:$0xf]
        %v6178 = vld [vmem:[#allocation3 + $0x84c] sm:$0xff]
        %v6179 = vld [vmem:[#allocation3 + $0x854] sm:$0xff]
        %v6180 = vld [vmem:[#allocation3 + $0x85c] sm:$0xff]
        %v6181 = vld [vmem:[#allocation3 + $0x864] sm:$0xff]
        %v6182 = vld [vmem:[#allocation3 + $0x86c] sm:$0xf]
        %v6183 = vld [vmem:[#allocation3 + $0x870] sm:$0xff]
        %v6184 = vld [vmem:[#allocation3 + $0x878] sm:$0xff]
        %v6185 = vld [vmem:[#allocation3 + $0x880] sm:$0xff]
        %v6186 = vld [vmem:[#allocation3 + $0x888] sm:$0xff]
        %v6187 = vld [vmem:[#allocation3 + $0x890] sm:$0xf]
        %v6188 = vld [vmem:[#allocation3 + $0x894] sm:$0xff]
        %v6189 = vld [vmem:[#allocation3 + $0x89c] sm:$0xff]
        %v6190 = vld [vmem:[#allocation3 + $0x8a4] sm:$0xff]
        %v6191 = vld [vmem:[#allocation3 + $0x8ac] sm:$0xff]
        %v6192 = vld [vmem:[#allocation3 + $0x8b4] sm:$0xf]
        %v6193 = vld [vmem:[#allocation3 + $0x8b8] sm:$0xff]
        %v6194 = vld [vmem:[#allocation3 + $0x8c0] sm:$0xff]
        %v6195 = vld [vmem:[#allocation3 + $0x8c8] sm:$0xff]
        %v6196 = vld [vmem:[#allocation3 + $0x8d0] sm:$0xff]
        %v6197 = vld [vmem:[#allocation3 + $0x8d8] sm:$0xf]
        %v6198 = vld [vmem:[#allocation3 + $0x8dc] sm:$0xff]
        %v6199 = vld [vmem:[#allocation3 + $0x8e4] sm:$0xff]
        %v6200 = vld [vmem:[#allocation3 + $0x8ec] sm:$0xff]
        %v6201 = vld [vmem:[#allocation3 + $0x8f4] sm:$0xff]
        %v6202 = vld [vmem:[#allocation3 + $0x8fc] sm:$0xf]
        %v6203 = vld [vmem:[#allocation9] sm:$0xf]
        %v6204 = vld [vmem:[#allocation9 + $0x4] sm:$0xf]
        %v6205 = vld [vmem:[#allocation9 + $0x8] sm:$0xf]
        %v6206 = vld [vmem:[#allocation9 + $0xc] sm:$0xf]
        %v6207 = vld [vmem:[#allocation9 + $0x10] sm:$0xf]
        %v6208 = vld [vmem:[#allocation9 + $0x14] sm:$0xf]
        %v6209 = vld [vmem:[#allocation9 + $0x18] sm:$0xf]
        %v6210 = vld [vmem:[#allocation9 + $0x1c] sm:$0xf]
        %v6211 = vld [vmem:[#allocation9 + $0x20] sm:$0xf]
        %v6212 = vld [vmem:[#allocation9 + $0x24] sm:$0xf]
        %v6213 = vld [vmem:[#allocation9 + $0x28] sm:$0xf]
        %v6214 = vld [vmem:[#allocation9 + $0x2c] sm:$0xf]
        %v6215 = vld [vmem:[#allocation9 + $0x30] sm:$0xf]
        %v6216 = vld [vmem:[#allocation9 + $0x34] sm:$0xf]
        %v6217 = vld [vmem:[#allocation9 + $0x38] sm:$0xf]
        %v6218 = vld [vmem:[#allocation9 + $0x3c] sm:$0xf]
        %v6219 = vld [vmem:[#allocation9 + $0x40] sm:$0xf]
        %v6220 = vld [vmem:[#allocation9 + $0x44] sm:$0xf]
        %v6221 = vld [vmem:[#allocation9 + $0x48] sm:$0xf]
        %v6222 = vld [vmem:[#allocation9 + $0x4c] sm:$0xf]
        %v6223 = vld [vmem:[#allocation9 + $0x50] sm:$0xf]
        %v6224 = vld [vmem:[#allocation9 + $0x54] sm:$0xf]
        %v6225 = vld [vmem:[#allocation9 + $0x58] sm:$0xf]
        %v6226 = vld [vmem:[#allocation9 + $0x5c] sm:$0xf]
        %v6227 = vld [vmem:[#allocation9 + $0x60] sm:$0xf]
        %v6228 = vld [vmem:[#allocation9 + $0x64] sm:$0xf]
        %v6229 = vld [vmem:[#allocation9 + $0x68] sm:$0xf]
        %v6230 = vld [vmem:[#allocation9 + $0x6c] sm:$0xf]
        %v6231 = vld [vmem:[#allocation9 + $0x70] sm:$0xf]
        %v6232 = vld [vmem:[#allocation9 + $0x74] sm:$0xf]
        %v6233 = vld [vmem:[#allocation9 + $0x78] sm:$0xf]
        %v6234 = vld [vmem:[#allocation9 + $0x7c] sm:$0xf]
        %v6235 = vld [vmem:[#allocation9 + $0x80] sm:$0xf]
        %v6236 = vld [vmem:[#allocation9 + $0x84] sm:$0xf]
        %v6237 = vld [vmem:[#allocation9 + $0x88] sm:$0xf]
        %v6238 = vld [vmem:[#allocation9 + $0x8c] sm:$0xf]
        %v6239 = vld [vmem:[#allocation9 + $0x90] sm:$0xf]
        %v6240 = vld [vmem:[#allocation9 + $0x94] sm:$0xf]
        %v6241 = vld [vmem:[#allocation9 + $0x98] sm:$0xf]
        %v6242 = vld [vmem:[#allocation9 + $0x9c] sm:$0xf]
        %v6243 = vld [vmem:[#allocation9 + $0xa0] sm:$0xf]
        %v6244 = vld [vmem:[#allocation9 + $0xa4] sm:$0xf]
        %v6245 = vld [vmem:[#allocation9 + $0xa8] sm:$0xf]
        %v6246 = vld [vmem:[#allocation9 + $0xac] sm:$0xf]
        %v6247 = vld [vmem:[#allocation9 + $0xb0] sm:$0xf]
        %v6248 = vld [vmem:[#allocation9 + $0xb4] sm:$0xf]
        %v6249 = vld [vmem:[#allocation9 + $0xb8] sm:$0xf]
        %v6250 = vld [vmem:[#allocation9 + $0xbc] sm:$0xf]
        %v6251 = vld [vmem:[#allocation9 + $0xc0] sm:$0xf]
        %v6252 = vld [vmem:[#allocation9 + $0xc4] sm:$0xf]
        %v6253 = vld [vmem:[#allocation9 + $0xc8] sm:$0xf]
        %v6254 = vld [vmem:[#allocation9 + $0xcc] sm:$0xf]
        %v6255 = vld [vmem:[#allocation9 + $0xd0] sm:$0xf]
        %v6256 = vld [vmem:[#allocation9 + $0xd4] sm:$0xf]
        %v6257 = vld [vmem:[#allocation9 + $0xd8] sm:$0xf]
        %v6258 = vld [vmem:[#allocation9 + $0xdc] sm:$0xf]
        %v6259 = vld [vmem:[#allocation9 + $0xe0] sm:$0xf]
        %v6260 = vld [vmem:[#allocation9 + $0xe4] sm:$0xf]
        %v6261 = vld [vmem:[#allocation9 + $0xe8] sm:$0xf]
        %v6262 = vld [vmem:[#allocation9 + $0xec] sm:$0xf]
        %v6263 = vld [vmem:[#allocation9 + $0xf0] sm:$0xf]
        %v6264 = vld [vmem:[#allocation9 + $0xf4] sm:$0xf]
        %v6265 = vld [vmem:[#allocation9 + $0xf8] sm:$0xf]
        %v6266 = vld [vmem:[#allocation9 + $0xfc] sm:$0xf]
        %v6267 = vld [vmem:[#allocation9 + $0x100] sm:$0xf]
        %v6268 = vld [vmem:[#allocation9 + $0x104] sm:$0xf]
        %v6269 = vld [vmem:[#allocation9 + $0x108] sm:$0xf]
        %v6270 = vld [vmem:[#allocation9 + $0x10c] sm:$0xf]
        %v6271 = vld [vmem:[#allocation9 + $0x110] sm:$0xf]
        %v6272 = vld [vmem:[#allocation9 + $0x114] sm:$0xf]
        %v6273 = vld [vmem:[#allocation9 + $0x118] sm:$0xf]
        %v6274 = vld [vmem:[#allocation9 + $0x11c] sm:$0xf]
        %v6275 = vld [vmem:[#allocation9 + $0x120] sm:$0xf]
        %v6276 = vld [vmem:[#allocation9 + $0x124] sm:$0xf]
        %v6277 = vld [vmem:[#allocation9 + $0x128] sm:$0xf]
        %v6278 = vld [vmem:[#allocation9 + $0x12c] sm:$0xf]
        %v6279 = vld [vmem:[#allocation9 + $0x130] sm:$0xf]
        %v6280 = vld [vmem:[#allocation9 + $0x134] sm:$0xf]
        %v6281 = vld [vmem:[#allocation9 + $0x138] sm:$0xf]
        %v6282 = vld [vmem:[#allocation9 + $0x13c] sm:$0xf]
        %v6283 = vld [vmem:[#allocation9 + $0x140] sm:$0xf]
        %v6284 = vld [vmem:[#allocation9 + $0x144] sm:$0xf]
        %v6285 = vld [vmem:[#allocation9 + $0x148] sm:$0xf]
        %v6286 = vld [vmem:[#allocation9 + $0x14c] sm:$0xf]
        %v6287 = vld [vmem:[#allocation9 + $0x150] sm:$0xf]
        %v6288 = vld [vmem:[#allocation9 + $0x154] sm:$0xf]
        %v6289 = vld [vmem:[#allocation9 + $0x158] sm:$0xf]
        %v6290 = vld [vmem:[#allocation9 + $0x15c] sm:$0xf]
        %v6291 = vld [vmem:[#allocation9 + $0x160] sm:$0xf]
        %v6292 = vld [vmem:[#allocation9 + $0x164] sm:$0xf]
        %v6293 = vld [vmem:[#allocation9 + $0x168] sm:$0xf]
        %v6294 = vld [vmem:[#allocation9 + $0x16c] sm:$0xf]
        %v6295 = vld [vmem:[#allocation9 + $0x170] sm:$0xf]
        %v6296 = vld [vmem:[#allocation9 + $0x174] sm:$0xf]
        %v6297 = vld [vmem:[#allocation9 + $0x178] sm:$0xf]
        %v6298 = vld [vmem:[#allocation9 + $0x17c] sm:$0xf]
        %v6299 = vld [vmem:[#allocation9 + $0x180] sm:$0xf]
        %v6300 = vld [vmem:[#allocation9 + $0x184] sm:$0xf]
        %v6301 = vld [vmem:[#allocation9 + $0x188] sm:$0xf]
        %v6302 = vld [vmem:[#allocation9 + $0x18c] sm:$0xf]
        %v6303 = vld [vmem:[#allocation9 + $0x190] sm:$0xf]
        %v6304 = vld [vmem:[#allocation9 + $0x194] sm:$0xf]
        %v6305 = vld [vmem:[#allocation9 + $0x198] sm:$0xf]
        %v6306 = vld [vmem:[#allocation9 + $0x19c] sm:$0xf]
        %v6307 = vld [vmem:[#allocation9 + $0x1a0] sm:$0xf]
        %v6308 = vld [vmem:[#allocation9 + $0x1a4] sm:$0xf]
        %v6309 = vld [vmem:[#allocation9 + $0x1a8] sm:$0xf]
        %v6310 = vld [vmem:[#allocation9 + $0x1ac] sm:$0xf]
        %v6311 = vld [vmem:[#allocation9 + $0x1b0] sm:$0xf]
        %v6312 = vld [vmem:[#allocation9 + $0x1b4] sm:$0xf]
        %v6313 = vld [vmem:[#allocation9 + $0x1b8] sm:$0xf]
        %v6314 = vld [vmem:[#allocation9 + $0x1bc] sm:$0xf]
        %v6315 = vld [vmem:[#allocation9 + $0x1c0] sm:$0xf]
        %v6316 = vld [vmem:[#allocation9 + $0x1c4] sm:$0xf]
        %v6317 = vld [vmem:[#allocation9 + $0x1c8] sm:$0xf]
        %v6318 = vld [vmem:[#allocation9 + $0x1cc] sm:$0xf]
        %v6319 = vld [vmem:[#allocation9 + $0x1d0] sm:$0xf]
        %v6320 = vld [vmem:[#allocation9 + $0x1d4] sm:$0xf]
        %v6321 = vld [vmem:[#allocation9 + $0x1d8] sm:$0xf]
        %v6322 = vld [vmem:[#allocation9 + $0x1dc] sm:$0xf]
        %v6323 = vld [vmem:[#allocation9 + $0x1e0] sm:$0xf]
        %v6324 = vld [vmem:[#allocation9 + $0x1e4] sm:$0xf]
        %v6325 = vld [vmem:[#allocation9 + $0x1e8] sm:$0xf]
        %v6326 = vld [vmem:[#allocation9 + $0x1ec] sm:$0xf]
        %v6327 = vld [vmem:[#allocation9 + $0x1f0] sm:$0xf]
        %v6328 = vld [vmem:[#allocation9 + $0x1f4] sm:$0xf]
        %v6329 = vld [vmem:[#allocation9 + $0x1f8] sm:$0xf]
        %v6330 = vld [vmem:[#allocation9 + $0x1fc] sm:$0xf]
        %v6331 = vld [vmem:[#allocation9 + $0x200] sm:$0xf]
        %v6332 = vld [vmem:[#allocation9 + $0x204] sm:$0xf]
        %v6333 = vld [vmem:[#allocation9 + $0x208] sm:$0xf]
        %v6334 = vld [vmem:[#allocation9 + $0x20c] sm:$0xf]
        %v6335 = vld [vmem:[#allocation9 + $0x210] sm:$0xf]
        %v6336 = vld [vmem:[#allocation9 + $0x214] sm:$0xf]
        %v6337 = vld [vmem:[#allocation9 + $0x218] sm:$0xf]
        %v6338 = vld [vmem:[#allocation9 + $0x21c] sm:$0xf]
        %v6339 = vld [vmem:[#allocation9 + $0x220] sm:$0xf]
        %v6340 = vld [vmem:[#allocation9 + $0x224] sm:$0xf]
        %v6341 = vld [vmem:[#allocation9 + $0x228] sm:$0xf]
        %v6342 = vld [vmem:[#allocation9 + $0x22c] sm:$0xf]
        %v6343 = vld [vmem:[#allocation9 + $0x230] sm:$0xf]
        %v6344 = vld [vmem:[#allocation9 + $0x234] sm:$0xf]
        %v6345 = vld [vmem:[#allocation9 + $0x238] sm:$0xf]
        %v6346 = vld [vmem:[#allocation9 + $0x23c] sm:$0xf]
        %v6347 = vld [vmem:[%s6] sm:$0x1]
        %v6349 = vperm.slane %v6347, 0
        %v6671 = vunpack.c.l.b16 %v5883
        %v6672 = vunpack.c.h.b16 %v5883
        %v6673 = vunpack.c.l.b16 %v5884
        %v6674 = vunpack.c.h.b16 %v5884
        %v6675 = vunpack.c.l.b16 %v5885
        %v6676 = vunpack.c.h.b16 %v5885
        %v6677 = vunpack.c.l.b16 %v5886
        %v6678 = vunpack.c.h.b16 %v5886
        %v6679 = vunpack.c.l.b16 %v5887
        %v6680 = vunpack.c.l.b16 %v5888
        %v6681 = vunpack.c.h.b16 %v5888
        %v6682 = vunpack.c.l.b16 %v5889
        %v6683 = vunpack.c.h.b16 %v5889
        %v6684 = vunpack.c.l.b16 %v5890
        %v6685 = vunpack.c.h.b16 %v5890
        %v6686 = vunpack.c.l.b16 %v5891
        %v6687 = vunpack.c.h.b16 %v5891
        %v6688 = vunpack.c.l.b16 %v5892
        %v6689 = vunpack.c.l.b16 %v5893
        %v6690 = vunpack.c.h.b16 %v5893
        %v6691 = vunpack.c.l.b16 %v5894
        %v6692 = vunpack.c.h.b16 %v5894
        %v6693 = vunpack.c.l.b16 %v5895
        %v6694 = vunpack.c.h.b16 %v5895
        %v6695 = vunpack.c.l.b16 %v5896
        %v6696 = vunpack.c.h.b16 %v5896
        %v6697 = vunpack.c.l.b16 %v5897
        %v6698 = vunpack.c.l.b16 %v5898
        %v6699 = vunpack.c.h.b16 %v5898
        %v6700 = vunpack.c.l.b16 %v5899
        %v6701 = vunpack.c.h.b16 %v5899
        %v6702 = vunpack.c.l.b16 %v5900
        %v6703 = vunpack.c.h.b16 %v5900
        %v6704 = vunpack.c.l.b16 %v5901
        %v6705 = vunpack.c.h.b16 %v5901
        %v6706 = vunpack.c.l.b16 %v5902
        %v6707 = vunpack.c.l.b16 %v5903
        %v6708 = vunpack.c.h.b16 %v5903
        %v6709 = vunpack.c.l.b16 %v5904
        %v6710 = vunpack.c.h.b16 %v5904
        %v6711 = vunpack.c.l.b16 %v5905
        %v6712 = vunpack.c.h.b16 %v5905
        %v6713 = vunpack.c.l.b16 %v5906
        %v6714 = vunpack.c.h.b16 %v5906
        %v6715 = vunpack.c.l.b16 %v5907
        %v6716 = vunpack.c.l.b16 %v5908
        %v6717 = vunpack.c.h.b16 %v5908
        %v6718 = vunpack.c.l.b16 %v5909
        %v6719 = vunpack.c.h.b16 %v5909
        %v6720 = vunpack.c.l.b16 %v5910
        %v6721 = vunpack.c.h.b16 %v5910
        %v6722 = vunpack.c.l.b16 %v5911
        %v6723 = vunpack.c.h.b16 %v5911
        %v6724 = vunpack.c.l.b16 %v5912
        %v6725 = vunpack.c.l.b16 %v5913
        %v6726 = vunpack.c.h.b16 %v5913
        %v6727 = vunpack.c.l.b16 %v5914
        %v6728 = vunpack.c.h.b16 %v5914
        %v6729 = vunpack.c.l.b16 %v5915
        %v6730 = vunpack.c.h.b16 %v5915
        %v6731 = vunpack.c.l.b16 %v5916
        %v6732 = vunpack.c.h.b16 %v5916
        %v6733 = vunpack.c.l.b16 %v5917
        %v6734 = vunpack.c.l.b16 %v5918
        %v6735 = vunpack.c.h.b16 %v5918
        %v6736 = vunpack.c.l.b16 %v5919
        %v6737 = vunpack.c.h.b16 %v5919
        %v6738 = vunpack.c.l.b16 %v5920
        %v6739 = vunpack.c.h.b16 %v5920
        %v6740 = vunpack.c.l.b16 %v5921
        %v6741 = vunpack.c.h.b16 %v5921
        %v6742 = vunpack.c.l.b16 %v5922
        %v6743 = vunpack.c.l.b16 %v5923
        %v6744 = vunpack.c.h.b16 %v5923
        %v6745 = vunpack.c.l.b16 %v5924
        %v6746 = vunpack.c.h.b16 %v5924
        %v6747 = vunpack.c.l.b16 %v5925
        %v6748 = vunpack.c.h.b16 %v5925
        %v6749 = vunpack.c.l.b16 %v5926
        %v6750 = vunpack.c.h.b16 %v5926
        %v6751 = vunpack.c.l.b16 %v5927
        %v6752 = vunpack.c.l.b16 %v5928
        %v6753 = vunpack.c.h.b16 %v5928
        %v6754 = vunpack.c.l.b16 %v5929
        %v6755 = vunpack.c.h.b16 %v5929
        %v6756 = vunpack.c.l.b16 %v5930
        %v6757 = vunpack.c.h.b16 %v5930
        %v6758 = vunpack.c.l.b16 %v5931
        %v6759 = vunpack.c.h.b16 %v5931
        %v6760 = vunpack.c.l.b16 %v5932
        %v6761 = vunpack.c.l.b16 %v5933
        %v6762 = vunpack.c.h.b16 %v5933
        %v6763 = vunpack.c.l.b16 %v5934
        %v6764 = vunpack.c.h.b16 %v5934
        %v6765 = vunpack.c.l.b16 %v5935
        %v6766 = vunpack.c.h.b16 %v5935
        %v6767 = vunpack.c.l.b16 %v5936
        %v6768 = vunpack.c.h.b16 %v5936
        %v6769 = vunpack.c.l.b16 %v5937
        %v6770 = vunpack.c.l.b16 %v5938
        %v6771 = vunpack.c.h.b16 %v5938
        %v6772 = vunpack.c.l.b16 %v5939
        %v6773 = vunpack.c.h.b16 %v5939
        %v6774 = vunpack.c.l.b16 %v5940
        %v6775 = vunpack.c.h.b16 %v5940
        %v6776 = vunpack.c.l.b16 %v5941
        %v6777 = vunpack.c.h.b16 %v5941
        %v6778 = vunpack.c.l.b16 %v5942
        %v6779 = vunpack.c.l.b16 %v5943
        %v6780 = vunpack.c.h.b16 %v5943
        %v6781 = vunpack.c.l.b16 %v5944
        %v6782 = vunpack.c.h.b16 %v5944
        %v6783 = vunpack.c.l.b16 %v5945
        %v6784 = vunpack.c.h.b16 %v5945
        %v6785 = vunpack.c.l.b16 %v5946
        %v6786 = vunpack.c.h.b16 %v5946
        %v6787 = vunpack.c.l.b16 %v5947
        %v6788 = vunpack.c.l.b16 %v5948
        %v6789 = vunpack.c.h.b16 %v5948
        %v6790 = vunpack.c.l.b16 %v5949
        %v6791 = vunpack.c.h.b16 %v5949
        %v6792 = vunpack.c.l.b16 %v5950
        %v6793 = vunpack.c.h.b16 %v5950
        %v6794 = vunpack.c.l.b16 %v5951
        %v6795 = vunpack.c.h.b16 %v5951
        %v6796 = vunpack.c.l.b16 %v5952
        %v6797 = vunpack.c.l.b16 %v5953
        %v6798 = vunpack.c.h.b16 %v5953
        %v6799 = vunpack.c.l.b16 %v5954
        %v6800 = vunpack.c.h.b16 %v5954
        %v6801 = vunpack.c.l.b16 %v5955
        %v6802 = vunpack.c.h.b16 %v5955
        %v6803 = vunpack.c.l.b16 %v5956
        %v6804 = vunpack.c.h.b16 %v5956
        %v6805 = vunpack.c.l.b16 %v5957
        %v6806 = vunpack.c.l.b16 %v5958
        %v6807 = vunpack.c.h.b16 %v5958
        %v6808 = vunpack.c.l.b16 %v5959
        %v6809 = vunpack.c.h.b16 %v5959
        %v6810 = vunpack.c.l.b16 %v5960
        %v6811 = vunpack.c.h.b16 %v5960
        %v6812 = vunpack.c.l.b16 %v5961
        %v6813 = vunpack.c.h.b16 %v5961
        %v6814 = vunpack.c.l.b16 %v5962
        %v6815 = vunpack.c.l.b16 %v5963
        %v6816 = vunpack.c.h.b16 %v5963
        %v6817 = vunpack.c.l.b16 %v5964
        %v6818 = vunpack.c.h.b16 %v5964
        %v6819 = vunpack.c.l.b16 %v5965
        %v6820 = vunpack.c.h.b16 %v5965
        %v6821 = vunpack.c.l.b16 %v5966
        %v6822 = vunpack.c.h.b16 %v5966
        %v6823 = vunpack.c.l.b16 %v5967
        %v6824 = vunpack.c.l.b16 %v5968
        %v6825 = vunpack.c.h.b16 %v5968
        %v6826 = vunpack.c.l.b16 %v5969
        %v6827 = vunpack.c.h.b16 %v5969
        %v6828 = vunpack.c.l.b16 %v5970
        %v6829 = vunpack.c.h.b16 %v5970
        %v6830 = vunpack.c.l.b16 %v5971
        %v6831 = vunpack.c.h.b16 %v5971
        %v6832 = vunpack.c.l.b16 %v5972
        %v6833 = vunpack.c.l.b16 %v5973
        %v6834 = vunpack.c.h.b16 %v5973
        %v6835 = vunpack.c.l.b16 %v5974
        %v6836 = vunpack.c.h.b16 %v5974
        %v6837 = vunpack.c.l.b16 %v5975
        %v6838 = vunpack.c.h.b16 %v5975
        %v6839 = vunpack.c.l.b16 %v5976
        %v6840 = vunpack.c.h.b16 %v5976
        %v6841 = vunpack.c.l.b16 %v5977
        %v6842 = vunpack.c.l.b16 %v5978
        %v6843 = vunpack.c.h.b16 %v5978
        %v6844 = vunpack.c.l.b16 %v5979
        %v6845 = vunpack.c.h.b16 %v5979
        %v6846 = vunpack.c.l.b16 %v5980
        %v6847 = vunpack.c.h.b16 %v5980
        %v6848 = vunpack.c.l.b16 %v5981
        %v6849 = vunpack.c.h.b16 %v5981
        %v6850 = vunpack.c.l.b16 %v5982
        %v6851 = vunpack.c.l.b16 %v5983
        %v6852 = vunpack.c.h.b16 %v5983
        %v6853 = vunpack.c.l.b16 %v5984
        %v6854 = vunpack.c.h.b16 %v5984
        %v6855 = vunpack.c.l.b16 %v5985
        %v6856 = vunpack.c.h.b16 %v5985
        %v6857 = vunpack.c.l.b16 %v5986
        %v6858 = vunpack.c.h.b16 %v5986
        %v6859 = vunpack.c.l.b16 %v5987
        %v6860 = vunpack.c.l.b16 %v5988
        %v6861 = vunpack.c.h.b16 %v5988
        %v6862 = vunpack.c.l.b16 %v5989
        %v6863 = vunpack.c.h.b16 %v5989
        %v6864 = vunpack.c.l.b16 %v5990
        %v6865 = vunpack.c.h.b16 %v5990
        %v6866 = vunpack.c.l.b16 %v5991
        %v6867 = vunpack.c.h.b16 %v5991
        %v6868 = vunpack.c.l.b16 %v5992
        %v6869 = vunpack.c.l.b16 %v5993
        %v6870 = vunpack.c.h.b16 %v5993
        %v6871 = vunpack.c.l.b16 %v5994
        %v6872 = vunpack.c.h.b16 %v5994
        %v6873 = vunpack.c.l.b16 %v5995
        %v6874 = vunpack.c.h.b16 %v5995
        %v6875 = vunpack.c.l.b16 %v5996
        %v6876 = vunpack.c.h.b16 %v5996
        %v6877 = vunpack.c.l.b16 %v5997
        %v6878 = vunpack.c.l.b16 %v5998
        %v6879 = vunpack.c.h.b16 %v5998
        %v6880 = vunpack.c.l.b16 %v5999
        %v6881 = vunpack.c.h.b16 %v5999
        %v6882 = vunpack.c.l.b16 %v6000
        %v6883 = vunpack.c.h.b16 %v6000
        %v6884 = vunpack.c.l.b16 %v6001
        %v6885 = vunpack.c.h.b16 %v6001
        %v6886 = vunpack.c.l.b16 %v6002
        %v6887 = vunpack.c.l.b16 %v6003
        %v6888 = vunpack.c.h.b16 %v6003
        %v6889 = vunpack.c.l.b16 %v6004
        %v6890 = vunpack.c.h.b16 %v6004
        %v6891 = vunpack.c.l.b16 %v6005
        %v6892 = vunpack.c.h.b16 %v6005
        %v6893 = vunpack.c.l.b16 %v6006
        %v6894 = vunpack.c.h.b16 %v6006
        %v6895 = vunpack.c.l.b16 %v6007
        %v6896 = vunpack.c.l.b16 %v6008
        %v6897 = vunpack.c.h.b16 %v6008
        %v6898 = vunpack.c.l.b16 %v6009
        %v6899 = vunpack.c.h.b16 %v6009
        %v6900 = vunpack.c.l.b16 %v6010
        %v6901 = vunpack.c.h.b16 %v6010
        %v6902 = vunpack.c.l.b16 %v6011
        %v6903 = vunpack.c.h.b16 %v6011
        %v6904 = vunpack.c.l.b16 %v6012
        %v6905 = vunpack.c.l.b16 %v6013
        %v6906 = vunpack.c.h.b16 %v6013
        %v6907 = vunpack.c.l.b16 %v6014
        %v6908 = vunpack.c.h.b16 %v6014
        %v6909 = vunpack.c.l.b16 %v6015
        %v6910 = vunpack.c.h.b16 %v6015
        %v6911 = vunpack.c.l.b16 %v6016
        %v6912 = vunpack.c.h.b16 %v6016
        %v6913 = vunpack.c.l.b16 %v6017
        %v6914 = vunpack.c.l.b16 %v6018
        %v6915 = vunpack.c.h.b16 %v6018
        %v6916 = vunpack.c.l.b16 %v6019
        %v6917 = vunpack.c.h.b16 %v6019
        %v6918 = vunpack.c.l.b16 %v6020
        %v6919 = vunpack.c.h.b16 %v6020
        %v6920 = vunpack.c.l.b16 %v6021
        %v6921 = vunpack.c.h.b16 %v6021
        %v6922 = vunpack.c.l.b16 %v6022
        %v6923 = vunpack.c.l.b16 %v6023
        %v6924 = vunpack.c.h.b16 %v6023
        %v6925 = vunpack.c.l.b16 %v6024
        %v6926 = vunpack.c.h.b16 %v6024
        %v6927 = vunpack.c.l.b16 %v6025
        %v6928 = vunpack.c.h.b16 %v6025
        %v6929 = vunpack.c.l.b16 %v6026
        %v6930 = vunpack.c.h.b16 %v6026
        %v6931 = vunpack.c.l.b16 %v6027
        %v6932 = vunpack.c.l.b16 %v6028
        %v6933 = vunpack.c.h.b16 %v6028
        %v6934 = vunpack.c.l.b16 %v6029
        %v6935 = vunpack.c.h.b16 %v6029
        %v6936 = vunpack.c.l.b16 %v6030
        %v6937 = vunpack.c.h.b16 %v6030
        %v6938 = vunpack.c.l.b16 %v6031
        %v6939 = vunpack.c.h.b16 %v6031
        %v6940 = vunpack.c.l.b16 %v6032
        %v6941 = vunpack.c.l.b16 %v6033
        %v6942 = vunpack.c.h.b16 %v6033
        %v6943 = vunpack.c.l.b16 %v6034
        %v6944 = vunpack.c.h.b16 %v6034
        %v6945 = vunpack.c.l.b16 %v6035
        %v6946 = vunpack.c.h.b16 %v6035
        %v6947 = vunpack.c.l.b16 %v6036
        %v6948 = vunpack.c.h.b16 %v6036
        %v6949 = vunpack.c.l.b16 %v6037
        %v6950 = vunpack.c.l.b16 %v6038
        %v6951 = vunpack.c.h.b16 %v6038
        %v6952 = vunpack.c.l.b16 %v6039
        %v6953 = vunpack.c.h.b16 %v6039
        %v6954 = vunpack.c.l.b16 %v6040
        %v6955 = vunpack.c.h.b16 %v6040
        %v6956 = vunpack.c.l.b16 %v6041
        %v6957 = vunpack.c.h.b16 %v6041
        %v6958 = vunpack.c.l.b16 %v6042
        %v6959 = vunpack.c.l.b16 %v6043
        %v6960 = vunpack.c.h.b16 %v6043
        %v6961 = vunpack.c.l.b16 %v6044
        %v6962 = vunpack.c.h.b16 %v6044
        %v6963 = vunpack.c.l.b16 %v6045
        %v6964 = vunpack.c.h.b16 %v6045
        %v6965 = vunpack.c.l.b16 %v6046
        %v6966 = vunpack.c.h.b16 %v6046
        %v6967 = vunpack.c.l.b16 %v6047
        %v6968 = vunpack.c.l.b16 %v6048
        %v6969 = vunpack.c.h.b16 %v6048
        %v6970 = vunpack.c.l.b16 %v6049
        %v6971 = vunpack.c.h.b16 %v6049
        %v6972 = vunpack.c.l.b16 %v6050
        %v6973 = vunpack.c.h.b16 %v6050
        %v6974 = vunpack.c.l.b16 %v6051
        %v6975 = vunpack.c.h.b16 %v6051
        %v6976 = vunpack.c.l.b16 %v6052
        %v6977 = vunpack.c.l.b16 %v6053
        %v6978 = vunpack.c.h.b16 %v6053
        %v6979 = vunpack.c.l.b16 %v6054
        %v6980 = vunpack.c.h.b16 %v6054
        %v6981 = vunpack.c.l.b16 %v6055
        %v6982 = vunpack.c.h.b16 %v6055
        %v6983 = vunpack.c.l.b16 %v6056
        %v6984 = vunpack.c.h.b16 %v6056
        %v6985 = vunpack.c.l.b16 %v6057
        %v6986 = vunpack.c.l.b16 %v6058
        %v6987 = vunpack.c.h.b16 %v6058
        %v6988 = vunpack.c.l.b16 %v6059
        %v6989 = vunpack.c.h.b16 %v6059
        %v6990 = vunpack.c.l.b16 %v6060
        %v6991 = vunpack.c.h.b16 %v6060
        %v6992 = vunpack.c.l.b16 %v6061
        %v6993 = vunpack.c.h.b16 %v6061
        %v6994 = vunpack.c.l.b16 %v6062
        %v6995 = vunpack.c.l.b16 %v6063
        %v6996 = vunpack.c.h.b16 %v6063
        %v6997 = vunpack.c.l.b16 %v6064
        %v6998 = vunpack.c.h.b16 %v6064
        %v6999 = vunpack.c.l.b16 %v6065
        %v7000 = vunpack.c.h.b16 %v6065
        %v7001 = vunpack.c.l.b16 %v6066
        %v7002 = vunpack.c.h.b16 %v6066
        %v7003 = vunpack.c.l.b16 %v6067
        %v7004 = vunpack.c.l.b16 %v6068
        %v7005 = vunpack.c.h.b16 %v6068
        %v7006 = vunpack.c.l.b16 %v6069
        %v7007 = vunpack.c.h.b16 %v6069
        %v7008 = vunpack.c.l.b16 %v6070
        %v7009 = vunpack.c.h.b16 %v6070
        %v7010 = vunpack.c.l.b16 %v6071
        %v7011 = vunpack.c.h.b16 %v6071
        %v7012 = vunpack.c.l.b16 %v6072
        %v7013 = vunpack.c.l.b16 %v6073
        %v7014 = vunpack.c.h.b16 %v6073
        %v7015 = vunpack.c.l.b16 %v6074
        %v7016 = vunpack.c.h.b16 %v6074
        %v7017 = vunpack.c.l.b16 %v6075
        %v7018 = vunpack.c.h.b16 %v6075
        %v7019 = vunpack.c.l.b16 %v6076
        %v7020 = vunpack.c.h.b16 %v6076
        %v7021 = vunpack.c.l.b16 %v6077
        %v7022 = vunpack.c.l.b16 %v6078
        %v7023 = vunpack.c.h.b16 %v6078
        %v7024 = vunpack.c.l.b16 %v6079
        %v7025 = vunpack.c.h.b16 %v6079
        %v7026 = vunpack.c.l.b16 %v6080
        %v7027 = vunpack.c.h.b16 %v6080
        %v7028 = vunpack.c.l.b16 %v6081
        %v7029 = vunpack.c.h.b16 %v6081
        %v7030 = vunpack.c.l.b16 %v6082
        %v7031 = vunpack.c.l.b16 %v6083
        %v7032 = vunpack.c.h.b16 %v6083
        %v7033 = vunpack.c.l.b16 %v6084
        %v7034 = vunpack.c.h.b16 %v6084
        %v7035 = vunpack.c.l.b16 %v6085
        %v7036 = vunpack.c.h.b16 %v6085
        %v7037 = vunpack.c.l.b16 %v6086
        %v7038 = vunpack.c.h.b16 %v6086
        %v7039 = vunpack.c.l.b16 %v6087
        %v7040 = vunpack.c.l.b16 %v6088
        %v7041 = vunpack.c.h.b16 %v6088
        %v7042 = vunpack.c.l.b16 %v6089
        %v7043 = vunpack.c.h.b16 %v6089
        %v7044 = vunpack.c.l.b16 %v6090
        %v7045 = vunpack.c.h.b16 %v6090
        %v7046 = vunpack.c.l.b16 %v6091
        %v7047 = vunpack.c.h.b16 %v6091
        %v7048 = vunpack.c.l.b16 %v6092
        %v7049 = vunpack.c.l.b16 %v6093
        %v7050 = vunpack.c.h.b16 %v6093
        %v7051 = vunpack.c.l.b16 %v6094
        %v7052 = vunpack.c.h.b16 %v6094
        %v7053 = vunpack.c.l.b16 %v6095
        %v7054 = vunpack.c.h.b16 %v6095
        %v7055 = vunpack.c.l.b16 %v6096
        %v7056 = vunpack.c.h.b16 %v6096
        %v7057 = vunpack.c.l.b16 %v6097
        %v7058 = vunpack.c.l.b16 %v6098
        %v7059 = vunpack.c.h.b16 %v6098
        %v7060 = vunpack.c.l.b16 %v6099
        %v7061 = vunpack.c.h.b16 %v6099
        %v7062 = vunpack.c.l.b16 %v6100
        %v7063 = vunpack.c.h.b16 %v6100
        %v7064 = vunpack.c.l.b16 %v6101
        %v7065 = vunpack.c.h.b16 %v6101
        %v7066 = vunpack.c.l.b16 %v6102
        %v7067 = vunpack.c.l.b16 %v6103
        %v7068 = vunpack.c.h.b16 %v6103
        %v7069 = vunpack.c.l.b16 %v6104
        %v7070 = vunpack.c.h.b16 %v6104
        %v7071 = vunpack.c.l.b16 %v6105
        %v7072 = vunpack.c.h.b16 %v6105
        %v7073 = vunpack.c.l.b16 %v6106
        %v7074 = vunpack.c.h.b16 %v6106
        %v7075 = vunpack.c.l.b16 %v6107
        %v7076 = vunpack.c.l.b16 %v6108
        %v7077 = vunpack.c.h.b16 %v6108
        %v7078 = vunpack.c.l.b16 %v6109
        %v7079 = vunpack.c.h.b16 %v6109
        %v7080 = vunpack.c.l.b16 %v6110
        %v7081 = vunpack.c.h.b16 %v6110
        %v7082 = vunpack.c.l.b16 %v6111
        %v7083 = vunpack.c.h.b16 %v6111
        %v7084 = vunpack.c.l.b16 %v6112
        %v7085 = vunpack.c.l.b16 %v6113
        %v7086 = vunpack.c.h.b16 %v6113
        %v7087 = vunpack.c.l.b16 %v6114
        %v7088 = vunpack.c.h.b16 %v6114
        %v7089 = vunpack.c.l.b16 %v6115
        %v7090 = vunpack.c.h.b16 %v6115
        %v7091 = vunpack.c.l.b16 %v6116
        %v7092 = vunpack.c.h.b16 %v6116
        %v7093 = vunpack.c.l.b16 %v6117
        %v7094 = vunpack.c.l.b16 %v6118
        %v7095 = vunpack.c.h.b16 %v6118
        %v7096 = vunpack.c.l.b16 %v6119
        %v7097 = vunpack.c.h.b16 %v6119
        %v7098 = vunpack.c.l.b16 %v6120
        %v7099 = vunpack.c.h.b16 %v6120
        %v7100 = vunpack.c.l.b16 %v6121
        %v7101 = vunpack.c.h.b16 %v6121
        %v7102 = vunpack.c.l.b16 %v6122
        %v7103 = vunpack.c.l.b16 %v6123
        %v7104 = vunpack.c.h.b16 %v6123
        %v7105 = vunpack.c.l.b16 %v6124
        %v7106 = vunpack.c.h.b16 %v6124
        %v7107 = vunpack.c.l.b16 %v6125
        %v7108 = vunpack.c.h.b16 %v6125
        %v7109 = vunpack.c.l.b16 %v6126
        %v7110 = vunpack.c.h.b16 %v6126
        %v7111 = vunpack.c.l.b16 %v6127
        %v7112 = vunpack.c.l.b16 %v6128
        %v7113 = vunpack.c.h.b16 %v6128
        %v7114 = vunpack.c.l.b16 %v6129
        %v7115 = vunpack.c.h.b16 %v6129
        %v7116 = vunpack.c.l.b16 %v6130
        %v7117 = vunpack.c.h.b16 %v6130
        %v7118 = vunpack.c.l.b16 %v6131
        %v7119 = vunpack.c.h.b16 %v6131
        %v7120 = vunpack.c.l.b16 %v6132
        %v7121 = vunpack.c.l.b16 %v6133
        %v7122 = vunpack.c.h.b16 %v6133
        %v7123 = vunpack.c.l.b16 %v6134
        %v7124 = vunpack.c.h.b16 %v6134
        %v7125 = vunpack.c.l.b16 %v6135
        %v7126 = vunpack.c.h.b16 %v6135
        %v7127 = vunpack.c.l.b16 %v6136
        %v7128 = vunpack.c.h.b16 %v6136
        %v7129 = vunpack.c.l.b16 %v6137
        %v7130 = vunpack.c.l.b16 %v6138
        %v7131 = vunpack.c.h.b16 %v6138
        %v7132 = vunpack.c.l.b16 %v6139
        %v7133 = vunpack.c.h.b16 %v6139
        %v7134 = vunpack.c.l.b16 %v6140
        %v7135 = vunpack.c.h.b16 %v6140
        %v7136 = vunpack.c.l.b16 %v6141
        %v7137 = vunpack.c.h.b16 %v6141
        %v7138 = vunpack.c.l.b16 %v6142
        %v7139 = vunpack.c.l.b16 %v6143
        %v7140 = vunpack.c.h.b16 %v6143
        %v7141 = vunpack.c.l.b16 %v6144
        %v7142 = vunpack.c.h.b16 %v6144
        %v7143 = vunpack.c.l.b16 %v6145
        %v7144 = vunpack.c.h.b16 %v6145
        %v7145 = vunpack.c.l.b16 %v6146
        %v7146 = vunpack.c.h.b16 %v6146
        %v7147 = vunpack.c.l.b16 %v6147
        %v7148 = vunpack.c.l.b16 %v6148
        %v7149 = vunpack.c.h.b16 %v6148
        %v7150 = vunpack.c.l.b16 %v6149
        %v7151 = vunpack.c.h.b16 %v6149
        %v7152 = vunpack.c.l.b16 %v6150
        %v7153 = vunpack.c.h.b16 %v6150
        %v7154 = vunpack.c.l.b16 %v6151
        %v7155 = vunpack.c.h.b16 %v6151
        %v7156 = vunpack.c.l.b16 %v6152
        %v7157 = vunpack.c.l.b16 %v6153
        %v7158 = vunpack.c.h.b16 %v6153
        %v7159 = vunpack.c.l.b16 %v6154
        %v7160 = vunpack.c.h.b16 %v6154
        %v7161 = vunpack.c.l.b16 %v6155
        %v7162 = vunpack.c.h.b16 %v6155
        %v7163 = vunpack.c.l.b16 %v6156
        %v7164 = vunpack.c.h.b16 %v6156
        %v7165 = vunpack.c.l.b16 %v6157
        %v7166 = vunpack.c.l.b16 %v6158
        %v7167 = vunpack.c.h.b16 %v6158
        %v7168 = vunpack.c.l.b16 %v6159
        %v7169 = vunpack.c.h.b16 %v6159
        %v7170 = vunpack.c.l.b16 %v6160
        %v7171 = vunpack.c.h.b16 %v6160
        %v7172 = vunpack.c.l.b16 %v6161
        %v7173 = vunpack.c.h.b16 %v6161
        %v7174 = vunpack.c.l.b16 %v6162
        %v7175 = vunpack.c.l.b16 %v6163
        %v7176 = vunpack.c.h.b16 %v6163
        %v7177 = vunpack.c.l.b16 %v6164
        %v7178 = vunpack.c.h.b16 %v6164
        %v7179 = vunpack.c.l.b16 %v6165
        %v7180 = vunpack.c.h.b16 %v6165
        %v7181 = vunpack.c.l.b16 %v6166
        %v7182 = vunpack.c.h.b16 %v6166
        %v7183 = vunpack.c.l.b16 %v6167
        %v7184 = vunpack.c.l.b16 %v6168
        %v7185 = vunpack.c.h.b16 %v6168
        %v7186 = vunpack.c.l.b16 %v6169
        %v7187 = vunpack.c.h.b16 %v6169
        %v7188 = vunpack.c.l.b16 %v6170
        %v7189 = vunpack.c.h.b16 %v6170
        %v7190 = vunpack.c.l.b16 %v6171
        %v7191 = vunpack.c.h.b16 %v6171
        %v7192 = vunpack.c.l.b16 %v6172
        %v7193 = vunpack.c.l.b16 %v6173
        %v7194 = vunpack.c.h.b16 %v6173
        %v7195 = vunpack.c.l.b16 %v6174
        %v7196 = vunpack.c.h.b16 %v6174
        %v7197 = vunpack.c.l.b16 %v6175
        %v7198 = vunpack.c.h.b16 %v6175
        %v7199 = vunpack.c.l.b16 %v6176
        %v7200 = vunpack.c.h.b16 %v6176
        %v7201 = vunpack.c.l.b16 %v6177
        %v7202 = vunpack.c.l.b16 %v6178
        %v7203 = vunpack.c.h.b16 %v6178
        %v7204 = vunpack.c.l.b16 %v6179
        %v7205 = vunpack.c.h.b16 %v6179
        %v7206 = vunpack.c.l.b16 %v6180
        %v7207 = vunpack.c.h.b16 %v6180
        %v7208 = vunpack.c.l.b16 %v6181
        %v7209 = vunpack.c.h.b16 %v6181
        %v7210 = vunpack.c.l.b16 %v6182
        %v7211 = vunpack.c.l.b16 %v6183
        %v7212 = vunpack.c.h.b16 %v6183
        %v7213 = vunpack.c.l.b16 %v6184
        %v7214 = vunpack.c.h.b16 %v6184
        %v7215 = vunpack.c.l.b16 %v6185
        %v7216 = vunpack.c.h.b16 %v6185
        %v7217 = vunpack.c.l.b16 %v6186
        %v7218 = vunpack.c.h.b16 %v6186
        %v7219 = vunpack.c.l.b16 %v6187
        %v7220 = vunpack.c.l.b16 %v6188
        %v7221 = vunpack.c.h.b16 %v6188
        %v7222 = vunpack.c.l.b16 %v6189
        %v7223 = vunpack.c.h.b16 %v6189
        %v7224 = vunpack.c.l.b16 %v6190
        %v7225 = vunpack.c.h.b16 %v6190
        %v7226 = vunpack.c.l.b16 %v6191
        %v7227 = vunpack.c.h.b16 %v6191
        %v7228 = vunpack.c.l.b16 %v6192
        %v7229 = vunpack.c.l.b16 %v6193
        %v7230 = vunpack.c.h.b16 %v6193
        %v7231 = vunpack.c.l.b16 %v6194
        %v7232 = vunpack.c.h.b16 %v6194
        %v7233 = vunpack.c.l.b16 %v6195
        %v7234 = vunpack.c.h.b16 %v6195
        %v7235 = vunpack.c.l.b16 %v6196
        %v7236 = vunpack.c.h.b16 %v6196
        %v7237 = vunpack.c.l.b16 %v6197
        %v7238 = vunpack.c.l.b16 %v6198
        %v7239 = vunpack.c.h.b16 %v6198
        %v7240 = vunpack.c.l.b16 %v6199
        %v7241 = vunpack.c.h.b16 %v6199
        %v7242 = vunpack.c.l.b16 %v6200
        %v7243 = vunpack.c.h.b16 %v6200
        %v7244 = vunpack.c.l.b16 %v6201
        %v7245 = vunpack.c.h.b16 %v6201
        %v7246 = vunpack.c.l.b16 %v6202
        %v7247 = vpack.c.b16 %v6680, %v6671
        %v7248 = vpack.c.b16 %v6681, %v6672
        %v7249 = vpack.c.b16 %v6682, %v6673
        %v7250 = vpack.c.b16 %v6683, %v6674
        %v7251 = vpack.c.b16 %v6684, %v6675
        %v7252 = vpack.c.b16 %v6685, %v6676
        %v7253 = vpack.c.b16 %v6686, %v6677
        %v7254 = vpack.c.b16 %v6687, %v6678
        %v7255 = vpack.c.b16 %v6688, %v6679
        %v7256 = vpack.c.b16 %v6698, %v6689
        %v7257 = vpack.c.b16 %v6699, %v6690
        %v7258 = vpack.c.b16 %v6700, %v6691
        %v7259 = vpack.c.b16 %v6701, %v6692
        %v7260 = vpack.c.b16 %v6702, %v6693
        %v7261 = vpack.c.b16 %v6703, %v6694
        %v7262 = vpack.c.b16 %v6704, %v6695
        %v7263 = vpack.c.b16 %v6705, %v6696
        %v7264 = vpack.c.b16 %v6706, %v6697
        %v7265 = vpack.c.b16 %v6716, %v6707
        %v7266 = vpack.c.b16 %v6717, %v6708
        %v7267 = vpack.c.b16 %v6718, %v6709
        %v7268 = vpack.c.b16 %v6719, %v6710
        %v7269 = vpack.c.b16 %v6720, %v6711
        %v7270 = vpack.c.b16 %v6721, %v6712
        %v7271 = vpack.c.b16 %v6722, %v6713
        %v7272 = vpack.c.b16 %v6723, %v6714
        %v7273 = vpack.c.b16 %v6724, %v6715
        %v7274 = vpack.c.b16 %v6734, %v6725
        %v7275 = vpack.c.b16 %v6735, %v6726
        %v7276 = vpack.c.b16 %v6736, %v6727
        %v7277 = vpack.c.b16 %v6737, %v6728
        %v7278 = vpack.c.b16 %v6738, %v6729
        %v7279 = vpack.c.b16 %v6739, %v6730
        %v7280 = vpack.c.b16 %v6740, %v6731
        %v7281 = vpack.c.b16 %v6741, %v6732
        %v7282 = vpack.c.b16 %v6742, %v6733
        %v7283 = vpack.c.b16 %v6752, %v6743
        %v7284 = vpack.c.b16 %v6753, %v6744
        %v7285 = vpack.c.b16 %v6754, %v6745
        %v7286 = vpack.c.b16 %v6755, %v6746
        %v7287 = vpack.c.b16 %v6756, %v6747
        %v7288 = vpack.c.b16 %v6757, %v6748
        %v7289 = vpack.c.b16 %v6758, %v6749
        %v7290 = vpack.c.b16 %v6759, %v6750
        %v7291 = vpack.c.b16 %v6760, %v6751
        %v7292 = vpack.c.b16 %v6770, %v6761
        %v7293 = vpack.c.b16 %v6771, %v6762
        %v7294 = vpack.c.b16 %v6772, %v6763
        %v7295 = vpack.c.b16 %v6773, %v6764
        %v7296 = vpack.c.b16 %v6774, %v6765
        %v7297 = vpack.c.b16 %v6775, %v6766
        %v7298 = vpack.c.b16 %v6776, %v6767
        %v7299 = vpack.c.b16 %v6777, %v6768
        %v7300 = vpack.c.b16 %v6778, %v6769
        %v7301 = vpack.c.b16 %v6788, %v6779
        %v7302 = vpack.c.b16 %v6789, %v6780
        %v7303 = vpack.c.b16 %v6790, %v6781
        %v7304 = vpack.c.b16 %v6791, %v6782
        %v7305 = vpack.c.b16 %v6792, %v6783
        %v7306 = vpack.c.b16 %v6793, %v6784
        %v7307 = vpack.c.b16 %v6794, %v6785
        %v7308 = vpack.c.b16 %v6795, %v6786
        %v7309 = vpack.c.b16 %v6796, %v6787
        %v7310 = vpack.c.b16 %v6806, %v6797
        %v7311 = vpack.c.b16 %v6807, %v6798
        %v7312 = vpack.c.b16 %v6808, %v6799
        %v7313 = vpack.c.b16 %v6809, %v6800
        %v7314 = vpack.c.b16 %v6810, %v6801
        %v7315 = vpack.c.b16 %v6811, %v6802
        %v7316 = vpack.c.b16 %v6812, %v6803
        %v7317 = vpack.c.b16 %v6813, %v6804
        %v7318 = vpack.c.b16 %v6814, %v6805
        %v7319 = vpack.c.b16 %v6824, %v6815
        %v7320 = vpack.c.b16 %v6825, %v6816
        %v7321 = vpack.c.b16 %v6826, %v6817
        %v7322 = vpack.c.b16 %v6827, %v6818
        %v7323 = vpack.c.b16 %v6828, %v6819
        %v7324 = vpack.c.b16 %v6829, %v6820
        %v7325 = vpack.c.b16 %v6830, %v6821
        %v7326 = vpack.c.b16 %v6831, %v6822
        %v7327 = vpack.c.b16 %v6832, %v6823
        %v7328 = vpack.c.b16 %v6842, %v6833
        %v7329 = vpack.c.b16 %v6843, %v6834
        %v7330 = vpack.c.b16 %v6844, %v6835
        %v7331 = vpack.c.b16 %v6845, %v6836
        %v7332 = vpack.c.b16 %v6846, %v6837
        %v7333 = vpack.c.b16 %v6847, %v6838
        %v7334 = vpack.c.b16 %v6848, %v6839
        %v7335 = vpack.c.b16 %v6849, %v6840
        %v7336 = vpack.c.b16 %v6850, %v6841
        %v7337 = vpack.c.b16 %v6860, %v6851
        %v7338 = vpack.c.b16 %v6861, %v6852
        %v7339 = vpack.c.b16 %v6862, %v6853
        %v7340 = vpack.c.b16 %v6863, %v6854
        %v7341 = vpack.c.b16 %v6864, %v6855
        %v7342 = vpack.c.b16 %v6865, %v6856
        %v7343 = vpack.c.b16 %v6866, %v6857
        %v7344 = vpack.c.b16 %v6867, %v6858
        %v7345 = vpack.c.b16 %v6868, %v6859
        %v7346 = vpack.c.b16 %v6878, %v6869
        %v7347 = vpack.c.b16 %v6879, %v6870
        %v7348 = vpack.c.b16 %v6880, %v6871
        %v7349 = vpack.c.b16 %v6881, %v6872
        %v7350 = vpack.c.b16 %v6882, %v6873
        %v7351 = vpack.c.b16 %v6883, %v6874
        %v7352 = vpack.c.b16 %v6884, %v6875
        %v7353 = vpack.c.b16 %v6885, %v6876
        %v7354 = vpack.c.b16 %v6886, %v6877
        %v7355 = vpack.c.b16 %v6896, %v6887
        %v7356 = vpack.c.b16 %v6897, %v6888
        %v7357 = vpack.c.b16 %v6898, %v6889
        %v7358 = vpack.c.b16 %v6899, %v6890
        %v7359 = vpack.c.b16 %v6900, %v6891
        %v7360 = vpack.c.b16 %v6901, %v6892
        %v7361 = vpack.c.b16 %v6902, %v6893
        %v7362 = vpack.c.b16 %v6903, %v6894
        %v7363 = vpack.c.b16 %v6904, %v6895
        %v7364 = vpack.c.b16 %v6914, %v6905
        %v7365 = vpack.c.b16 %v6915, %v6906
        %v7366 = vpack.c.b16 %v6916, %v6907
        %v7367 = vpack.c.b16 %v6917, %v6908
        %v7368 = vpack.c.b16 %v6918, %v6909
        %v7369 = vpack.c.b16 %v6919, %v6910
        %v7370 = vpack.c.b16 %v6920, %v6911
        %v7371 = vpack.c.b16 %v6921, %v6912
        %v7372 = vpack.c.b16 %v6922, %v6913
        %v7373 = vpack.c.b16 %v6932, %v6923
        %v7374 = vpack.c.b16 %v6933, %v6924
        %v7375 = vpack.c.b16 %v6934, %v6925
        %v7376 = vpack.c.b16 %v6935, %v6926
        %v7377 = vpack.c.b16 %v6936, %v6927
        %v7378 = vpack.c.b16 %v6937, %v6928
        %v7379 = vpack.c.b16 %v6938, %v6929
        %v7380 = vpack.c.b16 %v6939, %v6930
        %v7381 = vpack.c.b16 %v6940, %v6931
        %v7382 = vpack.c.b16 %v6950, %v6941
        %v7383 = vpack.c.b16 %v6951, %v6942
        %v7384 = vpack.c.b16 %v6952, %v6943
        %v7385 = vpack.c.b16 %v6953, %v6944
        %v7386 = vpack.c.b16 %v6954, %v6945
        %v7387 = vpack.c.b16 %v6955, %v6946
        %v7388 = vpack.c.b16 %v6956, %v6947
        %v7389 = vpack.c.b16 %v6957, %v6948
        %v7390 = vpack.c.b16 %v6958, %v6949
        %v7391 = vpack.c.b16 %v6968, %v6959
        %v7392 = vpack.c.b16 %v6969, %v6960
        %v7393 = vpack.c.b16 %v6970, %v6961
        %v7394 = vpack.c.b16 %v6971, %v6962
        %v7395 = vpack.c.b16 %v6972, %v6963
        %v7396 = vpack.c.b16 %v6973, %v6964
        %v7397 = vpack.c.b16 %v6974, %v6965
        %v7398 = vpack.c.b16 %v6975, %v6966
        %v7399 = vpack.c.b16 %v6976, %v6967
        %v7400 = vpack.c.b16 %v6986, %v6977
        %v7401 = vpack.c.b16 %v6987, %v6978
        %v7402 = vpack.c.b16 %v6988, %v6979
        %v7403 = vpack.c.b16 %v6989, %v6980
        %v7404 = vpack.c.b16 %v6990, %v6981
        %v7405 = vpack.c.b16 %v6991, %v6982
        %v7406 = vpack.c.b16 %v6992, %v6983
        %v7407 = vpack.c.b16 %v6993, %v6984
        %v7408 = vpack.c.b16 %v6994, %v6985
        %v7409 = vpack.c.b16 %v7004, %v6995
        %v7410 = vpack.c.b16 %v7005, %v6996
        %v7411 = vpack.c.b16 %v7006, %v6997
        %v7412 = vpack.c.b16 %v7007, %v6998
        %v7413 = vpack.c.b16 %v7008, %v6999
        %v7414 = vpack.c.b16 %v7009, %v7000
        %v7415 = vpack.c.b16 %v7010, %v7001
        %v7416 = vpack.c.b16 %v7011, %v7002
        %v7417 = vpack.c.b16 %v7012, %v7003
        %v7418 = vpack.c.b16 %v7022, %v7013
        %v7419 = vpack.c.b16 %v7023, %v7014
        %v7420 = vpack.c.b16 %v7024, %v7015
        %v7421 = vpack.c.b16 %v7025, %v7016
        %v7422 = vpack.c.b16 %v7026, %v7017
        %v7423 = vpack.c.b16 %v7027, %v7018
        %v7424 = vpack.c.b16 %v7028, %v7019
        %v7425 = vpack.c.b16 %v7029, %v7020
        %v7426 = vpack.c.b16 %v7030, %v7021
        %v7427 = vpack.c.b16 %v7040, %v7031
        %v7428 = vpack.c.b16 %v7041, %v7032
        %v7429 = vpack.c.b16 %v7042, %v7033
        %v7430 = vpack.c.b16 %v7043, %v7034
        %v7431 = vpack.c.b16 %v7044, %v7035
        %v7432 = vpack.c.b16 %v7045, %v7036
        %v7433 = vpack.c.b16 %v7046, %v7037
        %v7434 = vpack.c.b16 %v7047, %v7038
        %v7435 = vpack.c.b16 %v7048, %v7039
        %v7436 = vpack.c.b16 %v7058, %v7049
        %v7437 = vpack.c.b16 %v7059, %v7050
        %v7438 = vpack.c.b16 %v7060, %v7051
        %v7439 = vpack.c.b16 %v7061, %v7052
        %v7440 = vpack.c.b16 %v7062, %v7053
        %v7441 = vpack.c.b16 %v7063, %v7054
        %v7442 = vpack.c.b16 %v7064, %v7055
        %v7443 = vpack.c.b16 %v7065, %v7056
        %v7444 = vpack.c.b16 %v7066, %v7057
        %v7445 = vpack.c.b16 %v7076, %v7067
        %v7446 = vpack.c.b16 %v7077, %v7068
        %v7447 = vpack.c.b16 %v7078, %v7069
        %v7448 = vpack.c.b16 %v7079, %v7070
        %v7449 = vpack.c.b16 %v7080, %v7071
        %v7450 = vpack.c.b16 %v7081, %v7072
        %v7451 = vpack.c.b16 %v7082, %v7073
        %v7452 = vpack.c.b16 %v7083, %v7074
        %v7453 = vpack.c.b16 %v7084, %v7075
        %v7454 = vpack.c.b16 %v7094, %v7085
        %v7455 = vpack.c.b16 %v7095, %v7086
        %v7456 = vpack.c.b16 %v7096, %v7087
        %v7457 = vpack.c.b16 %v7097, %v7088
        %v7458 = vpack.c.b16 %v7098, %v7089
        %v7459 = vpack.c.b16 %v7099, %v7090
        %v7460 = vpack.c.b16 %v7100, %v7091
        %v7461 = vpack.c.b16 %v7101, %v7092
        %v7462 = vpack.c.b16 %v7102, %v7093
        %v7463 = vpack.c.b16 %v7112, %v7103
        %v7464 = vpack.c.b16 %v7113, %v7104
        %v7465 = vpack.c.b16 %v7114, %v7105
        %v7466 = vpack.c.b16 %v7115, %v7106
        %v7467 = vpack.c.b16 %v7116, %v7107
        %v7468 = vpack.c.b16 %v7117, %v7108
        %v7469 = vpack.c.b16 %v7118, %v7109
        %v7470 = vpack.c.b16 %v7119, %v7110
        %v7471 = vpack.c.b16 %v7120, %v7111
        %v7472 = vpack.c.b16 %v7130, %v7121
        %v7473 = vpack.c.b16 %v7131, %v7122
        %v7474 = vpack.c.b16 %v7132, %v7123
        %v7475 = vpack.c.b16 %v7133, %v7124
        %v7476 = vpack.c.b16 %v7134, %v7125
        %v7477 = vpack.c.b16 %v7135, %v7126
        %v7478 = vpack.c.b16 %v7136, %v7127
        %v7479 = vpack.c.b16 %v7137, %v7128
        %v7480 = vpack.c.b16 %v7138, %v7129
        %v7481 = vpack.c.b16 %v7148, %v7139
        %v7482 = vpack.c.b16 %v7149, %v7140
        %v7483 = vpack.c.b16 %v7150, %v7141
        %v7484 = vpack.c.b16 %v7151, %v7142
        %v7485 = vpack.c.b16 %v7152, %v7143
        %v7486 = vpack.c.b16 %v7153, %v7144
        %v7487 = vpack.c.b16 %v7154, %v7145
        %v7488 = vpack.c.b16 %v7155, %v7146
        %v7489 = vpack.c.b16 %v7156, %v7147
        %v7490 = vpack.c.b16 %v7166, %v7157
        %v7491 = vpack.c.b16 %v7167, %v7158
        %v7492 = vpack.c.b16 %v7168, %v7159
        %v7493 = vpack.c.b16 %v7169, %v7160
        %v7494 = vpack.c.b16 %v7170, %v7161
        %v7495 = vpack.c.b16 %v7171, %v7162
        %v7496 = vpack.c.b16 %v7172, %v7163
        %v7497 = vpack.c.b16 %v7173, %v7164
        %v7498 = vpack.c.b16 %v7174, %v7165
        %v7499 = vpack.c.b16 %v7184, %v7175
        %v7500 = vpack.c.b16 %v7185, %v7176
        %v7501 = vpack.c.b16 %v7186, %v7177
        %v7502 = vpack.c.b16 %v7187, %v7178
        %v7503 = vpack.c.b16 %v7188, %v7179
        %v7504 = vpack.c.b16 %v7189, %v7180
        %v7505 = vpack.c.b16 %v7190, %v7181
        %v7506 = vpack.c.b16 %v7191, %v7182
        %v7507 = vpack.c.b16 %v7192, %v7183
        %v7508 = vpack.c.b16 %v7202, %v7193
        %v7509 = vpack.c.b16 %v7203, %v7194
        %v7510 = vpack.c.b16 %v7204, %v7195
        %v7511 = vpack.c.b16 %v7205, %v7196
        %v7512 = vpack.c.b16 %v7206, %v7197
        %v7513 = vpack.c.b16 %v7207, %v7198
        %v7514 = vpack.c.b16 %v7208, %v7199
        %v7515 = vpack.c.b16 %v7209, %v7200
        %v7516 = vpack.c.b16 %v7210, %v7201
        %v7517 = vpack.c.b16 %v7220, %v7211
        %v7518 = vpack.c.b16 %v7221, %v7212
        %v7519 = vpack.c.b16 %v7222, %v7213
        %v7520 = vpack.c.b16 %v7223, %v7214
        %v7521 = vpack.c.b16 %v7224, %v7215
        %v7522 = vpack.c.b16 %v7225, %v7216
        %v7523 = vpack.c.b16 %v7226, %v7217
        %v7524 = vpack.c.b16 %v7227, %v7218
        %v7525 = vpack.c.b16 %v7228, %v7219
        %v7526 = vpack.c.b16 %v7238, %v7229
        %v7527 = vpack.c.b16 %v7239, %v7230
        %v7528 = vpack.c.b16 %v7240, %v7231
        %v7529 = vpack.c.b16 %v7241, %v7232
        %v7530 = vpack.c.b16 %v7242, %v7233
        %v7531 = vpack.c.b16 %v7243, %v7234
        %v7532 = vpack.c.b16 %v7244, %v7235
        %v7533 = vpack.c.b16 %v7245, %v7236
        %v7534 = vpack.c.b16 %v7246, %v7237
        %v7967 = vunpack.c.l.b16 %v6203
        %v7968 = vunpack.c.l.b16 %v6204
        %v7969 = vunpack.c.l.b16 %v6205
        %v7970 = vunpack.c.l.b16 %v6206
        %v7971 = vunpack.c.l.b16 %v6207
        %v7972 = vunpack.c.l.b16 %v6208
        %v7973 = vunpack.c.l.b16 %v6209
        %v7974 = vunpack.c.l.b16 %v6210
        %v7975 = vunpack.c.l.b16 %v6211
        %v7976 = vunpack.c.l.b16 %v6212
        %v7977 = vunpack.c.l.b16 %v6213
        %v7978 = vunpack.c.l.b16 %v6214
        %v7979 = vunpack.c.l.b16 %v6215
        %v7980 = vunpack.c.l.b16 %v6216
        %v7981 = vunpack.c.l.b16 %v6217
        %v7982 = vunpack.c.l.b16 %v6218
        %v7983 = vunpack.c.l.b16 %v6219
        %v7984 = vunpack.c.l.b16 %v6220
        %v7985 = vunpack.c.l.b16 %v6221
        %v7986 = vunpack.c.l.b16 %v6222
        %v7987 = vunpack.c.l.b16 %v6223
        %v7988 = vunpack.c.l.b16 %v6224
        %v7989 = vunpack.c.l.b16 %v6225
        %v7990 = vunpack.c.l.b16 %v6226
        %v7991 = vunpack.c.l.b16 %v6227
        %v7992 = vunpack.c.l.b16 %v6228
        %v7993 = vunpack.c.l.b16 %v6229
        %v7994 = vunpack.c.l.b16 %v6230
        %v7995 = vunpack.c.l.b16 %v6231
        %v7996 = vunpack.c.l.b16 %v6232
        %v7997 = vunpack.c.l.b16 %v6233
        %v7998 = vunpack.c.l.b16 %v6234
        %v7999 = vunpack.c.l.b16 %v6235
        %v8000 = vunpack.c.l.b16 %v6236
        %v8001 = vunpack.c.l.b16 %v6237
        %v8002 = vunpack.c.l.b16 %v6238
        %v8003 = vunpack.c.l.b16 %v6239
        %v8004 = vunpack.c.l.b16 %v6240
        %v8005 = vunpack.c.l.b16 %v6241
        %v8006 = vunpack.c.l.b16 %v6242
        %v8007 = vunpack.c.l.b16 %v6243
        %v8008 = vunpack.c.l.b16 %v6244
        %v8009 = vunpack.c.l.b16 %v6245
        %v8010 = vunpack.c.l.b16 %v6246
        %v8011 = vunpack.c.l.b16 %v6247
        %v8012 = vunpack.c.l.b16 %v6248
        %v8013 = vunpack.c.l.b16 %v6249
        %v8014 = vunpack.c.l.b16 %v6250
        %v8015 = vunpack.c.l.b16 %v6251
        %v8016 = vunpack.c.l.b16 %v6252
        %v8017 = vunpack.c.l.b16 %v6253
        %v8018 = vunpack.c.l.b16 %v6254
        %v8019 = vunpack.c.l.b16 %v6255
        %v8020 = vunpack.c.l.b16 %v6256
        %v8021 = vunpack.c.l.b16 %v6257
        %v8022 = vunpack.c.l.b16 %v6258
        %v8023 = vunpack.c.l.b16 %v6259
        %v8024 = vunpack.c.l.b16 %v6260
        %v8025 = vunpack.c.l.b16 %v6261
        %v8026 = vunpack.c.l.b16 %v6262
        %v8027 = vunpack.c.l.b16 %v6263
        %v8028 = vunpack.c.l.b16 %v6264
        %v8029 = vunpack.c.l.b16 %v6265
        %v8030 = vunpack.c.l.b16 %v6266
        %v8031 = vunpack.c.l.b16 %v6267
        %v8032 = vunpack.c.l.b16 %v6268
        %v8033 = vunpack.c.l.b16 %v6269
        %v8034 = vunpack.c.l.b16 %v6270
        %v8035 = vunpack.c.l.b16 %v6271
        %v8036 = vunpack.c.l.b16 %v6272
        %v8037 = vunpack.c.l.b16 %v6273
        %v8038 = vunpack.c.l.b16 %v6274
        %v8039 = vunpack.c.l.b16 %v6275
        %v8040 = vunpack.c.l.b16 %v6276
        %v8041 = vunpack.c.l.b16 %v6277
        %v8042 = vunpack.c.l.b16 %v6278
        %v8043 = vunpack.c.l.b16 %v6279
        %v8044 = vunpack.c.l.b16 %v6280
        %v8045 = vunpack.c.l.b16 %v6281
        %v8046 = vunpack.c.l.b16 %v6282
        %v8047 = vunpack.c.l.b16 %v6283
        %v8048 = vunpack.c.l.b16 %v6284
        %v8049 = vunpack.c.l.b16 %v6285
        %v8050 = vunpack.c.l.b16 %v6286
        %v8051 = vunpack.c.l.b16 %v6287
        %v8052 = vunpack.c.l.b16 %v6288
        %v8053 = vunpack.c.l.b16 %v6289
        %v8054 = vunpack.c.l.b16 %v6290
        %v8055 = vunpack.c.l.b16 %v6291
        %v8056 = vunpack.c.l.b16 %v6292
        %v8057 = vunpack.c.l.b16 %v6293
        %v8058 = vunpack.c.l.b16 %v6294
        %v8059 = vunpack.c.l.b16 %v6295
        %v8060 = vunpack.c.l.b16 %v6296
        %v8061 = vunpack.c.l.b16 %v6297
        %v8062 = vunpack.c.l.b16 %v6298
        %v8063 = vunpack.c.l.b16 %v6299
        %v8064 = vunpack.c.l.b16 %v6300
        %v8065 = vunpack.c.l.b16 %v6301
        %v8066 = vunpack.c.l.b16 %v6302
        %v8067 = vunpack.c.l.b16 %v6303
        %v8068 = vunpack.c.l.b16 %v6304
        %v8069 = vunpack.c.l.b16 %v6305
        %v8070 = vunpack.c.l.b16 %v6306
        %v8071 = vunpack.c.l.b16 %v6307
        %v8072 = vunpack.c.l.b16 %v6308
        %v8073 = vunpack.c.l.b16 %v6309
        %v8074 = vunpack.c.l.b16 %v6310
        %v8075 = vunpack.c.l.b16 %v6311
        %v8076 = vunpack.c.l.b16 %v6312
        %v8077 = vunpack.c.l.b16 %v6313
        %v8078 = vunpack.c.l.b16 %v6314
        %v8079 = vunpack.c.l.b16 %v6315
        %v8080 = vunpack.c.l.b16 %v6316
        %v8081 = vunpack.c.l.b16 %v6317
        %v8082 = vunpack.c.l.b16 %v6318
        %v8083 = vunpack.c.l.b16 %v6319
        %v8084 = vunpack.c.l.b16 %v6320
        %v8085 = vunpack.c.l.b16 %v6321
        %v8086 = vunpack.c.l.b16 %v6322
        %v8087 = vunpack.c.l.b16 %v6323
        %v8088 = vunpack.c.l.b16 %v6324
        %v8089 = vunpack.c.l.b16 %v6325
        %v8090 = vunpack.c.l.b16 %v6326
        %v8091 = vunpack.c.l.b16 %v6327
        %v8092 = vunpack.c.l.b16 %v6328
        %v8093 = vunpack.c.l.b16 %v6329
        %v8094 = vunpack.c.l.b16 %v6330
        %v8095 = vunpack.c.l.b16 %v6331
        %v8096 = vunpack.c.l.b16 %v6332
        %v8097 = vunpack.c.l.b16 %v6333
        %v8098 = vunpack.c.l.b16 %v6334
        %v8099 = vunpack.c.l.b16 %v6335
        %v8100 = vunpack.c.l.b16 %v6336
        %v8101 = vunpack.c.l.b16 %v6337
        %v8102 = vunpack.c.l.b16 %v6338
        %v8103 = vunpack.c.l.b16 %v6339
        %v8104 = vunpack.c.l.b16 %v6340
        %v8105 = vunpack.c.l.b16 %v6341
        %v8106 = vunpack.c.l.b16 %v6342
        %v8107 = vunpack.c.l.b16 %v6343
        %v8108 = vunpack.c.l.b16 %v6344
        %v8109 = vunpack.c.l.b16 %v6345
        %v8110 = vunpack.c.l.b16 %v6346
        %v8111 = vpack.c.b16 %v7968, %v7967
        %v8112 = vpack.c.b16 %v7970, %v7969
        %v8113 = vpack.c.b16 %v7972, %v7971
        %v8114 = vpack.c.b16 %v7974, %v7973
        %v8115 = vpack.c.b16 %v7976, %v7975
        %v8116 = vpack.c.b16 %v7978, %v7977
        %v8117 = vpack.c.b16 %v7980, %v7979
        %v8118 = vpack.c.b16 %v7982, %v7981
        %v8119 = vpack.c.b16 %v7984, %v7983
        %v8120 = vpack.c.b16 %v7986, %v7985
        %v8121 = vpack.c.b16 %v7988, %v7987
        %v8122 = vpack.c.b16 %v7990, %v7989
        %v8123 = vpack.c.b16 %v7992, %v7991
        %v8124 = vpack.c.b16 %v7994, %v7993
        %v8125 = vpack.c.b16 %v7996, %v7995
        %v8126 = vpack.c.b16 %v7998, %v7997
        %v8127 = vpack.c.b16 %v8000, %v7999
        %v8128 = vpack.c.b16 %v8002, %v8001
        %v8129 = vpack.c.b16 %v8004, %v8003
        %v8130 = vpack.c.b16 %v8006, %v8005
        %v8131 = vpack.c.b16 %v8008, %v8007
        %v8132 = vpack.c.b16 %v8010, %v8009
        %v8133 = vpack.c.b16 %v8012, %v8011
        %v8134 = vpack.c.b16 %v8014, %v8013
        %v8135 = vpack.c.b16 %v8016, %v8015
        %v8136 = vpack.c.b16 %v8018, %v8017
        %v8137 = vpack.c.b16 %v8020, %v8019
        %v8138 = vpack.c.b16 %v8022, %v8021
        %v8139 = vpack.c.b16 %v8024, %v8023
        %v8140 = vpack.c.b16 %v8026, %v8025
        %v8141 = vpack.c.b16 %v8028, %v8027
        %v8142 = vpack.c.b16 %v8030, %v8029
        %v8143 = vpack.c.b16 %v8032, %v8031
        %v8144 = vpack.c.b16 %v8034, %v8033
        %v8145 = vpack.c.b16 %v8036, %v8035
        %v8146 = vpack.c.b16 %v8038, %v8037
        %v8147 = vpack.c.b16 %v8040, %v8039
        %v8148 = vpack.c.b16 %v8042, %v8041
        %v8149 = vpack.c.b16 %v8044, %v8043
        %v8150 = vpack.c.b16 %v8046, %v8045
        %v8151 = vpack.c.b16 %v8048, %v8047
        %v8152 = vpack.c.b16 %v8050, %v8049
        %v8153 = vpack.c.b16 %v8052, %v8051
        %v8154 = vpack.c.b16 %v8054, %v8053
        %v8155 = vpack.c.b16 %v8056, %v8055
        %v8156 = vpack.c.b16 %v8058, %v8057
        %v8157 = vpack.c.b16 %v8060, %v8059
        %v8158 = vpack.c.b16 %v8062, %v8061
        %v8159 = vpack.c.b16 %v8064, %v8063
        %v8160 = vpack.c.b16 %v8066, %v8065
        %v8161 = vpack.c.b16 %v8068, %v8067
        %v8162 = vpack.c.b16 %v8070, %v8069
        %v8163 = vpack.c.b16 %v8072, %v8071
        %v8164 = vpack.c.b16 %v8074, %v8073
        %v8165 = vpack.c.b16 %v8076, %v8075
        %v8166 = vpack.c.b16 %v8078, %v8077
        %v8167 = vpack.c.b16 %v8080, %v8079
        %v8168 = vpack.c.b16 %v8082, %v8081
        %v8169 = vpack.c.b16 %v8084, %v8083
        %v8170 = vpack.c.b16 %v8086, %v8085
        %v8171 = vpack.c.b16 %v8088, %v8087
        %v8172 = vpack.c.b16 %v8090, %v8089
        %v8173 = vpack.c.b16 %v8092, %v8091
        %v8174 = vpack.c.b16 %v8094, %v8093
        %v8175 = vpack.c.b16 %v8096, %v8095
        %v8176 = vpack.c.b16 %v8098, %v8097
        %v8177 = vpack.c.b16 %v8100, %v8099
        %v8178 = vpack.c.b16 %v8102, %v8101
        %v8179 = vpack.c.b16 %v8104, %v8103
        %v8180 = vpack.c.b16 %v8106, %v8105
        %v8181 = vpack.c.b16 %v8108, %v8107
        %v8182 = vpack.c.b16 %v8110, %v8109
        %8255 = vmatpush.bf16.msra.mxu0 %v8118
        %8256 = vmatpush.bf16.msra.mxu0 %v8117
        %8257 = vmatpush.bf16.msra.mxu0 %v8116
        %8258 = vmatpush.bf16.msra.mxu0 %v8115
        %8259 = vmatpush.bf16.msra.mxu0 %v8114
        %8260 = vmatpush.bf16.msra.mxu0 %v8113
        %8261 = vmatpush.bf16.msra.mxu0 %v8112
        %8262 = vmatpush.bf16.msra.mxu0 %v8111
        %8263 = vmatmul.bf16.gmra.mxu0 %v7247
        %v8264 = vpop.f32.mrf.mxu0
        %v8265 = vadd.f32 %v6349, %v8264
        %v8266 = vpop.f32.mrf.mxu0
        %v8267 = vadd.f32 %v6349, %v8266
        %8268 = vmatmul.bf16.gmra.mxu0 %v7256
        %v8269 = vpop.f32.mrf.mxu0
        %v8270 = vadd.f32 %v6349, %v8269
        %v8271 = vpop.f32.mrf.mxu0
        %v8272 = vadd.f32 %v6349, %v8271
        %8273 = vmatmul.bf16.gmra.mxu0 %v7265
        %v8274 = vpop.f32.mrf.mxu0
        %v8275 = vadd.f32 %v6349, %v8274
        %v8276 = vpop.f32.mrf.mxu0
        %v8277 = vadd.f32 %v6349, %v8276
        %8278 = vmatmul.bf16.gmra.mxu0 %v7274
        %v8279 = vpop.f32.mrf.mxu0
        %v8280 = vadd.f32 %v6349, %v8279
        %v8281 = vpop.f32.mrf.mxu0
        %v8282 = vadd.f32 %v6349, %v8281
        %8283 = vmatmul.bf16.gmra.mxu0 %v7283
        %v8284 = vpop.f32.mrf.mxu0
        %v8285 = vadd.f32 %v6349, %v8284
        %v8286 = vpop.f32.mrf.mxu0
        %v8287 = vadd.f32 %v6349, %v8286
        %8288 = vmatmul.bf16.gmra.mxu0 %v7292
        %v8289 = vpop.f32.mrf.mxu0
        %v8290 = vadd.f32 %v6349, %v8289
        %v8291 = vpop.f32.mrf.mxu0
        %v8292 = vadd.f32 %v6349, %v8291
        %8293 = vmatmul.bf16.gmra.mxu0 %v7301
        %v8294 = vpop.f32.mrf.mxu0
        %v8295 = vadd.f32 %v6349, %v8294
        %v8296 = vpop.f32.mrf.mxu0
        %v8297 = vadd.f32 %v6349, %v8296
        %8298 = vmatmul.bf16.gmra.mxu0 %v7310
        %v8299 = vpop.f32.mrf.mxu0
        %v8300 = vadd.f32 %v6349, %v8299
        %v8301 = vpop.f32.mrf.mxu0
        %v8302 = vadd.f32 %v6349, %v8301
        %8303 = vmatmul.bf16.gmra.mxu0 %v7319
        %v8304 = vpop.f32.mrf.mxu0
        %v8305 = vadd.f32 %v6349, %v8304
        %v8306 = vpop.f32.mrf.mxu0
        %v8307 = vadd.f32 %v6349, %v8306
        %8308 = vmatmul.bf16.gmra.mxu0 %v7328
        %v8309 = vpop.f32.mrf.mxu0
        %v8310 = vadd.f32 %v6349, %v8309
        %v8311 = vpop.f32.mrf.mxu0
        %v8312 = vadd.f32 %v6349, %v8311
        %8313 = vmatmul.bf16.gmra.mxu0 %v7337
        %v8314 = vpop.f32.mrf.mxu0
        %v8315 = vadd.f32 %v6349, %v8314
        %v8316 = vpop.f32.mrf.mxu0
        %v8317 = vadd.f32 %v6349, %v8316
        %8318 = vmatmul.bf16.gmra.mxu0 %v7346
        %v8319 = vpop.f32.mrf.mxu0
        %v8320 = vadd.f32 %v6349, %v8319
        %v8321 = vpop.f32.mrf.mxu0
        %v8322 = vadd.f32 %v6349, %v8321
        %8323 = vmatmul.bf16.gmra.mxu0 %v7355
        %v8324 = vpop.f32.mrf.mxu0
        %v8325 = vadd.f32 %v6349, %v8324
        %v8326 = vpop.f32.mrf.mxu0
        %v8327 = vadd.f32 %v6349, %v8326
        %8328 = vmatmul.bf16.gmra.mxu0 %v7364
        %v8329 = vpop.f32.mrf.mxu0
        %v8330 = vadd.f32 %v6349, %v8329
        %v8331 = vpop.f32.mrf.mxu0
        %v8332 = vadd.f32 %v6349, %v8331
        %8333 = vmatmul.bf16.gmra.mxu0 %v7373
        %v8334 = vpop.f32.mrf.mxu0
        %v8335 = vadd.f32 %v6349, %v8334
        %v8336 = vpop.f32.mrf.mxu0
        %v8337 = vadd.f32 %v6349, %v8336
        %8338 = vmatmul.bf16.gmra.mxu0 %v7382
        %v8339 = vpop.f32.mrf.mxu0
        %v8340 = vadd.f32 %v6349, %v8339
        %v8341 = vpop.f32.mrf.mxu0
        %v8342 = vadd.f32 %v6349, %v8341
        %8343 = vmatmul.bf16.gmra.mxu0 %v7391
        %v8344 = vpop.f32.mrf.mxu0
        %v8345 = vadd.f32 %v6349, %v8344
        %v8346 = vpop.f32.mrf.mxu0
        %v8347 = vadd.f32 %v6349, %v8346
        %8348 = vmatmul.bf16.gmra.mxu0 %v7400
        %v8349 = vpop.f32.mrf.mxu0
        %v8350 = vadd.f32 %v6349, %v8349
        %v8351 = vpop.f32.mrf.mxu0
        %v8352 = vadd.f32 %v6349, %v8351
        %8353 = vmatmul.bf16.gmra.mxu0 %v7409
        %v8354 = vpop.f32.mrf.mxu0
        %v8355 = vadd.f32 %v6349, %v8354
        %v8356 = vpop.f32.mrf.mxu0
        %v8357 = vadd.f32 %v6349, %v8356
        %8358 = vmatmul.bf16.gmra.mxu0 %v7418
        %v8359 = vpop.f32.mrf.mxu0
        %v8360 = vadd.f32 %v6349, %v8359
        %v8361 = vpop.f32.mrf.mxu0
        %v8362 = vadd.f32 %v6349, %v8361
        %8363 = vmatmul.bf16.gmra.mxu0 %v7427
        %v8364 = vpop.f32.mrf.mxu0
        %v8365 = vadd.f32 %v6349, %v8364
        %v8366 = vpop.f32.mrf.mxu0
        %v8367 = vadd.f32 %v6349, %v8366
        %8368 = vmatmul.bf16.gmra.mxu0 %v7436
        %v8369 = vpop.f32.mrf.mxu0
        %v8370 = vadd.f32 %v6349, %v8369
        %v8371 = vpop.f32.mrf.mxu0
        %v8372 = vadd.f32 %v6349, %v8371
        %8373 = vmatmul.bf16.gmra.mxu0 %v7445
        %v8374 = vpop.f32.mrf.mxu0
        %v8375 = vadd.f32 %v6349, %v8374
        %v8376 = vpop.f32.mrf.mxu0
        %v8377 = vadd.f32 %v6349, %v8376
        %8378 = vmatmul.bf16.gmra.mxu0 %v7454
        %v8379 = vpop.f32.mrf.mxu0
        %v8380 = vadd.f32 %v6349, %v8379
        %v8381 = vpop.f32.mrf.mxu0
        %v8382 = vadd.f32 %v6349, %v8381
        %8383 = vmatmul.bf16.gmra.mxu0 %v7463
        %v8384 = vpop.f32.mrf.mxu0
        %v8385 = vadd.f32 %v6349, %v8384
        %v8386 = vpop.f32.mrf.mxu0
        %v8387 = vadd.f32 %v6349, %v8386
        %8388 = vmatmul.bf16.gmra.mxu0 %v7472
        %v8389 = vpop.f32.mrf.mxu0
        %v8390 = vadd.f32 %v6349, %v8389
        %v8391 = vpop.f32.mrf.mxu0
        %v8392 = vadd.f32 %v6349, %v8391
        %8393 = vmatmul.bf16.gmra.mxu0 %v7481
        %v8394 = vpop.f32.mrf.mxu0
        %v8395 = vadd.f32 %v6349, %v8394
        %v8396 = vpop.f32.mrf.mxu0
        %v8397 = vadd.f32 %v6349, %v8396
        %8398 = vmatmul.bf16.gmra.mxu0 %v7490
        %v8399 = vpop.f32.mrf.mxu0
        %v8400 = vadd.f32 %v6349, %v8399
        %v8401 = vpop.f32.mrf.mxu0
        %v8402 = vadd.f32 %v6349, %v8401
        %8403 = vmatmul.bf16.gmra.mxu0 %v7499
        %v8404 = vpop.f32.mrf.mxu0
        %v8405 = vadd.f32 %v6349, %v8404
        %v8406 = vpop.f32.mrf.mxu0
        %v8407 = vadd.f32 %v6349, %v8406
        %8408 = vmatmul.bf16.gmra.mxu0 %v7508
        %v8409 = vpop.f32.mrf.mxu0
        %v8410 = vadd.f32 %v6349, %v8409
        %v8411 = vpop.f32.mrf.mxu0
        %v8412 = vadd.f32 %v6349, %v8411
        %8413 = vmatmul.bf16.gmra.mxu0 %v7517
        %v8414 = vpop.f32.mrf.mxu0
        %v8415 = vadd.f32 %v6349, %v8414
        %v8416 = vpop.f32.mrf.mxu0
        %v8417 = vadd.f32 %v6349, %v8416
        %8418 = vmatmul.bf16.gmra.mxu0 %v7526
        %v8419 = vpop.f32.mrf.mxu0
        %v8420 = vadd.f32 %v6349, %v8419
        %v8421 = vpop.f32.mrf.mxu0
        %v8422 = vadd.f32 %v6349, %v8421
        %8423 = vdwg.mxu0
        %8424 = vmatpush.bf16.msra.mxu0 %v8126
        %8425 = vmatpush.bf16.msra.mxu0 %v8125
        %8426 = vmatpush.bf16.msra.mxu0 %v8124
        %8427 = vmatpush.bf16.msra.mxu0 %v8123
        %8428 = vmatpush.bf16.msra.mxu0 %v8122
        %8429 = vmatpush.bf16.msra.mxu0 %v8121
        %8430 = vmatpush.bf16.msra.mxu0 %v8120
        %8431 = vmatpush.bf16.msra.mxu0 %v8119
        %8432 = vmatmul.bf16.gmra.mxu0 %v7248
        %v8433 = vpop.f32.mrf.mxu0
        %v8434 = vadd.f32 %v8265, %v8433
        %v8435 = vpop.f32.mrf.mxu0
        %v8436 = vadd.f32 %v8267, %v8435
        %8437 = vmatmul.bf16.gmra.mxu0 %v7257
        %v8438 = vpop.f32.mrf.mxu0
        %v8439 = vadd.f32 %v8270, %v8438
        %v8440 = vpop.f32.mrf.mxu0
        %v8441 = vadd.f32 %v8272, %v8440
        %8442 = vmatmul.bf16.gmra.mxu0 %v7266
        %v8443 = vpop.f32.mrf.mxu0
        %v8444 = vadd.f32 %v8275, %v8443
        %v8445 = vpop.f32.mrf.mxu0
        %v8446 = vadd.f32 %v8277, %v8445
        %8447 = vmatmul.bf16.gmra.mxu0 %v7275
        %v8448 = vpop.f32.mrf.mxu0
        %v8449 = vadd.f32 %v8280, %v8448
        %v8450 = vpop.f32.mrf.mxu0
        %v8451 = vadd.f32 %v8282, %v8450
        %8452 = vmatmul.bf16.gmra.mxu0 %v7284
        %v8453 = vpop.f32.mrf.mxu0
        %v8454 = vadd.f32 %v8285, %v8453
        %v8455 = vpop.f32.mrf.mxu0
        %v8456 = vadd.f32 %v8287, %v8455
        %8457 = vmatmul.bf16.gmra.mxu0 %v7293
        %v8458 = vpop.f32.mrf.mxu0
        %v8459 = vadd.f32 %v8290, %v8458
        %v8460 = vpop.f32.mrf.mxu0
        %v8461 = vadd.f32 %v8292, %v8460
        %8462 = vmatmul.bf16.gmra.mxu0 %v7302
        %v8463 = vpop.f32.mrf.mxu0
        %v8464 = vadd.f32 %v8295, %v8463
        %v8465 = vpop.f32.mrf.mxu0
        %v8466 = vadd.f32 %v8297, %v8465
        %8467 = vmatmul.bf16.gmra.mxu0 %v7311
        %v8468 = vpop.f32.mrf.mxu0
        %v8469 = vadd.f32 %v8300, %v8468
        %v8470 = vpop.f32.mrf.mxu0
        %v8471 = vadd.f32 %v8302, %v8470
        %8472 = vmatmul.bf16.gmra.mxu0 %v7320
        %v8473 = vpop.f32.mrf.mxu0
        %v8474 = vadd.f32 %v8305, %v8473
        %v8475 = vpop.f32.mrf.mxu0
        %v8476 = vadd.f32 %v8307, %v8475
        %8477 = vmatmul.bf16.gmra.mxu0 %v7329
        %v8478 = vpop.f32.mrf.mxu0
        %v8479 = vadd.f32 %v8310, %v8478
        %v8480 = vpop.f32.mrf.mxu0
        %v8481 = vadd.f32 %v8312, %v8480
        %8482 = vmatmul.bf16.gmra.mxu0 %v7338
        %v8483 = vpop.f32.mrf.mxu0
        %v8484 = vadd.f32 %v8315, %v8483
        %v8485 = vpop.f32.mrf.mxu0
        %v8486 = vadd.f32 %v8317, %v8485
        %8487 = vmatmul.bf16.gmra.mxu0 %v7347
        %v8488 = vpop.f32.mrf.mxu0
        %v8489 = vadd.f32 %v8320, %v8488
        %v8490 = vpop.f32.mrf.mxu0
        %v8491 = vadd.f32 %v8322, %v8490
        %8492 = vmatmul.bf16.gmra.mxu0 %v7356
        %v8493 = vpop.f32.mrf.mxu0
        %v8494 = vadd.f32 %v8325, %v8493
        %v8495 = vpop.f32.mrf.mxu0
        %v8496 = vadd.f32 %v8327, %v8495
        %8497 = vmatmul.bf16.gmra.mxu0 %v7365
        %v8498 = vpop.f32.mrf.mxu0
        %v8499 = vadd.f32 %v8330, %v8498
        %v8500 = vpop.f32.mrf.mxu0
        %v8501 = vadd.f32 %v8332, %v8500
        %8502 = vmatmul.bf16.gmra.mxu0 %v7374
        %v8503 = vpop.f32.mrf.mxu0
        %v8504 = vadd.f32 %v8335, %v8503
        %v8505 = vpop.f32.mrf.mxu0
        %v8506 = vadd.f32 %v8337, %v8505
        %8507 = vmatmul.bf16.gmra.mxu0 %v7383
        %v8508 = vpop.f32.mrf.mxu0
        %v8509 = vadd.f32 %v8340, %v8508
        %v8510 = vpop.f32.mrf.mxu0
        %v8511 = vadd.f32 %v8342, %v8510
        %8512 = vmatmul.bf16.gmra.mxu0 %v7392
        %v8513 = vpop.f32.mrf.mxu0
        %v8514 = vadd.f32 %v8345, %v8513
        %v8515 = vpop.f32.mrf.mxu0
        %v8516 = vadd.f32 %v8347, %v8515
        %8517 = vmatmul.bf16.gmra.mxu0 %v7401
        %v8518 = vpop.f32.mrf.mxu0
        %v8519 = vadd.f32 %v8350, %v8518
        %v8520 = vpop.f32.mrf.mxu0
        %v8521 = vadd.f32 %v8352, %v8520
        %8522 = vmatmul.bf16.gmra.mxu0 %v7410
        %v8523 = vpop.f32.mrf.mxu0
        %v8524 = vadd.f32 %v8355, %v8523
        %v8525 = vpop.f32.mrf.mxu0
        %v8526 = vadd.f32 %v8357, %v8525
        %8527 = vmatmul.bf16.gmra.mxu0 %v7419
        %v8528 = vpop.f32.mrf.mxu0
        %v8529 = vadd.f32 %v8360, %v8528
        %v8530 = vpop.f32.mrf.mxu0
        %v8531 = vadd.f32 %v8362, %v8530
        %8532 = vmatmul.bf16.gmra.mxu0 %v7428
        %v8533 = vpop.f32.mrf.mxu0
        %v8534 = vadd.f32 %v8365, %v8533
        %v8535 = vpop.f32.mrf.mxu0
        %v8536 = vadd.f32 %v8367, %v8535
        %8537 = vmatmul.bf16.gmra.mxu0 %v7437
        %v8538 = vpop.f32.mrf.mxu0
        %v8539 = vadd.f32 %v8370, %v8538
        %v8540 = vpop.f32.mrf.mxu0
        %v8541 = vadd.f32 %v8372, %v8540
        %8542 = vmatmul.bf16.gmra.mxu0 %v7446
        %v8543 = vpop.f32.mrf.mxu0
        %v8544 = vadd.f32 %v8375, %v8543
        %v8545 = vpop.f32.mrf.mxu0
        %v8546 = vadd.f32 %v8377, %v8545
        %8547 = vmatmul.bf16.gmra.mxu0 %v7455
        %v8548 = vpop.f32.mrf.mxu0
        %v8549 = vadd.f32 %v8380, %v8548
        %v8550 = vpop.f32.mrf.mxu0
        %v8551 = vadd.f32 %v8382, %v8550
        %8552 = vmatmul.bf16.gmra.mxu0 %v7464
        %v8553 = vpop.f32.mrf.mxu0
        %v8554 = vadd.f32 %v8385, %v8553
        %v8555 = vpop.f32.mrf.mxu0
        %v8556 = vadd.f32 %v8387, %v8555
        %8557 = vmatmul.bf16.gmra.mxu0 %v7473
        %v8558 = vpop.f32.mrf.mxu0
        %v8559 = vadd.f32 %v8390, %v8558
        %v8560 = vpop.f32.mrf.mxu0
        %v8561 = vadd.f32 %v8392, %v8560
        %8562 = vmatmul.bf16.gmra.mxu0 %v7482
        %v8563 = vpop.f32.mrf.mxu0
        %v8564 = vadd.f32 %v8395, %v8563
        %v8565 = vpop.f32.mrf.mxu0
        %v8566 = vadd.f32 %v8397, %v8565
        %8567 = vmatmul.bf16.gmra.mxu0 %v7491
        %v8568 = vpop.f32.mrf.mxu0
        %v8569 = vadd.f32 %v8400, %v8568
        %v8570 = vpop.f32.mrf.mxu0
        %v8571 = vadd.f32 %v8402, %v8570
        %8572 = vmatmul.bf16.gmra.mxu0 %v7500
        %v8573 = vpop.f32.mrf.mxu0
        %v8574 = vadd.f32 %v8405, %v8573
        %v8575 = vpop.f32.mrf.mxu0
        %v8576 = vadd.f32 %v8407, %v8575
        %8577 = vmatmul.bf16.gmra.mxu0 %v7509
        %v8578 = vpop.f32.mrf.mxu0
        %v8579 = vadd.f32 %v8410, %v8578
        %v8580 = vpop.f32.mrf.mxu0
        %v8581 = vadd.f32 %v8412, %v8580
        %8582 = vmatmul.bf16.gmra.mxu0 %v7518
        %v8583 = vpop.f32.mrf.mxu0
        %v8584 = vadd.f32 %v8415, %v8583
        %v8585 = vpop.f32.mrf.mxu0
        %v8586 = vadd.f32 %v8417, %v8585
        %8587 = vmatmul.bf16.gmra.mxu0 %v7527
        %v8588 = vpop.f32.mrf.mxu0
        %v8589 = vadd.f32 %v8420, %v8588
        %v8590 = vpop.f32.mrf.mxu0
        %v8591 = vadd.f32 %v8422, %v8590
        %8592 = vdwg.mxu0
        %8593 = vmatpush.bf16.msra.mxu0 %v8134
        %8594 = vmatpush.bf16.msra.mxu0 %v8133
        %8595 = vmatpush.bf16.msra.mxu0 %v8132
        %8596 = vmatpush.bf16.msra.mxu0 %v8131
        %8597 = vmatpush.bf16.msra.mxu0 %v8130
        %8598 = vmatpush.bf16.msra.mxu0 %v8129
        %8599 = vmatpush.bf16.msra.mxu0 %v8128
        %8600 = vmatpush.bf16.msra.mxu0 %v8127
        %8601 = vmatmul.bf16.gmra.mxu0 %v7249
        %v8602 = vpop.f32.mrf.mxu0
        %v8603 = vadd.f32 %v8434, %v8602
        %v8604 = vpop.f32.mrf.mxu0
        %v8605 = vadd.f32 %v8436, %v8604
        %8606 = vmatmul.bf16.gmra.mxu0 %v7258
        %v8607 = vpop.f32.mrf.mxu0
        %v8608 = vadd.f32 %v8439, %v8607
        %v8609 = vpop.f32.mrf.mxu0
        %v8610 = vadd.f32 %v8441, %v8609
        %8611 = vmatmul.bf16.gmra.mxu0 %v7267
        %v8612 = vpop.f32.mrf.mxu0
        %v8613 = vadd.f32 %v8444, %v8612
        %v8614 = vpop.f32.mrf.mxu0
        %v8615 = vadd.f32 %v8446, %v8614
        %8616 = vmatmul.bf16.gmra.mxu0 %v7276
        %v8617 = vpop.f32.mrf.mxu0
        %v8618 = vadd.f32 %v8449, %v8617
        %v8619 = vpop.f32.mrf.mxu0
        %v8620 = vadd.f32 %v8451, %v8619
        %8621 = vmatmul.bf16.gmra.mxu0 %v7285
        %v8622 = vpop.f32.mrf.mxu0
        %v8623 = vadd.f32 %v8454, %v8622
        %v8624 = vpop.f32.mrf.mxu0
        %v8625 = vadd.f32 %v8456, %v8624
        %8626 = vmatmul.bf16.gmra.mxu0 %v7294
        %v8627 = vpop.f32.mrf.mxu0
        %v8628 = vadd.f32 %v8459, %v8627
        %v8629 = vpop.f32.mrf.mxu0
        %v8630 = vadd.f32 %v8461, %v8629
        %8631 = vmatmul.bf16.gmra.mxu0 %v7303
        %v8632 = vpop.f32.mrf.mxu0
        %v8633 = vadd.f32 %v8464, %v8632
        %v8634 = vpop.f32.mrf.mxu0
        %v8635 = vadd.f32 %v8466, %v8634
        %8636 = vmatmul.bf16.gmra.mxu0 %v7312
        %v8637 = vpop.f32.mrf.mxu0
        %v8638 = vadd.f32 %v8469, %v8637
        %v8639 = vpop.f32.mrf.mxu0
        %v8640 = vadd.f32 %v8471, %v8639
        %8641 = vmatmul.bf16.gmra.mxu0 %v7321
        %v8642 = vpop.f32.mrf.mxu0
        %v8643 = vadd.f32 %v8474, %v8642
        %v8644 = vpop.f32.mrf.mxu0
        %v8645 = vadd.f32 %v8476, %v8644
        %8646 = vmatmul.bf16.gmra.mxu0 %v7330
        %v8647 = vpop.f32.mrf.mxu0
        %v8648 = vadd.f32 %v8479, %v8647
        %v8649 = vpop.f32.mrf.mxu0
        %v8650 = vadd.f32 %v8481, %v8649
        %8651 = vmatmul.bf16.gmra.mxu0 %v7339
        %v8652 = vpop.f32.mrf.mxu0
        %v8653 = vadd.f32 %v8484, %v8652
        %v8654 = vpop.f32.mrf.mxu0
        %v8655 = vadd.f32 %v8486, %v8654
        %8656 = vmatmul.bf16.gmra.mxu0 %v7348
        %v8657 = vpop.f32.mrf.mxu0
        %v8658 = vadd.f32 %v8489, %v8657
        %v8659 = vpop.f32.mrf.mxu0
        %v8660 = vadd.f32 %v8491, %v8659
        %8661 = vmatmul.bf16.gmra.mxu0 %v7357
        %v8662 = vpop.f32.mrf.mxu0
        %v8663 = vadd.f32 %v8494, %v8662
        %v8664 = vpop.f32.mrf.mxu0
        %v8665 = vadd.f32 %v8496, %v8664
        %8666 = vmatmul.bf16.gmra.mxu0 %v7366
        %v8667 = vpop.f32.mrf.mxu0
        %v8668 = vadd.f32 %v8499, %v8667
        %v8669 = vpop.f32.mrf.mxu0
        %v8670 = vadd.f32 %v8501, %v8669
        %8671 = vmatmul.bf16.gmra.mxu0 %v7375
        %v8672 = vpop.f32.mrf.mxu0
        %v8673 = vadd.f32 %v8504, %v8672
        %v8674 = vpop.f32.mrf.mxu0
        %v8675 = vadd.f32 %v8506, %v8674
        %8676 = vmatmul.bf16.gmra.mxu0 %v7384
        %v8677 = vpop.f32.mrf.mxu0
        %v8678 = vadd.f32 %v8509, %v8677
        %v8679 = vpop.f32.mrf.mxu0
        %v8680 = vadd.f32 %v8511, %v8679
        %8681 = vmatmul.bf16.gmra.mxu0 %v7393
        %v8682 = vpop.f32.mrf.mxu0
        %v8683 = vadd.f32 %v8514, %v8682
        %v8684 = vpop.f32.mrf.mxu0
        %v8685 = vadd.f32 %v8516, %v8684
        %8686 = vmatmul.bf16.gmra.mxu0 %v7402
        %v8687 = vpop.f32.mrf.mxu0
        %v8688 = vadd.f32 %v8519, %v8687
        %v8689 = vpop.f32.mrf.mxu0
        %v8690 = vadd.f32 %v8521, %v8689
        %8691 = vmatmul.bf16.gmra.mxu0 %v7411
        %v8692 = vpop.f32.mrf.mxu0
        %v8693 = vadd.f32 %v8524, %v8692
        %v8694 = vpop.f32.mrf.mxu0
        %v8695 = vadd.f32 %v8526, %v8694
        %8696 = vmatmul.bf16.gmra.mxu0 %v7420
        %v8697 = vpop.f32.mrf.mxu0
        %v8698 = vadd.f32 %v8529, %v8697
        %v8699 = vpop.f32.mrf.mxu0
        %v8700 = vadd.f32 %v8531, %v8699
        %8701 = vmatmul.bf16.gmra.mxu0 %v7429
        %v8702 = vpop.f32.mrf.mxu0
        %v8703 = vadd.f32 %v8534, %v8702
        %v8704 = vpop.f32.mrf.mxu0
        %v8705 = vadd.f32 %v8536, %v8704
        %8706 = vmatmul.bf16.gmra.mxu0 %v7438
        %v8707 = vpop.f32.mrf.mxu0
        %v8708 = vadd.f32 %v8539, %v8707
        %v8709 = vpop.f32.mrf.mxu0
        %v8710 = vadd.f32 %v8541, %v8709
        %8711 = vmatmul.bf16.gmra.mxu0 %v7447
        %v8712 = vpop.f32.mrf.mxu0
        %v8713 = vadd.f32 %v8544, %v8712
        %v8714 = vpop.f32.mrf.mxu0
        %v8715 = vadd.f32 %v8546, %v8714
        %8716 = vmatmul.bf16.gmra.mxu0 %v7456
        %v8717 = vpop.f32.mrf.mxu0
        %v8718 = vadd.f32 %v8549, %v8717
        %v8719 = vpop.f32.mrf.mxu0
        %v8720 = vadd.f32 %v8551, %v8719
        %8721 = vmatmul.bf16.gmra.mxu0 %v7465
        %v8722 = vpop.f32.mrf.mxu0
        %v8723 = vadd.f32 %v8554, %v8722
        %v8724 = vpop.f32.mrf.mxu0
        %v8725 = vadd.f32 %v8556, %v8724
        %8726 = vmatmul.bf16.gmra.mxu0 %v7474
        %v8727 = vpop.f32.mrf.mxu0
        %v8728 = vadd.f32 %v8559, %v8727
        %v8729 = vpop.f32.mrf.mxu0
        %v8730 = vadd.f32 %v8561, %v8729
        %8731 = vmatmul.bf16.gmra.mxu0 %v7483
        %v8732 = vpop.f32.mrf.mxu0
        %v8733 = vadd.f32 %v8564, %v8732
        %v8734 = vpop.f32.mrf.mxu0
        %v8735 = vadd.f32 %v8566, %v8734
        %8736 = vmatmul.bf16.gmra.mxu0 %v7492
        %v8737 = vpop.f32.mrf.mxu0
        %v8738 = vadd.f32 %v8569, %v8737
        %v8739 = vpop.f32.mrf.mxu0
        %v8740 = vadd.f32 %v8571, %v8739
        %8741 = vmatmul.bf16.gmra.mxu0 %v7501
        %v8742 = vpop.f32.mrf.mxu0
        %v8743 = vadd.f32 %v8574, %v8742
        %v8744 = vpop.f32.mrf.mxu0
        %v8745 = vadd.f32 %v8576, %v8744
        %8746 = vmatmul.bf16.gmra.mxu0 %v7510
        %v8747 = vpop.f32.mrf.mxu0
        %v8748 = vadd.f32 %v8579, %v8747
        %v8749 = vpop.f32.mrf.mxu0
        %v8750 = vadd.f32 %v8581, %v8749
        %8751 = vmatmul.bf16.gmra.mxu0 %v7519
        %v8752 = vpop.f32.mrf.mxu0
        %v8753 = vadd.f32 %v8584, %v8752
        %v8754 = vpop.f32.mrf.mxu0
        %v8755 = vadd.f32 %v8586, %v8754
        %8756 = vmatmul.bf16.gmra.mxu0 %v7528
        %v8757 = vpop.f32.mrf.mxu0
        %v8758 = vadd.f32 %v8589, %v8757
        %v8759 = vpop.f32.mrf.mxu0
        %v8760 = vadd.f32 %v8591, %v8759
        %8761 = vdwg.mxu0
        %8762 = vmatpush.bf16.msra.mxu0 %v8142
        %8763 = vmatpush.bf16.msra.mxu0 %v8141
        %8764 = vmatpush.bf16.msra.mxu0 %v8140
        %8765 = vmatpush.bf16.msra.mxu0 %v8139
        %8766 = vmatpush.bf16.msra.mxu0 %v8138
        %8767 = vmatpush.bf16.msra.mxu0 %v8137
        %8768 = vmatpush.bf16.msra.mxu0 %v8136
        %8769 = vmatpush.bf16.msra.mxu0 %v8135
        %8770 = vmatmul.bf16.gmra.mxu0 %v7250
        %v8771 = vpop.f32.mrf.mxu0
        %v8772 = vadd.f32 %v8603, %v8771
        %v8773 = vpop.f32.mrf.mxu0
        %v8774 = vadd.f32 %v8605, %v8773
        %8775 = vmatmul.bf16.gmra.mxu0 %v7259
        %v8776 = vpop.f32.mrf.mxu0
        %v8777 = vadd.f32 %v8608, %v8776
        %v8778 = vpop.f32.mrf.mxu0
        %v8779 = vadd.f32 %v8610, %v8778
        %8780 = vmatmul.bf16.gmra.mxu0 %v7268
        %v8781 = vpop.f32.mrf.mxu0
        %v8782 = vadd.f32 %v8613, %v8781
        %v8783 = vpop.f32.mrf.mxu0
        %v8784 = vadd.f32 %v8615, %v8783
        %8785 = vmatmul.bf16.gmra.mxu0 %v7277
        %v8786 = vpop.f32.mrf.mxu0
        %v8787 = vadd.f32 %v8618, %v8786
        %v8788 = vpop.f32.mrf.mxu0
        %v8789 = vadd.f32 %v8620, %v8788
        %8790 = vmatmul.bf16.gmra.mxu0 %v7286
        %v8791 = vpop.f32.mrf.mxu0
        %v8792 = vadd.f32 %v8623, %v8791
        %v8793 = vpop.f32.mrf.mxu0
        %v8794 = vadd.f32 %v8625, %v8793
        %8795 = vmatmul.bf16.gmra.mxu0 %v7295
        %v8796 = vpop.f32.mrf.mxu0
        %v8797 = vadd.f32 %v8628, %v8796
        %v8798 = vpop.f32.mrf.mxu0
        %v8799 = vadd.f32 %v8630, %v8798
        %8800 = vmatmul.bf16.gmra.mxu0 %v7304
        %v8801 = vpop.f32.mrf.mxu0
        %v8802 = vadd.f32 %v8633, %v8801
        %v8803 = vpop.f32.mrf.mxu0
        %v8804 = vadd.f32 %v8635, %v8803
        %8805 = vmatmul.bf16.gmra.mxu0 %v7313
        %v8806 = vpop.f32.mrf.mxu0
        %v8807 = vadd.f32 %v8638, %v8806
        %v8808 = vpop.f32.mrf.mxu0
        %v8809 = vadd.f32 %v8640, %v8808
        %8810 = vmatmul.bf16.gmra.mxu0 %v7322
        %v8811 = vpop.f32.mrf.mxu0
        %v8812 = vadd.f32 %v8643, %v8811
        %v8813 = vpop.f32.mrf.mxu0
        %v8814 = vadd.f32 %v8645, %v8813
        %8815 = vmatmul.bf16.gmra.mxu0 %v7331
        %v8816 = vpop.f32.mrf.mxu0
        %v8817 = vadd.f32 %v8648, %v8816
        %v8818 = vpop.f32.mrf.mxu0
        %v8819 = vadd.f32 %v8650, %v8818
        %8820 = vmatmul.bf16.gmra.mxu0 %v7340
        %v8821 = vpop.f32.mrf.mxu0
        %v8822 = vadd.f32 %v8653, %v8821
        %v8823 = vpop.f32.mrf.mxu0
        %v8824 = vadd.f32 %v8655, %v8823
        %8825 = vmatmul.bf16.gmra.mxu0 %v7349
        %v8826 = vpop.f32.mrf.mxu0
        %v8827 = vadd.f32 %v8658, %v8826
        %v8828 = vpop.f32.mrf.mxu0
        %v8829 = vadd.f32 %v8660, %v8828
        %8830 = vmatmul.bf16.gmra.mxu0 %v7358
        %v8831 = vpop.f32.mrf.mxu0
        %v8832 = vadd.f32 %v8663, %v8831
        %v8833 = vpop.f32.mrf.mxu0
        %v8834 = vadd.f32 %v8665, %v8833
        %8835 = vmatmul.bf16.gmra.mxu0 %v7367
        %v8836 = vpop.f32.mrf.mxu0
        %v8837 = vadd.f32 %v8668, %v8836
        %v8838 = vpop.f32.mrf.mxu0
        %v8839 = vadd.f32 %v8670, %v8838
        %8840 = vmatmul.bf16.gmra.mxu0 %v7376
        %v8841 = vpop.f32.mrf.mxu0
        %v8842 = vadd.f32 %v8673, %v8841
        %v8843 = vpop.f32.mrf.mxu0
        %v8844 = vadd.f32 %v8675, %v8843
        %8845 = vmatmul.bf16.gmra.mxu0 %v7385
        %v8846 = vpop.f32.mrf.mxu0
        %v8847 = vadd.f32 %v8678, %v8846
        %v8848 = vpop.f32.mrf.mxu0
        %v8849 = vadd.f32 %v8680, %v8848
        %8850 = vmatmul.bf16.gmra.mxu0 %v7394
        %v8851 = vpop.f32.mrf.mxu0
        %v8852 = vadd.f32 %v8683, %v8851
        %v8853 = vpop.f32.mrf.mxu0
        %v8854 = vadd.f32 %v8685, %v8853
        %8855 = vmatmul.bf16.gmra.mxu0 %v7403
        %v8856 = vpop.f32.mrf.mxu0
        %v8857 = vadd.f32 %v8688, %v8856
        %v8858 = vpop.f32.mrf.mxu0
        %v8859 = vadd.f32 %v8690, %v8858
        %8860 = vmatmul.bf16.gmra.mxu0 %v7412
        %v8861 = vpop.f32.mrf.mxu0
        %v8862 = vadd.f32 %v8693, %v8861
        %v8863 = vpop.f32.mrf.mxu0
        %v8864 = vadd.f32 %v8695, %v8863
        %8865 = vmatmul.bf16.gmra.mxu0 %v7421
        %v8866 = vpop.f32.mrf.mxu0
        %v8867 = vadd.f32 %v8698, %v8866
        %v8868 = vpop.f32.mrf.mxu0
        %v8869 = vadd.f32 %v8700, %v8868
        %8870 = vmatmul.bf16.gmra.mxu0 %v7430
        %v8871 = vpop.f32.mrf.mxu0
        %v8872 = vadd.f32 %v8703, %v8871
        %v8873 = vpop.f32.mrf.mxu0
        %v8874 = vadd.f32 %v8705, %v8873
        %8875 = vmatmul.bf16.gmra.mxu0 %v7439
        %v8876 = vpop.f32.mrf.mxu0
        %v8877 = vadd.f32 %v8708, %v8876
        %v8878 = vpop.f32.mrf.mxu0
        %v8879 = vadd.f32 %v8710, %v8878
        %8880 = vmatmul.bf16.gmra.mxu0 %v7448
        %v8881 = vpop.f32.mrf.mxu0
        %v8882 = vadd.f32 %v8713, %v8881
        %v8883 = vpop.f32.mrf.mxu0
        %v8884 = vadd.f32 %v8715, %v8883
        %8885 = vmatmul.bf16.gmra.mxu0 %v7457
        %v8886 = vpop.f32.mrf.mxu0
        %v8887 = vadd.f32 %v8718, %v8886
        %v8888 = vpop.f32.mrf.mxu0
        %v8889 = vadd.f32 %v8720, %v8888
        %8890 = vmatmul.bf16.gmra.mxu0 %v7466
        %v8891 = vpop.f32.mrf.mxu0
        %v8892 = vadd.f32 %v8723, %v8891
        %v8893 = vpop.f32.mrf.mxu0
        %v8894 = vadd.f32 %v8725, %v8893
        %8895 = vmatmul.bf16.gmra.mxu0 %v7475
        %v8896 = vpop.f32.mrf.mxu0
        %v8897 = vadd.f32 %v8728, %v8896
        %v8898 = vpop.f32.mrf.mxu0
        %v8899 = vadd.f32 %v8730, %v8898
        %8900 = vmatmul.bf16.gmra.mxu0 %v7484
        %v8901 = vpop.f32.mrf.mxu0
        %v8902 = vadd.f32 %v8733, %v8901
        %v8903 = vpop.f32.mrf.mxu0
        %v8904 = vadd.f32 %v8735, %v8903
        %8905 = vmatmul.bf16.gmra.mxu0 %v7493
        %v8906 = vpop.f32.mrf.mxu0
        %v8907 = vadd.f32 %v8738, %v8906
        %v8908 = vpop.f32.mrf.mxu0
        %v8909 = vadd.f32 %v8740, %v8908
        %8910 = vmatmul.bf16.gmra.mxu0 %v7502
        %v8911 = vpop.f32.mrf.mxu0
        %v8912 = vadd.f32 %v8743, %v8911
        %v8913 = vpop.f32.mrf.mxu0
        %v8914 = vadd.f32 %v8745, %v8913
        %8915 = vmatmul.bf16.gmra.mxu0 %v7511
        %v8916 = vpop.f32.mrf.mxu0
        %v8917 = vadd.f32 %v8748, %v8916
        %v8918 = vpop.f32.mrf.mxu0
        %v8919 = vadd.f32 %v8750, %v8918
        %8920 = vmatmul.bf16.gmra.mxu0 %v7520
        %v8921 = vpop.f32.mrf.mxu0
        %v8922 = vadd.f32 %v8753, %v8921
        %v8923 = vpop.f32.mrf.mxu0
        %v8924 = vadd.f32 %v8755, %v8923
        %8925 = vmatmul.bf16.gmra.mxu0 %v7529
        %v8926 = vpop.f32.mrf.mxu0
        %v8927 = vadd.f32 %v8758, %v8926
        %v8928 = vpop.f32.mrf.mxu0
        %v8929 = vadd.f32 %v8760, %v8928
        %8930 = vdwg.mxu0
        %8931 = vmatpush.bf16.msra.mxu0 %v8150
        %8932 = vmatpush.bf16.msra.mxu0 %v8149
        %8933 = vmatpush.bf16.msra.mxu0 %v8148
        %8934 = vmatpush.bf16.msra.mxu0 %v8147
        %8935 = vmatpush.bf16.msra.mxu0 %v8146
        %8936 = vmatpush.bf16.msra.mxu0 %v8145
        %8937 = vmatpush.bf16.msra.mxu0 %v8144
        %8938 = vmatpush.bf16.msra.mxu0 %v8143
        %8939 = vmatmul.bf16.gmra.mxu0 %v7251
        %v8940 = vpop.f32.mrf.mxu0
        %v8941 = vadd.f32 %v8772, %v8940
        %v8942 = vpop.f32.mrf.mxu0
        %v8943 = vadd.f32 %v8774, %v8942
        %8944 = vmatmul.bf16.gmra.mxu0 %v7260
        %v8945 = vpop.f32.mrf.mxu0
        %v8946 = vadd.f32 %v8777, %v8945
        %v8947 = vpop.f32.mrf.mxu0
        %v8948 = vadd.f32 %v8779, %v8947
        %8949 = vmatmul.bf16.gmra.mxu0 %v7269
        %v8950 = vpop.f32.mrf.mxu0
        %v8951 = vadd.f32 %v8782, %v8950
        %v8952 = vpop.f32.mrf.mxu0
        %v8953 = vadd.f32 %v8784, %v8952
        %8954 = vmatmul.bf16.gmra.mxu0 %v7278
        %v8955 = vpop.f32.mrf.mxu0
        %v8956 = vadd.f32 %v8787, %v8955
        %v8957 = vpop.f32.mrf.mxu0
        %v8958 = vadd.f32 %v8789, %v8957
        %8959 = vmatmul.bf16.gmra.mxu0 %v7287
        %v8960 = vpop.f32.mrf.mxu0
        %v8961 = vadd.f32 %v8792, %v8960
        %v8962 = vpop.f32.mrf.mxu0
        %v8963 = vadd.f32 %v8794, %v8962
        %8964 = vmatmul.bf16.gmra.mxu0 %v7296
        %v8965 = vpop.f32.mrf.mxu0
        %v8966 = vadd.f32 %v8797, %v8965
        %v8967 = vpop.f32.mrf.mxu0
        %v8968 = vadd.f32 %v8799, %v8967
        %8969 = vmatmul.bf16.gmra.mxu0 %v7305
        %v8970 = vpop.f32.mrf.mxu0
        %v8971 = vadd.f32 %v8802, %v8970
        %v8972 = vpop.f32.mrf.mxu0
        %v8973 = vadd.f32 %v8804, %v8972
        %8974 = vmatmul.bf16.gmra.mxu0 %v7314
        %v8975 = vpop.f32.mrf.mxu0
        %v8976 = vadd.f32 %v8807, %v8975
        %v8977 = vpop.f32.mrf.mxu0
        %v8978 = vadd.f32 %v8809, %v8977
        %8979 = vmatmul.bf16.gmra.mxu0 %v7323
        %v8980 = vpop.f32.mrf.mxu0
        %v8981 = vadd.f32 %v8812, %v8980
        %v8982 = vpop.f32.mrf.mxu0
        %v8983 = vadd.f32 %v8814, %v8982
        %8984 = vmatmul.bf16.gmra.mxu0 %v7332
        %v8985 = vpop.f32.mrf.mxu0
        %v8986 = vadd.f32 %v8817, %v8985
        %v8987 = vpop.f32.mrf.mxu0
        %v8988 = vadd.f32 %v8819, %v8987
        %8989 = vmatmul.bf16.gmra.mxu0 %v7341
        %v8990 = vpop.f32.mrf.mxu0
        %v8991 = vadd.f32 %v8822, %v8990
        %v8992 = vpop.f32.mrf.mxu0
        %v8993 = vadd.f32 %v8824, %v8992
        %8994 = vmatmul.bf16.gmra.mxu0 %v7350
        %v8995 = vpop.f32.mrf.mxu0
        %v8996 = vadd.f32 %v8827, %v8995
        %v8997 = vpop.f32.mrf.mxu0
        %v8998 = vadd.f32 %v8829, %v8997
        %8999 = vmatmul.bf16.gmra.mxu0 %v7359
        %v9000 = vpop.f32.mrf.mxu0
        %v9001 = vadd.f32 %v8832, %v9000
        %v9002 = vpop.f32.mrf.mxu0
        %v9003 = vadd.f32 %v8834, %v9002
        %9004 = vmatmul.bf16.gmra.mxu0 %v7368
        %v9005 = vpop.f32.mrf.mxu0
        %v9006 = vadd.f32 %v8837, %v9005
        %v9007 = vpop.f32.mrf.mxu0
        %v9008 = vadd.f32 %v8839, %v9007
        %9009 = vmatmul.bf16.gmra.mxu0 %v7377
        %v9010 = vpop.f32.mrf.mxu0
        %v9011 = vadd.f32 %v8842, %v9010
        %v9012 = vpop.f32.mrf.mxu0
        %v9013 = vadd.f32 %v8844, %v9012
        %9014 = vmatmul.bf16.gmra.mxu0 %v7386
        %v9015 = vpop.f32.mrf.mxu0
        %v9016 = vadd.f32 %v8847, %v9015
        %v9017 = vpop.f32.mrf.mxu0
        %v9018 = vadd.f32 %v8849, %v9017
        %9019 = vmatmul.bf16.gmra.mxu0 %v7395
        %v9020 = vpop.f32.mrf.mxu0
        %v9021 = vadd.f32 %v8852, %v9020
        %v9022 = vpop.f32.mrf.mxu0
        %v9023 = vadd.f32 %v8854, %v9022
        %9024 = vmatmul.bf16.gmra.mxu0 %v7404
        %v9025 = vpop.f32.mrf.mxu0
        %v9026 = vadd.f32 %v8857, %v9025
        %v9027 = vpop.f32.mrf.mxu0
        %v9028 = vadd.f32 %v8859, %v9027
        %9029 = vmatmul.bf16.gmra.mxu0 %v7413
        %v9030 = vpop.f32.mrf.mxu0
        %v9031 = vadd.f32 %v8862, %v9030
        %v9032 = vpop.f32.mrf.mxu0
        %v9033 = vadd.f32 %v8864, %v9032
        %9034 = vmatmul.bf16.gmra.mxu0 %v7422
        %v9035 = vpop.f32.mrf.mxu0
        %v9036 = vadd.f32 %v8867, %v9035
        %v9037 = vpop.f32.mrf.mxu0
        %v9038 = vadd.f32 %v8869, %v9037
        %9039 = vmatmul.bf16.gmra.mxu0 %v7431
        %v9040 = vpop.f32.mrf.mxu0
        %v9041 = vadd.f32 %v8872, %v9040
        %v9042 = vpop.f32.mrf.mxu0
        %v9043 = vadd.f32 %v8874, %v9042
        %9044 = vmatmul.bf16.gmra.mxu0 %v7440
        %v9045 = vpop.f32.mrf.mxu0
        %v9046 = vadd.f32 %v8877, %v9045
        %v9047 = vpop.f32.mrf.mxu0
        %v9048 = vadd.f32 %v8879, %v9047
        %9049 = vmatmul.bf16.gmra.mxu0 %v7449
        %v9050 = vpop.f32.mrf.mxu0
        %v9051 = vadd.f32 %v8882, %v9050
        %v9052 = vpop.f32.mrf.mxu0
        %v9053 = vadd.f32 %v8884, %v9052
        %9054 = vmatmul.bf16.gmra.mxu0 %v7458
        %v9055 = vpop.f32.mrf.mxu0
        %v9056 = vadd.f32 %v8887, %v9055
        %v9057 = vpop.f32.mrf.mxu0
        %v9058 = vadd.f32 %v8889, %v9057
        %9059 = vmatmul.bf16.gmra.mxu0 %v7467
        %v9060 = vpop.f32.mrf.mxu0
        %v9061 = vadd.f32 %v8892, %v9060
        %v9062 = vpop.f32.mrf.mxu0
        %v9063 = vadd.f32 %v8894, %v9062
        %9064 = vmatmul.bf16.gmra.mxu0 %v7476
        %v9065 = vpop.f32.mrf.mxu0
        %v9066 = vadd.f32 %v8897, %v9065
        %v9067 = vpop.f32.mrf.mxu0
        %v9068 = vadd.f32 %v8899, %v9067
        %9069 = vmatmul.bf16.gmra.mxu0 %v7485
        %v9070 = vpop.f32.mrf.mxu0
        %v9071 = vadd.f32 %v8902, %v9070
        %v9072 = vpop.f32.mrf.mxu0
        %v9073 = vadd.f32 %v8904, %v9072
        %9074 = vmatmul.bf16.gmra.mxu0 %v7494
        %v9075 = vpop.f32.mrf.mxu0
        %v9076 = vadd.f32 %v8907, %v9075
        %v9077 = vpop.f32.mrf.mxu0
        %v9078 = vadd.f32 %v8909, %v9077
        %9079 = vmatmul.bf16.gmra.mxu0 %v7503
        %v9080 = vpop.f32.mrf.mxu0
        %v9081 = vadd.f32 %v8912, %v9080
        %v9082 = vpop.f32.mrf.mxu0
        %v9083 = vadd.f32 %v8914, %v9082
        %9084 = vmatmul.bf16.gmra.mxu0 %v7512
        %v9085 = vpop.f32.mrf.mxu0
        %v9086 = vadd.f32 %v8917, %v9085
        %v9087 = vpop.f32.mrf.mxu0
        %v9088 = vadd.f32 %v8919, %v9087
        %9089 = vmatmul.bf16.gmra.mxu0 %v7521
        %v9090 = vpop.f32.mrf.mxu0
        %v9091 = vadd.f32 %v8922, %v9090
        %v9092 = vpop.f32.mrf.mxu0
        %v9093 = vadd.f32 %v8924, %v9092
        %9094 = vmatmul.bf16.gmra.mxu0 %v7530
        %v9095 = vpop.f32.mrf.mxu0
        %v9096 = vadd.f32 %v8927, %v9095
        %v9097 = vpop.f32.mrf.mxu0
        %v9098 = vadd.f32 %v8929, %v9097
        %9099 = vdwg.mxu0
        %9100 = vmatpush.bf16.msra.mxu0 %v8158
        %9101 = vmatpush.bf16.msra.mxu0 %v8157
        %9102 = vmatpush.bf16.msra.mxu0 %v8156
        %9103 = vmatpush.bf16.msra.mxu0 %v8155
        %9104 = vmatpush.bf16.msra.mxu0 %v8154
        %9105 = vmatpush.bf16.msra.mxu0 %v8153
        %9106 = vmatpush.bf16.msra.mxu0 %v8152
        %9107 = vmatpush.bf16.msra.mxu0 %v8151
        %9108 = vmatmul.bf16.gmra.mxu0 %v7252
        %v9109 = vpop.f32.mrf.mxu0
        %v9110 = vadd.f32 %v8941, %v9109
        %v9111 = vpop.f32.mrf.mxu0
        %v9112 = vadd.f32 %v8943, %v9111
        %9113 = vmatmul.bf16.gmra.mxu0 %v7261
        %v9114 = vpop.f32.mrf.mxu0
        %v9115 = vadd.f32 %v8946, %v9114
        %v9116 = vpop.f32.mrf.mxu0
        %v9117 = vadd.f32 %v8948, %v9116
        %9118 = vmatmul.bf16.gmra.mxu0 %v7270
        %v9119 = vpop.f32.mrf.mxu0
        %v9120 = vadd.f32 %v8951, %v9119
        %v9121 = vpop.f32.mrf.mxu0
        %v9122 = vadd.f32 %v8953, %v9121
        %9123 = vmatmul.bf16.gmra.mxu0 %v7279
        %v9124 = vpop.f32.mrf.mxu0
        %v9125 = vadd.f32 %v8956, %v9124
        %v9126 = vpop.f32.mrf.mxu0
        %v9127 = vadd.f32 %v8958, %v9126
        %9128 = vmatmul.bf16.gmra.mxu0 %v7288
        %v9129 = vpop.f32.mrf.mxu0
        %v9130 = vadd.f32 %v8961, %v9129
        %v9131 = vpop.f32.mrf.mxu0
        %v9132 = vadd.f32 %v8963, %v9131
        %9133 = vmatmul.bf16.gmra.mxu0 %v7297
        %v9134 = vpop.f32.mrf.mxu0
        %v9135 = vadd.f32 %v8966, %v9134
        %v9136 = vpop.f32.mrf.mxu0
        %v9137 = vadd.f32 %v8968, %v9136
        %9138 = vmatmul.bf16.gmra.mxu0 %v7306
        %v9139 = vpop.f32.mrf.mxu0
        %v9140 = vadd.f32 %v8971, %v9139
        %v9141 = vpop.f32.mrf.mxu0
        %v9142 = vadd.f32 %v8973, %v9141
        %9143 = vmatmul.bf16.gmra.mxu0 %v7315
        %v9144 = vpop.f32.mrf.mxu0
        %v9145 = vadd.f32 %v8976, %v9144
        %v9146 = vpop.f32.mrf.mxu0
        %v9147 = vadd.f32 %v8978, %v9146
        %9148 = vmatmul.bf16.gmra.mxu0 %v7324
        %v9149 = vpop.f32.mrf.mxu0
        %v9150 = vadd.f32 %v8981, %v9149
        %v9151 = vpop.f32.mrf.mxu0
        %v9152 = vadd.f32 %v8983, %v9151
        %9153 = vmatmul.bf16.gmra.mxu0 %v7333
        %v9154 = vpop.f32.mrf.mxu0
        %v9155 = vadd.f32 %v8986, %v9154
        %v9156 = vpop.f32.mrf.mxu0
        %v9157 = vadd.f32 %v8988, %v9156
        %9158 = vmatmul.bf16.gmra.mxu0 %v7342
        %v9159 = vpop.f32.mrf.mxu0
        %v9160 = vadd.f32 %v8991, %v9159
        %v9161 = vpop.f32.mrf.mxu0
        %v9162 = vadd.f32 %v8993, %v9161
        %9163 = vmatmul.bf16.gmra.mxu0 %v7351
        %v9164 = vpop.f32.mrf.mxu0
        %v9165 = vadd.f32 %v8996, %v9164
        %v9166 = vpop.f32.mrf.mxu0
        %v9167 = vadd.f32 %v8998, %v9166
        %9168 = vmatmul.bf16.gmra.mxu0 %v7360
        %v9169 = vpop.f32.mrf.mxu0
        %v9170 = vadd.f32 %v9001, %v9169
        %v9171 = vpop.f32.mrf.mxu0
        %v9172 = vadd.f32 %v9003, %v9171
        %9173 = vmatmul.bf16.gmra.mxu0 %v7369
        %v9174 = vpop.f32.mrf.mxu0
        %v9175 = vadd.f32 %v9006, %v9174
        %v9176 = vpop.f32.mrf.mxu0
        %v9177 = vadd.f32 %v9008, %v9176
        %9178 = vmatmul.bf16.gmra.mxu0 %v7378
        %v9179 = vpop.f32.mrf.mxu0
        %v9180 = vadd.f32 %v9011, %v9179
        %v9181 = vpop.f32.mrf.mxu0
        %v9182 = vadd.f32 %v9013, %v9181
        %9183 = vmatmul.bf16.gmra.mxu0 %v7387
        %v9184 = vpop.f32.mrf.mxu0
        %v9185 = vadd.f32 %v9016, %v9184
        %v9186 = vpop.f32.mrf.mxu0
        %v9187 = vadd.f32 %v9018, %v9186
        %9188 = vmatmul.bf16.gmra.mxu0 %v7396
        %v9189 = vpop.f32.mrf.mxu0
        %v9190 = vadd.f32 %v9021, %v9189
        %v9191 = vpop.f32.mrf.mxu0
        %v9192 = vadd.f32 %v9023, %v9191
        %9193 = vmatmul.bf16.gmra.mxu0 %v7405
        %v9194 = vpop.f32.mrf.mxu0
        %v9195 = vadd.f32 %v9026, %v9194
        %v9196 = vpop.f32.mrf.mxu0
        %v9197 = vadd.f32 %v9028, %v9196
        %9198 = vmatmul.bf16.gmra.mxu0 %v7414
        %v9199 = vpop.f32.mrf.mxu0
        %v9200 = vadd.f32 %v9031, %v9199
        %v9201 = vpop.f32.mrf.mxu0
        %v9202 = vadd.f32 %v9033, %v9201
        %9203 = vmatmul.bf16.gmra.mxu0 %v7423
        %v9204 = vpop.f32.mrf.mxu0
        %v9205 = vadd.f32 %v9036, %v9204
        %v9206 = vpop.f32.mrf.mxu0
        %v9207 = vadd.f32 %v9038, %v9206
        %9208 = vmatmul.bf16.gmra.mxu0 %v7432
        %v9209 = vpop.f32.mrf.mxu0
        %v9210 = vadd.f32 %v9041, %v9209
        %v9211 = vpop.f32.mrf.mxu0
        %v9212 = vadd.f32 %v9043, %v9211
        %9213 = vmatmul.bf16.gmra.mxu0 %v7441
        %v9214 = vpop.f32.mrf.mxu0
        %v9215 = vadd.f32 %v9046, %v9214
        %v9216 = vpop.f32.mrf.mxu0
        %v9217 = vadd.f32 %v9048, %v9216
        %9218 = vmatmul.bf16.gmra.mxu0 %v7450
        %v9219 = vpop.f32.mrf.mxu0
        %v9220 = vadd.f32 %v9051, %v9219
        %v9221 = vpop.f32.mrf.mxu0
        %v9222 = vadd.f32 %v9053, %v9221
        %9223 = vmatmul.bf16.gmra.mxu0 %v7459
        %v9224 = vpop.f32.mrf.mxu0
        %v9225 = vadd.f32 %v9056, %v9224
        %v9226 = vpop.f32.mrf.mxu0
        %v9227 = vadd.f32 %v9058, %v9226
        %9228 = vmatmul.bf16.gmra.mxu0 %v7468
        %v9229 = vpop.f32.mrf.mxu0
        %v9230 = vadd.f32 %v9061, %v9229
        %v9231 = vpop.f32.mrf.mxu0
        %v9232 = vadd.f32 %v9063, %v9231
        %9233 = vmatmul.bf16.gmra.mxu0 %v7477
        %v9234 = vpop.f32.mrf.mxu0
        %v9235 = vadd.f32 %v9066, %v9234
        %v9236 = vpop.f32.mrf.mxu0
        %v9237 = vadd.f32 %v9068, %v9236
        %9238 = vmatmul.bf16.gmra.mxu0 %v7486
        %v9239 = vpop.f32.mrf.mxu0
        %v9240 = vadd.f32 %v9071, %v9239
        %v9241 = vpop.f32.mrf.mxu0
        %v9242 = vadd.f32 %v9073, %v9241
        %9243 = vmatmul.bf16.gmra.mxu0 %v7495
        %v9244 = vpop.f32.mrf.mxu0
        %v9245 = vadd.f32 %v9076, %v9244
        %v9246 = vpop.f32.mrf.mxu0
        %v9247 = vadd.f32 %v9078, %v9246
        %9248 = vmatmul.bf16.gmra.mxu0 %v7504
        %v9249 = vpop.f32.mrf.mxu0
        %v9250 = vadd.f32 %v9081, %v9249
        %v9251 = vpop.f32.mrf.mxu0
        %v9252 = vadd.f32 %v9083, %v9251
        %9253 = vmatmul.bf16.gmra.mxu0 %v7513
        %v9254 = vpop.f32.mrf.mxu0
        %v9255 = vadd.f32 %v9086, %v9254
        %v9256 = vpop.f32.mrf.mxu0
        %v9257 = vadd.f32 %v9088, %v9256
        %9258 = vmatmul.bf16.gmra.mxu0 %v7522
        %v9259 = vpop.f32.mrf.mxu0
        %v9260 = vadd.f32 %v9091, %v9259
        %v9261 = vpop.f32.mrf.mxu0
        %v9262 = vadd.f32 %v9093, %v9261
        %9263 = vmatmul.bf16.gmra.mxu0 %v7531
        %v9264 = vpop.f32.mrf.mxu0
        %v9265 = vadd.f32 %v9096, %v9264
        %v9266 = vpop.f32.mrf.mxu0
        %v9267 = vadd.f32 %v9098, %v9266
        %9268 = vdwg.mxu0
        %9269 = vmatpush.bf16.msra.mxu0 %v8166
        %9270 = vmatpush.bf16.msra.mxu0 %v8165
        %9271 = vmatpush.bf16.msra.mxu0 %v8164
        %9272 = vmatpush.bf16.msra.mxu0 %v8163
        %9273 = vmatpush.bf16.msra.mxu0 %v8162
        %9274 = vmatpush.bf16.msra.mxu0 %v8161
        %9275 = vmatpush.bf16.msra.mxu0 %v8160
        %9276 = vmatpush.bf16.msra.mxu0 %v8159
        %9277 = vmatmul.bf16.gmra.mxu0 %v7253
        %v9278 = vpop.f32.mrf.mxu0
        %v9279 = vadd.f32 %v9110, %v9278
        %v9280 = vpop.f32.mrf.mxu0
        %v9281 = vadd.f32 %v9112, %v9280
        %9282 = vmatmul.bf16.gmra.mxu0 %v7262
        %v9283 = vpop.f32.mrf.mxu0
        %v9284 = vadd.f32 %v9115, %v9283
        %v9285 = vpop.f32.mrf.mxu0
        %v9286 = vadd.f32 %v9117, %v9285
        %9287 = vmatmul.bf16.gmra.mxu0 %v7271
        %v9288 = vpop.f32.mrf.mxu0
        %v9289 = vadd.f32 %v9120, %v9288
        %v9290 = vpop.f32.mrf.mxu0
        %v9291 = vadd.f32 %v9122, %v9290
        %9292 = vmatmul.bf16.gmra.mxu0 %v7280
        %v9293 = vpop.f32.mrf.mxu0
        %v9294 = vadd.f32 %v9125, %v9293
        %v9295 = vpop.f32.mrf.mxu0
        %v9296 = vadd.f32 %v9127, %v9295
        %9297 = vmatmul.bf16.gmra.mxu0 %v7289
        %v9298 = vpop.f32.mrf.mxu0
        %v9299 = vadd.f32 %v9130, %v9298
        %v9300 = vpop.f32.mrf.mxu0
        %v9301 = vadd.f32 %v9132, %v9300
        %9302 = vmatmul.bf16.gmra.mxu0 %v7298
        %v9303 = vpop.f32.mrf.mxu0
        %v9304 = vadd.f32 %v9135, %v9303
        %v9305 = vpop.f32.mrf.mxu0
        %v9306 = vadd.f32 %v9137, %v9305
        %9307 = vmatmul.bf16.gmra.mxu0 %v7307
        %v9308 = vpop.f32.mrf.mxu0
        %v9309 = vadd.f32 %v9140, %v9308
        %v9310 = vpop.f32.mrf.mxu0
        %v9311 = vadd.f32 %v9142, %v9310
        %9312 = vmatmul.bf16.gmra.mxu0 %v7316
        %v9313 = vpop.f32.mrf.mxu0
        %v9314 = vadd.f32 %v9145, %v9313
        %v9315 = vpop.f32.mrf.mxu0
        %v9316 = vadd.f32 %v9147, %v9315
        %9317 = vmatmul.bf16.gmra.mxu0 %v7325
        %v9318 = vpop.f32.mrf.mxu0
        %v9319 = vadd.f32 %v9150, %v9318
        %v9320 = vpop.f32.mrf.mxu0
        %v9321 = vadd.f32 %v9152, %v9320
        %9322 = vmatmul.bf16.gmra.mxu0 %v7334
        %v9323 = vpop.f32.mrf.mxu0
        %v9324 = vadd.f32 %v9155, %v9323
        %v9325 = vpop.f32.mrf.mxu0
        %v9326 = vadd.f32 %v9157, %v9325
        %9327 = vmatmul.bf16.gmra.mxu0 %v7343
        %v9328 = vpop.f32.mrf.mxu0
        %v9329 = vadd.f32 %v9160, %v9328
        %v9330 = vpop.f32.mrf.mxu0
        %v9331 = vadd.f32 %v9162, %v9330
        %9332 = vmatmul.bf16.gmra.mxu0 %v7352
        %v9333 = vpop.f32.mrf.mxu0
        %v9334 = vadd.f32 %v9165, %v9333
        %v9335 = vpop.f32.mrf.mxu0
        %v9336 = vadd.f32 %v9167, %v9335
        %9337 = vmatmul.bf16.gmra.mxu0 %v7361
        %v9338 = vpop.f32.mrf.mxu0
        %v9339 = vadd.f32 %v9170, %v9338
        %v9340 = vpop.f32.mrf.mxu0
        %v9341 = vadd.f32 %v9172, %v9340
        %9342 = vmatmul.bf16.gmra.mxu0 %v7370
        %v9343 = vpop.f32.mrf.mxu0
        %v9344 = vadd.f32 %v9175, %v9343
        %v9345 = vpop.f32.mrf.mxu0
        %v9346 = vadd.f32 %v9177, %v9345
        %9347 = vmatmul.bf16.gmra.mxu0 %v7379
        %v9348 = vpop.f32.mrf.mxu0
        %v9349 = vadd.f32 %v9180, %v9348
        %v9350 = vpop.f32.mrf.mxu0
        %v9351 = vadd.f32 %v9182, %v9350
        %9352 = vmatmul.bf16.gmra.mxu0 %v7388
        %v9353 = vpop.f32.mrf.mxu0
        %v9354 = vadd.f32 %v9185, %v9353
        %v9355 = vpop.f32.mrf.mxu0
        %v9356 = vadd.f32 %v9187, %v9355
        %9357 = vmatmul.bf16.gmra.mxu0 %v7397
        %v9358 = vpop.f32.mrf.mxu0
        %v9359 = vadd.f32 %v9190, %v9358
        %v9360 = vpop.f32.mrf.mxu0
        %v9361 = vadd.f32 %v9192, %v9360
        %9362 = vmatmul.bf16.gmra.mxu0 %v7406
        %v9363 = vpop.f32.mrf.mxu0
        %v9364 = vadd.f32 %v9195, %v9363
        %v9365 = vpop.f32.mrf.mxu0
        %v9366 = vadd.f32 %v9197, %v9365
        %9367 = vmatmul.bf16.gmra.mxu0 %v7415
        %v9368 = vpop.f32.mrf.mxu0
        %v9369 = vadd.f32 %v9200, %v9368
        %v9370 = vpop.f32.mrf.mxu0
        %v9371 = vadd.f32 %v9202, %v9370
        %9372 = vmatmul.bf16.gmra.mxu0 %v7424
        %v9373 = vpop.f32.mrf.mxu0
        %v9374 = vadd.f32 %v9205, %v9373
        %v9375 = vpop.f32.mrf.mxu0
        %v9376 = vadd.f32 %v9207, %v9375
        %9377 = vmatmul.bf16.gmra.mxu0 %v7433
        %v9378 = vpop.f32.mrf.mxu0
        %v9379 = vadd.f32 %v9210, %v9378
        %v9380 = vpop.f32.mrf.mxu0
        %v9381 = vadd.f32 %v9212, %v9380
        %9382 = vmatmul.bf16.gmra.mxu0 %v7442
        %v9383 = vpop.f32.mrf.mxu0
        %v9384 = vadd.f32 %v9215, %v9383
        %v9385 = vpop.f32.mrf.mxu0
        %v9386 = vadd.f32 %v9217, %v9385
        %9387 = vmatmul.bf16.gmra.mxu0 %v7451
        %v9388 = vpop.f32.mrf.mxu0
        %v9389 = vadd.f32 %v9220, %v9388
        %v9390 = vpop.f32.mrf.mxu0
        %v9391 = vadd.f32 %v9222, %v9390
        %9392 = vmatmul.bf16.gmra.mxu0 %v7460
        %v9393 = vpop.f32.mrf.mxu0
        %v9394 = vadd.f32 %v9225, %v9393
        %v9395 = vpop.f32.mrf.mxu0
        %v9396 = vadd.f32 %v9227, %v9395
        %9397 = vmatmul.bf16.gmra.mxu0 %v7469
        %v9398 = vpop.f32.mrf.mxu0
        %v9399 = vadd.f32 %v9230, %v9398
        %v9400 = vpop.f32.mrf.mxu0
        %v9401 = vadd.f32 %v9232, %v9400
        %9402 = vmatmul.bf16.gmra.mxu0 %v7478
        %v9403 = vpop.f32.mrf.mxu0
        %v9404 = vadd.f32 %v9235, %v9403
        %v9405 = vpop.f32.mrf.mxu0
        %v9406 = vadd.f32 %v9237, %v9405
        %9407 = vmatmul.bf16.gmra.mxu0 %v7487
        %v9408 = vpop.f32.mrf.mxu0
        %v9409 = vadd.f32 %v9240, %v9408
        %v9410 = vpop.f32.mrf.mxu0
        %v9411 = vadd.f32 %v9242, %v9410
        %9412 = vmatmul.bf16.gmra.mxu0 %v7496
        %v9413 = vpop.f32.mrf.mxu0
        %v9414 = vadd.f32 %v9245, %v9413
        %v9415 = vpop.f32.mrf.mxu0
        %v9416 = vadd.f32 %v9247, %v9415
        %9417 = vmatmul.bf16.gmra.mxu0 %v7505
        %v9418 = vpop.f32.mrf.mxu0
        %v9419 = vadd.f32 %v9250, %v9418
        %v9420 = vpop.f32.mrf.mxu0
        %v9421 = vadd.f32 %v9252, %v9420
        %9422 = vmatmul.bf16.gmra.mxu0 %v7514
        %v9423 = vpop.f32.mrf.mxu0
        %v9424 = vadd.f32 %v9255, %v9423
        %v9425 = vpop.f32.mrf.mxu0
        %v9426 = vadd.f32 %v9257, %v9425
        %9427 = vmatmul.bf16.gmra.mxu0 %v7523
        %v9428 = vpop.f32.mrf.mxu0
        %v9429 = vadd.f32 %v9260, %v9428
        %v9430 = vpop.f32.mrf.mxu0
        %v9431 = vadd.f32 %v9262, %v9430
        %9432 = vmatmul.bf16.gmra.mxu0 %v7532
        %v9433 = vpop.f32.mrf.mxu0
        %v9434 = vadd.f32 %v9265, %v9433
        %v9435 = vpop.f32.mrf.mxu0
        %v9436 = vadd.f32 %v9267, %v9435
        %9437 = vdwg.mxu0
        %9438 = vmatpush.bf16.msra.mxu0 %v8174
        %9439 = vmatpush.bf16.msra.mxu0 %v8173
        %9440 = vmatpush.bf16.msra.mxu0 %v8172
        %9441 = vmatpush.bf16.msra.mxu0 %v8171
        %9442 = vmatpush.bf16.msra.mxu0 %v8170
        %9443 = vmatpush.bf16.msra.mxu0 %v8169
        %9444 = vmatpush.bf16.msra.mxu0 %v8168
        %9445 = vmatpush.bf16.msra.mxu0 %v8167
        %9446 = vmatmul.bf16.gmra.mxu0 %v7254
        %v9447 = vpop.f32.mrf.mxu0
        %v9448 = vadd.f32 %v9279, %v9447
        %v9449 = vpop.f32.mrf.mxu0
        %v9450 = vadd.f32 %v9281, %v9449
        %9451 = vmatmul.bf16.gmra.mxu0 %v7263
        %v9452 = vpop.f32.mrf.mxu0
        %v9453 = vadd.f32 %v9284, %v9452
        %v9454 = vpop.f32.mrf.mxu0
        %v9455 = vadd.f32 %v9286, %v9454
        %9456 = vmatmul.bf16.gmra.mxu0 %v7272
        %v9457 = vpop.f32.mrf.mxu0
        %v9458 = vadd.f32 %v9289, %v9457
        %v9459 = vpop.f32.mrf.mxu0
        %v9460 = vadd.f32 %v9291, %v9459
        %9461 = vmatmul.bf16.gmra.mxu0 %v7281
        %v9462 = vpop.f32.mrf.mxu0
        %v9463 = vadd.f32 %v9294, %v9462
        %v9464 = vpop.f32.mrf.mxu0
        %v9465 = vadd.f32 %v9296, %v9464
        %9466 = vmatmul.bf16.gmra.mxu0 %v7290
        %v9467 = vpop.f32.mrf.mxu0
        %v9468 = vadd.f32 %v9299, %v9467
        %v9469 = vpop.f32.mrf.mxu0
        %v9470 = vadd.f32 %v9301, %v9469
        %9471 = vmatmul.bf16.gmra.mxu0 %v7299
        %v9472 = vpop.f32.mrf.mxu0
        %v9473 = vadd.f32 %v9304, %v9472
        %v9474 = vpop.f32.mrf.mxu0
        %v9475 = vadd.f32 %v9306, %v9474
        %9476 = vmatmul.bf16.gmra.mxu0 %v7308
        %v9477 = vpop.f32.mrf.mxu0
        %v9478 = vadd.f32 %v9309, %v9477
        %v9479 = vpop.f32.mrf.mxu0
        %v9480 = vadd.f32 %v9311, %v9479
        %9481 = vmatmul.bf16.gmra.mxu0 %v7317
        %v9482 = vpop.f32.mrf.mxu0
        %v9483 = vadd.f32 %v9314, %v9482
        %v9484 = vpop.f32.mrf.mxu0
        %v9485 = vadd.f32 %v9316, %v9484
        %9486 = vmatmul.bf16.gmra.mxu0 %v7326
        %v9487 = vpop.f32.mrf.mxu0
        %v9488 = vadd.f32 %v9319, %v9487
        %v9489 = vpop.f32.mrf.mxu0
        %v9490 = vadd.f32 %v9321, %v9489
        %9491 = vmatmul.bf16.gmra.mxu0 %v7335
        %v9492 = vpop.f32.mrf.mxu0
        %v9493 = vadd.f32 %v9324, %v9492
        %v9494 = vpop.f32.mrf.mxu0
        %v9495 = vadd.f32 %v9326, %v9494
        %9496 = vmatmul.bf16.gmra.mxu0 %v7344
        %v9497 = vpop.f32.mrf.mxu0
        %v9498 = vadd.f32 %v9329, %v9497
        %v9499 = vpop.f32.mrf.mxu0
        %v9500 = vadd.f32 %v9331, %v9499
        %9501 = vmatmul.bf16.gmra.mxu0 %v7353
        %v9502 = vpop.f32.mrf.mxu0
        %v9503 = vadd.f32 %v9334, %v9502
        %v9504 = vpop.f32.mrf.mxu0
        %v9505 = vadd.f32 %v9336, %v9504
        %9506 = vmatmul.bf16.gmra.mxu0 %v7362
        %v9507 = vpop.f32.mrf.mxu0
        %v9508 = vadd.f32 %v9339, %v9507
        %v9509 = vpop.f32.mrf.mxu0
        %v9510 = vadd.f32 %v9341, %v9509
        %9511 = vmatmul.bf16.gmra.mxu0 %v7371
        %v9512 = vpop.f32.mrf.mxu0
        %v9513 = vadd.f32 %v9344, %v9512
        %v9514 = vpop.f32.mrf.mxu0
        %v9515 = vadd.f32 %v9346, %v9514
        %9516 = vmatmul.bf16.gmra.mxu0 %v7380
        %v9517 = vpop.f32.mrf.mxu0
        %v9518 = vadd.f32 %v9349, %v9517
        %v9519 = vpop.f32.mrf.mxu0
        %v9520 = vadd.f32 %v9351, %v9519
        %9521 = vmatmul.bf16.gmra.mxu0 %v7389
        %v9522 = vpop.f32.mrf.mxu0
        %v9523 = vadd.f32 %v9354, %v9522
        %v9524 = vpop.f32.mrf.mxu0
        %v9525 = vadd.f32 %v9356, %v9524
        %9526 = vmatmul.bf16.gmra.mxu0 %v7398
        %v9527 = vpop.f32.mrf.mxu0
        %v9528 = vadd.f32 %v9359, %v9527
        %v9529 = vpop.f32.mrf.mxu0
        %v9530 = vadd.f32 %v9361, %v9529
        %9531 = vmatmul.bf16.gmra.mxu0 %v7407
        %v9532 = vpop.f32.mrf.mxu0
        %v9533 = vadd.f32 %v9364, %v9532
        %v9534 = vpop.f32.mrf.mxu0
        %v9535 = vadd.f32 %v9366, %v9534
        %9536 = vmatmul.bf16.gmra.mxu0 %v7416
        %v9537 = vpop.f32.mrf.mxu0
        %v9538 = vadd.f32 %v9369, %v9537
        %v9539 = vpop.f32.mrf.mxu0
        %v9540 = vadd.f32 %v9371, %v9539
        %9541 = vmatmul.bf16.gmra.mxu0 %v7425
        %v9542 = vpop.f32.mrf.mxu0
        %v9543 = vadd.f32 %v9374, %v9542
        %v9544 = vpop.f32.mrf.mxu0
        %v9545 = vadd.f32 %v9376, %v9544
        %9546 = vmatmul.bf16.gmra.mxu0 %v7434
        %v9547 = vpop.f32.mrf.mxu0
        %v9548 = vadd.f32 %v9379, %v9547
        %v9549 = vpop.f32.mrf.mxu0
        %v9550 = vadd.f32 %v9381, %v9549
        %9551 = vmatmul.bf16.gmra.mxu0 %v7443
        %v9552 = vpop.f32.mrf.mxu0
        %v9553 = vadd.f32 %v9384, %v9552
        %v9554 = vpop.f32.mrf.mxu0
        %v9555 = vadd.f32 %v9386, %v9554
        %9556 = vmatmul.bf16.gmra.mxu0 %v7452
        %v9557 = vpop.f32.mrf.mxu0
        %v9558 = vadd.f32 %v9389, %v9557
        %v9559 = vpop.f32.mrf.mxu0
        %v9560 = vadd.f32 %v9391, %v9559
        %9561 = vmatmul.bf16.gmra.mxu0 %v7461
        %v9562 = vpop.f32.mrf.mxu0
        %v9563 = vadd.f32 %v9394, %v9562
        %v9564 = vpop.f32.mrf.mxu0
        %v9565 = vadd.f32 %v9396, %v9564
        %9566 = vmatmul.bf16.gmra.mxu0 %v7470
        %v9567 = vpop.f32.mrf.mxu0
        %v9568 = vadd.f32 %v9399, %v9567
        %v9569 = vpop.f32.mrf.mxu0
        %v9570 = vadd.f32 %v9401, %v9569
        %9571 = vmatmul.bf16.gmra.mxu0 %v7479
        %v9572 = vpop.f32.mrf.mxu0
        %v9573 = vadd.f32 %v9404, %v9572
        %v9574 = vpop.f32.mrf.mxu0
        %v9575 = vadd.f32 %v9406, %v9574
        %9576 = vmatmul.bf16.gmra.mxu0 %v7488
        %v9577 = vpop.f32.mrf.mxu0
        %v9578 = vadd.f32 %v9409, %v9577
        %v9579 = vpop.f32.mrf.mxu0
        %v9580 = vadd.f32 %v9411, %v9579
        %9581 = vmatmul.bf16.gmra.mxu0 %v7497
        %v9582 = vpop.f32.mrf.mxu0
        %v9583 = vadd.f32 %v9414, %v9582
        %v9584 = vpop.f32.mrf.mxu0
        %v9585 = vadd.f32 %v9416, %v9584
        %9586 = vmatmul.bf16.gmra.mxu0 %v7506
        %v9587 = vpop.f32.mrf.mxu0
        %v9588 = vadd.f32 %v9419, %v9587
        %v9589 = vpop.f32.mrf.mxu0
        %v9590 = vadd.f32 %v9421, %v9589
        %9591 = vmatmul.bf16.gmra.mxu0 %v7515
        %v9592 = vpop.f32.mrf.mxu0
        %v9593 = vadd.f32 %v9424, %v9592
        %v9594 = vpop.f32.mrf.mxu0
        %v9595 = vadd.f32 %v9426, %v9594
        %9596 = vmatmul.bf16.gmra.mxu0 %v7524
        %v9597 = vpop.f32.mrf.mxu0
        %v9598 = vadd.f32 %v9429, %v9597
        %v9599 = vpop.f32.mrf.mxu0
        %v9600 = vadd.f32 %v9431, %v9599
        %9601 = vmatmul.bf16.gmra.mxu0 %v7533
        %v9602 = vpop.f32.mrf.mxu0
        %v9603 = vadd.f32 %v9434, %v9602
        %v9604 = vpop.f32.mrf.mxu0
        %v9605 = vadd.f32 %v9436, %v9604
        %9606 = vdwg.mxu0
        %9607 = vmatpush.bf16.msra.mxu0 %v8182
        %9608 = vmatpush.bf16.msra.mxu0 %v8181
        %9609 = vmatpush.bf16.msra.mxu0 %v8180
        %9610 = vmatpush.bf16.msra.mxu0 %v8179
        %9611 = vmatpush.bf16.msra.mxu0 %v8178
        %9612 = vmatpush.bf16.msra.mxu0 %v8177
        %9613 = vmatpush.bf16.msra.mxu0 %v8176
        %9614 = vmatpush.bf16.msra.mxu0 %v8175
        %9615 = vmatmul.bf16.gmra.mxu0 %v7255
        %v9616 = vpop.f32.mrf.mxu0
        %v9617 = vadd.f32 %v9448, %v9616
        %v9618 = vpop.f32.mrf.mxu0
        %v9619 = vadd.f32 %v9450, %v9618
        %9620 = vmatmul.bf16.gmra.mxu0 %v7264
        %v9621 = vpop.f32.mrf.mxu0
        %v9622 = vadd.f32 %v9453, %v9621
        %v9623 = vpop.f32.mrf.mxu0
        %v9624 = vadd.f32 %v9455, %v9623
        %9625 = vmatmul.bf16.gmra.mxu0 %v7273
        %v9626 = vpop.f32.mrf.mxu0
        %v9627 = vadd.f32 %v9458, %v9626
        %v9628 = vpop.f32.mrf.mxu0
        %v9629 = vadd.f32 %v9460, %v9628
        %9630 = vmatmul.bf16.gmra.mxu0 %v7282
        %v9631 = vpop.f32.mrf.mxu0
        %v9632 = vadd.f32 %v9463, %v9631
        %v9633 = vpop.f32.mrf.mxu0
        %v9634 = vadd.f32 %v9465, %v9633
        %9635 = vmatmul.bf16.gmra.mxu0 %v7291
        %v9636 = vpop.f32.mrf.mxu0
        %v9637 = vadd.f32 %v9468, %v9636
        %v9638 = vpop.f32.mrf.mxu0
        %v9639 = vadd.f32 %v9470, %v9638
        %9640 = vmatmul.bf16.gmra.mxu0 %v7300
        %v9641 = vpop.f32.mrf.mxu0
        %v9642 = vadd.f32 %v9473, %v9641
        %v9643 = vpop.f32.mrf.mxu0
        %v9644 = vadd.f32 %v9475, %v9643
        %9645 = vmatmul.bf16.gmra.mxu0 %v7309
        %v9646 = vpop.f32.mrf.mxu0
        %v9647 = vadd.f32 %v9478, %v9646
        %v9648 = vpop.f32.mrf.mxu0
        %v9649 = vadd.f32 %v9480, %v9648
        %9650 = vmatmul.bf16.gmra.mxu0 %v7318
        %v9651 = vpop.f32.mrf.mxu0
        %v9652 = vadd.f32 %v9483, %v9651
        %v9653 = vpop.f32.mrf.mxu0
        %v9654 = vadd.f32 %v9485, %v9653
        %9655 = vmatmul.bf16.gmra.mxu0 %v7327
        %v9656 = vpop.f32.mrf.mxu0
        %v9657 = vadd.f32 %v9488, %v9656
        %v9658 = vpop.f32.mrf.mxu0
        %v9659 = vadd.f32 %v9490, %v9658
        %9660 = vmatmul.bf16.gmra.mxu0 %v7336
        %v9661 = vpop.f32.mrf.mxu0
        %v9662 = vadd.f32 %v9493, %v9661
        %v9663 = vpop.f32.mrf.mxu0
        %v9664 = vadd.f32 %v9495, %v9663
        %9665 = vmatmul.bf16.gmra.mxu0 %v7345
        %v9666 = vpop.f32.mrf.mxu0
        %v9667 = vadd.f32 %v9498, %v9666
        %v9668 = vpop.f32.mrf.mxu0
        %v9669 = vadd.f32 %v9500, %v9668
        %9670 = vmatmul.bf16.gmra.mxu0 %v7354
        %v9671 = vpop.f32.mrf.mxu0
        %v9672 = vadd.f32 %v9503, %v9671
        %v9673 = vpop.f32.mrf.mxu0
        %v9674 = vadd.f32 %v9505, %v9673
        %9675 = vmatmul.bf16.gmra.mxu0 %v7363
        %v9676 = vpop.f32.mrf.mxu0
        %v9677 = vadd.f32 %v9508, %v9676
        %v9678 = vpop.f32.mrf.mxu0
        %v9679 = vadd.f32 %v9510, %v9678
        %9680 = vmatmul.bf16.gmra.mxu0 %v7372
        %v9681 = vpop.f32.mrf.mxu0
        %v9682 = vadd.f32 %v9513, %v9681
        %v9683 = vpop.f32.mrf.mxu0
        %v9684 = vadd.f32 %v9515, %v9683
        %9685 = vmatmul.bf16.gmra.mxu0 %v7381
        %v9686 = vpop.f32.mrf.mxu0
        %v9687 = vadd.f32 %v9518, %v9686
        %v9688 = vpop.f32.mrf.mxu0
        %v9689 = vadd.f32 %v9520, %v9688
        %9690 = vmatmul.bf16.gmra.mxu0 %v7390
        %v9691 = vpop.f32.mrf.mxu0
        %v9692 = vadd.f32 %v9523, %v9691
        %v9693 = vpop.f32.mrf.mxu0
        %v9694 = vadd.f32 %v9525, %v9693
        %9695 = vmatmul.bf16.gmra.mxu0 %v7399
        %v9696 = vpop.f32.mrf.mxu0
        %v9697 = vadd.f32 %v9528, %v9696
        %v9698 = vpop.f32.mrf.mxu0
        %v9699 = vadd.f32 %v9530, %v9698
        %9700 = vmatmul.bf16.gmra.mxu0 %v7408
        %v9701 = vpop.f32.mrf.mxu0
        %v9702 = vadd.f32 %v9533, %v9701
        %v9703 = vpop.f32.mrf.mxu0
        %v9704 = vadd.f32 %v9535, %v9703
        %9705 = vmatmul.bf16.gmra.mxu0 %v7417
        %v9706 = vpop.f32.mrf.mxu0
        %v9707 = vadd.f32 %v9538, %v9706
        %v9708 = vpop.f32.mrf.mxu0
        %v9709 = vadd.f32 %v9540, %v9708
        %9710 = vmatmul.bf16.gmra.mxu0 %v7426
        %v9711 = vpop.f32.mrf.mxu0
        %v9712 = vadd.f32 %v9543, %v9711
        %v9713 = vpop.f32.mrf.mxu0
        %v9714 = vadd.f32 %v9545, %v9713
        %9715 = vmatmul.bf16.gmra.mxu0 %v7435
        %v9716 = vpop.f32.mrf.mxu0
        %v9717 = vadd.f32 %v9548, %v9716
        %v9718 = vpop.f32.mrf.mxu0
        %v9719 = vadd.f32 %v9550, %v9718
        %9720 = vmatmul.bf16.gmra.mxu0 %v7444
        %v9721 = vpop.f32.mrf.mxu0
        %v9722 = vadd.f32 %v9553, %v9721
        %v9723 = vpop.f32.mrf.mxu0
        %v9724 = vadd.f32 %v9555, %v9723
        %9725 = vmatmul.bf16.gmra.mxu0 %v7453
        %v9726 = vpop.f32.mrf.mxu0
        %v9727 = vadd.f32 %v9558, %v9726
        %v9728 = vpop.f32.mrf.mxu0
        %v9729 = vadd.f32 %v9560, %v9728
        %9730 = vmatmul.bf16.gmra.mxu0 %v7462
        %v9731 = vpop.f32.mrf.mxu0
        %v9732 = vadd.f32 %v9563, %v9731
        %v9733 = vpop.f32.mrf.mxu0
        %v9734 = vadd.f32 %v9565, %v9733
        %9735 = vmatmul.bf16.gmra.mxu0 %v7471
        %v9736 = vpop.f32.mrf.mxu0
        %v9737 = vadd.f32 %v9568, %v9736
        %v9738 = vpop.f32.mrf.mxu0
        %v9739 = vadd.f32 %v9570, %v9738
        %9740 = vmatmul.bf16.gmra.mxu0 %v7480
        %v9741 = vpop.f32.mrf.mxu0
        %v9742 = vadd.f32 %v9573, %v9741
        %v9743 = vpop.f32.mrf.mxu0
        %v9744 = vadd.f32 %v9575, %v9743
        %9745 = vmatmul.bf16.gmra.mxu0 %v7489
        %v9746 = vpop.f32.mrf.mxu0
        %v9747 = vadd.f32 %v9578, %v9746
        %v9748 = vpop.f32.mrf.mxu0
        %v9749 = vadd.f32 %v9580, %v9748
        %9750 = vmatmul.bf16.gmra.mxu0 %v7498
        %v9751 = vpop.f32.mrf.mxu0
        %v9752 = vadd.f32 %v9583, %v9751
        %v9753 = vpop.f32.mrf.mxu0
        %v9754 = vadd.f32 %v9585, %v9753
        %9755 = vmatmul.bf16.gmra.mxu0 %v7507
        %v9756 = vpop.f32.mrf.mxu0
        %v9757 = vadd.f32 %v9588, %v9756
        %v9758 = vpop.f32.mrf.mxu0
        %v9759 = vadd.f32 %v9590, %v9758
        %9760 = vmatmul.bf16.gmra.mxu0 %v7516
        %v9761 = vpop.f32.mrf.mxu0
        %v9762 = vadd.f32 %v9593, %v9761
        %v9763 = vpop.f32.mrf.mxu0
        %v9764 = vadd.f32 %v9595, %v9763
        %9765 = vmatmul.bf16.gmra.mxu0 %v7525
        %v9766 = vpop.f32.mrf.mxu0
        %v9767 = vadd.f32 %v9598, %v9766
        %v9768 = vpop.f32.mrf.mxu0
        %v9769 = vadd.f32 %v9600, %v9768
        %9770 = vmatmul.bf16.gmra.mxu0 %v7534
        %v9771 = vpop.f32.mrf.mxu0
        %v9772 = vadd.f32 %v9603, %v9771
        %v9773 = vpop.f32.mrf.mxu0
        %v9774 = vadd.f32 %v9605, %v9773
        %9775 = vdwg.mxu0
        %9776 = vadd.xlane.f32.xlu0 %v9617
        %v9777 = vpop.xlane.xlu0 %9776
        %9778 = vadd.xlane.f32.xlu0 %v9619
        %v9779 = vpop.xlane.xlu0 %9778
        %9780 = vadd.xlane.f32.xlu0 %v9622
        %v9781 = vpop.xlane.xlu0 %9780
        %9782 = vadd.xlane.f32.xlu0 %v9624
        %v9783 = vpop.xlane.xlu0 %9782
        %9784 = vadd.xlane.f32.xlu0 %v9627
        %v9785 = vpop.xlane.xlu0 %9784
        %9786 = vadd.xlane.f32.xlu0 %v9629
        %v9787 = vpop.xlane.xlu0 %9786
        %9788 = vadd.xlane.f32.xlu0 %v9632
        %v9789 = vpop.xlane.xlu0 %9788
        %9790 = vadd.xlane.f32.xlu0 %v9634
        %v9791 = vpop.xlane.xlu0 %9790
        %9792 = vadd.xlane.f32.xlu0 %v9637
        %v9793 = vpop.xlane.xlu0 %9792
        %9794 = vadd.xlane.f32.xlu0 %v9639
        %v9795 = vpop.xlane.xlu0 %9794
        %9796 = vadd.xlane.f32.xlu0 %v9642
        %v9797 = vpop.xlane.xlu0 %9796
        %9798 = vadd.xlane.f32.xlu0 %v9644
        %v9799 = vpop.xlane.xlu0 %9798
        %9800 = vadd.xlane.f32.xlu0 %v9647
        %v9801 = vpop.xlane.xlu0 %9800
        %9802 = vadd.xlane.f32.xlu0 %v9649
        %v9803 = vpop.xlane.xlu0 %9802
        %9804 = vadd.xlane.f32.xlu0 %v9652
        %v9805 = vpop.xlane.xlu0 %9804
        %9806 = vadd.xlane.f32.xlu0 %v9654
        %v9807 = vpop.xlane.xlu0 %9806
        %9808 = vadd.xlane.f32.xlu0 %v9657
        %v9809 = vpop.xlane.xlu0 %9808
        %9810 = vadd.xlane.f32.xlu0 %v9659
        %v9811 = vpop.xlane.xlu0 %9810
        %9812 = vadd.xlane.f32.xlu0 %v9662
        %v9813 = vpop.xlane.xlu0 %9812
        %9814 = vadd.xlane.f32.xlu0 %v9664
        %v9815 = vpop.xlane.xlu0 %9814
        %9816 = vadd.xlane.f32.xlu0 %v9667
        %v9817 = vpop.xlane.xlu0 %9816
        %9818 = vadd.xlane.f32.xlu0 %v9669
        %v9819 = vpop.xlane.xlu0 %9818
        %9820 = vadd.xlane.f32.xlu0 %v9672
        %v9821 = vpop.xlane.xlu0 %9820
        %9822 = vadd.xlane.f32.xlu0 %v9674
        %v9823 = vpop.xlane.xlu0 %9822
        %9824 = vadd.xlane.f32.xlu0 %v9677
        %v9825 = vpop.xlane.xlu0 %9824
        %9826 = vadd.xlane.f32.xlu0 %v9679
        %v9827 = vpop.xlane.xlu0 %9826
        %9828 = vadd.xlane.f32.xlu0 %v9682
        %v9829 = vpop.xlane.xlu0 %9828
        %9830 = vadd.xlane.f32.xlu0 %v9684
        %v9831 = vpop.xlane.xlu0 %9830
        %9832 = vadd.xlane.f32.xlu0 %v9687
        %v9833 = vpop.xlane.xlu0 %9832
        %9834 = vadd.xlane.f32.xlu0 %v9689
        %v9835 = vpop.xlane.xlu0 %9834
        %9836 = vadd.xlane.f32.xlu0 %v9692
        %v9837 = vpop.xlane.xlu0 %9836
        %9838 = vadd.xlane.f32.xlu0 %v9694
        %v9839 = vpop.xlane.xlu0 %9838
        %9840 = vadd.xlane.f32.xlu0 %v9697
        %v9841 = vpop.xlane.xlu0 %9840
        %9842 = vadd.xlane.f32.xlu0 %v9699
        %v9843 = vpop.xlane.xlu0 %9842
        %9844 = vadd.xlane.f32.xlu0 %v9702
        %v9845 = vpop.xlane.xlu0 %9844
        %9846 = vadd.xlane.f32.xlu0 %v9704
        %v9847 = vpop.xlane.xlu0 %9846
        %9848 = vadd.xlane.f32.xlu0 %v9707
        %v9849 = vpop.xlane.xlu0 %9848
        %9850 = vadd.xlane.f32.xlu0 %v9709
        %v9851 = vpop.xlane.xlu0 %9850
        %9852 = vadd.xlane.f32.xlu0 %v9712
        %v9853 = vpop.xlane.xlu0 %9852
        %9854 = vadd.xlane.f32.xlu0 %v9714
        %v9855 = vpop.xlane.xlu0 %9854
        %9856 = vadd.xlane.f32.xlu0 %v9717
        %v9857 = vpop.xlane.xlu0 %9856
        %9858 = vadd.xlane.f32.xlu0 %v9719
        %v9859 = vpop.xlane.xlu0 %9858
        %9860 = vadd.xlane.f32.xlu0 %v9722
        %v9861 = vpop.xlane.xlu0 %9860
        %9862 = vadd.xlane.f32.xlu0 %v9724
        %v9863 = vpop.xlane.xlu0 %9862
        %9864 = vadd.xlane.f32.xlu0 %v9727
        %v9865 = vpop.xlane.xlu0 %9864
        %9866 = vadd.xlane.f32.xlu0 %v9729
        %v9867 = vpop.xlane.xlu0 %9866
        %9868 = vadd.xlane.f32.xlu0 %v9732
        %v9869 = vpop.xlane.xlu0 %9868
        %9870 = vadd.xlane.f32.xlu0 %v9734
        %v9871 = vpop.xlane.xlu0 %9870
        %9872 = vadd.xlane.f32.xlu0 %v9737
        %v9873 = vpop.xlane.xlu0 %9872
        %9874 = vadd.xlane.f32.xlu0 %v9739
        %v9875 = vpop.xlane.xlu0 %9874
        %9876 = vadd.xlane.f32.xlu0 %v9742
        %v9877 = vpop.xlane.xlu0 %9876
        %9878 = vadd.xlane.f32.xlu0 %v9744
        %v9879 = vpop.xlane.xlu0 %9878
        %9880 = vadd.xlane.f32.xlu0 %v9747
        %v9881 = vpop.xlane.xlu0 %9880
        %9882 = vadd.xlane.f32.xlu0 %v9749
        %v9883 = vpop.xlane.xlu0 %9882
        %9884 = vadd.xlane.f32.xlu0 %v9752
        %v9885 = vpop.xlane.xlu0 %9884
        %9886 = vadd.xlane.f32.xlu0 %v9754
        %v9887 = vpop.xlane.xlu0 %9886
        %9888 = vadd.xlane.f32.xlu0 %v9757
        %v9889 = vpop.xlane.xlu0 %9888
        %9890 = vadd.xlane.f32.xlu0 %v9759
        %v9891 = vpop.xlane.xlu0 %9890
        %9892 = vadd.xlane.f32.xlu0 %v9762
        %v9893 = vpop.xlane.xlu0 %9892
        %9894 = vadd.xlane.f32.xlu0 %v9764
        %v9895 = vpop.xlane.xlu0 %9894
        %9896 = vadd.xlane.f32.xlu0 %v9767
        %v9897 = vpop.xlane.xlu0 %9896
        %9898 = vadd.xlane.f32.xlu0 %v9769
        %v9899 = vpop.xlane.xlu0 %9898
        %9900 = vadd.xlane.f32.xlu0 %v9772
        %v9901 = vpop.xlane.xlu0 %9900
        %9902 = vadd.xlane.f32.xlu0 %v9774
        %v9903 = vpop.xlane.xlu0 %9902
        %v9904 = vmul.f32 %v9777, 0.0078125
        %v9905 = vmul.f32 %v9779, 0.0078125
        %v9906 = vmul.f32 %v9781, 0.0078125
        %v9907 = vmul.f32 %v9783, 0.0078125
        %v9908 = vmul.f32 %v9785, 0.0078125
        %v9909 = vmul.f32 %v9787, 0.0078125
        %v9910 = vmul.f32 %v9789, 0.0078125
        %v9911 = vmul.f32 %v9791, 0.0078125
        %v9912 = vmul.f32 %v9793, 0.0078125
        %v9913 = vmul.f32 %v9795, 0.0078125
        %v9914 = vmul.f32 %v9797, 0.0078125
        %v9915 = vmul.f32 %v9799, 0.0078125
        %v9916 = vmul.f32 %v9801, 0.0078125
        %v9917 = vmul.f32 %v9803, 0.0078125
        %v9918 = vmul.f32 %v9805, 0.0078125
        %v9919 = vmul.f32 %v9807, 0.0078125
        %v9920 = vmul.f32 %v9809, 0.0078125
        %v9921 = vmul.f32 %v9811, 0.0078125
        %v9922 = vmul.f32 %v9813, 0.0078125
        %v9923 = vmul.f32 %v9815, 0.0078125
        %v9924 = vmul.f32 %v9817, 0.0078125
        %v9925 = vmul.f32 %v9819, 0.0078125
        %v9926 = vmul.f32 %v9821, 0.0078125
        %v9927 = vmul.f32 %v9823, 0.0078125
        %v9928 = vmul.f32 %v9825, 0.0078125
        %v9929 = vmul.f32 %v9827, 0.0078125
        %v9930 = vmul.f32 %v9829, 0.0078125
        %v9931 = vmul.f32 %v9831, 0.0078125
        %v9932 = vmul.f32 %v9833, 0.0078125
        %v9933 = vmul.f32 %v9835, 0.0078125
        %v9934 = vmul.f32 %v9837, 0.0078125
        %v9935 = vmul.f32 %v9839, 0.0078125
        %v9936 = vmul.f32 %v9841, 0.0078125
        %v9937 = vmul.f32 %v9843, 0.0078125
        %v9938 = vmul.f32 %v9845, 0.0078125
        %v9939 = vmul.f32 %v9847, 0.0078125
        %v9940 = vmul.f32 %v9849, 0.0078125
        %v9941 = vmul.f32 %v9851, 0.0078125
        %v9942 = vmul.f32 %v9853, 0.0078125
        %v9943 = vmul.f32 %v9855, 0.0078125
        %v9944 = vmul.f32 %v9857, 0.0078125
        %v9945 = vmul.f32 %v9859, 0.0078125
        %v9946 = vmul.f32 %v9861, 0.0078125
        %v9947 = vmul.f32 %v9863, 0.0078125
        %v9948 = vmul.f32 %v9865, 0.0078125
        %v9949 = vmul.f32 %v9867, 0.0078125
        %v9950 = vmul.f32 %v9869, 0.0078125
        %v9951 = vmul.f32 %v9871, 0.0078125
        %v9952 = vmul.f32 %v9873, 0.0078125
        %v9953 = vmul.f32 %v9875, 0.0078125
        %v9954 = vmul.f32 %v9877, 0.0078125
        %v9955 = vmul.f32 %v9879, 0.0078125
        %v9956 = vmul.f32 %v9881, 0.0078125
        %v9957 = vmul.f32 %v9883, 0.0078125
        %v9958 = vmul.f32 %v9885, 0.0078125
        %v9959 = vmul.f32 %v9887, 0.0078125
        %v9960 = vmul.f32 %v9889, 0.0078125
        %v9961 = vmul.f32 %v9891, 0.0078125
        %v9962 = vmul.f32 %v9893, 0.0078125
        %v9963 = vmul.f32 %v9895, 0.0078125
        %v9964 = vmul.f32 %v9897, 0.0078125
        %v9965 = vmul.f32 %v9899, 0.0078125
        %v9966 = vmul.f32 %v9901, 0.0078125
        %v9967 = vmul.f32 %v9903, 0.0078125
        %v9968 = vsub.f32 %v9617, %v9904
        %v9969 = vsub.f32 %v9619, %v9905
        %v9970 = vsub.f32 %v9622, %v9906
        %v9971 = vsub.f32 %v9624, %v9907
        %v9972 = vsub.f32 %v9627, %v9908
        %v9973 = vsub.f32 %v9629, %v9909
        %v9974 = vsub.f32 %v9632, %v9910
        %v9975 = vsub.f32 %v9634, %v9911
        %v9976 = vsub.f32 %v9637, %v9912
        %v9977 = vsub.f32 %v9639, %v9913
        %v9978 = vsub.f32 %v9642, %v9914
        %v9979 = vsub.f32 %v9644, %v9915
        %v9980 = vsub.f32 %v9647, %v9916
        %v9981 = vsub.f32 %v9649, %v9917
        %v9982 = vsub.f32 %v9652, %v9918
        %v9983 = vsub.f32 %v9654, %v9919
        %v9984 = vsub.f32 %v9657, %v9920
        %v9985 = vsub.f32 %v9659, %v9921
        %v9986 = vsub.f32 %v9662, %v9922
        %v9987 = vsub.f32 %v9664, %v9923
        %v9988 = vsub.f32 %v9667, %v9924
        %v9989 = vsub.f32 %v9669, %v9925
        %v9990 = vsub.f32 %v9672, %v9926
        %v9991 = vsub.f32 %v9674, %v9927
        %v9992 = vsub.f32 %v9677, %v9928
        %v9993 = vsub.f32 %v9679, %v9929
        %v9994 = vsub.f32 %v9682, %v9930
        %v9995 = vsub.f32 %v9684, %v9931
        %v9996 = vsub.f32 %v9687, %v9932
        %v9997 = vsub.f32 %v9689, %v9933
        %v9998 = vsub.f32 %v9692, %v9934
        %v9999 = vsub.f32 %v9694, %v9935
        %v10000 = vsub.f32 %v9697, %v9936
        %v10001 = vsub.f32 %v9699, %v9937
        %v10002 = vsub.f32 %v9702, %v9938
        %v10003 = vsub.f32 %v9704, %v9939
        %v10004 = vsub.f32 %v9707, %v9940
        %v10005 = vsub.f32 %v9709, %v9941
        %v10006 = vsub.f32 %v9712, %v9942
        %v10007 = vsub.f32 %v9714, %v9943
        %v10008 = vsub.f32 %v9717, %v9944
        %v10009 = vsub.f32 %v9719, %v9945
        %v10010 = vsub.f32 %v9722, %v9946
        %v10011 = vsub.f32 %v9724, %v9947
        %v10012 = vsub.f32 %v9727, %v9948
        %v10013 = vsub.f32 %v9729, %v9949
        %v10014 = vsub.f32 %v9732, %v9950
        %v10015 = vsub.f32 %v9734, %v9951
        %v10016 = vsub.f32 %v9737, %v9952
        %v10017 = vsub.f32 %v9739, %v9953
        %v10018 = vsub.f32 %v9742, %v9954
        %v10019 = vsub.f32 %v9744, %v9955
        %v10020 = vsub.f32 %v9747, %v9956
        %v10021 = vsub.f32 %v9749, %v9957
        %v10022 = vsub.f32 %v9752, %v9958
        %v10023 = vsub.f32 %v9754, %v9959
        %v10024 = vsub.f32 %v9757, %v9960
        %v10025 = vsub.f32 %v9759, %v9961
        %v10026 = vsub.f32 %v9762, %v9962
        %v10027 = vsub.f32 %v9764, %v9963
        %v10028 = vsub.f32 %v9767, %v9964
        %v10029 = vsub.f32 %v9769, %v9965
        %v10030 = vsub.f32 %v9772, %v9966
        %v10031 = vsub.f32 %v9774, %v9967
        %v10032 = vmul.f32 %v9968, %v9968
        %v10033 = vmul.f32 %v9969, %v9969
        %v10034 = vmul.f32 %v9970, %v9970
        %v10035 = vmul.f32 %v9971, %v9971
        %v10036 = vmul.f32 %v9972, %v9972
        %v10037 = vmul.f32 %v9973, %v9973
        %v10038 = vmul.f32 %v9974, %v9974
        %v10039 = vmul.f32 %v9975, %v9975
        %v10040 = vmul.f32 %v9976, %v9976
        %v10041 = vmul.f32 %v9977, %v9977
        %v10042 = vmul.f32 %v9978, %v9978
        %v10043 = vmul.f32 %v9979, %v9979
        %v10044 = vmul.f32 %v9980, %v9980
        %v10045 = vmul.f32 %v9981, %v9981
        %v10046 = vmul.f32 %v9982, %v9982
        %v10047 = vmul.f32 %v9983, %v9983
        %v10048 = vmul.f32 %v9984, %v9984
        %v10049 = vmul.f32 %v9985, %v9985
        %v10050 = vmul.f32 %v9986, %v9986
        %v10051 = vmul.f32 %v9987, %v9987
        %v10052 = vmul.f32 %v9988, %v9988
        %v10053 = vmul.f32 %v9989, %v9989
        %v10054 = vmul.f32 %v9990, %v9990
        %v10055 = vmul.f32 %v9991, %v9991
        %v10056 = vmul.f32 %v9992, %v9992
        %v10057 = vmul.f32 %v9993, %v9993
        %v10058 = vmul.f32 %v9994, %v9994
        %v10059 = vmul.f32 %v9995, %v9995
        %v10060 = vmul.f32 %v9996, %v9996
        %v10061 = vmul.f32 %v9997, %v9997
        %v10062 = vmul.f32 %v9998, %v9998
        %v10063 = vmul.f32 %v9999, %v9999
        %v10064 = vmul.f32 %v10000, %v10000
        %v10065 = vmul.f32 %v10001, %v10001
        %v10066 = vmul.f32 %v10002, %v10002
        %v10067 = vmul.f32 %v10003, %v10003
        %v10068 = vmul.f32 %v10004, %v10004
        %v10069 = vmul.f32 %v10005, %v10005
        %v10070 = vmul.f32 %v10006, %v10006
        %v10071 = vmul.f32 %v10007, %v10007
        %v10072 = vmul.f32 %v10008, %v10008
        %v10073 = vmul.f32 %v10009, %v10009
        %v10074 = vmul.f32 %v10010, %v10010
        %v10075 = vmul.f32 %v10011, %v10011
        %v10076 = vmul.f32 %v10012, %v10012
        %v10077 = vmul.f32 %v10013, %v10013
        %v10078 = vmul.f32 %v10014, %v10014
        %v10079 = vmul.f32 %v10015, %v10015
        %v10080 = vmul.f32 %v10016, %v10016
        %v10081 = vmul.f32 %v10017, %v10017
        %v10082 = vmul.f32 %v10018, %v10018
        %v10083 = vmul.f32 %v10019, %v10019
        %v10084 = vmul.f32 %v10020, %v10020
        %v10085 = vmul.f32 %v10021, %v10021
        %v10086 = vmul.f32 %v10022, %v10022
        %v10087 = vmul.f32 %v10023, %v10023
        %v10088 = vmul.f32 %v10024, %v10024
        %v10089 = vmul.f32 %v10025, %v10025
        %v10090 = vmul.f32 %v10026, %v10026
        %v10091 = vmul.f32 %v10027, %v10027
        %v10092 = vmul.f32 %v10028, %v10028
        %v10093 = vmul.f32 %v10029, %v10029
        %v10094 = vmul.f32 %v10030, %v10030
        %v10095 = vmul.f32 %v10031, %v10031
        %10096 = vadd.xlane.f32.xlu0 %v10032
        %v10097 = vpop.xlane.xlu0 %10096
        %10098 = vadd.xlane.f32.xlu0 %v10033
        %v10099 = vpop.xlane.xlu0 %10098
        %10100 = vadd.xlane.f32.xlu0 %v10034
        %v10101 = vpop.xlane.xlu0 %10100
        %10102 = vadd.xlane.f32.xlu0 %v10035
        %v10103 = vpop.xlane.xlu0 %10102
        %10104 = vadd.xlane.f32.xlu0 %v10036
        %v10105 = vpop.xlane.xlu0 %10104
        %10106 = vadd.xlane.f32.xlu0 %v10037
        %v10107 = vpop.xlane.xlu0 %10106
        %10108 = vadd.xlane.f32.xlu0 %v10038
        %v10109 = vpop.xlane.xlu0 %10108
        %10110 = vadd.xlane.f32.xlu0 %v10039
        %v10111 = vpop.xlane.xlu0 %10110
        %10112 = vadd.xlane.f32.xlu0 %v10040
        %v10113 = vpop.xlane.xlu0 %10112
        %10114 = vadd.xlane.f32.xlu0 %v10041
        %v10115 = vpop.xlane.xlu0 %10114
        %10116 = vadd.xlane.f32.xlu0 %v10042
        %v10117 = vpop.xlane.xlu0 %10116
        %10118 = vadd.xlane.f32.xlu0 %v10043
        %v10119 = vpop.xlane.xlu0 %10118
        %10120 = vadd.xlane.f32.xlu0 %v10044
        %v10121 = vpop.xlane.xlu0 %10120
        %10122 = vadd.xlane.f32.xlu0 %v10045
        %v10123 = vpop.xlane.xlu0 %10122
        %10124 = vadd.xlane.f32.xlu0 %v10046
        %v10125 = vpop.xlane.xlu0 %10124
        %10126 = vadd.xlane.f32.xlu0 %v10047
        %v10127 = vpop.xlane.xlu0 %10126
        %10128 = vadd.xlane.f32.xlu0 %v10048
        %v10129 = vpop.xlane.xlu0 %10128
        %10130 = vadd.xlane.f32.xlu0 %v10049
        %v10131 = vpop.xlane.xlu0 %10130
        %10132 = vadd.xlane.f32.xlu0 %v10050
        %v10133 = vpop.xlane.xlu0 %10132
        %10134 = vadd.xlane.f32.xlu0 %v10051
        %v10135 = vpop.xlane.xlu0 %10134
        %10136 = vadd.xlane.f32.xlu0 %v10052
        %v10137 = vpop.xlane.xlu0 %10136
        %10138 = vadd.xlane.f32.xlu0 %v10053
        %v10139 = vpop.xlane.xlu0 %10138
        %10140 = vadd.xlane.f32.xlu0 %v10054
        %v10141 = vpop.xlane.xlu0 %10140
        %10142 = vadd.xlane.f32.xlu0 %v10055
        %v10143 = vpop.xlane.xlu0 %10142
        %10144 = vadd.xlane.f32.xlu0 %v10056
        %v10145 = vpop.xlane.xlu0 %10144
        %10146 = vadd.xlane.f32.xlu0 %v10057
        %v10147 = vpop.xlane.xlu0 %10146
        %10148 = vadd.xlane.f32.xlu0 %v10058
        %v10149 = vpop.xlane.xlu0 %10148
        %10150 = vadd.xlane.f32.xlu0 %v10059
        %v10151 = vpop.xlane.xlu0 %10150
        %10152 = vadd.xlane.f32.xlu0 %v10060
        %v10153 = vpop.xlane.xlu0 %10152
        %10154 = vadd.xlane.f32.xlu0 %v10061
        %v10155 = vpop.xlane.xlu0 %10154
        %10156 = vadd.xlane.f32.xlu0 %v10062
        %v10157 = vpop.xlane.xlu0 %10156
        %10158 = vadd.xlane.f32.xlu0 %v10063
        %v10159 = vpop.xlane.xlu0 %10158
        %10160 = vadd.xlane.f32.xlu0 %v10064
        %v10161 = vpop.xlane.xlu0 %10160
        %10162 = vadd.xlane.f32.xlu0 %v10065
        %v10163 = vpop.xlane.xlu0 %10162
        %10164 = vadd.xlane.f32.xlu0 %v10066
        %v10165 = vpop.xlane.xlu0 %10164
        %10166 = vadd.xlane.f32.xlu0 %v10067
        %v10167 = vpop.xlane.xlu0 %10166
        %10168 = vadd.xlane.f32.xlu0 %v10068
        %v10169 = vpop.xlane.xlu0 %10168
        %10170 = vadd.xlane.f32.xlu0 %v10069
        %v10171 = vpop.xlane.xlu0 %10170
        %10172 = vadd.xlane.f32.xlu0 %v10070
        %v10173 = vpop.xlane.xlu0 %10172
        %10174 = vadd.xlane.f32.xlu0 %v10071
        %v10175 = vpop.xlane.xlu0 %10174
        %10176 = vadd.xlane.f32.xlu0 %v10072
        %v10177 = vpop.xlane.xlu0 %10176
        %10178 = vadd.xlane.f32.xlu0 %v10073
        %v10179 = vpop.xlane.xlu0 %10178
        %10180 = vadd.xlane.f32.xlu0 %v10074
        %v10181 = vpop.xlane.xlu0 %10180
        %10182 = vadd.xlane.f32.xlu0 %v10075
        %v10183 = vpop.xlane.xlu0 %10182
        %10184 = vadd.xlane.f32.xlu0 %v10076
        %v10185 = vpop.xlane.xlu0 %10184
        %10186 = vadd.xlane.f32.xlu0 %v10077
        %v10187 = vpop.xlane.xlu0 %10186
        %10188 = vadd.xlane.f32.xlu0 %v10078
        %v10189 = vpop.xlane.xlu0 %10188
        %10190 = vadd.xlane.f32.xlu0 %v10079
        %v10191 = vpop.xlane.xlu0 %10190
        %10192 = vadd.xlane.f32.xlu0 %v10080
        %v10193 = vpop.xlane.xlu0 %10192
        %10194 = vadd.xlane.f32.xlu0 %v10081
        %v10195 = vpop.xlane.xlu0 %10194
        %10196 = vadd.xlane.f32.xlu0 %v10082
        %v10197 = vpop.xlane.xlu0 %10196
        %10198 = vadd.xlane.f32.xlu0 %v10083
        %v10199 = vpop.xlane.xlu0 %10198
        %10200 = vadd.xlane.f32.xlu0 %v10084
        %v10201 = vpop.xlane.xlu0 %10200
        %10202 = vadd.xlane.f32.xlu0 %v10085
        %v10203 = vpop.xlane.xlu0 %10202
        %10204 = vadd.xlane.f32.xlu0 %v10086
        %v10205 = vpop.xlane.xlu0 %10204
        %10206 = vadd.xlane.f32.xlu0 %v10087
        %v10207 = vpop.xlane.xlu0 %10206
        %10208 = vadd.xlane.f32.xlu0 %v10088
        %v10209 = vpop.xlane.xlu0 %10208
        %10210 = vadd.xlane.f32.xlu0 %v10089
        %v10211 = vpop.xlane.xlu0 %10210
        %10212 = vadd.xlane.f32.xlu0 %v10090
        %v10213 = vpop.xlane.xlu0 %10212
        %10214 = vadd.xlane.f32.xlu0 %v10091
        %v10215 = vpop.xlane.xlu0 %10214
        %10216 = vadd.xlane.f32.xlu0 %v10092
        %v10217 = vpop.xlane.xlu0 %10216
        %10218 = vadd.xlane.f32.xlu0 %v10093
        %v10219 = vpop.xlane.xlu0 %10218
        %10220 = vadd.xlane.f32.xlu0 %v10094
        %v10221 = vpop.xlane.xlu0 %10220
        %10222 = vadd.xlane.f32.xlu0 %v10095
        %v10223 = vpop.xlane.xlu0 %10222
        %v10224 = vmul.f32 %v10097, 0.0078125
        %v10225 = vmul.f32 %v10099, 0.0078125
        %v10226 = vmul.f32 %v10101, 0.0078125
        %v10227 = vmul.f32 %v10103, 0.0078125
        %v10228 = vmul.f32 %v10105, 0.0078125
        %v10229 = vmul.f32 %v10107, 0.0078125
        %v10230 = vmul.f32 %v10109, 0.0078125
        %v10231 = vmul.f32 %v10111, 0.0078125
        %v10232 = vmul.f32 %v10113, 0.0078125
        %v10233 = vmul.f32 %v10115, 0.0078125
        %v10234 = vmul.f32 %v10117, 0.0078125
        %v10235 = vmul.f32 %v10119, 0.0078125
        %v10236 = vmul.f32 %v10121, 0.0078125
        %v10237 = vmul.f32 %v10123, 0.0078125
        %v10238 = vmul.f32 %v10125, 0.0078125
        %v10239 = vmul.f32 %v10127, 0.0078125
        %v10240 = vmul.f32 %v10129, 0.0078125
        %v10241 = vmul.f32 %v10131, 0.0078125
        %v10242 = vmul.f32 %v10133, 0.0078125
        %v10243 = vmul.f32 %v10135, 0.0078125
        %v10244 = vmul.f32 %v10137, 0.0078125
        %v10245 = vmul.f32 %v10139, 0.0078125
        %v10246 = vmul.f32 %v10141, 0.0078125
        %v10247 = vmul.f32 %v10143, 0.0078125
        %v10248 = vmul.f32 %v10145, 0.0078125
        %v10249 = vmul.f32 %v10147, 0.0078125
        %v10250 = vmul.f32 %v10149, 0.0078125
        %v10251 = vmul.f32 %v10151, 0.0078125
        %v10252 = vmul.f32 %v10153, 0.0078125
        %v10253 = vmul.f32 %v10155, 0.0078125
        %v10254 = vmul.f32 %v10157, 0.0078125
        %v10255 = vmul.f32 %v10159, 0.0078125
        %v10256 = vmul.f32 %v10161, 0.0078125
        %v10257 = vmul.f32 %v10163, 0.0078125
        %v10258 = vmul.f32 %v10165, 0.0078125
        %v10259 = vmul.f32 %v10167, 0.0078125
        %v10260 = vmul.f32 %v10169, 0.0078125
        %v10261 = vmul.f32 %v10171, 0.0078125
        %v10262 = vmul.f32 %v10173, 0.0078125
        %v10263 = vmul.f32 %v10175, 0.0078125
        %v10264 = vmul.f32 %v10177, 0.0078125
        %v10265 = vmul.f32 %v10179, 0.0078125
        %v10266 = vmul.f32 %v10181, 0.0078125
        %v10267 = vmul.f32 %v10183, 0.0078125
        %v10268 = vmul.f32 %v10185, 0.0078125
        %v10269 = vmul.f32 %v10187, 0.0078125
        %v10270 = vmul.f32 %v10189, 0.0078125
        %v10271 = vmul.f32 %v10191, 0.0078125
        %v10272 = vmul.f32 %v10193, 0.0078125
        %v10273 = vmul.f32 %v10195, 0.0078125
        %v10274 = vmul.f32 %v10197, 0.0078125
        %v10275 = vmul.f32 %v10199, 0.0078125
        %v10276 = vmul.f32 %v10201, 0.0078125
        %v10277 = vmul.f32 %v10203, 0.0078125
        %v10278 = vmul.f32 %v10205, 0.0078125
        %v10279 = vmul.f32 %v10207, 0.0078125
        %v10280 = vmul.f32 %v10209, 0.0078125
        %v10281 = vmul.f32 %v10211, 0.0078125
        %v10282 = vmul.f32 %v10213, 0.0078125
        %v10283 = vmul.f32 %v10215, 0.0078125
        %v10284 = vmul.f32 %v10217, 0.0078125
        %v10285 = vmul.f32 %v10219, 0.0078125
        %v10286 = vmul.f32 %v10221, 0.0078125
        %v10287 = vmul.f32 %v10223, 0.0078125
        %v10288 = vadd.f32 %v10224, 1e-06
        %v10289 = vadd.f32 %v10225, 1e-06
        %v10290 = vadd.f32 %v10226, 1e-06
        %v10291 = vadd.f32 %v10227, 1e-06
        %v10292 = vadd.f32 %v10228, 1e-06
        %v10293 = vadd.f32 %v10229, 1e-06
        %v10294 = vadd.f32 %v10230, 1e-06
        %v10295 = vadd.f32 %v10231, 1e-06
        %v10296 = vadd.f32 %v10232, 1e-06
        %v10297 = vadd.f32 %v10233, 1e-06
        %v10298 = vadd.f32 %v10234, 1e-06
        %v10299 = vadd.f32 %v10235, 1e-06
        %v10300 = vadd.f32 %v10236, 1e-06
        %v10301 = vadd.f32 %v10237, 1e-06
        %v10302 = vadd.f32 %v10238, 1e-06
        %v10303 = vadd.f32 %v10239, 1e-06
        %v10304 = vadd.f32 %v10240, 1e-06
        %v10305 = vadd.f32 %v10241, 1e-06
        %v10306 = vadd.f32 %v10242, 1e-06
        %v10307 = vadd.f32 %v10243, 1e-06
        %v10308 = vadd.f32 %v10244, 1e-06
        %v10309 = vadd.f32 %v10245, 1e-06
        %v10310 = vadd.f32 %v10246, 1e-06
        %v10311 = vadd.f32 %v10247, 1e-06
        %v10312 = vadd.f32 %v10248, 1e-06
        %v10313 = vadd.f32 %v10249, 1e-06
        %v10314 = vadd.f32 %v10250, 1e-06
        %v10315 = vadd.f32 %v10251, 1e-06
        %v10316 = vadd.f32 %v10252, 1e-06
        %v10317 = vadd.f32 %v10253, 1e-06
        %v10318 = vadd.f32 %v10254, 1e-06
        %v10319 = vadd.f32 %v10255, 1e-06
        %v10320 = vadd.f32 %v10256, 1e-06
        %v10321 = vadd.f32 %v10257, 1e-06
        %v10322 = vadd.f32 %v10258, 1e-06
        %v10323 = vadd.f32 %v10259, 1e-06
        %v10324 = vadd.f32 %v10260, 1e-06
        %v10325 = vadd.f32 %v10261, 1e-06
        %v10326 = vadd.f32 %v10262, 1e-06
        %v10327 = vadd.f32 %v10263, 1e-06
        %v10328 = vadd.f32 %v10264, 1e-06
        %v10329 = vadd.f32 %v10265, 1e-06
        %v10330 = vadd.f32 %v10266, 1e-06
        %v10331 = vadd.f32 %v10267, 1e-06
        %v10332 = vadd.f32 %v10268, 1e-06
        %v10333 = vadd.f32 %v10269, 1e-06
        %v10334 = vadd.f32 %v10270, 1e-06
        %v10335 = vadd.f32 %v10271, 1e-06
        %v10336 = vadd.f32 %v10272, 1e-06
        %v10337 = vadd.f32 %v10273, 1e-06
        %v10338 = vadd.f32 %v10274, 1e-06
        %v10339 = vadd.f32 %v10275, 1e-06
        %v10340 = vadd.f32 %v10276, 1e-06
        %v10341 = vadd.f32 %v10277, 1e-06
        %v10342 = vadd.f32 %v10278, 1e-06
        %v10343 = vadd.f32 %v10279, 1e-06
        %v10344 = vadd.f32 %v10280, 1e-06
        %v10345 = vadd.f32 %v10281, 1e-06
        %v10346 = vadd.f32 %v10282, 1e-06
        %v10347 = vadd.f32 %v10283, 1e-06
        %v10348 = vadd.f32 %v10284, 1e-06
        %v10349 = vadd.f32 %v10285, 1e-06
        %v10350 = vadd.f32 %v10286, 1e-06
        %v10351 = vadd.f32 %v10287, 1e-06
        %v10352 = vrsqrt.pop %v10288
        %v10353 = vmul.f32 %v10352, %v10288
        %v10354 = vmul.f32 %v10353, %v10352
        %v10355 = vmul.f32 0.5, %v10354
        %v10356 = vsub.f32 1.5, %v10355
        %v10357 = vmul.f32 %v10352, %v10356
        %vm10358 = vweird.f32 %v10288
        %vm10359 = vweird.f32 %v10352
        %vm10360 = vmor %vm10358, %vm10359
        %v10361 = vsel %vm10360, %v10352, %v10357
        %v10362 = vrsqrt.pop %v10289
        %v10363 = vmul.f32 %v10362, %v10289
        %v10364 = vmul.f32 %v10363, %v10362
        %v10365 = vmul.f32 0.5, %v10364
        %v10366 = vsub.f32 1.5, %v10365
        %v10367 = vmul.f32 %v10362, %v10366
        %vm10368 = vweird.f32 %v10289
        %vm10369 = vweird.f32 %v10362
        %vm10370 = vmor %vm10368, %vm10369
        %v10371 = vsel %vm10370, %v10362, %v10367
        %v10372 = vrsqrt.pop %v10290
        %v10373 = vmul.f32 %v10372, %v10290
        %v10374 = vmul.f32 %v10373, %v10372
        %v10375 = vmul.f32 0.5, %v10374
        %v10376 = vsub.f32 1.5, %v10375
        %v10377 = vmul.f32 %v10372, %v10376
        %vm10378 = vweird.f32 %v10290
        %vm10379 = vweird.f32 %v10372
        %vm10380 = vmor %vm10378, %vm10379
        %v10381 = vsel %vm10380, %v10372, %v10377
        %v10382 = vrsqrt.pop %v10291
        %v10383 = vmul.f32 %v10382, %v10291
        %v10384 = vmul.f32 %v10383, %v10382
        %v10385 = vmul.f32 0.5, %v10384
        %v10386 = vsub.f32 1.5, %v10385
        %v10387 = vmul.f32 %v10382, %v10386
        %vm10388 = vweird.f32 %v10291
        %vm10389 = vweird.f32 %v10382
        %vm10390 = vmor %vm10388, %vm10389
        %v10391 = vsel %vm10390, %v10382, %v10387
        %v10392 = vrsqrt.pop %v10292
        %v10393 = vmul.f32 %v10392, %v10292
        %v10394 = vmul.f32 %v10393, %v10392
        %v10395 = vmul.f32 0.5, %v10394
        %v10396 = vsub.f32 1.5, %v10395
        %v10397 = vmul.f32 %v10392, %v10396
        %vm10398 = vweird.f32 %v10292
        %vm10399 = vweird.f32 %v10392
        %vm10400 = vmor %vm10398, %vm10399
        %v10401 = vsel %vm10400, %v10392, %v10397
        %v10402 = vrsqrt.pop %v10293
        %v10403 = vmul.f32 %v10402, %v10293
        %v10404 = vmul.f32 %v10403, %v10402
        %v10405 = vmul.f32 0.5, %v10404
        %v10406 = vsub.f32 1.5, %v10405
        %v10407 = vmul.f32 %v10402, %v10406
        %vm10408 = vweird.f32 %v10293
        %vm10409 = vweird.f32 %v10402
        %vm10410 = vmor %vm10408, %vm10409
        %v10411 = vsel %vm10410, %v10402, %v10407
        %v10412 = vrsqrt.pop %v10294
        %v10413 = vmul.f32 %v10412, %v10294
        %v10414 = vmul.f32 %v10413, %v10412
        %v10415 = vmul.f32 0.5, %v10414
        %v10416 = vsub.f32 1.5, %v10415
        %v10417 = vmul.f32 %v10412, %v10416
        %vm10418 = vweird.f32 %v10294
        %vm10419 = vweird.f32 %v10412
        %vm10420 = vmor %vm10418, %vm10419
        %v10421 = vsel %vm10420, %v10412, %v10417
        %v10422 = vrsqrt.pop %v10295
        %v10423 = vmul.f32 %v10422, %v10295
        %v10424 = vmul.f32 %v10423, %v10422
        %v10425 = vmul.f32 0.5, %v10424
        %v10426 = vsub.f32 1.5, %v10425
        %v10427 = vmul.f32 %v10422, %v10426
        %vm10428 = vweird.f32 %v10295
        %vm10429 = vweird.f32 %v10422
        %vm10430 = vmor %vm10428, %vm10429
        %v10431 = vsel %vm10430, %v10422, %v10427
        %v10432 = vrsqrt.pop %v10296
        %v10433 = vmul.f32 %v10432, %v10296
        %v10434 = vmul.f32 %v10433, %v10432
        %v10435 = vmul.f32 0.5, %v10434
        %v10436 = vsub.f32 1.5, %v10435
        %v10437 = vmul.f32 %v10432, %v10436
        %vm10438 = vweird.f32 %v10296
        %vm10439 = vweird.f32 %v10432
        %vm10440 = vmor %vm10438, %vm10439
        %v10441 = vsel %vm10440, %v10432, %v10437
        %v10442 = vrsqrt.pop %v10297
        %v10443 = vmul.f32 %v10442, %v10297
        %v10444 = vmul.f32 %v10443, %v10442
        %v10445 = vmul.f32 0.5, %v10444
        %v10446 = vsub.f32 1.5, %v10445
        %v10447 = vmul.f32 %v10442, %v10446
        %vm10448 = vweird.f32 %v10297
        %vm10449 = vweird.f32 %v10442
        %vm10450 = vmor %vm10448, %vm10449
        %v10451 = vsel %vm10450, %v10442, %v10447
        %v10452 = vrsqrt.pop %v10298
        %v10453 = vmul.f32 %v10452, %v10298
        %v10454 = vmul.f32 %v10453, %v10452
        %v10455 = vmul.f32 0.5, %v10454
        %v10456 = vsub.f32 1.5, %v10455
        %v10457 = vmul.f32 %v10452, %v10456
        %vm10458 = vweird.f32 %v10298
        %vm10459 = vweird.f32 %v10452
        %vm10460 = vmor %vm10458, %vm10459
        %v10461 = vsel %vm10460, %v10452, %v10457
        %v10462 = vrsqrt.pop %v10299
        %v10463 = vmul.f32 %v10462, %v10299
        %v10464 = vmul.f32 %v10463, %v10462
        %v10465 = vmul.f32 0.5, %v10464
        %v10466 = vsub.f32 1.5, %v10465
        %v10467 = vmul.f32 %v10462, %v10466
        %vm10468 = vweird.f32 %v10299
        %vm10469 = vweird.f32 %v10462
        %vm10470 = vmor %vm10468, %vm10469
        %v10471 = vsel %vm10470, %v10462, %v10467
        %v10472 = vrsqrt.pop %v10300
        %v10473 = vmul.f32 %v10472, %v10300
        %v10474 = vmul.f32 %v10473, %v10472
        %v10475 = vmul.f32 0.5, %v10474
        %v10476 = vsub.f32 1.5, %v10475
        %v10477 = vmul.f32 %v10472, %v10476
        %vm10478 = vweird.f32 %v10300
        %vm10479 = vweird.f32 %v10472
        %vm10480 = vmor %vm10478, %vm10479
        %v10481 = vsel %vm10480, %v10472, %v10477
        %v10482 = vrsqrt.pop %v10301
        %v10483 = vmul.f32 %v10482, %v10301
        %v10484 = vmul.f32 %v10483, %v10482
        %v10485 = vmul.f32 0.5, %v10484
        %v10486 = vsub.f32 1.5, %v10485
        %v10487 = vmul.f32 %v10482, %v10486
        %vm10488 = vweird.f32 %v10301
        %vm10489 = vweird.f32 %v10482
        %vm10490 = vmor %vm10488, %vm10489
        %v10491 = vsel %vm10490, %v10482, %v10487
        %v10492 = vrsqrt.pop %v10302
        %v10493 = vmul.f32 %v10492, %v10302
        %v10494 = vmul.f32 %v10493, %v10492
        %v10495 = vmul.f32 0.5, %v10494
        %v10496 = vsub.f32 1.5, %v10495
        %v10497 = vmul.f32 %v10492, %v10496
        %vm10498 = vweird.f32 %v10302
        %vm10499 = vweird.f32 %v10492
        %vm10500 = vmor %vm10498, %vm10499
        %v10501 = vsel %vm10500, %v10492, %v10497
        %v10502 = vrsqrt.pop %v10303
        %v10503 = vmul.f32 %v10502, %v10303
        %v10504 = vmul.f32 %v10503, %v10502
        %v10505 = vmul.f32 0.5, %v10504
        %v10506 = vsub.f32 1.5, %v10505
        %v10507 = vmul.f32 %v10502, %v10506
        %vm10508 = vweird.f32 %v10303
        %vm10509 = vweird.f32 %v10502
        %vm10510 = vmor %vm10508, %vm10509
        %v10511 = vsel %vm10510, %v10502, %v10507
        %v10512 = vrsqrt.pop %v10304
        %v10513 = vmul.f32 %v10512, %v10304
        %v10514 = vmul.f32 %v10513, %v10512
        %v10515 = vmul.f32 0.5, %v10514
        %v10516 = vsub.f32 1.5, %v10515
        %v10517 = vmul.f32 %v10512, %v10516
        %vm10518 = vweird.f32 %v10304
        %vm10519 = vweird.f32 %v10512
        %vm10520 = vmor %vm10518, %vm10519
        %v10521 = vsel %vm10520, %v10512, %v10517
        %v10522 = vrsqrt.pop %v10305
        %v10523 = vmul.f32 %v10522, %v10305
        %v10524 = vmul.f32 %v10523, %v10522
        %v10525 = vmul.f32 0.5, %v10524
        %v10526 = vsub.f32 1.5, %v10525
        %v10527 = vmul.f32 %v10522, %v10526
        %vm10528 = vweird.f32 %v10305
        %vm10529 = vweird.f32 %v10522
        %vm10530 = vmor %vm10528, %vm10529
        %v10531 = vsel %vm10530, %v10522, %v10527
        %v10532 = vrsqrt.pop %v10306
        %v10533 = vmul.f32 %v10532, %v10306
        %v10534 = vmul.f32 %v10533, %v10532
        %v10535 = vmul.f32 0.5, %v10534
        %v10536 = vsub.f32 1.5, %v10535
        %v10537 = vmul.f32 %v10532, %v10536
        %vm10538 = vweird.f32 %v10306
        %vm10539 = vweird.f32 %v10532
        %vm10540 = vmor %vm10538, %vm10539
        %v10541 = vsel %vm10540, %v10532, %v10537
        %v10542 = vrsqrt.pop %v10307
        %v10543 = vmul.f32 %v10542, %v10307
        %v10544 = vmul.f32 %v10543, %v10542
        %v10545 = vmul.f32 0.5, %v10544
        %v10546 = vsub.f32 1.5, %v10545
        %v10547 = vmul.f32 %v10542, %v10546
        %vm10548 = vweird.f32 %v10307
        %vm10549 = vweird.f32 %v10542
        %vm10550 = vmor %vm10548, %vm10549
        %v10551 = vsel %vm10550, %v10542, %v10547
        %v10552 = vrsqrt.pop %v10308
        %v10553 = vmul.f32 %v10552, %v10308
        %v10554 = vmul.f32 %v10553, %v10552
        %v10555 = vmul.f32 0.5, %v10554
        %v10556 = vsub.f32 1.5, %v10555
        %v10557 = vmul.f32 %v10552, %v10556
        %vm10558 = vweird.f32 %v10308
        %vm10559 = vweird.f32 %v10552
        %vm10560 = vmor %vm10558, %vm10559
        %v10561 = vsel %vm10560, %v10552, %v10557
        %v10562 = vrsqrt.pop %v10309
        %v10563 = vmul.f32 %v10562, %v10309
        %v10564 = vmul.f32 %v10563, %v10562
        %v10565 = vmul.f32 0.5, %v10564
        %v10566 = vsub.f32 1.5, %v10565
        %v10567 = vmul.f32 %v10562, %v10566
        %vm10568 = vweird.f32 %v10309
        %vm10569 = vweird.f32 %v10562
        %vm10570 = vmor %vm10568, %vm10569
        %v10571 = vsel %vm10570, %v10562, %v10567
        %v10572 = vrsqrt.pop %v10310
        %v10573 = vmul.f32 %v10572, %v10310
        %v10574 = vmul.f32 %v10573, %v10572
        %v10575 = vmul.f32 0.5, %v10574
        %v10576 = vsub.f32 1.5, %v10575
        %v10577 = vmul.f32 %v10572, %v10576
        %vm10578 = vweird.f32 %v10310
        %vm10579 = vweird.f32 %v10572
        %vm10580 = vmor %vm10578, %vm10579
        %v10581 = vsel %vm10580, %v10572, %v10577
        %v10582 = vrsqrt.pop %v10311
        %v10583 = vmul.f32 %v10582, %v10311
        %v10584 = vmul.f32 %v10583, %v10582
        %v10585 = vmul.f32 0.5, %v10584
        %v10586 = vsub.f32 1.5, %v10585
        %v10587 = vmul.f32 %v10582, %v10586
        %vm10588 = vweird.f32 %v10311
        %vm10589 = vweird.f32 %v10582
        %vm10590 = vmor %vm10588, %vm10589
        %v10591 = vsel %vm10590, %v10582, %v10587
        %v10592 = vrsqrt.pop %v10312
        %v10593 = vmul.f32 %v10592, %v10312
        %v10594 = vmul.f32 %v10593, %v10592
        %v10595 = vmul.f32 0.5, %v10594
        %v10596 = vsub.f32 1.5, %v10595
        %v10597 = vmul.f32 %v10592, %v10596
        %vm10598 = vweird.f32 %v10312
        %vm10599 = vweird.f32 %v10592
        %vm10600 = vmor %vm10598, %vm10599
        %v10601 = vsel %vm10600, %v10592, %v10597
        %v10602 = vrsqrt.pop %v10313
        %v10603 = vmul.f32 %v10602, %v10313
        %v10604 = vmul.f32 %v10603, %v10602
        %v10605 = vmul.f32 0.5, %v10604
        %v10606 = vsub.f32 1.5, %v10605
        %v10607 = vmul.f32 %v10602, %v10606
        %vm10608 = vweird.f32 %v10313
        %vm10609 = vweird.f32 %v10602
        %vm10610 = vmor %vm10608, %vm10609
        %v10611 = vsel %vm10610, %v10602, %v10607
        %v10612 = vrsqrt.pop %v10314
        %v10613 = vmul.f32 %v10612, %v10314
        %v10614 = vmul.f32 %v10613, %v10612
        %v10615 = vmul.f32 0.5, %v10614
        %v10616 = vsub.f32 1.5, %v10615
        %v10617 = vmul.f32 %v10612, %v10616
        %vm10618 = vweird.f32 %v10314
        %vm10619 = vweird.f32 %v10612
        %vm10620 = vmor %vm10618, %vm10619
        %v10621 = vsel %vm10620, %v10612, %v10617
        %v10622 = vrsqrt.pop %v10315
        %v10623 = vmul.f32 %v10622, %v10315
        %v10624 = vmul.f32 %v10623, %v10622
        %v10625 = vmul.f32 0.5, %v10624
        %v10626 = vsub.f32 1.5, %v10625
        %v10627 = vmul.f32 %v10622, %v10626
        %vm10628 = vweird.f32 %v10315
        %vm10629 = vweird.f32 %v10622
        %vm10630 = vmor %vm10628, %vm10629
        %v10631 = vsel %vm10630, %v10622, %v10627
        %v10632 = vrsqrt.pop %v10316
        %v10633 = vmul.f32 %v10632, %v10316
        %v10634 = vmul.f32 %v10633, %v10632
        %v10635 = vmul.f32 0.5, %v10634
        %v10636 = vsub.f32 1.5, %v10635
        %v10637 = vmul.f32 %v10632, %v10636
        %vm10638 = vweird.f32 %v10316
        %vm10639 = vweird.f32 %v10632
        %vm10640 = vmor %vm10638, %vm10639
        %v10641 = vsel %vm10640, %v10632, %v10637
        %v10642 = vrsqrt.pop %v10317
        %v10643 = vmul.f32 %v10642, %v10317
        %v10644 = vmul.f32 %v10643, %v10642
        %v10645 = vmul.f32 0.5, %v10644
        %v10646 = vsub.f32 1.5, %v10645
        %v10647 = vmul.f32 %v10642, %v10646
        %vm10648 = vweird.f32 %v10317
        %vm10649 = vweird.f32 %v10642
        %vm10650 = vmor %vm10648, %vm10649
        %v10651 = vsel %vm10650, %v10642, %v10647
        %v10652 = vrsqrt.pop %v10318
        %v10653 = vmul.f32 %v10652, %v10318
        %v10654 = vmul.f32 %v10653, %v10652
        %v10655 = vmul.f32 0.5, %v10654
        %v10656 = vsub.f32 1.5, %v10655
        %v10657 = vmul.f32 %v10652, %v10656
        %vm10658 = vweird.f32 %v10318
        %vm10659 = vweird.f32 %v10652
        %vm10660 = vmor %vm10658, %vm10659
        %v10661 = vsel %vm10660, %v10652, %v10657
        %v10662 = vrsqrt.pop %v10319
        %v10663 = vmul.f32 %v10662, %v10319
        %v10664 = vmul.f32 %v10663, %v10662
        %v10665 = vmul.f32 0.5, %v10664
        %v10666 = vsub.f32 1.5, %v10665
        %v10667 = vmul.f32 %v10662, %v10666
        %vm10668 = vweird.f32 %v10319
        %vm10669 = vweird.f32 %v10662
        %vm10670 = vmor %vm10668, %vm10669
        %v10671 = vsel %vm10670, %v10662, %v10667
        %v10672 = vrsqrt.pop %v10320
        %v10673 = vmul.f32 %v10672, %v10320
        %v10674 = vmul.f32 %v10673, %v10672
        %v10675 = vmul.f32 0.5, %v10674
        %v10676 = vsub.f32 1.5, %v10675
        %v10677 = vmul.f32 %v10672, %v10676
        %vm10678 = vweird.f32 %v10320
        %vm10679 = vweird.f32 %v10672
        %vm10680 = vmor %vm10678, %vm10679
        %v10681 = vsel %vm10680, %v10672, %v10677
        %v10682 = vrsqrt.pop %v10321
        %v10683 = vmul.f32 %v10682, %v10321
        %v10684 = vmul.f32 %v10683, %v10682
        %v10685 = vmul.f32 0.5, %v10684
        %v10686 = vsub.f32 1.5, %v10685
        %v10687 = vmul.f32 %v10682, %v10686
        %vm10688 = vweird.f32 %v10321
        %vm10689 = vweird.f32 %v10682
        %vm10690 = vmor %vm10688, %vm10689
        %v10691 = vsel %vm10690, %v10682, %v10687
        %v10692 = vrsqrt.pop %v10322
        %v10693 = vmul.f32 %v10692, %v10322
        %v10694 = vmul.f32 %v10693, %v10692
        %v10695 = vmul.f32 0.5, %v10694
        %v10696 = vsub.f32 1.5, %v10695
        %v10697 = vmul.f32 %v10692, %v10696
        %vm10698 = vweird.f32 %v10322
        %vm10699 = vweird.f32 %v10692
        %vm10700 = vmor %vm10698, %vm10699
        %v10701 = vsel %vm10700, %v10692, %v10697
        %v10702 = vrsqrt.pop %v10323
        %v10703 = vmul.f32 %v10702, %v10323
        %v10704 = vmul.f32 %v10703, %v10702
        %v10705 = vmul.f32 0.5, %v10704
        %v10706 = vsub.f32 1.5, %v10705
        %v10707 = vmul.f32 %v10702, %v10706
        %vm10708 = vweird.f32 %v10323
        %vm10709 = vweird.f32 %v10702
        %vm10710 = vmor %vm10708, %vm10709
        %v10711 = vsel %vm10710, %v10702, %v10707
        %v10712 = vrsqrt.pop %v10324
        %v10713 = vmul.f32 %v10712, %v10324
        %v10714 = vmul.f32 %v10713, %v10712
        %v10715 = vmul.f32 0.5, %v10714
        %v10716 = vsub.f32 1.5, %v10715
        %v10717 = vmul.f32 %v10712, %v10716
        %vm10718 = vweird.f32 %v10324
        %vm10719 = vweird.f32 %v10712
        %vm10720 = vmor %vm10718, %vm10719
        %v10721 = vsel %vm10720, %v10712, %v10717
        %v10722 = vrsqrt.pop %v10325
        %v10723 = vmul.f32 %v10722, %v10325
        %v10724 = vmul.f32 %v10723, %v10722
        %v10725 = vmul.f32 0.5, %v10724
        %v10726 = vsub.f32 1.5, %v10725
        %v10727 = vmul.f32 %v10722, %v10726
        %vm10728 = vweird.f32 %v10325
        %vm10729 = vweird.f32 %v10722
        %vm10730 = vmor %vm10728, %vm10729
        %v10731 = vsel %vm10730, %v10722, %v10727
        %v10732 = vrsqrt.pop %v10326
        %v10733 = vmul.f32 %v10732, %v10326
        %v10734 = vmul.f32 %v10733, %v10732
        %v10735 = vmul.f32 0.5, %v10734
        %v10736 = vsub.f32 1.5, %v10735
        %v10737 = vmul.f32 %v10732, %v10736
        %vm10738 = vweird.f32 %v10326
        %vm10739 = vweird.f32 %v10732
        %vm10740 = vmor %vm10738, %vm10739
        %v10741 = vsel %vm10740, %v10732, %v10737
        %v10742 = vrsqrt.pop %v10327
        %v10743 = vmul.f32 %v10742, %v10327
        %v10744 = vmul.f32 %v10743, %v10742
        %v10745 = vmul.f32 0.5, %v10744
        %v10746 = vsub.f32 1.5, %v10745
        %v10747 = vmul.f32 %v10742, %v10746
        %vm10748 = vweird.f32 %v10327
        %vm10749 = vweird.f32 %v10742
        %vm10750 = vmor %vm10748, %vm10749
        %v10751 = vsel %vm10750, %v10742, %v10747
        %v10752 = vrsqrt.pop %v10328
        %v10753 = vmul.f32 %v10752, %v10328
        %v10754 = vmul.f32 %v10753, %v10752
        %v10755 = vmul.f32 0.5, %v10754
        %v10756 = vsub.f32 1.5, %v10755
        %v10757 = vmul.f32 %v10752, %v10756
        %vm10758 = vweird.f32 %v10328
        %vm10759 = vweird.f32 %v10752
        %vm10760 = vmor %vm10758, %vm10759
        %v10761 = vsel %vm10760, %v10752, %v10757
        %v10762 = vrsqrt.pop %v10329
        %v10763 = vmul.f32 %v10762, %v10329
        %v10764 = vmul.f32 %v10763, %v10762
        %v10765 = vmul.f32 0.5, %v10764
        %v10766 = vsub.f32 1.5, %v10765
        %v10767 = vmul.f32 %v10762, %v10766
        %vm10768 = vweird.f32 %v10329
        %vm10769 = vweird.f32 %v10762
        %vm10770 = vmor %vm10768, %vm10769
        %v10771 = vsel %vm10770, %v10762, %v10767
        %v10772 = vrsqrt.pop %v10330
        %v10773 = vmul.f32 %v10772, %v10330
        %v10774 = vmul.f32 %v10773, %v10772
        %v10775 = vmul.f32 0.5, %v10774
        %v10776 = vsub.f32 1.5, %v10775
        %v10777 = vmul.f32 %v10772, %v10776
        %vm10778 = vweird.f32 %v10330
        %vm10779 = vweird.f32 %v10772
        %vm10780 = vmor %vm10778, %vm10779
        %v10781 = vsel %vm10780, %v10772, %v10777
        %v10782 = vrsqrt.pop %v10331
        %v10783 = vmul.f32 %v10782, %v10331
        %v10784 = vmul.f32 %v10783, %v10782
        %v10785 = vmul.f32 0.5, %v10784
        %v10786 = vsub.f32 1.5, %v10785
        %v10787 = vmul.f32 %v10782, %v10786
        %vm10788 = vweird.f32 %v10331
        %vm10789 = vweird.f32 %v10782
        %vm10790 = vmor %vm10788, %vm10789
        %v10791 = vsel %vm10790, %v10782, %v10787
        %v10792 = vrsqrt.pop %v10332
        %v10793 = vmul.f32 %v10792, %v10332
        %v10794 = vmul.f32 %v10793, %v10792
        %v10795 = vmul.f32 0.5, %v10794
        %v10796 = vsub.f32 1.5, %v10795
        %v10797 = vmul.f32 %v10792, %v10796
        %vm10798 = vweird.f32 %v10332
        %vm10799 = vweird.f32 %v10792
        %vm10800 = vmor %vm10798, %vm10799
        %v10801 = vsel %vm10800, %v10792, %v10797
        %v10802 = vrsqrt.pop %v10333
        %v10803 = vmul.f32 %v10802, %v10333
        %v10804 = vmul.f32 %v10803, %v10802
        %v10805 = vmul.f32 0.5, %v10804
        %v10806 = vsub.f32 1.5, %v10805
        %v10807 = vmul.f32 %v10802, %v10806
        %vm10808 = vweird.f32 %v10333
        %vm10809 = vweird.f32 %v10802
        %vm10810 = vmor %vm10808, %vm10809
        %v10811 = vsel %vm10810, %v10802, %v10807
        %v10812 = vrsqrt.pop %v10334
        %v10813 = vmul.f32 %v10812, %v10334
        %v10814 = vmul.f32 %v10813, %v10812
        %v10815 = vmul.f32 0.5, %v10814
        %v10816 = vsub.f32 1.5, %v10815
        %v10817 = vmul.f32 %v10812, %v10816
        %vm10818 = vweird.f32 %v10334
        %vm10819 = vweird.f32 %v10812
        %vm10820 = vmor %vm10818, %vm10819
        %v10821 = vsel %vm10820, %v10812, %v10817
        %v10822 = vrsqrt.pop %v10335
        %v10823 = vmul.f32 %v10822, %v10335
        %v10824 = vmul.f32 %v10823, %v10822
        %v10825 = vmul.f32 0.5, %v10824
        %v10826 = vsub.f32 1.5, %v10825
        %v10827 = vmul.f32 %v10822, %v10826
        %vm10828 = vweird.f32 %v10335
        %vm10829 = vweird.f32 %v10822
        %vm10830 = vmor %vm10828, %vm10829
        %v10831 = vsel %vm10830, %v10822, %v10827
        %v10832 = vrsqrt.pop %v10336
        %v10833 = vmul.f32 %v10832, %v10336
        %v10834 = vmul.f32 %v10833, %v10832
        %v10835 = vmul.f32 0.5, %v10834
        %v10836 = vsub.f32 1.5, %v10835
        %v10837 = vmul.f32 %v10832, %v10836
        %vm10838 = vweird.f32 %v10336
        %vm10839 = vweird.f32 %v10832
        %vm10840 = vmor %vm10838, %vm10839
        %v10841 = vsel %vm10840, %v10832, %v10837
        %v10842 = vrsqrt.pop %v10337
        %v10843 = vmul.f32 %v10842, %v10337
        %v10844 = vmul.f32 %v10843, %v10842
        %v10845 = vmul.f32 0.5, %v10844
        %v10846 = vsub.f32 1.5, %v10845
        %v10847 = vmul.f32 %v10842, %v10846
        %vm10848 = vweird.f32 %v10337
        %vm10849 = vweird.f32 %v10842
        %vm10850 = vmor %vm10848, %vm10849
        %v10851 = vsel %vm10850, %v10842, %v10847
        %v10852 = vrsqrt.pop %v10338
        %v10853 = vmul.f32 %v10852, %v10338
        %v10854 = vmul.f32 %v10853, %v10852
        %v10855 = vmul.f32 0.5, %v10854
        %v10856 = vsub.f32 1.5, %v10855
        %v10857 = vmul.f32 %v10852, %v10856
        %vm10858 = vweird.f32 %v10338
        %vm10859 = vweird.f32 %v10852
        %vm10860 = vmor %vm10858, %vm10859
        %v10861 = vsel %vm10860, %v10852, %v10857
        %v10862 = vrsqrt.pop %v10339
        %v10863 = vmul.f32 %v10862, %v10339
        %v10864 = vmul.f32 %v10863, %v10862
        %v10865 = vmul.f32 0.5, %v10864
        %v10866 = vsub.f32 1.5, %v10865
        %v10867 = vmul.f32 %v10862, %v10866
        %vm10868 = vweird.f32 %v10339
        %vm10869 = vweird.f32 %v10862
        %vm10870 = vmor %vm10868, %vm10869
        %v10871 = vsel %vm10870, %v10862, %v10867
        %v10872 = vrsqrt.pop %v10340
        %v10873 = vmul.f32 %v10872, %v10340
        %v10874 = vmul.f32 %v10873, %v10872
        %v10875 = vmul.f32 0.5, %v10874
        %v10876 = vsub.f32 1.5, %v10875
        %v10877 = vmul.f32 %v10872, %v10876
        %vm10878 = vweird.f32 %v10340
        %vm10879 = vweird.f32 %v10872
        %vm10880 = vmor %vm10878, %vm10879
        %v10881 = vsel %vm10880, %v10872, %v10877
        %v10882 = vrsqrt.pop %v10341
        %v10883 = vmul.f32 %v10882, %v10341
        %v10884 = vmul.f32 %v10883, %v10882
        %v10885 = vmul.f32 0.5, %v10884
        %v10886 = vsub.f32 1.5, %v10885
        %v10887 = vmul.f32 %v10882, %v10886
        %vm10888 = vweird.f32 %v10341
        %vm10889 = vweird.f32 %v10882
        %vm10890 = vmor %vm10888, %vm10889
        %v10891 = vsel %vm10890, %v10882, %v10887
        %v10892 = vrsqrt.pop %v10342
        %v10893 = vmul.f32 %v10892, %v10342
        %v10894 = vmul.f32 %v10893, %v10892
        %v10895 = vmul.f32 0.5, %v10894
        %v10896 = vsub.f32 1.5, %v10895
        %v10897 = vmul.f32 %v10892, %v10896
        %vm10898 = vweird.f32 %v10342
        %vm10899 = vweird.f32 %v10892
        %vm10900 = vmor %vm10898, %vm10899
        %v10901 = vsel %vm10900, %v10892, %v10897
        %v10902 = vrsqrt.pop %v10343
        %v10903 = vmul.f32 %v10902, %v10343
        %v10904 = vmul.f32 %v10903, %v10902
        %v10905 = vmul.f32 0.5, %v10904
        %v10906 = vsub.f32 1.5, %v10905
        %v10907 = vmul.f32 %v10902, %v10906
        %vm10908 = vweird.f32 %v10343
        %vm10909 = vweird.f32 %v10902
        %vm10910 = vmor %vm10908, %vm10909
        %v10911 = vsel %vm10910, %v10902, %v10907
        %v10912 = vrsqrt.pop %v10344
        %v10913 = vmul.f32 %v10912, %v10344
        %v10914 = vmul.f32 %v10913, %v10912
        %v10915 = vmul.f32 0.5, %v10914
        %v10916 = vsub.f32 1.5, %v10915
        %v10917 = vmul.f32 %v10912, %v10916
        %vm10918 = vweird.f32 %v10344
        %vm10919 = vweird.f32 %v10912
        %vm10920 = vmor %vm10918, %vm10919
        %v10921 = vsel %vm10920, %v10912, %v10917
        %v10922 = vrsqrt.pop %v10345
        %v10923 = vmul.f32 %v10922, %v10345
        %v10924 = vmul.f32 %v10923, %v10922
        %v10925 = vmul.f32 0.5, %v10924
        %v10926 = vsub.f32 1.5, %v10925
        %v10927 = vmul.f32 %v10922, %v10926
        %vm10928 = vweird.f32 %v10345
        %vm10929 = vweird.f32 %v10922
        %vm10930 = vmor %vm10928, %vm10929
        %v10931 = vsel %vm10930, %v10922, %v10927
        %v10932 = vrsqrt.pop %v10346
        %v10933 = vmul.f32 %v10932, %v10346
        %v10934 = vmul.f32 %v10933, %v10932
        %v10935 = vmul.f32 0.5, %v10934
        %v10936 = vsub.f32 1.5, %v10935
        %v10937 = vmul.f32 %v10932, %v10936
        %vm10938 = vweird.f32 %v10346
        %vm10939 = vweird.f32 %v10932
        %vm10940 = vmor %vm10938, %vm10939
        %v10941 = vsel %vm10940, %v10932, %v10937
        %v10942 = vrsqrt.pop %v10347
        %v10943 = vmul.f32 %v10942, %v10347
        %v10944 = vmul.f32 %v10943, %v10942
        %v10945 = vmul.f32 0.5, %v10944
        %v10946 = vsub.f32 1.5, %v10945
        %v10947 = vmul.f32 %v10942, %v10946
        %vm10948 = vweird.f32 %v10347
        %vm10949 = vweird.f32 %v10942
        %vm10950 = vmor %vm10948, %vm10949
        %v10951 = vsel %vm10950, %v10942, %v10947
        %v10952 = vrsqrt.pop %v10348
        %v10953 = vmul.f32 %v10952, %v10348
        %v10954 = vmul.f32 %v10953, %v10952
        %v10955 = vmul.f32 0.5, %v10954
        %v10956 = vsub.f32 1.5, %v10955
        %v10957 = vmul.f32 %v10952, %v10956
        %vm10958 = vweird.f32 %v10348
        %vm10959 = vweird.f32 %v10952
        %vm10960 = vmor %vm10958, %vm10959
        %v10961 = vsel %vm10960, %v10952, %v10957
        %v10962 = vrsqrt.pop %v10349
        %v10963 = vmul.f32 %v10962, %v10349
        %v10964 = vmul.f32 %v10963, %v10962
        %v10965 = vmul.f32 0.5, %v10964
        %v10966 = vsub.f32 1.5, %v10965
        %v10967 = vmul.f32 %v10962, %v10966
        %vm10968 = vweird.f32 %v10349
        %vm10969 = vweird.f32 %v10962
        %vm10970 = vmor %vm10968, %vm10969
        %v10971 = vsel %vm10970, %v10962, %v10967
        %v10972 = vrsqrt.pop %v10350
        %v10973 = vmul.f32 %v10972, %v10350
        %v10974 = vmul.f32 %v10973, %v10972
        %v10975 = vmul.f32 0.5, %v10974
        %v10976 = vsub.f32 1.5, %v10975
        %v10977 = vmul.f32 %v10972, %v10976
        %vm10978 = vweird.f32 %v10350
        %vm10979 = vweird.f32 %v10972
        %vm10980 = vmor %vm10978, %vm10979
        %v10981 = vsel %vm10980, %v10972, %v10977
        %v10982 = vrsqrt.pop %v10351
        %v10983 = vmul.f32 %v10982, %v10351
        %v10984 = vmul.f32 %v10983, %v10982
        %v10985 = vmul.f32 0.5, %v10984
        %v10986 = vsub.f32 1.5, %v10985
        %v10987 = vmul.f32 %v10982, %v10986
        %vm10988 = vweird.f32 %v10351
        %vm10989 = vweird.f32 %v10982
        %vm10990 = vmor %vm10988, %vm10989
        %v10991 = vsel %vm10990, %v10982, %v10987
        %v10992 = vmul.f32 %v9968, %v10361
        %v10993 = vmul.f32 %v9969, %v10371
        %v10994 = vmul.f32 %v9970, %v10381
        %v10995 = vmul.f32 %v9971, %v10391
        %v10996 = vmul.f32 %v9972, %v10401
        %v10997 = vmul.f32 %v9973, %v10411
        %v10998 = vmul.f32 %v9974, %v10421
        %v10999 = vmul.f32 %v9975, %v10431
        %v11000 = vmul.f32 %v9976, %v10441
        %v11001 = vmul.f32 %v9977, %v10451
        %v11002 = vmul.f32 %v9978, %v10461
        %v11003 = vmul.f32 %v9979, %v10471
        %v11004 = vmul.f32 %v9980, %v10481
        %v11005 = vmul.f32 %v9981, %v10491
        %v11006 = vmul.f32 %v9982, %v10501
        %v11007 = vmul.f32 %v9983, %v10511
        %v11008 = vmul.f32 %v9984, %v10521
        %v11009 = vmul.f32 %v9985, %v10531
        %v11010 = vmul.f32 %v9986, %v10541
        %v11011 = vmul.f32 %v9987, %v10551
        %v11012 = vmul.f32 %v9988, %v10561
        %v11013 = vmul.f32 %v9989, %v10571
        %v11014 = vmul.f32 %v9990, %v10581
        %v11015 = vmul.f32 %v9991, %v10591
        %v11016 = vmul.f32 %v9992, %v10601
        %v11017 = vmul.f32 %v9993, %v10611
        %v11018 = vmul.f32 %v9994, %v10621
        %v11019 = vmul.f32 %v9995, %v10631
        %v11020 = vmul.f32 %v9996, %v10641
        %v11021 = vmul.f32 %v9997, %v10651
        %v11022 = vmul.f32 %v9998, %v10661
        %v11023 = vmul.f32 %v9999, %v10671
        %v11024 = vmul.f32 %v10000, %v10681
        %v11025 = vmul.f32 %v10001, %v10691
        %v11026 = vmul.f32 %v10002, %v10701
        %v11027 = vmul.f32 %v10003, %v10711
        %v11028 = vmul.f32 %v10004, %v10721
        %v11029 = vmul.f32 %v10005, %v10731
        %v11030 = vmul.f32 %v10006, %v10741
        %v11031 = vmul.f32 %v10007, %v10751
        %v11032 = vmul.f32 %v10008, %v10761
        %v11033 = vmul.f32 %v10009, %v10771
        %v11034 = vmul.f32 %v10010, %v10781
        %v11035 = vmul.f32 %v10011, %v10791
        %v11036 = vmul.f32 %v10012, %v10801
        %v11037 = vmul.f32 %v10013, %v10811
        %v11038 = vmul.f32 %v10014, %v10821
        %v11039 = vmul.f32 %v10015, %v10831
        %v11040 = vmul.f32 %v10016, %v10841
        %v11041 = vmul.f32 %v10017, %v10851
        %v11042 = vmul.f32 %v10018, %v10861
        %v11043 = vmul.f32 %v10019, %v10871
        %v11044 = vmul.f32 %v10020, %v10881
        %v11045 = vmul.f32 %v10021, %v10891
        %v11046 = vmul.f32 %v10022, %v10901
        %v11047 = vmul.f32 %v10023, %v10911
        %v11048 = vmul.f32 %v10024, %v10921
        %v11049 = vmul.f32 %v10025, %v10931
        %v11050 = vmul.f32 %v10026, %v10941
        %v11051 = vmul.f32 %v10027, %v10951
        %v11052 = vmul.f32 %v10028, %v10961
        %v11053 = vmul.f32 %v10029, %v10971
        %v11054 = vmul.f32 %v10030, %v10981
        %v11055 = vmul.f32 %v10031, %v10991
        %v11056 = vld [vmem:[%s7] sm:$0x1]
        %v11058 = vperm.slane %v11056, 0
        %v11060 = vmul.f32 %v10992, %v11058
        %v11061 = vmul.f32 %v10993, %v11058
        %v11062 = vmul.f32 %v10994, %v11058
        %v11063 = vmul.f32 %v10995, %v11058
        %v11064 = vmul.f32 %v10996, %v11058
        %v11065 = vmul.f32 %v10997, %v11058
        %v11066 = vmul.f32 %v10998, %v11058
        %v11067 = vmul.f32 %v10999, %v11058
        %v11068 = vmul.f32 %v11000, %v11058
        %v11069 = vmul.f32 %v11001, %v11058
        %v11070 = vmul.f32 %v11002, %v11058
        %v11071 = vmul.f32 %v11003, %v11058
        %v11072 = vmul.f32 %v11004, %v11058
        %v11073 = vmul.f32 %v11005, %v11058
        %v11074 = vmul.f32 %v11006, %v11058
        %v11075 = vmul.f32 %v11007, %v11058
        %v11076 = vmul.f32 %v11008, %v11058
        %v11077 = vmul.f32 %v11009, %v11058
        %v11078 = vmul.f32 %v11010, %v11058
        %v11079 = vmul.f32 %v11011, %v11058
        %v11080 = vmul.f32 %v11012, %v11058
        %v11081 = vmul.f32 %v11013, %v11058
        %v11082 = vmul.f32 %v11014, %v11058
        %v11083 = vmul.f32 %v11015, %v11058
        %v11084 = vmul.f32 %v11016, %v11058
        %v11085 = vmul.f32 %v11017, %v11058
        %v11086 = vmul.f32 %v11018, %v11058
        %v11087 = vmul.f32 %v11019, %v11058
        %v11088 = vmul.f32 %v11020, %v11058
        %v11089 = vmul.f32 %v11021, %v11058
        %v11090 = vmul.f32 %v11022, %v11058
        %v11091 = vmul.f32 %v11023, %v11058
        %v11092 = vmul.f32 %v11024, %v11058
        %v11093 = vmul.f32 %v11025, %v11058
        %v11094 = vmul.f32 %v11026, %v11058
        %v11095 = vmul.f32 %v11027, %v11058
        %v11096 = vmul.f32 %v11028, %v11058
        %v11097 = vmul.f32 %v11029, %v11058
        %v11098 = vmul.f32 %v11030, %v11058
        %v11099 = vmul.f32 %v11031, %v11058
        %v11100 = vmul.f32 %v11032, %v11058
        %v11101 = vmul.f32 %v11033, %v11058
        %v11102 = vmul.f32 %v11034, %v11058
        %v11103 = vmul.f32 %v11035, %v11058
        %v11104 = vmul.f32 %v11036, %v11058
        %v11105 = vmul.f32 %v11037, %v11058
        %v11106 = vmul.f32 %v11038, %v11058
        %v11107 = vmul.f32 %v11039, %v11058
        %v11108 = vmul.f32 %v11040, %v11058
        %v11109 = vmul.f32 %v11041, %v11058
        %v11110 = vmul.f32 %v11042, %v11058
        %v11111 = vmul.f32 %v11043, %v11058
        %v11112 = vmul.f32 %v11044, %v11058
        %v11113 = vmul.f32 %v11045, %v11058
        %v11114 = vmul.f32 %v11046, %v11058
        %v11115 = vmul.f32 %v11047, %v11058
        %v11116 = vmul.f32 %v11048, %v11058
        %v11117 = vmul.f32 %v11049, %v11058
        %v11118 = vmul.f32 %v11050, %v11058
        %v11119 = vmul.f32 %v11051, %v11058
        %v11120 = vmul.f32 %v11052, %v11058
        %v11121 = vmul.f32 %v11053, %v11058
        %v11122 = vmul.f32 %v11054, %v11058
        %v11123 = vmul.f32 %v11055, %v11058
        %v11124 = vld [vmem:[%s8] sm:$0x1]
        %v11126 = vperm.slane %v11124, 0
        %v11128 = vadd.f32 %v11060, %v11126
        %v11129 = vadd.f32 %v11061, %v11126
        %v11130 = vadd.f32 %v11062, %v11126
        %v11131 = vadd.f32 %v11063, %v11126
        %v11132 = vadd.f32 %v11064, %v11126
        %v11133 = vadd.f32 %v11065, %v11126
        %v11134 = vadd.f32 %v11066, %v11126
        %v11135 = vadd.f32 %v11067, %v11126
        %v11136 = vadd.f32 %v11068, %v11126
        %v11137 = vadd.f32 %v11069, %v11126
        %v11138 = vadd.f32 %v11070, %v11126
        %v11139 = vadd.f32 %v11071, %v11126
        %v11140 = vadd.f32 %v11072, %v11126
        %v11141 = vadd.f32 %v11073, %v11126
        %v11142 = vadd.f32 %v11074, %v11126
        %v11143 = vadd.f32 %v11075, %v11126
        %v11144 = vadd.f32 %v11076, %v11126
        %v11145 = vadd.f32 %v11077, %v11126
        %v11146 = vadd.f32 %v11078, %v11126
        %v11147 = vadd.f32 %v11079, %v11126
        %v11148 = vadd.f32 %v11080, %v11126
        %v11149 = vadd.f32 %v11081, %v11126
        %v11150 = vadd.f32 %v11082, %v11126
        %v11151 = vadd.f32 %v11083, %v11126
        %v11152 = vadd.f32 %v11084, %v11126
        %v11153 = vadd.f32 %v11085, %v11126
        %v11154 = vadd.f32 %v11086, %v11126
        %v11155 = vadd.f32 %v11087, %v11126
        %v11156 = vadd.f32 %v11088, %v11126
        %v11157 = vadd.f32 %v11089, %v11126
        %v11158 = vadd.f32 %v11090, %v11126
        %v11159 = vadd.f32 %v11091, %v11126
        %v11160 = vadd.f32 %v11092, %v11126
        %v11161 = vadd.f32 %v11093, %v11126
        %v11162 = vadd.f32 %v11094, %v11126
        %v11163 = vadd.f32 %v11095, %v11126
        %v11164 = vadd.f32 %v11096, %v11126
        %v11165 = vadd.f32 %v11097, %v11126
        %v11166 = vadd.f32 %v11098, %v11126
        %v11167 = vadd.f32 %v11099, %v11126
        %v11168 = vadd.f32 %v11100, %v11126
        %v11169 = vadd.f32 %v11101, %v11126
        %v11170 = vadd.f32 %v11102, %v11126
        %v11171 = vadd.f32 %v11103, %v11126
        %v11172 = vadd.f32 %v11104, %v11126
        %v11173 = vadd.f32 %v11105, %v11126
        %v11174 = vadd.f32 %v11106, %v11126
        %v11175 = vadd.f32 %v11107, %v11126
        %v11176 = vadd.f32 %v11108, %v11126
        %v11177 = vadd.f32 %v11109, %v11126
        %v11178 = vadd.f32 %v11110, %v11126
        %v11179 = vadd.f32 %v11111, %v11126
        %v11180 = vadd.f32 %v11112, %v11126
        %v11181 = vadd.f32 %v11113, %v11126
        %v11182 = vadd.f32 %v11114, %v11126
        %v11183 = vadd.f32 %v11115, %v11126
        %v11184 = vadd.f32 %v11116, %v11126
        %v11185 = vadd.f32 %v11117, %v11126
        %v11186 = vadd.f32 %v11118, %v11126
        %v11187 = vadd.f32 %v11119, %v11126
        %v11188 = vadd.f32 %v11120, %v11126
        %v11189 = vadd.f32 %v11121, %v11126
        %v11190 = vadd.f32 %v11122, %v11126
        %v11191 = vadd.f32 %v11123, %v11126
        %v11192 = vadd.f32 %v11128, %v11129
        %v11193 = vadd.f32 %v11192, %v11130
        %v11194 = vadd.f32 %v11193, %v11131
        %v11195 = vadd.f32 %v11194, %v11132
        %v11196 = vadd.f32 %v11195, %v11133
        %v11197 = vadd.f32 %v11196, %v11134
        %v11198 = vadd.f32 %v11197, %v11135
        %v11199 = vadd.f32 %v11198, %v11136
        %v11200 = vadd.f32 %v11199, %v11137
        %v11201 = vadd.f32 %v11200, %v11138
        %v11202 = vadd.f32 %v11201, %v11139
        %v11203 = vadd.f32 %v11202, %v11140
        %v11204 = vadd.f32 %v11203, %v11141
        %v11205 = vadd.f32 %v11204, %v11142
        %v11206 = vadd.f32 %v11205, %v11143
        %v11207 = vadd.f32 %v11206, %v11144
        %v11208 = vadd.f32 %v11207, %v11145
        %v11209 = vadd.f32 %v11208, %v11146
        %v11210 = vadd.f32 %v11209, %v11147
        %v11211 = vadd.f32 %v11210, %v11148
        %v11212 = vadd.f32 %v11211, %v11149
        %v11213 = vadd.f32 %v11212, %v11150
        %v11214 = vadd.f32 %v11213, %v11151
        %v11215 = vadd.f32 %v11214, %v11152
        %v11216 = vadd.f32 %v11215, %v11153
        %v11217 = vadd.f32 %v11216, %v11154
        %v11218 = vadd.f32 %v11217, %v11155
        %v11219 = vadd.f32 %v11218, %v11156
        %v11220 = vadd.f32 %v11219, %v11157
        %v11221 = vadd.f32 %v11220, %v11158
        %v11222 = vadd.f32 %v11221, %v11159
        %v11223 = vrot.slane %v11222, 4
        %v11224 = vadd.f32 %v11222, %v11223
        %v11225 = vrot.slane %v11224, 2
        %v11226 = vadd.f32 %v11224, %v11225
        %v11227 = vrot.slane %v11226, 1
        %v11228 = vadd.f32 %v11226, %v11227
        %v11229 = vadd.f32 %v11160, %v11161
        %v11230 = vadd.f32 %v11229, %v11162
        %v11231 = vadd.f32 %v11230, %v11163
        %v11232 = vadd.f32 %v11231, %v11164
        %v11233 = vadd.f32 %v11232, %v11165
        %v11234 = vadd.f32 %v11233, %v11166
        %v11235 = vadd.f32 %v11234, %v11167
        %v11236 = vadd.f32 %v11235, %v11168
        %v11237 = vadd.f32 %v11236, %v11169
        %v11238 = vadd.f32 %v11237, %v11170
        %v11239 = vadd.f32 %v11238, %v11171
        %v11240 = vadd.f32 %v11239, %v11172
        %v11241 = vadd.f32 %v11240, %v11173
        %v11242 = vadd.f32 %v11241, %v11174
        %v11243 = vadd.f32 %v11242, %v11175
        %v11244 = vadd.f32 %v11243, %v11176
        %v11245 = vadd.f32 %v11244, %v11177
        %v11246 = vadd.f32 %v11245, %v11178
        %v11247 = vadd.f32 %v11246, %v11179
        %v11248 = vadd.f32 %v11247, %v11180
        %v11249 = vadd.f32 %v11248, %v11181
        %v11250 = vadd.f32 %v11249, %v11182
        %v11251 = vadd.f32 %v11250, %v11183
        %v11252 = vadd.f32 %v11251, %v11184
        %v11253 = vadd.f32 %v11252, %v11185
        %v11254 = vadd.f32 %v11253, %v11186
        %v11255 = vadd.f32 %v11254, %v11187
        %v11256 = vadd.f32 %v11255, %v11188
        %v11257 = vadd.f32 %v11256, %v11189
        %v11258 = vadd.f32 %v11257, %v11190
        %v11259 = vadd.f32 %v11258, %v11191
        %v11260 = vrot.slane %v11259, 4
        %v11261 = vadd.f32 %v11259, %v11260
        %v11262 = vrot.slane %v11261, 2
        %v11263 = vadd.f32 %v11261, %v11262
        %v11264 = vrot.slane %v11263, 1
        %v11265 = vadd.f32 %v11263, %v11264
        %v11266 = vmul.f32 %v11228, 0.00390625
        %v11267 = vmul.f32 %v11265, 0.00390625
        %vm11270 = vcmask 1041409
        %v11271 = vsel %vm11270, %v11267, %v11266
        %11273 = vst [vmem:[%s386] sm:$0x3] %v11271
        %s11274 = sand.u32 %s229, 1
        %s11275 = scalar_lea.sflag [#allocation6], %s11274
        %s11276 = sand.u32 %s229, 1
        %s11277 = smul.addr %s11276, 2
        %s11278 = scalar_lea.vmem [#allocation10], %s11277
        // Predicated region
        $region69: #{tpu_custom_call.1} parent=55 // pred_check
          %p11279 = pneg %p239
        $region70: #{tpu_custom_call.1} parent=55 // pred_check_branch
          %11281 = sbr.rel (%p11279) target = $region72
        $region71: #{tpu_custom_call.1} parent=55 // pred_region
          %11283 = vsyncadd %s11275, 0
          %s11284 = smul.addr %s27, 2
          %s11285 = scalar_lea.hbm %s9, %s11284
          %s11287 = sshll.u32 %s11278, 4
          %s11288 = int_to_ptr.vmem [resolvable:$true] %s11287
          %s11289 = sshll.u32 %s11285, 4
          %s11290 = int_to_ptr.hbm [resolvable:$true] %s11289
          %11292 = dma.vmem_to_hbm [thread:$0]  %s11288, 32, %s11290, %s11275
        $region72: #{tpu_custom_call.1} parent=55 // pred_fallthru
          _
      $region56: #{tpu_custom_call.1} parent=5 // pred_fallthru
        _
      %p11293 = scmp.le.s32.totalorder 2, %s22
      // Predicated region
      $region73: #{tpu_custom_call.1} parent=5 // pred_check
        %p11294 = pneg %p11293
      $region74: #{tpu_custom_call.1} parent=5 // pred_check_branch
        %11296 = sbr.rel (%p11294) target = $region76
      $region75: #{tpu_custom_call.1} parent=5 // pred_region
        %s11297 = ssub.s32 %s22, 2
        // Predicated region
        $region77: #{tpu_custom_call.1} parent=75 // pred_check
          %p11298 = pneg %p245
        $region78: #{tpu_custom_call.1} parent=75 // pred_check_branch
          %11300 = sbr.rel (%p11298) target = $region80
        $region79: #{tpu_custom_call.1} parent=75 // pred_region
          %s11301 = sand.u32 %s230, 1
          %s11302 = scalar_lea.sflag [#allocation6], %s11301
          %s11303 = sand.u32 %s230, 1
          %s11304 = smul.addr %s11303, 2
          %s11305 = scalar_lea.vmem [#allocation10], %s11304
          %11307 = dma.done %s11302, 32
        $region80: #{tpu_custom_call.1} parent=75 // pred_fallthru
          _
      $region76: #{tpu_custom_call.1} parent=5 // pred_fallthru
        _
    $region6: #{tpu_custom_call.1} parent=1 // loop_footer
      %s26 = sadd.s32 1, %s22
    $region7: #{tpu_custom_call.1} parent=1 // loop_footer_branch
      %21 = sbr.rel target = $region3
    $region8: #{tpu_custom_call.1} parent=1 // loop_exit
      _
    %11308 = vsyncpa [#allocation5], 1
    %s11309 = scalar_lea.sflag [#allocation5], 1
    %11310 = vsyncpa %s11309, 1
    %11311 = vsyncpa [#allocation8], 1
    %11312 = vsyncpa [#allocation6], 1
    %s11313 = scalar_lea.sflag [#allocation6], 1
    %11314 = vsyncpa %s11313, 1

</llo_original>
